<compile_context>
chip_gen: v5e
topology: v5e:2x2
jax: 0.10.0
libtpu: 0.0.40
codegen_flags: <defaults>
</compile_context>

<pallas_src>
import math

import jax
import jax.numpy as jnp
from jax.experimental import pallas as pl
from jax.experimental.pallas import tpu as pltpu


_SMALL_K_THRESHOLD = 8   # below this contraction depth, skip the MXU


def _round_up(x, m):
    return ((x + m - 1) // m) * m


# ----------------------------------------------------------------------------
# Fused Pallas kernel: the entire SirenNet forward for one column tile.
# ----------------------------------------------------------------------------
def _fused_siren_kernel(x_ref, *refs):
    # refs = (w_1, b_1, w_2, b_2, ..., w_L, b_L, o_ref)   (feature-major)
    #   w_l : (dout_l, din_l)  -- PyTorch layout, already scaled by w0
    #   b_l : (dout_l, 1)      -- already scaled by w0
    #   x_ref : (dim_in, tm) column tile; o_ref : (dim_out, tm)
    o_ref = refs[-1]
    num_layers = (len(refs) - 1) // 2

    h = x_ref[...]                                     # (din_l, tm)
    for li in range(num_layers):                       # statically unrolled
        w_ref = refs[2 * li]
        b_ref = refs[2 * li + 1]
        k_dim = w_ref.shape[1]
        if k_dim < _SMALL_K_THRESHOLD:
            # Tiny contraction (2-D coordinates): pure-VALU broadcast FMAs,
            # MXU skipped.  Operands are lane-dense (1, tm) rows.
            w = w_ref[...]                             # (dout, k)
            z = b_ref[...] + w[:, 0:1] * h[0:1, :]     # (dout, tm)
            for k in range(1, k_dim):
                z = z + w[:, k:k + 1] * h[k:k + 1, :]
        else:
            z = jnp.dot(w_ref[...], h, preferred_element_type=jnp.float32)
            z = z + b_ref[...]
        # TODO(synk): if still not fast enough, a bounded-range sin polynomial
        # for the hidden layers (|z| is O(4) post-fold) could ~halve VALU work.
        h = jnp.sin(z)                                 # w0 already folded in
    o_ref[...] = h.astype(o_ref.dtype)


# ----------------------------------------------------------------------------
# Wrapper: one pallas_call for the whole network (lane-dense layout).
# ----------------------------------------------------------------------------
def siren_net_forward(x, params, *, tm_max=4096, min_grid=2):
    """x: (N, dim_in) f32; params: list of dicts(weight (dout,din), bias (dout,), w0)."""
    n, dim_in = x.shape
    dim_hidden = params[0]["weight"].shape[0]
    dim_out = params[-1]["weight"].shape[0]

    # Row tile lives in the lane dimension.  Keep >= min_grid grid steps so
    # both v7x TensorCores get work; cap at tm_max (VMEM/col is ~1 KiB).
    tm = max(128, min(tm_max, _round_up(pl.cdiv(n, min_grid), 128)))
    grid = pl.cdiv(n, tm)

    # Feature-major: sample points go to lanes.  This is layout plumbing on a
    # tiny (N, 2) array; the kernel itself is sin/VALU-bound.
    x_t = x.T.astype(jnp.float32)                      # (dim_in, N)

    # Fold w0 into the parameters (exact in real arithmetic) but keep the
    # PyTorch (dout, din) weight layout so the kernel computes z = W @ h.
    flat_wb = []
    in_specs = [pl.BlockSpec((dim_in, tm), lambda i: (0, i))]
    for p in params:
        w0 = float(p["w0"])
        w = (w0 * p["weight"]).astype(jnp.float32)              # (dout, din)
        b = (w0 * p["bias"]).reshape(-1, 1).astype(jnp.float32)  # (dout, 1)
        flat_wb.append(w)
        flat_wb.append(b)
        in_specs.append(pl.BlockSpec(w.shape, lambda i: (0, 0)))
        in_specs.append(pl.BlockSpec(b.shape, lambda i: (0, 0)))

    # Explicit VMEM budget: double-buffered x/out tiles, a few live
    # (dim_hidden, tm) intermediates, KB-scale weights, plus headroom.
    # Capped well below the v7x 64 MiB physical VMEM.
    per_col_bytes = 4 * (4 * dim_in + 4 * _round_up(dim_out, 8) + 8 * dim_hidden)
    vmem_limit = int(min(48 << 20, max(16 << 20, per_col_bytes * tm + (2 << 20))))

    out_t = pl.pallas_call(
        _fused_siren_kernel,
        out_shape=jax.ShapeDtypeStruct((dim_out, n), jnp.float32),
        grid_spec=pltpu.PrefetchScalarGridSpec(
            num_scalar_prefetch=0,
            grid=(grid,),
            in_specs=in_specs,
            out_specs=pl.BlockSpec((dim_out, tm), lambda i: (0, i)),
        ),
        compiler_params=pltpu.CompilerParams(
            dimension_semantics=("parallel",),
            vmem_limit_bytes=vmem_limit),
    )(x_t, *flat_wb)

    return out_t.T                                     # (N, dim_out)


# ----------------------------------------------------------------------------
# Parameter construction (deterministic, mirrors Siren.init_)
# ----------------------------------------------------------------------------
def init_siren_params(key, dim_in, dim_hidden, dim_out, num_layers,
                      w0=30.0, w0_initial=30.0, c=6.0):
    params = []
    for ind in range(num_layers):
        is_first = ind == 0
        layer_w0 = w0_initial if is_first else w0
        layer_dim_in = dim_in if is_first else dim_hidden
        w_std = (1.0 / layer_dim_in) if is_first \
            else math.sqrt(c / layer_dim_in) / layer_w0
        key, kw, kb = jax.random.split(key, 3)
        weight = jax.random.uniform(kw, (dim_hidden, layer_dim_in),
                                    minval=-w_std, maxval=w_std,
                                    dtype=jnp.float32)
        bias = jax.random.uniform(kb, (dim_hidden,),
                                  minval=-w_std, maxval=w_std,
                                  dtype=jnp.float32)
        params.append(dict(weight=weight, bias=bias, w0=layer_w0))

    # Last layer: dim_hidden -> dim_out, is_first=False; activation is Sine(w0)
    # because final_activation=None in the reference SirenNet.
    w_std = math.sqrt(c / dim_hidden) / w0
    key, kw, kb = jax.random.split(key, 3)
    weight = jax.random.uniform(kw, (dim_out, dim_hidden),
                                minval=-w_std, maxval=w_std, dtype=jnp.float32)
    bias = jax.random.uniform(kb, (dim_out,),
                              minval=-w_std, maxval=w_std, dtype=jnp.float32)
    params.append(dict(weight=weight, bias=bias, w0=w0))
    return params


# ----------------------------------------------------------------------------
# Pure-JAX reference (PyTorch operation order: sin(w0 * (x @ W.T + b)))
# ----------------------------------------------------------------------------
def siren_net_ref(x, params):
    for p in params:
        y = jnp.dot(x, p["weight"].T,
                    precision=jax.lax.Precision.HIGHEST) + p["bias"]
        x = jnp.sin(p["w0"] * y)
    return x


if __name__ == "__main__":
    # SIREN-typical shapes: 2-D coordinates in, 32 hidden units, 3 output
    # channels, 3 hidden layers.  N=1000 deliberately not a multiple of 128
    # to exercise the partial-last-block (masked writeback) path.
    N = 1000
    DIM_IN = 2
    DIM_HIDDEN = 32
    DIM_OUT = 3
    NUM_LAYERS = 3

    key = jax.random.PRNGKey(0)
    key, kx = jax.random.split(key)
    x = jax.random.uniform(kx, (N, DIM_IN), minval=-1.0, maxval=1.0,
                           dtype=jnp.float32)
    params = init_siren_params(key, DIM_IN, DIM_HIDDEN, DIM_OUT, NUM_LAYERS)

    out = siren_net_forward(x, params)
    out = jax.block_until_ready(out)

    ref = siren_net_ref(x, params)
    assert out.shape == (N, DIM_OUT), out.shape
    # Tolerance note (accuracy contract): the kernel folds w0 into W/b, which
    # is exact in real arithmetic but reorders f32 rounding under the w0=30
    # amplification; ~1e-4 drift after 4 layers is expected.  Do not stack
    # further precision reductions (e.g. bf16 activations) on top of this.
    assert jnp.allclose(out, ref, atol=1e-3, rtol=1e-4), \
        float(jnp.max(jnp.abs(out - ref)))

    print("KERNEL_OK")
</pallas_src>

<mosaic_0001>
module attributes {stable_mosaic.version = 11 : i64} {
  func.func @_fused_siren_kernel(%arg0: i32, %arg1: memref<2x512xf32, #tpu.memory_space<vmem>>, %arg2: memref<32x2xf32, #tpu.memory_space<vmem>>, %arg3: memref<32x1xf32, #tpu.memory_space<vmem>>, %arg4: memref<32x32xf32, #tpu.memory_space<vmem>>, %arg5: memref<32x1xf32, #tpu.memory_space<vmem>>, %arg6: memref<32x32xf32, #tpu.memory_space<vmem>>, %arg7: memref<32x1xf32, #tpu.memory_space<vmem>>, %arg8: memref<3x32xf32, #tpu.memory_space<vmem>>, %arg9: memref<3x1xf32, #tpu.memory_space<vmem>>, %arg10: memref<3x512xf32, #tpu.memory_space<vmem>>) attributes {dimension_semantics = [#tpu.dimension_semantics<parallel>], iteration_bounds = array<i64: 2>, scalar_prefetch = 0 : i64, scratch_operands = 0 : i64, tpu.core_type = #tpu.core_type<tc>, window_params = [{transform_indices = @transform_0, window_bounds = array<i64: 2, 512>}, {pipeline_mode = #tpu.pipeline_mode<synchronous>, transform_indices = @transform_1, window_bounds = array<i64: 32, 2>}, {pipeline_mode = #tpu.pipeline_mode<synchronous>, transform_indices = @transform_2, window_bounds = array<i64: 32, 1>}, {pipeline_mode = #tpu.pipeline_mode<synchronous>, transform_indices = @transform_3, window_bounds = array<i64: 32, 32>}, {pipeline_mode = #tpu.pipeline_mode<synchronous>, transform_indices = @transform_4, window_bounds = array<i64: 32, 1>}, {pipeline_mode = #tpu.pipeline_mode<synchronous>, transform_indices = @transform_5, window_bounds = array<i64: 32, 32>}, {pipeline_mode = #tpu.pipeline_mode<synchronous>, transform_indices = @transform_6, window_bounds = array<i64: 32, 1>}, {pipeline_mode = #tpu.pipeline_mode<synchronous>, transform_indices = @transform_7, window_bounds = array<i64: 3, 32>}, {pipeline_mode = #tpu.pipeline_mode<synchronous>, transform_indices = @transform_8, window_bounds = array<i64: 3, 1>}, {transform_indices = @transform_9, window_bounds = array<i64: 3, 512>}]} {
    %c0 = arith.constant 0 : index
    %c0_0 = arith.constant 0 : index
    %0 = vector.load %arg1[%c0, %c0_0] : memref<2x512xf32, #tpu.memory_space<vmem>>, vector<2x512xf32>
    %c0_1 = arith.constant 0 : index
    %c0_2 = arith.constant 0 : index
    %1 = vector.load %arg2[%c0_1, %c0_2] : memref<32x2xf32, #tpu.memory_space<vmem>>, vector<32x2xf32>
    %c0_3 = arith.constant 0 : index
    %c0_4 = arith.constant 0 : index
    %2 = vector.load %arg3[%c0_3, %c0_4] : memref<32x1xf32, #tpu.memory_space<vmem>>, vector<32x1xf32>
    %3 = vector.extract_strided_slice %1 {offsets = [0, 0], sizes = [32, 1], strides = [1, 1]} : vector<32x2xf32> to vector<32x1xf32>
    %4 = vector.extract_strided_slice %0 {offsets = [0, 0], sizes = [1, 512], strides = [1, 1]} : vector<2x512xf32> to vector<1x512xf32>
    %5 = vector.broadcast %3 : vector<32x1xf32> to vector<32x512xf32>
    %6 = vector.broadcast %4 : vector<1x512xf32> to vector<32x512xf32>
    %7 = arith.mulf %5, %6 : vector<32x512xf32>
    %8 = vector.broadcast %2 : vector<32x1xf32> to vector<32x512xf32>
    %9 = arith.addf %8, %7 : vector<32x512xf32>
    %10 = vector.extract_strided_slice %1 {offsets = [0, 1], sizes = [32, 1], strides = [1, 1]} : vector<32x2xf32> to vector<32x1xf32>
    %11 = vector.extract_strided_slice %0 {offsets = [1, 0], sizes = [1, 512], strides = [1, 1]} : vector<2x512xf32> to vector<1x512xf32>
    %12 = vector.broadcast %10 : vector<32x1xf32> to vector<32x512xf32>
    %13 = vector.broadcast %11 : vector<1x512xf32> to vector<32x512xf32>
    %14 = arith.mulf %12, %13 : vector<32x512xf32>
    %15 = arith.addf %9, %14 : vector<32x512xf32>
    %16 = math.sin %15 : vector<32x512xf32>
    %c0_5 = arith.constant 0 : index
    %c0_6 = arith.constant 0 : index
    %17 = vector.load %arg4[%c0_5, %c0_6] : memref<32x32xf32, #tpu.memory_space<vmem>>, vector<32x32xf32>
    %cst = arith.constant dense<0.000000e+00> : vector<32x512xf32>
    %18 = tpu.matmul %17, %16, %cst {dimension_numbers = #tpu.dot_dimension_numbers<[1], [0], [0], [1], [0, 0, 1, 1], [], []>} : vector<32x32xf32>, vector<32x512xf32>, vector<32x512xf32> -> vector<32x512xf32>
    %c0_7 = arith.constant 0 : index
    %c0_8 = arith.constant 0 : index
    %19 = vector.load %arg5[%c0_7, %c0_8] : memref<32x1xf32, #tpu.memory_space<vmem>>, vector<32x1xf32>
    %20 = vector.broadcast %19 : vector<32x1xf32> to vector<32x512xf32>
    %21 = arith.addf %18, %20 : vector<32x512xf32>
    %22 = math.sin %21 : vector<32x512xf32>
    %c0_9 = arith.constant 0 : index
    %c0_10 = arith.constant 0 : index
    %23 = vector.load %arg6[%c0_9, %c0_10] : memref<32x32xf32, #tpu.memory_space<vmem>>, vector<32x32xf32>
    %cst_11 = arith.constant dense<0.000000e+00> : vector<32x512xf32>
    %24 = tpu.matmul %23, %22, %cst_11 {dimension_numbers = #tpu.dot_dimension_numbers<[1], [0], [0], [1], [0, 0, 1, 1], [], []>} : vector<32x32xf32>, vector<32x512xf32>, vector<32x512xf32> -> vector<32x512xf32>
    %c0_12 = arith.constant 0 : index
    %c0_13 = arith.constant 0 : index
    %25 = vector.load %arg7[%c0_12, %c0_13] : memref<32x1xf32, #tpu.memory_space<vmem>>, vector<32x1xf32>
    %26 = vector.broadcast %25 : vector<32x1xf32> to vector<32x512xf32>
    %27 = arith.addf %24, %26 : vector<32x512xf32>
    %28 = math.sin %27 : vector<32x512xf32>
    %c0_14 = arith.constant 0 : index
    %c0_15 = arith.constant 0 : index
    %29 = vector.load %arg8[%c0_14, %c0_15] : memref<3x32xf32, #tpu.memory_space<vmem>>, vector<3x32xf32>
    %cst_16 = arith.constant dense<0.000000e+00> : vector<3x512xf32>
    %30 = tpu.matmul %29, %28, %cst_16 {dimension_numbers = #tpu.dot_dimension_numbers<[1], [0], [0], [1], [0, 0, 1, 1], [], []>} : vector<3x32xf32>, vector<32x512xf32>, vector<3x512xf32> -> vector<3x512xf32>
    %c0_17 = arith.constant 0 : index
    %c0_18 = arith.constant 0 : index
    %31 = vector.load %arg9[%c0_17, %c0_18] : memref<3x1xf32, #tpu.memory_space<vmem>>, vector<3x1xf32>
    %32 = vector.broadcast %31 : vector<3x1xf32> to vector<3x512xf32>
    %33 = arith.addf %30, %32 : vector<3x512xf32>
    %34 = math.sin %33 : vector<3x512xf32>
    %c0_19 = arith.constant 0 : index
    %c0_20 = arith.constant 0 : index
    %35 = vector.load %arg10[%c0_19, %c0_20] : memref<3x512xf32, #tpu.memory_space<vmem>>, vector<3x512xf32>
    tpu.vector_store %arg10[%c0_19, %c0_20], %34 {strides = array<i32>} : memref<3x512xf32, #tpu.memory_space<vmem>>, vector<3x512xf32>,
    return
  }
  func.func @transform_0(%arg0: i32) -> (i32, i32) {
    %c0_i32 = arith.constant 0 : i32
    %c0_i32_0 = arith.constant 0 : i32
    return %c0_i32, %arg0 : i32, i32
  }
  func.func @transform_1(%arg0: i32) -> (i32, i32) {
    %c0_i32 = arith.constant 0 : i32
    %c0_i32_0 = arith.constant 0 : i32
    %c0_i32_1 = arith.constant 0 : i32
    return %c0_i32, %c0_i32_0 : i32, i32
  }
  func.func @transform_2(%arg0: i32) -> (i32, i32) {
    %c0_i32 = arith.constant 0 : i32
    %c0_i32_0 = arith.constant 0 : i32
    %c0_i32_1 = arith.constant 0 : i32
    return %c0_i32, %c0_i32_0 : i32, i32
  }
  func.func @transform_3(%arg0: i32) -> (i32, i32) {
    %c0_i32 = arith.constant 0 : i32
    %c0_i32_0 = arith.constant 0 : i32
    %c0_i32_1 = arith.constant 0 : i32
    return %c0_i32, %c0_i32_0 : i32, i32
  }
  func.func @transform_4(%arg0: i32) -> (i32, i32) {
    %c0_i32 = arith.constant 0 : i32
    %c0_i32_0 = arith.constant 0 : i32
    %c0_i32_1 = arith.constant 0 : i32
    return %c0_i32, %c0_i32_0 : i32, i32
  }
  func.func @transform_5(%arg0: i32) -> (i32, i32) {
    %c0_i32 = arith.constant 0 : i32
    %c0_i32_0 = arith.constant 0 : i32
    %c0_i32_1 = arith.constant 0 : i32
    return %c0_i32, %c0_i32_0 : i32, i32
  }
  func.func @transform_6(%arg0: i32) -> (i32, i32) {
    %c0_i32 = arith.constant 0 : i32
    %c0_i32_0 = arith.constant 0 : i32
    %c0_i32_1 = arith.constant 0 : i32
    return %c0_i32, %c0_i32_0 : i32, i32
  }
  func.func @transform_7(%arg0: i32) -> (i32, i32) {
    %c0_i32 = arith.constant 0 : i32
    %c0_i32_0 = arith.constant 0 : i32
    %c0_i32_1 = arith.constant 0 : i32
    return %c0_i32, %c0_i32_0 : i32, i32
  }
  func.func @transform_8(%arg0: i32) -> (i32, i32) {
    %c0_i32 = arith.constant 0 : i32
    %c0_i32_0 = arith.constant 0 : i32
    %c0_i32_1 = arith.constant 0 : i32
    return %c0_i32, %c0_i32_0 : i32, i32
  }
  func.func @transform_9(%arg0: i32) -> (i32, i32) {
    %c0_i32 = arith.constant 0 : i32
    %c0_i32_0 = arith.constant 0 : i32
    return %c0_i32, %arg0 : i32, i32
  }
}

</mosaic_0001>

<llo_original>
// kernel: tpu_custom_call.1
$region0: #{tpu_custom_call.1}
  #allocation0 [shape = 'u32[]', space=smem, size = 0x4, offset = 0x4, fixed_abs, tag = 'smem constant byte address 0x4 - core index']
  #allocation1 [shape = 'u32[72,128]{1,0:T(1,128)}', space=vmem, size = 0x9000, scoped, tag = 'internal scratch']
  %s0 = inlined_call_operand.vmem [shape: f32[2,1000], index: 0, kind: input, shape index: {}]
  %s1 = inlined_call_operand.vmem [shape: f32[32,2], index: 1, kind: input, shape index: {}]
  %s2 = inlined_call_operand.vmem [shape: f32[32,1], index: 2, kind: input, shape index: {}]
  %s3 = inlined_call_operand.vmem [shape: f32[32,32], index: 3, kind: input, shape index: {}]
  %s4 = inlined_call_operand.vmem [shape: f32[32,1], index: 4, kind: input, shape index: {}]
  %s5 = inlined_call_operand.vmem [shape: f32[32,32], index: 5, kind: input, shape index: {}]
  %s6 = inlined_call_operand.vmem [shape: f32[32,1], index: 6, kind: input, shape index: {}]
  %s7 = inlined_call_operand.vmem [shape: f32[3,32], index: 7, kind: input, shape index: {}]
  %s8 = inlined_call_operand.vmem [shape: f32[3,1], index: 8, kind: input, shape index: {}]
  %s9 = inlined_call_operand.hbm [shape: f32[3,1000], index: 9, kind: output, shape index: {}]
  %s10 = sld [smem:[#allocation0]]
  $region69: #{tpu_custom_call.1} parent=0
    _
  %s12 = ssub.s32 1, %s10
  %s13 = scalar_select 0, %s12, %s10
  $region1: #{tpu_custom_call.1} parent=0
    #allocation2 [shape = 'u8[16384]{0}', space=vmem, size = 0x4000, scoped, tag = 'output window, operand 0']
    #allocation3 [shape = 's32[2]{0}', space=sflag, size = 0x8, scoped, tag = 'scoped memory for tpu_custom_call.1']
    %14 = vsyncpa [#allocation3], 0
    %s15 = scalar_lea.sflag [#allocation3], 1
    %16 = vsyncpa %s15, 0
    loop: start=0, step=1, limit=4
    $region2: #{tpu_custom_call.1} parent=1 // loop_pre_header
      _
    $region3: #{tpu_custom_call.1} parent=1 // loop_header
      %s18 = sphi 0, %s22
      %p19 = scmp.ge.s32.totalorder %s18, 4
      %s28 = sphi 0, %s30
      %s31 = sphi 0, %s28
      %s32 = sphi 0, %s31
      %s48 = sphi 0, %s32
      %s52 = sphi 0, %s52
      %s54 = sphi 0, %s52
      %s55 = sphi 0, %s54
      %s69 = sphi 0, %s55
      %s73 = sphi 0, %s73
      %s75 = sphi 0, %s73
      %s76 = sphi 0, %s75
      %s90 = sphi 0, %s76
      %s94 = sphi 0, %s94
      %s96 = sphi 0, %s94
      %s97 = sphi 0, %s96
      %s111 = sphi 0, %s97
      %s115 = sphi 0, %s115
      %s117 = sphi 0, %s115
      %s118 = sphi 0, %s117
      %s132 = sphi 0, %s118
      %s136 = sphi 0, %s136
      %s138 = sphi 0, %s136
      %s139 = sphi 0, %s138
      %s153 = sphi 0, %s139
      %s157 = sphi 0, %s157
      %s159 = sphi 0, %s157
      %s160 = sphi 0, %s159
      %s174 = sphi 0, %s160
      %s178 = sphi 0, %s178
      %s180 = sphi 0, %s178
      %s181 = sphi 0, %s180
      %s195 = sphi 0, %s181
      %s199 = sphi 0, %s199
      %s201 = sphi 0, %s199
      %s202 = sphi 0, %s201
      %s216 = sphi 0, %s202
      %s222 = sphi 0, %s224
      %s225 = sphi 0, %s222
      %s226 = sphi 0, %s225
      %s242 = sphi 0, %s226
    $region4: #{tpu_custom_call.1} parent=1 // loop_header_branch
      %21 = sbr.rel (%p19) target = $region8
    $region5: #{tpu_custom_call.1} parent=1 // loop_body
      %s23 = ssub.s32 %s18, 1
      %s24 = ssub.s32 %s18, 2
      %s25 = sadd.s32 %s18, 1
      %s26 = ssub.s32 %s18, %s25
      %p27 = scmp.eq.s32.totalorder %s26, 0
      %s29 = sadd.s32 %s28, 1
      %s30 = scalar_select %p27, %s28, %s29
      %p33 = pneg %p27
      %p34 = scmp.eq.s32.totalorder %s18, 1
      %p35 = por %p33, %p34
      %p36 = scmp.ne.s32.totalorder %s28, %s31
      %p37 = scmp.eq.s32.totalorder %s18, 0
      %p38 = por %p36, %p37
      %p39 = scmp.ne.s32.totalorder %s28, %s31
      %p40 = scmp.eq.s32.totalorder %s23, 1
      %p41 = por %p39, %p40
      %p42 = scmp.ne.s32.totalorder %s31, %s32
      %p43 = scmp.eq.s32.totalorder %s23, 0
      %p44 = por %p42, %p43
      %p45 = scmp.ne.s32.totalorder %s31, %s32
      %p46 = scmp.eq.s32.totalorder %s24, 1
      %p47 = por %p45, %p46
      %p49 = scmp.ne.s32.totalorder %s32, %s48
      %p50 = scmp.eq.s32.totalorder %s24, 0
      %p51 = por %p49, %p50
      %s53 = sadd.s32 %s52, 1
      %p56 = scmp.eq.s32.totalorder %s18, 1
      %p57 = scmp.ne.s32.totalorder %s52, %s54
      %p58 = scmp.eq.s32.totalorder %s18, 0
      %p59 = por %p57, %p58
      %p60 = scmp.ne.s32.totalorder %s52, %s54
      %p61 = scmp.eq.s32.totalorder %s23, 1
      %p62 = por %p60, %p61
      %p63 = scmp.ne.s32.totalorder %s54, %s55
      %p64 = scmp.eq.s32.totalorder %s23, 0
      %p65 = por %p63, %p64
      %p66 = scmp.ne.s32.totalorder %s54, %s55
      %p67 = scmp.eq.s32.totalorder %s24, 1
      %p68 = por %p66, %p67
      %p70 = scmp.ne.s32.totalorder %s55, %s69
      %p71 = scmp.eq.s32.totalorder %s24, 0
      %p72 = por %p70, %p71
      %s74 = sadd.s32 %s73, 1
      %p77 = scmp.eq.s32.totalorder %s18, 1
      %p78 = scmp.ne.s32.totalorder %s73, %s75
      %p79 = scmp.eq.s32.totalorder %s18, 0
      %p80 = por %p78, %p79
      %p81 = scmp.ne.s32.totalorder %s73, %s75
      %p82 = scmp.eq.s32.totalorder %s23, 1
      %p83 = por %p81, %p82
      %p84 = scmp.ne.s32.totalorder %s75, %s76
      %p85 = scmp.eq.s32.totalorder %s23, 0
      %p86 = por %p84, %p85
      %p87 = scmp.ne.s32.totalorder %s75, %s76
      %p88 = scmp.eq.s32.totalorder %s24, 1
      %p89 = por %p87, %p88
      %p91 = scmp.ne.s32.totalorder %s76, %s90
      %p92 = scmp.eq.s32.totalorder %s24, 0
      %p93 = por %p91, %p92
      %s95 = sadd.s32 %s94, 1
      %p98 = scmp.eq.s32.totalorder %s18, 1
      %p99 = scmp.ne.s32.totalorder %s94, %s96
      %p100 = scmp.eq.s32.totalorder %s18, 0
      %p101 = por %p99, %p100
      %p102 = scmp.ne.s32.totalorder %s94, %s96
      %p103 = scmp.eq.s32.totalorder %s23, 1
      %p104 = por %p102, %p103
      %p105 = scmp.ne.s32.totalorder %s96, %s97
      %p106 = scmp.eq.s32.totalorder %s23, 0
      %p107 = por %p105, %p106
      %p108 = scmp.ne.s32.totalorder %s96, %s97
      %p109 = scmp.eq.s32.totalorder %s24, 1
      %p110 = por %p108, %p109
      %p112 = scmp.ne.s32.totalorder %s97, %s111
      %p113 = scmp.eq.s32.totalorder %s24, 0
      %p114 = por %p112, %p113
      %s116 = sadd.s32 %s115, 1
      %p119 = scmp.eq.s32.totalorder %s18, 1
      %p120 = scmp.ne.s32.totalorder %s115, %s117
      %p121 = scmp.eq.s32.totalorder %s18, 0
      %p122 = por %p120, %p121
      %p123 = scmp.ne.s32.totalorder %s115, %s117
      %p124 = scmp.eq.s32.totalorder %s23, 1
      %p125 = por %p123, %p124
      %p126 = scmp.ne.s32.totalorder %s117, %s118
      %p127 = scmp.eq.s32.totalorder %s23, 0
      %p128 = por %p126, %p127
      %p129 = scmp.ne.s32.totalorder %s117, %s118
      %p130 = scmp.eq.s32.totalorder %s24, 1
      %p131 = por %p129, %p130
      %p133 = scmp.ne.s32.totalorder %s118, %s132
      %p134 = scmp.eq.s32.totalorder %s24, 0
      %p135 = por %p133, %p134
      %s137 = sadd.s32 %s136, 1
      %p140 = scmp.eq.s32.totalorder %s18, 1
      %p141 = scmp.ne.s32.totalorder %s136, %s138
      %p142 = scmp.eq.s32.totalorder %s18, 0
      %p143 = por %p141, %p142
      %p144 = scmp.ne.s32.totalorder %s136, %s138
      %p145 = scmp.eq.s32.totalorder %s23, 1
      %p146 = por %p144, %p145
      %p147 = scmp.ne.s32.totalorder %s138, %s139
      %p148 = scmp.eq.s32.totalorder %s23, 0
      %p149 = por %p147, %p148
      %p150 = scmp.ne.s32.totalorder %s138, %s139
      %p151 = scmp.eq.s32.totalorder %s24, 1
      %p152 = por %p150, %p151
      %p154 = scmp.ne.s32.totalorder %s139, %s153
      %p155 = scmp.eq.s32.totalorder %s24, 0
      %p156 = por %p154, %p155
      %s158 = sadd.s32 %s157, 1
      %p161 = scmp.eq.s32.totalorder %s18, 1
      %p162 = scmp.ne.s32.totalorder %s157, %s159
      %p163 = scmp.eq.s32.totalorder %s18, 0
      %p164 = por %p162, %p163
      %p165 = scmp.ne.s32.totalorder %s157, %s159
      %p166 = scmp.eq.s32.totalorder %s23, 1
      %p167 = por %p165, %p166
      %p168 = scmp.ne.s32.totalorder %s159, %s160
      %p169 = scmp.eq.s32.totalorder %s23, 0
      %p170 = por %p168, %p169
      %p171 = scmp.ne.s32.totalorder %s159, %s160
      %p172 = scmp.eq.s32.totalorder %s24, 1
      %p173 = por %p171, %p172
      %p175 = scmp.ne.s32.totalorder %s160, %s174
      %p176 = scmp.eq.s32.totalorder %s24, 0
      %p177 = por %p175, %p176
      %s179 = sadd.s32 %s178, 1
      %p182 = scmp.eq.s32.totalorder %s18, 1
      %p183 = scmp.ne.s32.totalorder %s178, %s180
      %p184 = scmp.eq.s32.totalorder %s18, 0
      %p185 = por %p183, %p184
      %p186 = scmp.ne.s32.totalorder %s178, %s180
      %p187 = scmp.eq.s32.totalorder %s23, 1
      %p188 = por %p186, %p187
      %p189 = scmp.ne.s32.totalorder %s180, %s181
      %p190 = scmp.eq.s32.totalorder %s23, 0
      %p191 = por %p189, %p190
      %p192 = scmp.ne.s32.totalorder %s180, %s181
      %p193 = scmp.eq.s32.totalorder %s24, 1
      %p194 = por %p192, %p193
      %p196 = scmp.ne.s32.totalorder %s181, %s195
      %p197 = scmp.eq.s32.totalorder %s24, 0
      %p198 = por %p196, %p197
      %s200 = sadd.s32 %s199, 1
      %p203 = scmp.eq.s32.totalorder %s18, 1
      %p204 = scmp.ne.s32.totalorder %s199, %s201
      %p205 = scmp.eq.s32.totalorder %s18, 0
      %p206 = por %p204, %p205
      %p207 = scmp.ne.s32.totalorder %s199, %s201
      %p208 = scmp.eq.s32.totalorder %s23, 1
      %p209 = por %p207, %p208
      %p210 = scmp.ne.s32.totalorder %s201, %s202
      %p211 = scmp.eq.s32.totalorder %s23, 0
      %p212 = por %p210, %p211
      %p213 = scmp.ne.s32.totalorder %s201, %s202
      %p214 = scmp.eq.s32.totalorder %s24, 1
      %p215 = por %p213, %p214
      %p217 = scmp.ne.s32.totalorder %s202, %s216
      %p218 = scmp.eq.s32.totalorder %s24, 0
      %p219 = por %p217, %p218
      %s220 = ssub.s32 %s18, %s25
      %p221 = scmp.eq.s32.totalorder %s220, 0
      %s223 = sadd.s32 %s222, 1
      %s224 = scalar_select %p221, %s222, %s223
      %p227 = pneg %p221
      %p228 = scmp.eq.s32.totalorder %s18, 1
      %p229 = por %p227, %p228
      %p230 = scmp.ne.s32.totalorder %s222, %s225
      %p231 = scmp.eq.s32.totalorder %s18, 0
      %p232 = por %p230, %p231
      %p233 = scmp.ne.s32.totalorder %s222, %s225
      %p234 = scmp.eq.s32.totalorder %s23, 1
      %p235 = por %p233, %p234
      %p236 = scmp.ne.s32.totalorder %s225, %s226
      %p237 = scmp.eq.s32.totalorder %s23, 0
      %p238 = por %p236, %p237
      %p239 = scmp.ne.s32.totalorder %s225, %s226
      %p240 = scmp.eq.s32.totalorder %s24, 1
      %p241 = por %p239, %p240
      %p243 = scmp.ne.s32.totalorder %s226, %s242
      %p244 = scmp.eq.s32.totalorder %s24, 0
      %p245 = por %p243, %p244
      %p246 = scmp.le.s32.totalorder 1, %s18
      %p247 = scmp.lt.s32.totalorder %s18, 3
      %p248 = pnand %p246, %p247
      %p249 = pneg %p248
      // Predicated region
      $region9: #{tpu_custom_call.1} parent=5 // pred_check
        _
      $region10: #{tpu_custom_call.1} parent=5 // pred_check_branch
        %251 = sbr.rel (%p248) target = $region12
      $region11: #{tpu_custom_call.1} parent=5 // pred_region
        %s252 = ssub.s32 %s18, 1
        // Predicated region
        $region13: #{tpu_custom_call.1} parent=11 // pred_check
          %p253 = pneg %p65
        $region14: #{tpu_custom_call.1} parent=11 // pred_check_branch
          %255 = sbr.rel (%p253) target = $region16
        $region15: #{tpu_custom_call.1} parent=11 // pred_region
          _
        $region16: #{tpu_custom_call.1} parent=11 // pred_fallthru
          _
        // Predicated region
        $region17: #{tpu_custom_call.1} parent=11 // pred_check
          %p256 = pneg %p86
        $region18: #{tpu_custom_call.1} parent=11 // pred_check_branch
          %258 = sbr.rel (%p256) target = $region20
        $region19: #{tpu_custom_call.1} parent=11 // pred_region
          _
        $region20: #{tpu_custom_call.1} parent=11 // pred_fallthru
          _
        // Predicated region
        $region21: #{tpu_custom_call.1} parent=11 // pred_check
          %p259 = pneg %p107
        $region22: #{tpu_custom_call.1} parent=11 // pred_check_branch
          %261 = sbr.rel (%p259) target = $region24
        $region23: #{tpu_custom_call.1} parent=11 // pred_region
          _
        $region24: #{tpu_custom_call.1} parent=11 // pred_fallthru
          _
        // Predicated region
        $region25: #{tpu_custom_call.1} parent=11 // pred_check
          %p262 = pneg %p128
        $region26: #{tpu_custom_call.1} parent=11 // pred_check_branch
          %264 = sbr.rel (%p262) target = $region28
        $region27: #{tpu_custom_call.1} parent=11 // pred_region
          _
        $region28: #{tpu_custom_call.1} parent=11 // pred_fallthru
          _
        // Predicated region
        $region29: #{tpu_custom_call.1} parent=11 // pred_check
          %p265 = pneg %p149
        $region30: #{tpu_custom_call.1} parent=11 // pred_check_branch
          %267 = sbr.rel (%p265) target = $region32
        $region31: #{tpu_custom_call.1} parent=11 // pred_region
          _
        $region32: #{tpu_custom_call.1} parent=11 // pred_fallthru
          _
        // Predicated region
        $region33: #{tpu_custom_call.1} parent=11 // pred_check
          %p268 = pneg %p170
        $region34: #{tpu_custom_call.1} parent=11 // pred_check_branch
          %270 = sbr.rel (%p268) target = $region36
        $region35: #{tpu_custom_call.1} parent=11 // pred_region
          _
        $region36: #{tpu_custom_call.1} parent=11 // pred_fallthru
          _
        // Predicated region
        $region37: #{tpu_custom_call.1} parent=11 // pred_check
          %p271 = pneg %p191
        $region38: #{tpu_custom_call.1} parent=11 // pred_check_branch
          %273 = sbr.rel (%p271) target = $region40
        $region39: #{tpu_custom_call.1} parent=11 // pred_region
          _
        $region40: #{tpu_custom_call.1} parent=11 // pred_fallthru
          _
        // Predicated region
        $region41: #{tpu_custom_call.1} parent=11 // pred_check
          %p274 = pneg %p212
        $region42: #{tpu_custom_call.1} parent=11 // pred_check_branch
          %276 = sbr.rel (%p274) target = $region44
        $region43: #{tpu_custom_call.1} parent=11 // pred_region
          _
        $region44: #{tpu_custom_call.1} parent=11 // pred_fallthru
          _
      $region12: #{tpu_custom_call.1} parent=5 // pred_fallthru
        _
      %p277 = scmp.lt.s32.totalorder %s18, 2
      // Predicated region
      $region45: #{tpu_custom_call.1} parent=5 // pred_check
        %p278 = pneg %p277
      $region46: #{tpu_custom_call.1} parent=5 // pred_check_branch
        %280 = sbr.rel (%p278) target = $region48
      $region47: #{tpu_custom_call.1} parent=5 // pred_region
        // Predicated region
        $region49: #{tpu_custom_call.1} parent=47 // pred_check
          %p281 = pneg %p38
        $region50: #{tpu_custom_call.1} parent=47 // pred_check_branch
          %283 = sbr.rel (%p281) target = $region52
        $region51: #{tpu_custom_call.1} parent=47 // pred_region
          %s284 = smul.u32 4, %s18
          %p285 = scmp.lt.s32.totalorder %s284, 7
          %s286 = scalar_select %p285, %s284, 7
          %s287 = smul.addr %s286, 2
          %s288 = scalar_lea.vmem %s0, %s287
          %s289 = smul.u32 4, %s18
        $region52: #{tpu_custom_call.1} parent=47 // pred_fallthru
          _
      $region48: #{tpu_custom_call.1} parent=5 // pred_fallthru
        _
      %p290 = scmp.le.s32.totalorder 1, %s18
      %p291 = scmp.lt.s32.totalorder %s18, 3
      %p292 = pnand %p290, %p291
      %p293 = pneg %p292
      // Predicated region
      $region53: #{tpu_custom_call.1} parent=5 // pred_check
        _
      $region54: #{tpu_custom_call.1} parent=5 // pred_check_branch
        %295 = sbr.rel (%p292) target = $region56
      $region55: #{tpu_custom_call.1} parent=5 // pred_region
        %s296 = ssub.s32 %s18, 1
        %s297 = smul.u32 4, %s23
        %p298 = scmp.lt.s32.totalorder %s297, 7
        %s299 = scalar_select %p298, %s297, 7
        %s300 = smul.addr %s299, 2
        %s301 = scalar_lea.vmem %s0, %s300
        %p302 = pneg %p44
        %p303 = pneg %p41
        %p304 = pneg %p65
        %p305 = pneg %p62
        %p306 = pneg %p86
        %p307 = pneg %p83
        %p308 = pneg %p107
        %p309 = pneg %p104
        %p310 = pneg %p128
        %p311 = pneg %p125
        %p312 = pneg %p149
        %p313 = pneg %p146
        %p314 = pneg %p170
        %p315 = pneg %p167
        %p316 = pneg %p191
        %p317 = pneg %p188
        %p318 = pneg %p212
        %p319 = pneg %p209
        %p320 = pneg %p238
        %p321 = pneg %p235
        %s322 = sand.u32 %s225, 1
        %s323 = scalar_lea.sflag [#allocation3], %s322
        %s324 = sand.u32 %s225, 1
        %s325 = smul.addr %s324, 16
        %s326 = scalar_lea.vmem [#allocation2], %s325
        %s327 = smul.u32 4, %s23
        %p328 = scmp.lt.s32.totalorder %s327, 7
        %s329 = scalar_select %p328, %s327, 7
        %s330 = smul.addr %s329, 2
        %s331 = scalar_lea.vmem %s0, %s330
        %s332 = smul.u32 4, %s23
        %s333 = smul.u32 4, %s23
        %v334 = vld [vmem:[%s331] sm:$0xff]
        %v335 = vld [vmem:[%s1] sm:$0xff]
        %v336 = vld [vmem:[%s1 + $0x8] sm:$0xff]
        %v337 = vld [vmem:[%s1 + $0x10] sm:$0xff]
        %v338 = vld [vmem:[%s1 + $0x18] sm:$0xff]
        %v339 = vld [vmem:[%s2] sm:$0xff]
        %v340 = vld [vmem:[%s2 + $0x8] sm:$0xff]
        %v341 = vld [vmem:[%s2 + $0x10] sm:$0xff]
        %v342 = vld [vmem:[%s2 + $0x18] sm:$0xff]
        %344 = vset.pattern.permute.xlu0 0
        %345 = vperm.xlu0 %344, %v335
        %v346 = vpop.permute.xlu0 %345
        %349 = vset.pattern.permute.xlu0 0
        %350 = vperm.xlu0 %349, %v336
        %v351 = vpop.permute.xlu0 %350
        %354 = vset.pattern.permute.xlu0 0
        %355 = vperm.xlu0 %354, %v337
        %v356 = vpop.permute.xlu0 %355
        %359 = vset.pattern.permute.xlu0 0
        %360 = vperm.xlu0 %359, %v338
        %v361 = vpop.permute.xlu0 %360
        %v364 = vperm.slane %v334, 0
        %v365 = vperm.slane %v334, 2
        %v366 = vperm.slane %v334, 4
        %v367 = vperm.slane %v334, 6
        %v372 = vperm.slane %v364, 0
        %v373 = vperm.slane %v365, 0
        %v374 = vperm.slane %v366, 0
        %v375 = vperm.slane %v367, 0
        %v376 = vmul.f32 %v346, %v372
        %v377 = vmul.f32 %v346, %v373
        %v378 = vmul.f32 %v346, %v374
        %v379 = vmul.f32 %v346, %v375
        %v380 = vmul.f32 %v351, %v372
        %v381 = vmul.f32 %v351, %v373
        %v382 = vmul.f32 %v351, %v374
        %v383 = vmul.f32 %v351, %v375
        %v384 = vmul.f32 %v356, %v372
        %v385 = vmul.f32 %v356, %v373
        %v386 = vmul.f32 %v356, %v374
        %v387 = vmul.f32 %v356, %v375
        %v388 = vmul.f32 %v361, %v372
        %v389 = vmul.f32 %v361, %v373
        %v390 = vmul.f32 %v361, %v374
        %v391 = vmul.f32 %v361, %v375
        %393 = vset.pattern.permute.xlu0 0
        %394 = vperm.xlu0 %393, %v339
        %v395 = vpop.permute.xlu0 %394
        %398 = vset.pattern.permute.xlu0 0
        %399 = vperm.xlu0 %398, %v340
        %v400 = vpop.permute.xlu0 %399
        %403 = vset.pattern.permute.xlu0 0
        %404 = vperm.xlu0 %403, %v341
        %v405 = vpop.permute.xlu0 %404
        %408 = vset.pattern.permute.xlu0 0
        %409 = vperm.xlu0 %408, %v342
        %v410 = vpop.permute.xlu0 %409
        %v412 = vadd.f32 %v395, %v376
        %v413 = vadd.f32 %v395, %v377
        %v414 = vadd.f32 %v395, %v378
        %v415 = vadd.f32 %v395, %v379
        %v416 = vadd.f32 %v400, %v380
        %v417 = vadd.f32 %v400, %v381
        %v418 = vadd.f32 %v400, %v382
        %v419 = vadd.f32 %v400, %v383
        %v420 = vadd.f32 %v405, %v384
        %v421 = vadd.f32 %v405, %v385
        %v422 = vadd.f32 %v405, %v386
        %v423 = vadd.f32 %v405, %v387
        %v424 = vadd.f32 %v410, %v388
        %v425 = vadd.f32 %v410, %v389
        %v426 = vadd.f32 %v410, %v390
        %v427 = vadd.f32 %v410, %v391
        %428 = vset.pattern.permute.xlu0 1
        %429 = vperm.xlu0 %428, %v335
        %v430 = vpop.permute.xlu0 %429
        %432 = vset.pattern.permute.xlu0 1
        %433 = vperm.xlu0 %432, %v336
        %v434 = vpop.permute.xlu0 %433
        %436 = vset.pattern.permute.xlu0 1
        %437 = vperm.xlu0 %436, %v337
        %v438 = vpop.permute.xlu0 %437
        %440 = vset.pattern.permute.xlu0 1
        %441 = vperm.xlu0 %440, %v338
        %v442 = vpop.permute.xlu0 %441
        %v444 = vperm.slane %v334, 1
        %v445 = vperm.slane %v334, 3
        %v446 = vperm.slane %v334, 5
        %v447 = vperm.slane %v334, 7
        %v452 = vperm.slane %v444, 1
        %v453 = vperm.slane %v445, 1
        %v454 = vperm.slane %v446, 1
        %v455 = vperm.slane %v447, 1
        %v456 = vmul.f32 %v430, %v452
        %v457 = vmul.f32 %v430, %v453
        %v458 = vmul.f32 %v430, %v454
        %v459 = vmul.f32 %v430, %v455
        %v460 = vmul.f32 %v434, %v452
        %v461 = vmul.f32 %v434, %v453
        %v462 = vmul.f32 %v434, %v454
        %v463 = vmul.f32 %v434, %v455
        %v464 = vmul.f32 %v438, %v452
        %v465 = vmul.f32 %v438, %v453
        %v466 = vmul.f32 %v438, %v454
        %v467 = vmul.f32 %v438, %v455
        %v468 = vmul.f32 %v442, %v452
        %v469 = vmul.f32 %v442, %v453
        %v470 = vmul.f32 %v442, %v454
        %v471 = vmul.f32 %v442, %v455
        %v472 = vadd.f32 %v412, %v456
        %v473 = vadd.f32 %v413, %v457
        %v474 = vadd.f32 %v414, %v458
        %v475 = vadd.f32 %v415, %v459
        %v476 = vadd.f32 %v416, %v460
        %v477 = vadd.f32 %v417, %v461
        %v478 = vadd.f32 %v418, %v462
        %v479 = vadd.f32 %v419, %v463
        %v480 = vadd.f32 %v420, %v464
        %v481 = vadd.f32 %v421, %v465
        %v482 = vadd.f32 %v422, %v466
        %v483 = vadd.f32 %v423, %v467
        %v484 = vadd.f32 %v424, %v468
        %v485 = vadd.f32 %v425, %v469
        %v486 = vadd.f32 %v426, %v470
        %v487 = vadd.f32 %v427, %v471
        %v488 = vand.u32 2147483647, %v472
        %vm489 = vcmp.le.f32.partialorder %v488, 0.7853982
        %vm490 = vcmp.lt.s32.totalorder %v472, 0
        %v491 = vand.u32 %v472, 2139095040
        %v492 = vshrl.u32 %v491, 23
        %v493 = vsub.s32 %v492, 127
        %v494 = vand.u32 2147483647, %v472
        %v495 = vand.u32 %v494, 8388607
        %v496 = vor.u32 %v495, 8388608
        %v497 = vsub.s32 0, %v496
        %v498 = vadd.s32 %v493, 1
        %vm499 = vcmp.gt.s32.totalorder %v498, 0
        %v500 = vsel %vm499, %v498, 0
        %v501 = vshrl.u32 %v500, 5
        %v502 = vand.u32 %v500, 31
        %v503 = vsub.s32 32, %v502
        %v504 = vshrl.u32 683565275, %v503
        %v505 = vshll.u32 683565275, %v502
        %v506 = vshrl.u32 2475754826, %v503
        %v507 = vor.u32 %v505, %v506
        %v508 = vshll.u32 2475754826, %v502
        %v509 = vshrl.u32 2131351028, %v503
        %v510 = vor.u32 %v508, %v509
        %v511 = vshll.u32 2131351028, %v502
        %v512 = vshrl.u32 2102212464, %v503
        %v513 = vor.u32 %v511, %v512
        %v514 = vshll.u32 2102212464, %v502
        %v515 = vshrl.u32 920167782, %v503
        %v516 = vor.u32 %v514, %v515
        %v517 = vshll.u32 920167782, %v502
        %v518 = vshrl.u32 1326507024, %v503
        %v519 = vor.u32 %v517, %v518
        %vm520 = vcmp.lt.s32.totalorder %v501, 1
        %vm521 = vcmp.lt.s32.totalorder %v501, 2
        %vm522 = vcmp.lt.s32.totalorder %v501, 3
        %vm523 = vcmp.lt.s32.totalorder %v501, 4
        %v524 = vsel %vm520, %v504, %v507
        %v525 = vsel %vm523, %v513, 2102212464
        %v526 = vsel %vm522, %v510, %v525
        %v527 = vsel %vm521, %v524, %v526
        %v528 = vsel %vm520, %v507, %v510
        %v529 = vsel %vm523, %v516, 920167782
        %v530 = vsel %vm522, %v513, %v529
        %v531 = vsel %vm521, %v528, %v530
        %v532 = vsel %vm520, %v510, %v513
        %v533 = vsel %vm523, %v519, 1326507024
        %v534 = vsel %vm522, %v516, %v533
        %v535 = vsel %vm521, %v532, %v534
        %v536 = vshll.u32 %v496, 8
        %v537 = vand.u32 %v536, 65535
        %v538 = vshrl.u32 %v536, 16
        %v539 = vand.u32 %v535, 65535
        %v540 = vshrl.u32 %v535, 16
        %v541 = vmul.u32 %v537, %v539
        %v542 = vmul.u32 %v537, %v540
        %v543 = vmul.u32 %v538, %v539
        %v544 = vmul.u32 %v538, %v540
        %v545 = vshll.u32 %v542, 16
        %v546 = vshrl.u32 %v542, 16
        %v547 = vshll.u32 %v543, 16
        %v548 = vshrl.u32 %v543, 16
        %vm549 = vc.u32 %v541, %v545
        %v550 = vsel %vm549, 1, 0
        %v551 = vadd.s32 %v541, %v545
        %v552 = vadd.s32 %v544, %v550
        %vm553 = vc.u32 %v551, %v547
        %v554 = vsel %vm553, 1, 0
        %v555 = vadd.s32 %v551, %v547
        %v556 = vadd.s32 %v552, %v554
        %v557 = vadd.s32 %v556, %v546
        %v558 = vadd.s32 %v557, %v548
        %v559 = vand.u32 %v536, 65535
        %v560 = vshrl.u32 %v536, 16
        %v561 = vand.u32 %v531, 65535
        %v562 = vshrl.u32 %v531, 16
        %v563 = vmul.u32 %v559, %v561
        %v564 = vmul.u32 %v559, %v562
        %v565 = vmul.u32 %v560, %v561
        %v566 = vmul.u32 %v560, %v562
        %v567 = vshll.u32 %v564, 16
        %v568 = vshrl.u32 %v564, 16
        %v569 = vshll.u32 %v565, 16
        %v570 = vshrl.u32 %v565, 16
        %vm571 = vc.u32 %v563, %v567
        %v572 = vsel %vm571, 1, 0
        %v573 = vadd.s32 %v563, %v567
        %v574 = vadd.s32 %v566, %v572
        %vm575 = vc.u32 %v573, %v569
        %v576 = vsel %vm575, 1, 0
        %v577 = vadd.s32 %v573, %v569
        %v578 = vadd.s32 %v574, %v576
        %v579 = vadd.s32 %v578, %v568
        %v580 = vadd.s32 %v579, %v570
        %v581 = vmul.u32 %v536, %v527
        %v582 = vadd.s32 %v558, %v577
        %vm583 = vc.u32 %v558, %v577
        %v584 = vadd.s32 %v580, 1
        %v585 = vsel %vm583, %v584, %v580
        %v586 = vadd.s32 %v581, %v585
        %v587 = vadd.s32 %v586, 536870912
        %v588 = vshrl.u32 %v587, 30
        %v589 = vshll.u32 %v588, 30
        %v590 = vsub.s32 %v586, %v589
        %vm591 = vcmp.lt.s32.totalorder %v590, 0
        %v592 = vsub.s32 0, %v590
        %v593 = vsel %vm591, %v592, %v590
        %v594 = vclz %v593
        %v595 = vsub.s32 %v594, 2
        %vm596 = vcmp.gt.s32.totalorder 0, %v595
        %v597 = vsel %vm596, 0, %v595
        %v598 = vsub.s32 32, %v597
        %v599 = vshll.u32 %v590, %v597
        %v600 = vshrl.u32 %v582, %v598
        %v601 = vor.u32 %v599, %v600
        %v602 = vsub.s32 4294967266, %v597
        %v603 = vadd.s32 %v602, 127
        %v604 = vshll.u32 %v603, 23
        %v605 = vor.u32 4788187, %v604
        %v606 = vand.u32 2147483647, %v605
        %v608 = vcvt.s32.f32 %v601
        %v609 = vmul.f32 %v608, %v606
        %v610 = vxor.u32 %v609, 2147483648
        %v611 = vsel %vm490, %v610, %v609
        %v612 = vsub.s32 4, %v588
        %v613 = vsel %vm490, %v612, %v588
        %v614 = vsel %vm489, %v472, %v611
        %v615 = vsel %vm489, 0, %v613
        %v616 = vmul.f32 %v614, %v614
        %v617 = vmul.f32 %v616, -0.001358992
        %v618 = vadd.f32 %v617, 0.041655596
        %v619 = vmul.f32 %v616, %v618
        %v620 = vadd.f32 %v619, -0.4999988
        %v621 = vmul.f32 %v616, %v620
        %v622 = vadd.f32 1.0, %v621
        %v623 = vmul.f32 %v614, %v614
        %v624 = vmul.f32 %v623, -0.00019511016
        %v625 = vadd.f32 %v624, 0.008332121
        %v626 = vmul.f32 %v623, %v625
        %v627 = vadd.f32 %v626, -0.16666654
        %v628 = vmul.f32 %v623, %v627
        %v629 = vadd.f32 %v628, 1.0
        %v630 = vmul.f32 %v629, %v614
        %vm631 = vweird.f32 %v472
        %v632 = vadd.s32 %v615, 3
        %v633 = vand.u32 %v632, 3
        %vm634 = vcmp.lt.s32.totalorder %v633, 2
        %vm635 = vcmp.eq.s32.totalorder %v633, 0
        %v636 = vxor.u32 %v630, 2147483648
        %v637 = vsel %vm635, %v622, %v636
        %vm638 = vcmp.eq.s32.totalorder %v633, 2
        %v639 = vxor.u32 %v622, 2147483648
        %v640 = vsel %vm638, %v639, %v630
        %v641 = vsel %vm634, %v637, %v640
        %v642 = vsel %vm631, nan, %v641
        %v643 = vand.u32 2147483647, %v473
        %vm644 = vcmp.le.f32.partialorder %v643, 0.7853982
        %vm645 = vcmp.lt.s32.totalorder %v473, 0
        %v646 = vand.u32 %v473, 2139095040
        %v647 = vshrl.u32 %v646, 23
        %v648 = vsub.s32 %v647, 127
        %v649 = vand.u32 2147483647, %v473
        %v650 = vand.u32 %v649, 8388607
        %v651 = vor.u32 %v650, 8388608
        %v652 = vsub.s32 0, %v651
        %v653 = vadd.s32 %v648, 1
        %vm654 = vcmp.gt.s32.totalorder %v653, 0
        %v655 = vsel %vm654, %v653, 0
        %v656 = vshrl.u32 %v655, 5
        %v657 = vand.u32 %v655, 31
        %v658 = vsub.s32 32, %v657
        %v659 = vshrl.u32 683565275, %v658
        %v660 = vshll.u32 683565275, %v657
        %v661 = vshrl.u32 2475754826, %v658
        %v662 = vor.u32 %v660, %v661
        %v663 = vshll.u32 2475754826, %v657
        %v664 = vshrl.u32 2131351028, %v658
        %v665 = vor.u32 %v663, %v664
        %v666 = vshll.u32 2131351028, %v657
        %v667 = vshrl.u32 2102212464, %v658
        %v668 = vor.u32 %v666, %v667
        %v669 = vshll.u32 2102212464, %v657
        %v670 = vshrl.u32 920167782, %v658
        %v671 = vor.u32 %v669, %v670
        %v672 = vshll.u32 920167782, %v657
        %v673 = vshrl.u32 1326507024, %v658
        %v674 = vor.u32 %v672, %v673
        %vm675 = vcmp.lt.s32.totalorder %v656, 1
        %vm676 = vcmp.lt.s32.totalorder %v656, 2
        %vm677 = vcmp.lt.s32.totalorder %v656, 3
        %vm678 = vcmp.lt.s32.totalorder %v656, 4
        %v679 = vsel %vm675, %v659, %v662
        %v680 = vsel %vm678, %v668, 2102212464
        %v681 = vsel %vm677, %v665, %v680
        %v682 = vsel %vm676, %v679, %v681
        %v683 = vsel %vm675, %v662, %v665
        %v684 = vsel %vm678, %v671, 920167782
        %v685 = vsel %vm677, %v668, %v684
        %v686 = vsel %vm676, %v683, %v685
        %v687 = vsel %vm675, %v665, %v668
        %v688 = vsel %vm678, %v674, 1326507024
        %v689 = vsel %vm677, %v671, %v688
        %v690 = vsel %vm676, %v687, %v689
        %v691 = vshll.u32 %v651, 8
        %v692 = vand.u32 %v691, 65535
        %v693 = vshrl.u32 %v691, 16
        %v694 = vand.u32 %v690, 65535
        %v695 = vshrl.u32 %v690, 16
        %v696 = vmul.u32 %v692, %v694
        %v697 = vmul.u32 %v692, %v695
        %v698 = vmul.u32 %v693, %v694
        %v699 = vmul.u32 %v693, %v695
        %v700 = vshll.u32 %v697, 16
        %v701 = vshrl.u32 %v697, 16
        %v702 = vshll.u32 %v698, 16
        %v703 = vshrl.u32 %v698, 16
        %vm704 = vc.u32 %v696, %v700
        %v705 = vsel %vm704, 1, 0
        %v706 = vadd.s32 %v696, %v700
        %v707 = vadd.s32 %v699, %v705
        %vm708 = vc.u32 %v706, %v702
        %v709 = vsel %vm708, 1, 0
        %v710 = vadd.s32 %v706, %v702
        %v711 = vadd.s32 %v707, %v709
        %v712 = vadd.s32 %v711, %v701
        %v713 = vadd.s32 %v712, %v703
        %v714 = vand.u32 %v691, 65535
        %v715 = vshrl.u32 %v691, 16
        %v716 = vand.u32 %v686, 65535
        %v717 = vshrl.u32 %v686, 16
        %v718 = vmul.u32 %v714, %v716
        %v719 = vmul.u32 %v714, %v717
        %v720 = vmul.u32 %v715, %v716
        %v721 = vmul.u32 %v715, %v717
        %v722 = vshll.u32 %v719, 16
        %v723 = vshrl.u32 %v719, 16
        %v724 = vshll.u32 %v720, 16
        %v725 = vshrl.u32 %v720, 16
        %vm726 = vc.u32 %v718, %v722
        %v727 = vsel %vm726, 1, 0
        %v728 = vadd.s32 %v718, %v722
        %v729 = vadd.s32 %v721, %v727
        %vm730 = vc.u32 %v728, %v724
        %v731 = vsel %vm730, 1, 0
        %v732 = vadd.s32 %v728, %v724
        %v733 = vadd.s32 %v729, %v731
        %v734 = vadd.s32 %v733, %v723
        %v735 = vadd.s32 %v734, %v725
        %v736 = vmul.u32 %v691, %v682
        %v737 = vadd.s32 %v713, %v732
        %vm738 = vc.u32 %v713, %v732
        %v739 = vadd.s32 %v735, 1
        %v740 = vsel %vm738, %v739, %v735
        %v741 = vadd.s32 %v736, %v740
        %v742 = vadd.s32 %v741, 536870912
        %v743 = vshrl.u32 %v742, 30
        %v744 = vshll.u32 %v743, 30
        %v745 = vsub.s32 %v741, %v744
        %vm746 = vcmp.lt.s32.totalorder %v745, 0
        %v747 = vsub.s32 0, %v745
        %v748 = vsel %vm746, %v747, %v745
        %v749 = vclz %v748
        %v750 = vsub.s32 %v749, 2
        %vm751 = vcmp.gt.s32.totalorder 0, %v750
        %v752 = vsel %vm751, 0, %v750
        %v753 = vsub.s32 32, %v752
        %v754 = vshll.u32 %v745, %v752
        %v755 = vshrl.u32 %v737, %v753
        %v756 = vor.u32 %v754, %v755
        %v757 = vsub.s32 4294967266, %v752
        %v758 = vadd.s32 %v757, 127
        %v759 = vshll.u32 %v758, 23
        %v760 = vor.u32 4788187, %v759
        %v761 = vand.u32 2147483647, %v760
        %v763 = vcvt.s32.f32 %v756
        %v764 = vmul.f32 %v763, %v761
        %v765 = vxor.u32 %v764, 2147483648
        %v766 = vsel %vm645, %v765, %v764
        %v767 = vsub.s32 4, %v743
        %v768 = vsel %vm645, %v767, %v743
        %v769 = vsel %vm644, %v473, %v766
        %v770 = vsel %vm644, 0, %v768
        %v771 = vmul.f32 %v769, %v769
        %v772 = vmul.f32 %v771, -0.001358992
        %v773 = vadd.f32 %v772, 0.041655596
        %v774 = vmul.f32 %v771, %v773
        %v775 = vadd.f32 %v774, -0.4999988
        %v776 = vmul.f32 %v771, %v775
        %v777 = vadd.f32 1.0, %v776
        %v778 = vmul.f32 %v769, %v769
        %v779 = vmul.f32 %v778, -0.00019511016
        %v780 = vadd.f32 %v779, 0.008332121
        %v781 = vmul.f32 %v778, %v780
        %v782 = vadd.f32 %v781, -0.16666654
        %v783 = vmul.f32 %v778, %v782
        %v784 = vadd.f32 %v783, 1.0
        %v785 = vmul.f32 %v784, %v769
        %vm786 = vweird.f32 %v473
        %v787 = vadd.s32 %v770, 3
        %v788 = vand.u32 %v787, 3
        %vm789 = vcmp.lt.s32.totalorder %v788, 2
        %vm790 = vcmp.eq.s32.totalorder %v788, 0
        %v791 = vxor.u32 %v785, 2147483648
        %v792 = vsel %vm790, %v777, %v791
        %vm793 = vcmp.eq.s32.totalorder %v788, 2
        %v794 = vxor.u32 %v777, 2147483648
        %v795 = vsel %vm793, %v794, %v785
        %v796 = vsel %vm789, %v792, %v795
        %v797 = vsel %vm786, nan, %v796
        %v798 = vand.u32 2147483647, %v474
        %vm799 = vcmp.le.f32.partialorder %v798, 0.7853982
        %vm800 = vcmp.lt.s32.totalorder %v474, 0
        %v801 = vand.u32 %v474, 2139095040
        %v802 = vshrl.u32 %v801, 23
        %v803 = vsub.s32 %v802, 127
        %v804 = vand.u32 2147483647, %v474
        %v805 = vand.u32 %v804, 8388607
        %v806 = vor.u32 %v805, 8388608
        %v807 = vsub.s32 0, %v806
        %v808 = vadd.s32 %v803, 1
        %vm809 = vcmp.gt.s32.totalorder %v808, 0
        %v810 = vsel %vm809, %v808, 0
        %v811 = vshrl.u32 %v810, 5
        %v812 = vand.u32 %v810, 31
        %v813 = vsub.s32 32, %v812
        %v814 = vshrl.u32 683565275, %v813
        %v815 = vshll.u32 683565275, %v812
        %v816 = vshrl.u32 2475754826, %v813
        %v817 = vor.u32 %v815, %v816
        %v818 = vshll.u32 2475754826, %v812
        %v819 = vshrl.u32 2131351028, %v813
        %v820 = vor.u32 %v818, %v819
        %v821 = vshll.u32 2131351028, %v812
        %v822 = vshrl.u32 2102212464, %v813
        %v823 = vor.u32 %v821, %v822
        %v824 = vshll.u32 2102212464, %v812
        %v825 = vshrl.u32 920167782, %v813
        %v826 = vor.u32 %v824, %v825
        %v827 = vshll.u32 920167782, %v812
        %v828 = vshrl.u32 1326507024, %v813
        %v829 = vor.u32 %v827, %v828
        %vm830 = vcmp.lt.s32.totalorder %v811, 1
        %vm831 = vcmp.lt.s32.totalorder %v811, 2
        %vm832 = vcmp.lt.s32.totalorder %v811, 3
        %vm833 = vcmp.lt.s32.totalorder %v811, 4
        %v834 = vsel %vm830, %v814, %v817
        %v835 = vsel %vm833, %v823, 2102212464
        %v836 = vsel %vm832, %v820, %v835
        %v837 = vsel %vm831, %v834, %v836
        %v838 = vsel %vm830, %v817, %v820
        %v839 = vsel %vm833, %v826, 920167782
        %v840 = vsel %vm832, %v823, %v839
        %v841 = vsel %vm831, %v838, %v840
        %v842 = vsel %vm830, %v820, %v823
        %v843 = vsel %vm833, %v829, 1326507024
        %v844 = vsel %vm832, %v826, %v843
        %v845 = vsel %vm831, %v842, %v844
        %v846 = vshll.u32 %v806, 8
        %v847 = vand.u32 %v846, 65535
        %v848 = vshrl.u32 %v846, 16
        %v849 = vand.u32 %v845, 65535
        %v850 = vshrl.u32 %v845, 16
        %v851 = vmul.u32 %v847, %v849
        %v852 = vmul.u32 %v847, %v850
        %v853 = vmul.u32 %v848, %v849
        %v854 = vmul.u32 %v848, %v850
        %v855 = vshll.u32 %v852, 16
        %v856 = vshrl.u32 %v852, 16
        %v857 = vshll.u32 %v853, 16
        %v858 = vshrl.u32 %v853, 16
        %vm859 = vc.u32 %v851, %v855
        %v860 = vsel %vm859, 1, 0
        %v861 = vadd.s32 %v851, %v855
        %v862 = vadd.s32 %v854, %v860
        %vm863 = vc.u32 %v861, %v857
        %v864 = vsel %vm863, 1, 0
        %v865 = vadd.s32 %v861, %v857
        %v866 = vadd.s32 %v862, %v864
        %v867 = vadd.s32 %v866, %v856
        %v868 = vadd.s32 %v867, %v858
        %v869 = vand.u32 %v846, 65535
        %v870 = vshrl.u32 %v846, 16
        %v871 = vand.u32 %v841, 65535
        %v872 = vshrl.u32 %v841, 16
        %v873 = vmul.u32 %v869, %v871
        %v874 = vmul.u32 %v869, %v872
        %v875 = vmul.u32 %v870, %v871
        %v876 = vmul.u32 %v870, %v872
        %v877 = vshll.u32 %v874, 16
        %v878 = vshrl.u32 %v874, 16
        %v879 = vshll.u32 %v875, 16
        %v880 = vshrl.u32 %v875, 16
        %vm881 = vc.u32 %v873, %v877
        %v882 = vsel %vm881, 1, 0
        %v883 = vadd.s32 %v873, %v877
        %v884 = vadd.s32 %v876, %v882
        %vm885 = vc.u32 %v883, %v879
        %v886 = vsel %vm885, 1, 0
        %v887 = vadd.s32 %v883, %v879
        %v888 = vadd.s32 %v884, %v886
        %v889 = vadd.s32 %v888, %v878
        %v890 = vadd.s32 %v889, %v880
        %v891 = vmul.u32 %v846, %v837
        %v892 = vadd.s32 %v868, %v887
        %vm893 = vc.u32 %v868, %v887
        %v894 = vadd.s32 %v890, 1
        %v895 = vsel %vm893, %v894, %v890
        %v896 = vadd.s32 %v891, %v895
        %v897 = vadd.s32 %v896, 536870912
        %v898 = vshrl.u32 %v897, 30
        %v899 = vshll.u32 %v898, 30
        %v900 = vsub.s32 %v896, %v899
        %vm901 = vcmp.lt.s32.totalorder %v900, 0
        %v902 = vsub.s32 0, %v900
        %v903 = vsel %vm901, %v902, %v900
        %v904 = vclz %v903
        %v905 = vsub.s32 %v904, 2
        %vm906 = vcmp.gt.s32.totalorder 0, %v905
        %v907 = vsel %vm906, 0, %v905
        %v908 = vsub.s32 32, %v907
        %v909 = vshll.u32 %v900, %v907
        %v910 = vshrl.u32 %v892, %v908
        %v911 = vor.u32 %v909, %v910
        %v912 = vsub.s32 4294967266, %v907
        %v913 = vadd.s32 %v912, 127
        %v914 = vshll.u32 %v913, 23
        %v915 = vor.u32 4788187, %v914
        %v916 = vand.u32 2147483647, %v915
        %v918 = vcvt.s32.f32 %v911
        %v919 = vmul.f32 %v918, %v916
        %v920 = vxor.u32 %v919, 2147483648
        %v921 = vsel %vm800, %v920, %v919
        %v922 = vsub.s32 4, %v898
        %v923 = vsel %vm800, %v922, %v898
        %v924 = vsel %vm799, %v474, %v921
        %v925 = vsel %vm799, 0, %v923
        %v926 = vmul.f32 %v924, %v924
        %v927 = vmul.f32 %v926, -0.001358992
        %v928 = vadd.f32 %v927, 0.041655596
        %v929 = vmul.f32 %v926, %v928
        %v930 = vadd.f32 %v929, -0.4999988
        %v931 = vmul.f32 %v926, %v930
        %v932 = vadd.f32 1.0, %v931
        %v933 = vmul.f32 %v924, %v924
        %v934 = vmul.f32 %v933, -0.00019511016
        %v935 = vadd.f32 %v934, 0.008332121
        %v936 = vmul.f32 %v933, %v935
        %v937 = vadd.f32 %v936, -0.16666654
        %v938 = vmul.f32 %v933, %v937
        %v939 = vadd.f32 %v938, 1.0
        %v940 = vmul.f32 %v939, %v924
        %vm941 = vweird.f32 %v474
        %v942 = vadd.s32 %v925, 3
        %v943 = vand.u32 %v942, 3
        %vm944 = vcmp.lt.s32.totalorder %v943, 2
        %vm945 = vcmp.eq.s32.totalorder %v943, 0
        %v946 = vxor.u32 %v940, 2147483648
        %v947 = vsel %vm945, %v932, %v946
        %vm948 = vcmp.eq.s32.totalorder %v943, 2
        %v949 = vxor.u32 %v932, 2147483648
        %v950 = vsel %vm948, %v949, %v940
        %v951 = vsel %vm944, %v947, %v950
        %v952 = vsel %vm941, nan, %v951
        %v953 = vand.u32 2147483647, %v475
        %vm954 = vcmp.le.f32.partialorder %v953, 0.7853982
        %vm955 = vcmp.lt.s32.totalorder %v475, 0
        %v956 = vand.u32 %v475, 2139095040
        %v957 = vshrl.u32 %v956, 23
        %v958 = vsub.s32 %v957, 127
        %v959 = vand.u32 2147483647, %v475
        %v960 = vand.u32 %v959, 8388607
        %v961 = vor.u32 %v960, 8388608
        %v962 = vsub.s32 0, %v961
        %v963 = vadd.s32 %v958, 1
        %vm964 = vcmp.gt.s32.totalorder %v963, 0
        %v965 = vsel %vm964, %v963, 0
        %v966 = vshrl.u32 %v965, 5
        %v967 = vand.u32 %v965, 31
        %v968 = vsub.s32 32, %v967
        %v969 = vshrl.u32 683565275, %v968
        %v970 = vshll.u32 683565275, %v967
        %v971 = vshrl.u32 2475754826, %v968
        %v972 = vor.u32 %v970, %v971
        %v973 = vshll.u32 2475754826, %v967
        %v974 = vshrl.u32 2131351028, %v968
        %v975 = vor.u32 %v973, %v974
        %v976 = vshll.u32 2131351028, %v967
        %v977 = vshrl.u32 2102212464, %v968
        %v978 = vor.u32 %v976, %v977
        %v979 = vshll.u32 2102212464, %v967
        %v980 = vshrl.u32 920167782, %v968
        %v981 = vor.u32 %v979, %v980
        %v982 = vshll.u32 920167782, %v967
        %v983 = vshrl.u32 1326507024, %v968
        %v984 = vor.u32 %v982, %v983
        %vm985 = vcmp.lt.s32.totalorder %v966, 1
        %vm986 = vcmp.lt.s32.totalorder %v966, 2
        %vm987 = vcmp.lt.s32.totalorder %v966, 3
        %vm988 = vcmp.lt.s32.totalorder %v966, 4
        %v989 = vsel %vm985, %v969, %v972
        %v990 = vsel %vm988, %v978, 2102212464
        %v991 = vsel %vm987, %v975, %v990
        %v992 = vsel %vm986, %v989, %v991
        %v993 = vsel %vm985, %v972, %v975
        %v994 = vsel %vm988, %v981, 920167782
        %v995 = vsel %vm987, %v978, %v994
        %v996 = vsel %vm986, %v993, %v995
        %v997 = vsel %vm985, %v975, %v978
        %v998 = vsel %vm988, %v984, 1326507024
        %v999 = vsel %vm987, %v981, %v998
        %v1000 = vsel %vm986, %v997, %v999
        %v1001 = vshll.u32 %v961, 8
        %v1002 = vand.u32 %v1001, 65535
        %v1003 = vshrl.u32 %v1001, 16
        %v1004 = vand.u32 %v1000, 65535
        %v1005 = vshrl.u32 %v1000, 16
        %v1006 = vmul.u32 %v1002, %v1004
        %v1007 = vmul.u32 %v1002, %v1005
        %v1008 = vmul.u32 %v1003, %v1004
        %v1009 = vmul.u32 %v1003, %v1005
        %v1010 = vshll.u32 %v1007, 16
        %v1011 = vshrl.u32 %v1007, 16
        %v1012 = vshll.u32 %v1008, 16
        %v1013 = vshrl.u32 %v1008, 16
        %vm1014 = vc.u32 %v1006, %v1010
        %v1015 = vsel %vm1014, 1, 0
        %v1016 = vadd.s32 %v1006, %v1010
        %v1017 = vadd.s32 %v1009, %v1015
        %vm1018 = vc.u32 %v1016, %v1012
        %v1019 = vsel %vm1018, 1, 0
        %v1020 = vadd.s32 %v1016, %v1012
        %v1021 = vadd.s32 %v1017, %v1019
        %v1022 = vadd.s32 %v1021, %v1011
        %v1023 = vadd.s32 %v1022, %v1013
        %v1024 = vand.u32 %v1001, 65535
        %v1025 = vshrl.u32 %v1001, 16
        %v1026 = vand.u32 %v996, 65535
        %v1027 = vshrl.u32 %v996, 16
        %v1028 = vmul.u32 %v1024, %v1026
        %v1029 = vmul.u32 %v1024, %v1027
        %v1030 = vmul.u32 %v1025, %v1026
        %v1031 = vmul.u32 %v1025, %v1027
        %v1032 = vshll.u32 %v1029, 16
        %v1033 = vshrl.u32 %v1029, 16
        %v1034 = vshll.u32 %v1030, 16
        %v1035 = vshrl.u32 %v1030, 16
        %vm1036 = vc.u32 %v1028, %v1032
        %v1037 = vsel %vm1036, 1, 0
        %v1038 = vadd.s32 %v1028, %v1032
        %v1039 = vadd.s32 %v1031, %v1037
        %vm1040 = vc.u32 %v1038, %v1034
        %v1041 = vsel %vm1040, 1, 0
        %v1042 = vadd.s32 %v1038, %v1034
        %v1043 = vadd.s32 %v1039, %v1041
        %v1044 = vadd.s32 %v1043, %v1033
        %v1045 = vadd.s32 %v1044, %v1035
        %v1046 = vmul.u32 %v1001, %v992
        %v1047 = vadd.s32 %v1023, %v1042
        %vm1048 = vc.u32 %v1023, %v1042
        %v1049 = vadd.s32 %v1045, 1
        %v1050 = vsel %vm1048, %v1049, %v1045
        %v1051 = vadd.s32 %v1046, %v1050
        %v1052 = vadd.s32 %v1051, 536870912
        %v1053 = vshrl.u32 %v1052, 30
        %v1054 = vshll.u32 %v1053, 30
        %v1055 = vsub.s32 %v1051, %v1054
        %vm1056 = vcmp.lt.s32.totalorder %v1055, 0
        %v1057 = vsub.s32 0, %v1055
        %v1058 = vsel %vm1056, %v1057, %v1055
        %v1059 = vclz %v1058
        %v1060 = vsub.s32 %v1059, 2
        %vm1061 = vcmp.gt.s32.totalorder 0, %v1060
        %v1062 = vsel %vm1061, 0, %v1060
        %v1063 = vsub.s32 32, %v1062
        %v1064 = vshll.u32 %v1055, %v1062
        %v1065 = vshrl.u32 %v1047, %v1063
        %v1066 = vor.u32 %v1064, %v1065
        %v1067 = vsub.s32 4294967266, %v1062
        %v1068 = vadd.s32 %v1067, 127
        %v1069 = vshll.u32 %v1068, 23
        %v1070 = vor.u32 4788187, %v1069
        %v1071 = vand.u32 2147483647, %v1070
        %v1073 = vcvt.s32.f32 %v1066
        %v1074 = vmul.f32 %v1073, %v1071
        %v1075 = vxor.u32 %v1074, 2147483648
        %v1076 = vsel %vm955, %v1075, %v1074
        %v1077 = vsub.s32 4, %v1053
        %v1078 = vsel %vm955, %v1077, %v1053
        %v1079 = vsel %vm954, %v475, %v1076
        %v1080 = vsel %vm954, 0, %v1078
        %v1081 = vmul.f32 %v1079, %v1079
        %v1082 = vmul.f32 %v1081, -0.001358992
        %v1083 = vadd.f32 %v1082, 0.041655596
        %v1084 = vmul.f32 %v1081, %v1083
        %v1085 = vadd.f32 %v1084, -0.4999988
        %v1086 = vmul.f32 %v1081, %v1085
        %v1087 = vadd.f32 1.0, %v1086
        %v1088 = vmul.f32 %v1079, %v1079
        %v1089 = vmul.f32 %v1088, -0.00019511016
        %v1090 = vadd.f32 %v1089, 0.008332121
        %v1091 = vmul.f32 %v1088, %v1090
        %v1092 = vadd.f32 %v1091, -0.16666654
        %v1093 = vmul.f32 %v1088, %v1092
        %v1094 = vadd.f32 %v1093, 1.0
        %v1095 = vmul.f32 %v1094, %v1079
        %vm1096 = vweird.f32 %v475
        %v1097 = vadd.s32 %v1080, 3
        %v1098 = vand.u32 %v1097, 3
        %vm1099 = vcmp.lt.s32.totalorder %v1098, 2
        %vm1100 = vcmp.eq.s32.totalorder %v1098, 0
        %v1101 = vxor.u32 %v1095, 2147483648
        %v1102 = vsel %vm1100, %v1087, %v1101
        %vm1103 = vcmp.eq.s32.totalorder %v1098, 2
        %v1104 = vxor.u32 %v1087, 2147483648
        %v1105 = vsel %vm1103, %v1104, %v1095
        %v1106 = vsel %vm1099, %v1102, %v1105
        %v1107 = vsel %vm1096, nan, %v1106
        %v1108 = vand.u32 2147483647, %v476
        %vm1109 = vcmp.le.f32.partialorder %v1108, 0.7853982
        %vm1110 = vcmp.lt.s32.totalorder %v476, 0
        %v1111 = vand.u32 %v476, 2139095040
        %v1112 = vshrl.u32 %v1111, 23
        %v1113 = vsub.s32 %v1112, 127
        %v1114 = vand.u32 2147483647, %v476
        %v1115 = vand.u32 %v1114, 8388607
        %v1116 = vor.u32 %v1115, 8388608
        %v1117 = vsub.s32 0, %v1116
        %v1118 = vadd.s32 %v1113, 1
        %vm1119 = vcmp.gt.s32.totalorder %v1118, 0
        %v1120 = vsel %vm1119, %v1118, 0
        %v1121 = vshrl.u32 %v1120, 5
        %v1122 = vand.u32 %v1120, 31
        %v1123 = vsub.s32 32, %v1122
        %v1124 = vshrl.u32 683565275, %v1123
        %v1125 = vshll.u32 683565275, %v1122
        %v1126 = vshrl.u32 2475754826, %v1123
        %v1127 = vor.u32 %v1125, %v1126
        %v1128 = vshll.u32 2475754826, %v1122
        %v1129 = vshrl.u32 2131351028, %v1123
        %v1130 = vor.u32 %v1128, %v1129
        %v1131 = vshll.u32 2131351028, %v1122
        %v1132 = vshrl.u32 2102212464, %v1123
        %v1133 = vor.u32 %v1131, %v1132
        %v1134 = vshll.u32 2102212464, %v1122
        %v1135 = vshrl.u32 920167782, %v1123
        %v1136 = vor.u32 %v1134, %v1135
        %v1137 = vshll.u32 920167782, %v1122
        %v1138 = vshrl.u32 1326507024, %v1123
        %v1139 = vor.u32 %v1137, %v1138
        %vm1140 = vcmp.lt.s32.totalorder %v1121, 1
        %vm1141 = vcmp.lt.s32.totalorder %v1121, 2
        %vm1142 = vcmp.lt.s32.totalorder %v1121, 3
        %vm1143 = vcmp.lt.s32.totalorder %v1121, 4
        %v1144 = vsel %vm1140, %v1124, %v1127
        %v1145 = vsel %vm1143, %v1133, 2102212464
        %v1146 = vsel %vm1142, %v1130, %v1145
        %v1147 = vsel %vm1141, %v1144, %v1146
        %v1148 = vsel %vm1140, %v1127, %v1130
        %v1149 = vsel %vm1143, %v1136, 920167782
        %v1150 = vsel %vm1142, %v1133, %v1149
        %v1151 = vsel %vm1141, %v1148, %v1150
        %v1152 = vsel %vm1140, %v1130, %v1133
        %v1153 = vsel %vm1143, %v1139, 1326507024
        %v1154 = vsel %vm1142, %v1136, %v1153
        %v1155 = vsel %vm1141, %v1152, %v1154
        %v1156 = vshll.u32 %v1116, 8
        %v1157 = vand.u32 %v1156, 65535
        %v1158 = vshrl.u32 %v1156, 16
        %v1159 = vand.u32 %v1155, 65535
        %v1160 = vshrl.u32 %v1155, 16
        %v1161 = vmul.u32 %v1157, %v1159
        %v1162 = vmul.u32 %v1157, %v1160
        %v1163 = vmul.u32 %v1158, %v1159
        %v1164 = vmul.u32 %v1158, %v1160
        %v1165 = vshll.u32 %v1162, 16
        %v1166 = vshrl.u32 %v1162, 16
        %v1167 = vshll.u32 %v1163, 16
        %v1168 = vshrl.u32 %v1163, 16
        %vm1169 = vc.u32 %v1161, %v1165
        %v1170 = vsel %vm1169, 1, 0
        %v1171 = vadd.s32 %v1161, %v1165
        %v1172 = vadd.s32 %v1164, %v1170
        %vm1173 = vc.u32 %v1171, %v1167
        %v1174 = vsel %vm1173, 1, 0
        %v1175 = vadd.s32 %v1171, %v1167
        %v1176 = vadd.s32 %v1172, %v1174
        %v1177 = vadd.s32 %v1176, %v1166
        %v1178 = vadd.s32 %v1177, %v1168
        %v1179 = vand.u32 %v1156, 65535
        %v1180 = vshrl.u32 %v1156, 16
        %v1181 = vand.u32 %v1151, 65535
        %v1182 = vshrl.u32 %v1151, 16
        %v1183 = vmul.u32 %v1179, %v1181
        %v1184 = vmul.u32 %v1179, %v1182
        %v1185 = vmul.u32 %v1180, %v1181
        %v1186 = vmul.u32 %v1180, %v1182
        %v1187 = vshll.u32 %v1184, 16
        %v1188 = vshrl.u32 %v1184, 16
        %v1189 = vshll.u32 %v1185, 16
        %v1190 = vshrl.u32 %v1185, 16
        %vm1191 = vc.u32 %v1183, %v1187
        %v1192 = vsel %vm1191, 1, 0
        %v1193 = vadd.s32 %v1183, %v1187
        %v1194 = vadd.s32 %v1186, %v1192
        %vm1195 = vc.u32 %v1193, %v1189
        %v1196 = vsel %vm1195, 1, 0
        %v1197 = vadd.s32 %v1193, %v1189
        %v1198 = vadd.s32 %v1194, %v1196
        %v1199 = vadd.s32 %v1198, %v1188
        %v1200 = vadd.s32 %v1199, %v1190
        %v1201 = vmul.u32 %v1156, %v1147
        %v1202 = vadd.s32 %v1178, %v1197
        %vm1203 = vc.u32 %v1178, %v1197
        %v1204 = vadd.s32 %v1200, 1
        %v1205 = vsel %vm1203, %v1204, %v1200
        %v1206 = vadd.s32 %v1201, %v1205
        %v1207 = vadd.s32 %v1206, 536870912
        %v1208 = vshrl.u32 %v1207, 30
        %v1209 = vshll.u32 %v1208, 30
        %v1210 = vsub.s32 %v1206, %v1209
        %vm1211 = vcmp.lt.s32.totalorder %v1210, 0
        %v1212 = vsub.s32 0, %v1210
        %v1213 = vsel %vm1211, %v1212, %v1210
        %v1214 = vclz %v1213
        %v1215 = vsub.s32 %v1214, 2
        %vm1216 = vcmp.gt.s32.totalorder 0, %v1215
        %v1217 = vsel %vm1216, 0, %v1215
        %v1218 = vsub.s32 32, %v1217
        %v1219 = vshll.u32 %v1210, %v1217
        %v1220 = vshrl.u32 %v1202, %v1218
        %v1221 = vor.u32 %v1219, %v1220
        %v1222 = vsub.s32 4294967266, %v1217
        %v1223 = vadd.s32 %v1222, 127
        %v1224 = vshll.u32 %v1223, 23
        %v1225 = vor.u32 4788187, %v1224
        %v1226 = vand.u32 2147483647, %v1225
        %v1228 = vcvt.s32.f32 %v1221
        %v1229 = vmul.f32 %v1228, %v1226
        %v1230 = vxor.u32 %v1229, 2147483648
        %v1231 = vsel %vm1110, %v1230, %v1229
        %v1232 = vsub.s32 4, %v1208
        %v1233 = vsel %vm1110, %v1232, %v1208
        %v1234 = vsel %vm1109, %v476, %v1231
        %v1235 = vsel %vm1109, 0, %v1233
        %v1236 = vmul.f32 %v1234, %v1234
        %v1237 = vmul.f32 %v1236, -0.001358992
        %v1238 = vadd.f32 %v1237, 0.041655596
        %v1239 = vmul.f32 %v1236, %v1238
        %v1240 = vadd.f32 %v1239, -0.4999988
        %v1241 = vmul.f32 %v1236, %v1240
        %v1242 = vadd.f32 1.0, %v1241
        %v1243 = vmul.f32 %v1234, %v1234
        %v1244 = vmul.f32 %v1243, -0.00019511016
        %v1245 = vadd.f32 %v1244, 0.008332121
        %v1246 = vmul.f32 %v1243, %v1245
        %v1247 = vadd.f32 %v1246, -0.16666654
        %v1248 = vmul.f32 %v1243, %v1247
        %v1249 = vadd.f32 %v1248, 1.0
        %v1250 = vmul.f32 %v1249, %v1234
        %vm1251 = vweird.f32 %v476
        %v1252 = vadd.s32 %v1235, 3
        %v1253 = vand.u32 %v1252, 3
        %vm1254 = vcmp.lt.s32.totalorder %v1253, 2
        %vm1255 = vcmp.eq.s32.totalorder %v1253, 0
        %v1256 = vxor.u32 %v1250, 2147483648
        %v1257 = vsel %vm1255, %v1242, %v1256
        %vm1258 = vcmp.eq.s32.totalorder %v1253, 2
        %v1259 = vxor.u32 %v1242, 2147483648
        %v1260 = vsel %vm1258, %v1259, %v1250
        %v1261 = vsel %vm1254, %v1257, %v1260
        %v1262 = vsel %vm1251, nan, %v1261
        %v1263 = vand.u32 2147483647, %v477
        %vm1264 = vcmp.le.f32.partialorder %v1263, 0.7853982
        %vm1265 = vcmp.lt.s32.totalorder %v477, 0
        %v1266 = vand.u32 %v477, 2139095040
        %v1267 = vshrl.u32 %v1266, 23
        %v1268 = vsub.s32 %v1267, 127
        %v1269 = vand.u32 2147483647, %v477
        %v1270 = vand.u32 %v1269, 8388607
        %v1271 = vor.u32 %v1270, 8388608
        %v1272 = vsub.s32 0, %v1271
        %v1273 = vadd.s32 %v1268, 1
        %vm1274 = vcmp.gt.s32.totalorder %v1273, 0
        %v1275 = vsel %vm1274, %v1273, 0
        %v1276 = vshrl.u32 %v1275, 5
        %v1277 = vand.u32 %v1275, 31
        %v1278 = vsub.s32 32, %v1277
        %v1279 = vshrl.u32 683565275, %v1278
        %v1280 = vshll.u32 683565275, %v1277
        %v1281 = vshrl.u32 2475754826, %v1278
        %v1282 = vor.u32 %v1280, %v1281
        %v1283 = vshll.u32 2475754826, %v1277
        %v1284 = vshrl.u32 2131351028, %v1278
        %v1285 = vor.u32 %v1283, %v1284
        %v1286 = vshll.u32 2131351028, %v1277
        %v1287 = vshrl.u32 2102212464, %v1278
        %v1288 = vor.u32 %v1286, %v1287
        %v1289 = vshll.u32 2102212464, %v1277
        %v1290 = vshrl.u32 920167782, %v1278
        %v1291 = vor.u32 %v1289, %v1290
        %v1292 = vshll.u32 920167782, %v1277
        %v1293 = vshrl.u32 1326507024, %v1278
        %v1294 = vor.u32 %v1292, %v1293
        %vm1295 = vcmp.lt.s32.totalorder %v1276, 1
        %vm1296 = vcmp.lt.s32.totalorder %v1276, 2
        %vm1297 = vcmp.lt.s32.totalorder %v1276, 3
        %vm1298 = vcmp.lt.s32.totalorder %v1276, 4
        %v1299 = vsel %vm1295, %v1279, %v1282
        %v1300 = vsel %vm1298, %v1288, 2102212464
        %v1301 = vsel %vm1297, %v1285, %v1300
        %v1302 = vsel %vm1296, %v1299, %v1301
        %v1303 = vsel %vm1295, %v1282, %v1285
        %v1304 = vsel %vm1298, %v1291, 920167782
        %v1305 = vsel %vm1297, %v1288, %v1304
        %v1306 = vsel %vm1296, %v1303, %v1305
        %v1307 = vsel %vm1295, %v1285, %v1288
        %v1308 = vsel %vm1298, %v1294, 1326507024
        %v1309 = vsel %vm1297, %v1291, %v1308
        %v1310 = vsel %vm1296, %v1307, %v1309
        %v1311 = vshll.u32 %v1271, 8
        %v1312 = vand.u32 %v1311, 65535
        %v1313 = vshrl.u32 %v1311, 16
        %v1314 = vand.u32 %v1310, 65535
        %v1315 = vshrl.u32 %v1310, 16
        %v1316 = vmul.u32 %v1312, %v1314
        %v1317 = vmul.u32 %v1312, %v1315
        %v1318 = vmul.u32 %v1313, %v1314
        %v1319 = vmul.u32 %v1313, %v1315
        %v1320 = vshll.u32 %v1317, 16
        %v1321 = vshrl.u32 %v1317, 16
        %v1322 = vshll.u32 %v1318, 16
        %v1323 = vshrl.u32 %v1318, 16
        %vm1324 = vc.u32 %v1316, %v1320
        %v1325 = vsel %vm1324, 1, 0
        %v1326 = vadd.s32 %v1316, %v1320
        %v1327 = vadd.s32 %v1319, %v1325
        %vm1328 = vc.u32 %v1326, %v1322
        %v1329 = vsel %vm1328, 1, 0
        %v1330 = vadd.s32 %v1326, %v1322
        %v1331 = vadd.s32 %v1327, %v1329
        %v1332 = vadd.s32 %v1331, %v1321
        %v1333 = vadd.s32 %v1332, %v1323
        %v1334 = vand.u32 %v1311, 65535
        %v1335 = vshrl.u32 %v1311, 16
        %v1336 = vand.u32 %v1306, 65535
        %v1337 = vshrl.u32 %v1306, 16
        %v1338 = vmul.u32 %v1334, %v1336
        %v1339 = vmul.u32 %v1334, %v1337
        %v1340 = vmul.u32 %v1335, %v1336
        %v1341 = vmul.u32 %v1335, %v1337
        %v1342 = vshll.u32 %v1339, 16
        %v1343 = vshrl.u32 %v1339, 16
        %v1344 = vshll.u32 %v1340, 16
        %v1345 = vshrl.u32 %v1340, 16
        %vm1346 = vc.u32 %v1338, %v1342
        %v1347 = vsel %vm1346, 1, 0
        %v1348 = vadd.s32 %v1338, %v1342
        %v1349 = vadd.s32 %v1341, %v1347
        %vm1350 = vc.u32 %v1348, %v1344
        %v1351 = vsel %vm1350, 1, 0
        %v1352 = vadd.s32 %v1348, %v1344
        %v1353 = vadd.s32 %v1349, %v1351
        %v1354 = vadd.s32 %v1353, %v1343
        %v1355 = vadd.s32 %v1354, %v1345
        %v1356 = vmul.u32 %v1311, %v1302
        %v1357 = vadd.s32 %v1333, %v1352
        %vm1358 = vc.u32 %v1333, %v1352
        %v1359 = vadd.s32 %v1355, 1
        %v1360 = vsel %vm1358, %v1359, %v1355
        %v1361 = vadd.s32 %v1356, %v1360
        %v1362 = vadd.s32 %v1361, 536870912
        %v1363 = vshrl.u32 %v1362, 30
        %v1364 = vshll.u32 %v1363, 30
        %v1365 = vsub.s32 %v1361, %v1364
        %vm1366 = vcmp.lt.s32.totalorder %v1365, 0
        %v1367 = vsub.s32 0, %v1365
        %v1368 = vsel %vm1366, %v1367, %v1365
        %v1369 = vclz %v1368
        %v1370 = vsub.s32 %v1369, 2
        %vm1371 = vcmp.gt.s32.totalorder 0, %v1370
        %v1372 = vsel %vm1371, 0, %v1370
        %v1373 = vsub.s32 32, %v1372
        %v1374 = vshll.u32 %v1365, %v1372
        %v1375 = vshrl.u32 %v1357, %v1373
        %v1376 = vor.u32 %v1374, %v1375
        %v1377 = vsub.s32 4294967266, %v1372
        %v1378 = vadd.s32 %v1377, 127
        %v1379 = vshll.u32 %v1378, 23
        %v1380 = vor.u32 4788187, %v1379
        %v1381 = vand.u32 2147483647, %v1380
        %v1383 = vcvt.s32.f32 %v1376
        %v1384 = vmul.f32 %v1383, %v1381
        %v1385 = vxor.u32 %v1384, 2147483648
        %v1386 = vsel %vm1265, %v1385, %v1384
        %v1387 = vsub.s32 4, %v1363
        %v1388 = vsel %vm1265, %v1387, %v1363
        %v1389 = vsel %vm1264, %v477, %v1386
        %v1390 = vsel %vm1264, 0, %v1388
        %v1391 = vmul.f32 %v1389, %v1389
        %v1392 = vmul.f32 %v1391, -0.001358992
        %v1393 = vadd.f32 %v1392, 0.041655596
        %v1394 = vmul.f32 %v1391, %v1393
        %v1395 = vadd.f32 %v1394, -0.4999988
        %v1396 = vmul.f32 %v1391, %v1395
        %v1397 = vadd.f32 1.0, %v1396
        %v1398 = vmul.f32 %v1389, %v1389
        %v1399 = vmul.f32 %v1398, -0.00019511016
        %v1400 = vadd.f32 %v1399, 0.008332121
        %v1401 = vmul.f32 %v1398, %v1400
        %v1402 = vadd.f32 %v1401, -0.16666654
        %v1403 = vmul.f32 %v1398, %v1402
        %v1404 = vadd.f32 %v1403, 1.0
        %v1405 = vmul.f32 %v1404, %v1389
        %vm1406 = vweird.f32 %v477
        %v1407 = vadd.s32 %v1390, 3
        %v1408 = vand.u32 %v1407, 3
        %vm1409 = vcmp.lt.s32.totalorder %v1408, 2
        %vm1410 = vcmp.eq.s32.totalorder %v1408, 0
        %v1411 = vxor.u32 %v1405, 2147483648
        %v1412 = vsel %vm1410, %v1397, %v1411
        %vm1413 = vcmp.eq.s32.totalorder %v1408, 2
        %v1414 = vxor.u32 %v1397, 2147483648
        %v1415 = vsel %vm1413, %v1414, %v1405
        %v1416 = vsel %vm1409, %v1412, %v1415
        %v1417 = vsel %vm1406, nan, %v1416
        %v1418 = vand.u32 2147483647, %v478
        %vm1419 = vcmp.le.f32.partialorder %v1418, 0.7853982
        %vm1420 = vcmp.lt.s32.totalorder %v478, 0
        %v1421 = vand.u32 %v478, 2139095040
        %v1422 = vshrl.u32 %v1421, 23
        %v1423 = vsub.s32 %v1422, 127
        %v1424 = vand.u32 2147483647, %v478
        %v1425 = vand.u32 %v1424, 8388607
        %v1426 = vor.u32 %v1425, 8388608
        %v1427 = vsub.s32 0, %v1426
        %v1428 = vadd.s32 %v1423, 1
        %vm1429 = vcmp.gt.s32.totalorder %v1428, 0
        %v1430 = vsel %vm1429, %v1428, 0
        %v1431 = vshrl.u32 %v1430, 5
        %v1432 = vand.u32 %v1430, 31
        %v1433 = vsub.s32 32, %v1432
        %v1434 = vshrl.u32 683565275, %v1433
        %v1435 = vshll.u32 683565275, %v1432
        %v1436 = vshrl.u32 2475754826, %v1433
        %v1437 = vor.u32 %v1435, %v1436
        %v1438 = vshll.u32 2475754826, %v1432
        %v1439 = vshrl.u32 2131351028, %v1433
        %v1440 = vor.u32 %v1438, %v1439
        %v1441 = vshll.u32 2131351028, %v1432
        %v1442 = vshrl.u32 2102212464, %v1433
        %v1443 = vor.u32 %v1441, %v1442
        %v1444 = vshll.u32 2102212464, %v1432
        %v1445 = vshrl.u32 920167782, %v1433
        %v1446 = vor.u32 %v1444, %v1445
        %v1447 = vshll.u32 920167782, %v1432
        %v1448 = vshrl.u32 1326507024, %v1433
        %v1449 = vor.u32 %v1447, %v1448
        %vm1450 = vcmp.lt.s32.totalorder %v1431, 1
        %vm1451 = vcmp.lt.s32.totalorder %v1431, 2
        %vm1452 = vcmp.lt.s32.totalorder %v1431, 3
        %vm1453 = vcmp.lt.s32.totalorder %v1431, 4
        %v1454 = vsel %vm1450, %v1434, %v1437
        %v1455 = vsel %vm1453, %v1443, 2102212464
        %v1456 = vsel %vm1452, %v1440, %v1455
        %v1457 = vsel %vm1451, %v1454, %v1456
        %v1458 = vsel %vm1450, %v1437, %v1440
        %v1459 = vsel %vm1453, %v1446, 920167782
        %v1460 = vsel %vm1452, %v1443, %v1459
        %v1461 = vsel %vm1451, %v1458, %v1460
        %v1462 = vsel %vm1450, %v1440, %v1443
        %v1463 = vsel %vm1453, %v1449, 1326507024
        %v1464 = vsel %vm1452, %v1446, %v1463
        %v1465 = vsel %vm1451, %v1462, %v1464
        %v1466 = vshll.u32 %v1426, 8
        %v1467 = vand.u32 %v1466, 65535
        %v1468 = vshrl.u32 %v1466, 16
        %v1469 = vand.u32 %v1465, 65535
        %v1470 = vshrl.u32 %v1465, 16
        %v1471 = vmul.u32 %v1467, %v1469
        %v1472 = vmul.u32 %v1467, %v1470
        %v1473 = vmul.u32 %v1468, %v1469
        %v1474 = vmul.u32 %v1468, %v1470
        %v1475 = vshll.u32 %v1472, 16
        %v1476 = vshrl.u32 %v1472, 16
        %v1477 = vshll.u32 %v1473, 16
        %v1478 = vshrl.u32 %v1473, 16
        %vm1479 = vc.u32 %v1471, %v1475
        %v1480 = vsel %vm1479, 1, 0
        %v1481 = vadd.s32 %v1471, %v1475
        %v1482 = vadd.s32 %v1474, %v1480
        %vm1483 = vc.u32 %v1481, %v1477
        %v1484 = vsel %vm1483, 1, 0
        %v1485 = vadd.s32 %v1481, %v1477
        %v1486 = vadd.s32 %v1482, %v1484
        %v1487 = vadd.s32 %v1486, %v1476
        %v1488 = vadd.s32 %v1487, %v1478
        %v1489 = vand.u32 %v1466, 65535
        %v1490 = vshrl.u32 %v1466, 16
        %v1491 = vand.u32 %v1461, 65535
        %v1492 = vshrl.u32 %v1461, 16
        %v1493 = vmul.u32 %v1489, %v1491
        %v1494 = vmul.u32 %v1489, %v1492
        %v1495 = vmul.u32 %v1490, %v1491
        %v1496 = vmul.u32 %v1490, %v1492
        %v1497 = vshll.u32 %v1494, 16
        %v1498 = vshrl.u32 %v1494, 16
        %v1499 = vshll.u32 %v1495, 16
        %v1500 = vshrl.u32 %v1495, 16
        %vm1501 = vc.u32 %v1493, %v1497
        %v1502 = vsel %vm1501, 1, 0
        %v1503 = vadd.s32 %v1493, %v1497
        %v1504 = vadd.s32 %v1496, %v1502
        %vm1505 = vc.u32 %v1503, %v1499
        %v1506 = vsel %vm1505, 1, 0
        %v1507 = vadd.s32 %v1503, %v1499
        %v1508 = vadd.s32 %v1504, %v1506
        %v1509 = vadd.s32 %v1508, %v1498
        %v1510 = vadd.s32 %v1509, %v1500
        %v1511 = vmul.u32 %v1466, %v1457
        %v1512 = vadd.s32 %v1488, %v1507
        %vm1513 = vc.u32 %v1488, %v1507
        %v1514 = vadd.s32 %v1510, 1
        %v1515 = vsel %vm1513, %v1514, %v1510
        %v1516 = vadd.s32 %v1511, %v1515
        %v1517 = vadd.s32 %v1516, 536870912
        %v1518 = vshrl.u32 %v1517, 30
        %v1519 = vshll.u32 %v1518, 30
        %v1520 = vsub.s32 %v1516, %v1519
        %vm1521 = vcmp.lt.s32.totalorder %v1520, 0
        %v1522 = vsub.s32 0, %v1520
        %v1523 = vsel %vm1521, %v1522, %v1520
        %v1524 = vclz %v1523
        %v1525 = vsub.s32 %v1524, 2
        %vm1526 = vcmp.gt.s32.totalorder 0, %v1525
        %v1527 = vsel %vm1526, 0, %v1525
        %v1528 = vsub.s32 32, %v1527
        %v1529 = vshll.u32 %v1520, %v1527
        %v1530 = vshrl.u32 %v1512, %v1528
        %v1531 = vor.u32 %v1529, %v1530
        %v1532 = vsub.s32 4294967266, %v1527
        %v1533 = vadd.s32 %v1532, 127
        %v1534 = vshll.u32 %v1533, 23
        %v1535 = vor.u32 4788187, %v1534
        %v1536 = vand.u32 2147483647, %v1535
        %v1538 = vcvt.s32.f32 %v1531
        %v1539 = vmul.f32 %v1538, %v1536
        %v1540 = vxor.u32 %v1539, 2147483648
        %v1541 = vsel %vm1420, %v1540, %v1539
        %v1542 = vsub.s32 4, %v1518
        %v1543 = vsel %vm1420, %v1542, %v1518
        %v1544 = vsel %vm1419, %v478, %v1541
        %v1545 = vsel %vm1419, 0, %v1543
        %v1546 = vmul.f32 %v1544, %v1544
        %v1547 = vmul.f32 %v1546, -0.001358992
        %v1548 = vadd.f32 %v1547, 0.041655596
        %v1549 = vmul.f32 %v1546, %v1548
        %v1550 = vadd.f32 %v1549, -0.4999988
        %v1551 = vmul.f32 %v1546, %v1550
        %v1552 = vadd.f32 1.0, %v1551
        %v1553 = vmul.f32 %v1544, %v1544
        %v1554 = vmul.f32 %v1553, -0.00019511016
        %v1555 = vadd.f32 %v1554, 0.008332121
        %v1556 = vmul.f32 %v1553, %v1555
        %v1557 = vadd.f32 %v1556, -0.16666654
        %v1558 = vmul.f32 %v1553, %v1557
        %v1559 = vadd.f32 %v1558, 1.0
        %v1560 = vmul.f32 %v1559, %v1544
        %vm1561 = vweird.f32 %v478
        %v1562 = vadd.s32 %v1545, 3
        %v1563 = vand.u32 %v1562, 3
        %vm1564 = vcmp.lt.s32.totalorder %v1563, 2
        %vm1565 = vcmp.eq.s32.totalorder %v1563, 0
        %v1566 = vxor.u32 %v1560, 2147483648
        %v1567 = vsel %vm1565, %v1552, %v1566
        %vm1568 = vcmp.eq.s32.totalorder %v1563, 2
        %v1569 = vxor.u32 %v1552, 2147483648
        %v1570 = vsel %vm1568, %v1569, %v1560
        %v1571 = vsel %vm1564, %v1567, %v1570
        %v1572 = vsel %vm1561, nan, %v1571
        %v1573 = vand.u32 2147483647, %v479
        %vm1574 = vcmp.le.f32.partialorder %v1573, 0.7853982
        %vm1575 = vcmp.lt.s32.totalorder %v479, 0
        %v1576 = vand.u32 %v479, 2139095040
        %v1577 = vshrl.u32 %v1576, 23
        %v1578 = vsub.s32 %v1577, 127
        %v1579 = vand.u32 2147483647, %v479
        %v1580 = vand.u32 %v1579, 8388607
        %v1581 = vor.u32 %v1580, 8388608
        %v1582 = vsub.s32 0, %v1581
        %v1583 = vadd.s32 %v1578, 1
        %vm1584 = vcmp.gt.s32.totalorder %v1583, 0
        %v1585 = vsel %vm1584, %v1583, 0
        %v1586 = vshrl.u32 %v1585, 5
        %v1587 = vand.u32 %v1585, 31
        %v1588 = vsub.s32 32, %v1587
        %v1589 = vshrl.u32 683565275, %v1588
        %v1590 = vshll.u32 683565275, %v1587
        %v1591 = vshrl.u32 2475754826, %v1588
        %v1592 = vor.u32 %v1590, %v1591
        %v1593 = vshll.u32 2475754826, %v1587
        %v1594 = vshrl.u32 2131351028, %v1588
        %v1595 = vor.u32 %v1593, %v1594
        %v1596 = vshll.u32 2131351028, %v1587
        %v1597 = vshrl.u32 2102212464, %v1588
        %v1598 = vor.u32 %v1596, %v1597
        %v1599 = vshll.u32 2102212464, %v1587
        %v1600 = vshrl.u32 920167782, %v1588
        %v1601 = vor.u32 %v1599, %v1600
        %v1602 = vshll.u32 920167782, %v1587
        %v1603 = vshrl.u32 1326507024, %v1588
        %v1604 = vor.u32 %v1602, %v1603
        %vm1605 = vcmp.lt.s32.totalorder %v1586, 1
        %vm1606 = vcmp.lt.s32.totalorder %v1586, 2
        %vm1607 = vcmp.lt.s32.totalorder %v1586, 3
        %vm1608 = vcmp.lt.s32.totalorder %v1586, 4
        %v1609 = vsel %vm1605, %v1589, %v1592
        %v1610 = vsel %vm1608, %v1598, 2102212464
        %v1611 = vsel %vm1607, %v1595, %v1610
        %v1612 = vsel %vm1606, %v1609, %v1611
        %v1613 = vsel %vm1605, %v1592, %v1595
        %v1614 = vsel %vm1608, %v1601, 920167782
        %v1615 = vsel %vm1607, %v1598, %v1614
        %v1616 = vsel %vm1606, %v1613, %v1615
        %v1617 = vsel %vm1605, %v1595, %v1598
        %v1618 = vsel %vm1608, %v1604, 1326507024
        %v1619 = vsel %vm1607, %v1601, %v1618
        %v1620 = vsel %vm1606, %v1617, %v1619
        %v1621 = vshll.u32 %v1581, 8
        %v1622 = vand.u32 %v1621, 65535
        %v1623 = vshrl.u32 %v1621, 16
        %v1624 = vand.u32 %v1620, 65535
        %v1625 = vshrl.u32 %v1620, 16
        %v1626 = vmul.u32 %v1622, %v1624
        %v1627 = vmul.u32 %v1622, %v1625
        %v1628 = vmul.u32 %v1623, %v1624
        %v1629 = vmul.u32 %v1623, %v1625
        %v1630 = vshll.u32 %v1627, 16
        %v1631 = vshrl.u32 %v1627, 16
        %v1632 = vshll.u32 %v1628, 16
        %v1633 = vshrl.u32 %v1628, 16
        %vm1634 = vc.u32 %v1626, %v1630
        %v1635 = vsel %vm1634, 1, 0
        %v1636 = vadd.s32 %v1626, %v1630
        %v1637 = vadd.s32 %v1629, %v1635
        %vm1638 = vc.u32 %v1636, %v1632
        %v1639 = vsel %vm1638, 1, 0
        %v1640 = vadd.s32 %v1636, %v1632
        %v1641 = vadd.s32 %v1637, %v1639
        %v1642 = vadd.s32 %v1641, %v1631
        %v1643 = vadd.s32 %v1642, %v1633
        %v1644 = vand.u32 %v1621, 65535
        %v1645 = vshrl.u32 %v1621, 16
        %v1646 = vand.u32 %v1616, 65535
        %v1647 = vshrl.u32 %v1616, 16
        %v1648 = vmul.u32 %v1644, %v1646
        %v1649 = vmul.u32 %v1644, %v1647
        %v1650 = vmul.u32 %v1645, %v1646
        %v1651 = vmul.u32 %v1645, %v1647
        %v1652 = vshll.u32 %v1649, 16
        %v1653 = vshrl.u32 %v1649, 16
        %v1654 = vshll.u32 %v1650, 16
        %v1655 = vshrl.u32 %v1650, 16
        %vm1656 = vc.u32 %v1648, %v1652
        %v1657 = vsel %vm1656, 1, 0
        %v1658 = vadd.s32 %v1648, %v1652
        %v1659 = vadd.s32 %v1651, %v1657
        %vm1660 = vc.u32 %v1658, %v1654
        %v1661 = vsel %vm1660, 1, 0
        %v1662 = vadd.s32 %v1658, %v1654
        %v1663 = vadd.s32 %v1659, %v1661
        %v1664 = vadd.s32 %v1663, %v1653
        %v1665 = vadd.s32 %v1664, %v1655
        %v1666 = vmul.u32 %v1621, %v1612
        %v1667 = vadd.s32 %v1643, %v1662
        %vm1668 = vc.u32 %v1643, %v1662
        %v1669 = vadd.s32 %v1665, 1
        %v1670 = vsel %vm1668, %v1669, %v1665
        %v1671 = vadd.s32 %v1666, %v1670
        %v1672 = vadd.s32 %v1671, 536870912
        %v1673 = vshrl.u32 %v1672, 30
        %v1674 = vshll.u32 %v1673, 30
        %v1675 = vsub.s32 %v1671, %v1674
        %vm1676 = vcmp.lt.s32.totalorder %v1675, 0
        %v1677 = vsub.s32 0, %v1675
        %v1678 = vsel %vm1676, %v1677, %v1675
        %v1679 = vclz %v1678
        %v1680 = vsub.s32 %v1679, 2
        %vm1681 = vcmp.gt.s32.totalorder 0, %v1680
        %v1682 = vsel %vm1681, 0, %v1680
        %v1683 = vsub.s32 32, %v1682
        %v1684 = vshll.u32 %v1675, %v1682
        %v1685 = vshrl.u32 %v1667, %v1683
        %v1686 = vor.u32 %v1684, %v1685
        %v1687 = vsub.s32 4294967266, %v1682
        %v1688 = vadd.s32 %v1687, 127
        %v1689 = vshll.u32 %v1688, 23
        %v1690 = vor.u32 4788187, %v1689
        %v1691 = vand.u32 2147483647, %v1690
        %v1693 = vcvt.s32.f32 %v1686
        %v1694 = vmul.f32 %v1693, %v1691
        %v1695 = vxor.u32 %v1694, 2147483648
        %v1696 = vsel %vm1575, %v1695, %v1694
        %v1697 = vsub.s32 4, %v1673
        %v1698 = vsel %vm1575, %v1697, %v1673
        %v1699 = vsel %vm1574, %v479, %v1696
        %v1700 = vsel %vm1574, 0, %v1698
        %v1701 = vmul.f32 %v1699, %v1699
        %v1702 = vmul.f32 %v1701, -0.001358992
        %v1703 = vadd.f32 %v1702, 0.041655596
        %v1704 = vmul.f32 %v1701, %v1703
        %v1705 = vadd.f32 %v1704, -0.4999988
        %v1706 = vmul.f32 %v1701, %v1705
        %v1707 = vadd.f32 1.0, %v1706
        %v1708 = vmul.f32 %v1699, %v1699
        %v1709 = vmul.f32 %v1708, -0.00019511016
        %v1710 = vadd.f32 %v1709, 0.008332121
        %v1711 = vmul.f32 %v1708, %v1710
        %v1712 = vadd.f32 %v1711, -0.16666654
        %v1713 = vmul.f32 %v1708, %v1712
        %v1714 = vadd.f32 %v1713, 1.0
        %v1715 = vmul.f32 %v1714, %v1699
        %vm1716 = vweird.f32 %v479
        %v1717 = vadd.s32 %v1700, 3
        %v1718 = vand.u32 %v1717, 3
        %vm1719 = vcmp.lt.s32.totalorder %v1718, 2
        %vm1720 = vcmp.eq.s32.totalorder %v1718, 0
        %v1721 = vxor.u32 %v1715, 2147483648
        %v1722 = vsel %vm1720, %v1707, %v1721
        %vm1723 = vcmp.eq.s32.totalorder %v1718, 2
        %v1724 = vxor.u32 %v1707, 2147483648
        %v1725 = vsel %vm1723, %v1724, %v1715
        %v1726 = vsel %vm1719, %v1722, %v1725
        %v1727 = vsel %vm1716, nan, %v1726
        %v1728 = vand.u32 2147483647, %v480
        %vm1729 = vcmp.le.f32.partialorder %v1728, 0.7853982
        %vm1730 = vcmp.lt.s32.totalorder %v480, 0
        %v1731 = vand.u32 %v480, 2139095040
        %v1732 = vshrl.u32 %v1731, 23
        %v1733 = vsub.s32 %v1732, 127
        %v1734 = vand.u32 2147483647, %v480
        %v1735 = vand.u32 %v1734, 8388607
        %v1736 = vor.u32 %v1735, 8388608
        %v1737 = vsub.s32 0, %v1736
        %v1738 = vadd.s32 %v1733, 1
        %vm1739 = vcmp.gt.s32.totalorder %v1738, 0
        %v1740 = vsel %vm1739, %v1738, 0
        %v1741 = vshrl.u32 %v1740, 5
        %v1742 = vand.u32 %v1740, 31
        %v1743 = vsub.s32 32, %v1742
        %v1744 = vshrl.u32 683565275, %v1743
        %v1745 = vshll.u32 683565275, %v1742
        %v1746 = vshrl.u32 2475754826, %v1743
        %v1747 = vor.u32 %v1745, %v1746
        %v1748 = vshll.u32 2475754826, %v1742
        %v1749 = vshrl.u32 2131351028, %v1743
        %v1750 = vor.u32 %v1748, %v1749
        %v1751 = vshll.u32 2131351028, %v1742
        %v1752 = vshrl.u32 2102212464, %v1743
        %v1753 = vor.u32 %v1751, %v1752
        %v1754 = vshll.u32 2102212464, %v1742
        %v1755 = vshrl.u32 920167782, %v1743
        %v1756 = vor.u32 %v1754, %v1755
        %v1757 = vshll.u32 920167782, %v1742
        %v1758 = vshrl.u32 1326507024, %v1743
        %v1759 = vor.u32 %v1757, %v1758
        %vm1760 = vcmp.lt.s32.totalorder %v1741, 1
        %vm1761 = vcmp.lt.s32.totalorder %v1741, 2
        %vm1762 = vcmp.lt.s32.totalorder %v1741, 3
        %vm1763 = vcmp.lt.s32.totalorder %v1741, 4
        %v1764 = vsel %vm1760, %v1744, %v1747
        %v1765 = vsel %vm1763, %v1753, 2102212464
        %v1766 = vsel %vm1762, %v1750, %v1765
        %v1767 = vsel %vm1761, %v1764, %v1766
        %v1768 = vsel %vm1760, %v1747, %v1750
        %v1769 = vsel %vm1763, %v1756, 920167782
        %v1770 = vsel %vm1762, %v1753, %v1769
        %v1771 = vsel %vm1761, %v1768, %v1770
        %v1772 = vsel %vm1760, %v1750, %v1753
        %v1773 = vsel %vm1763, %v1759, 1326507024
        %v1774 = vsel %vm1762, %v1756, %v1773
        %v1775 = vsel %vm1761, %v1772, %v1774
        %v1776 = vshll.u32 %v1736, 8
        %v1777 = vand.u32 %v1776, 65535
        %v1778 = vshrl.u32 %v1776, 16
        %v1779 = vand.u32 %v1775, 65535
        %v1780 = vshrl.u32 %v1775, 16
        %v1781 = vmul.u32 %v1777, %v1779
        %v1782 = vmul.u32 %v1777, %v1780
        %v1783 = vmul.u32 %v1778, %v1779
        %v1784 = vmul.u32 %v1778, %v1780
        %v1785 = vshll.u32 %v1782, 16
        %v1786 = vshrl.u32 %v1782, 16
        %v1787 = vshll.u32 %v1783, 16
        %v1788 = vshrl.u32 %v1783, 16
        %vm1789 = vc.u32 %v1781, %v1785
        %v1790 = vsel %vm1789, 1, 0
        %v1791 = vadd.s32 %v1781, %v1785
        %v1792 = vadd.s32 %v1784, %v1790
        %vm1793 = vc.u32 %v1791, %v1787
        %v1794 = vsel %vm1793, 1, 0
        %v1795 = vadd.s32 %v1791, %v1787
        %v1796 = vadd.s32 %v1792, %v1794
        %v1797 = vadd.s32 %v1796, %v1786
        %v1798 = vadd.s32 %v1797, %v1788
        %v1799 = vand.u32 %v1776, 65535
        %v1800 = vshrl.u32 %v1776, 16
        %v1801 = vand.u32 %v1771, 65535
        %v1802 = vshrl.u32 %v1771, 16
        %v1803 = vmul.u32 %v1799, %v1801
        %v1804 = vmul.u32 %v1799, %v1802
        %v1805 = vmul.u32 %v1800, %v1801
        %v1806 = vmul.u32 %v1800, %v1802
        %v1807 = vshll.u32 %v1804, 16
        %v1808 = vshrl.u32 %v1804, 16
        %v1809 = vshll.u32 %v1805, 16
        %v1810 = vshrl.u32 %v1805, 16
        %vm1811 = vc.u32 %v1803, %v1807
        %v1812 = vsel %vm1811, 1, 0
        %v1813 = vadd.s32 %v1803, %v1807
        %v1814 = vadd.s32 %v1806, %v1812
        %vm1815 = vc.u32 %v1813, %v1809
        %v1816 = vsel %vm1815, 1, 0
        %v1817 = vadd.s32 %v1813, %v1809
        %v1818 = vadd.s32 %v1814, %v1816
        %v1819 = vadd.s32 %v1818, %v1808
        %v1820 = vadd.s32 %v1819, %v1810
        %v1821 = vmul.u32 %v1776, %v1767
        %v1822 = vadd.s32 %v1798, %v1817
        %vm1823 = vc.u32 %v1798, %v1817
        %v1824 = vadd.s32 %v1820, 1
        %v1825 = vsel %vm1823, %v1824, %v1820
        %v1826 = vadd.s32 %v1821, %v1825
        %v1827 = vadd.s32 %v1826, 536870912
        %v1828 = vshrl.u32 %v1827, 30
        %v1829 = vshll.u32 %v1828, 30
        %v1830 = vsub.s32 %v1826, %v1829
        %vm1831 = vcmp.lt.s32.totalorder %v1830, 0
        %v1832 = vsub.s32 0, %v1830
        %v1833 = vsel %vm1831, %v1832, %v1830
        %v1834 = vclz %v1833
        %v1835 = vsub.s32 %v1834, 2
        %vm1836 = vcmp.gt.s32.totalorder 0, %v1835
        %v1837 = vsel %vm1836, 0, %v1835
        %v1838 = vsub.s32 32, %v1837
        %v1839 = vshll.u32 %v1830, %v1837
        %v1840 = vshrl.u32 %v1822, %v1838
        %v1841 = vor.u32 %v1839, %v1840
        %v1842 = vsub.s32 4294967266, %v1837
        %v1843 = vadd.s32 %v1842, 127
        %v1844 = vshll.u32 %v1843, 23
        %v1845 = vor.u32 4788187, %v1844
        %v1846 = vand.u32 2147483647, %v1845
        %v1848 = vcvt.s32.f32 %v1841
        %v1849 = vmul.f32 %v1848, %v1846
        %v1850 = vxor.u32 %v1849, 2147483648
        %v1851 = vsel %vm1730, %v1850, %v1849
        %v1852 = vsub.s32 4, %v1828
        %v1853 = vsel %vm1730, %v1852, %v1828
        %v1854 = vsel %vm1729, %v480, %v1851
        %v1855 = vsel %vm1729, 0, %v1853
        %v1856 = vmul.f32 %v1854, %v1854
        %v1857 = vmul.f32 %v1856, -0.001358992
        %v1858 = vadd.f32 %v1857, 0.041655596
        %v1859 = vmul.f32 %v1856, %v1858
        %v1860 = vadd.f32 %v1859, -0.4999988
        %v1861 = vmul.f32 %v1856, %v1860
        %v1862 = vadd.f32 1.0, %v1861
        %v1863 = vmul.f32 %v1854, %v1854
        %v1864 = vmul.f32 %v1863, -0.00019511016
        %v1865 = vadd.f32 %v1864, 0.008332121
        %v1866 = vmul.f32 %v1863, %v1865
        %v1867 = vadd.f32 %v1866, -0.16666654
        %v1868 = vmul.f32 %v1863, %v1867
        %v1869 = vadd.f32 %v1868, 1.0
        %v1870 = vmul.f32 %v1869, %v1854
        %vm1871 = vweird.f32 %v480
        %v1872 = vadd.s32 %v1855, 3
        %v1873 = vand.u32 %v1872, 3
        %vm1874 = vcmp.lt.s32.totalorder %v1873, 2
        %vm1875 = vcmp.eq.s32.totalorder %v1873, 0
        %v1876 = vxor.u32 %v1870, 2147483648
        %v1877 = vsel %vm1875, %v1862, %v1876
        %vm1878 = vcmp.eq.s32.totalorder %v1873, 2
        %v1879 = vxor.u32 %v1862, 2147483648
        %v1880 = vsel %vm1878, %v1879, %v1870
        %v1881 = vsel %vm1874, %v1877, %v1880
        %v1882 = vsel %vm1871, nan, %v1881
        %v1883 = vand.u32 2147483647, %v481
        %vm1884 = vcmp.le.f32.partialorder %v1883, 0.7853982
        %vm1885 = vcmp.lt.s32.totalorder %v481, 0
        %v1886 = vand.u32 %v481, 2139095040
        %v1887 = vshrl.u32 %v1886, 23
        %v1888 = vsub.s32 %v1887, 127
        %v1889 = vand.u32 2147483647, %v481
        %v1890 = vand.u32 %v1889, 8388607
        %v1891 = vor.u32 %v1890, 8388608
        %v1892 = vsub.s32 0, %v1891
        %v1893 = vadd.s32 %v1888, 1
        %vm1894 = vcmp.gt.s32.totalorder %v1893, 0
        %v1895 = vsel %vm1894, %v1893, 0
        %v1896 = vshrl.u32 %v1895, 5
        %v1897 = vand.u32 %v1895, 31
        %v1898 = vsub.s32 32, %v1897
        %v1899 = vshrl.u32 683565275, %v1898
        %v1900 = vshll.u32 683565275, %v1897
        %v1901 = vshrl.u32 2475754826, %v1898
        %v1902 = vor.u32 %v1900, %v1901
        %v1903 = vshll.u32 2475754826, %v1897
        %v1904 = vshrl.u32 2131351028, %v1898
        %v1905 = vor.u32 %v1903, %v1904
        %v1906 = vshll.u32 2131351028, %v1897
        %v1907 = vshrl.u32 2102212464, %v1898
        %v1908 = vor.u32 %v1906, %v1907
        %v1909 = vshll.u32 2102212464, %v1897
        %v1910 = vshrl.u32 920167782, %v1898
        %v1911 = vor.u32 %v1909, %v1910
        %v1912 = vshll.u32 920167782, %v1897
        %v1913 = vshrl.u32 1326507024, %v1898
        %v1914 = vor.u32 %v1912, %v1913
        %vm1915 = vcmp.lt.s32.totalorder %v1896, 1
        %vm1916 = vcmp.lt.s32.totalorder %v1896, 2
        %vm1917 = vcmp.lt.s32.totalorder %v1896, 3
        %vm1918 = vcmp.lt.s32.totalorder %v1896, 4
        %v1919 = vsel %vm1915, %v1899, %v1902
        %v1920 = vsel %vm1918, %v1908, 2102212464
        %v1921 = vsel %vm1917, %v1905, %v1920
        %v1922 = vsel %vm1916, %v1919, %v1921
        %v1923 = vsel %vm1915, %v1902, %v1905
        %v1924 = vsel %vm1918, %v1911, 920167782
        %v1925 = vsel %vm1917, %v1908, %v1924
        %v1926 = vsel %vm1916, %v1923, %v1925
        %v1927 = vsel %vm1915, %v1905, %v1908
        %v1928 = vsel %vm1918, %v1914, 1326507024
        %v1929 = vsel %vm1917, %v1911, %v1928
        %v1930 = vsel %vm1916, %v1927, %v1929
        %v1931 = vshll.u32 %v1891, 8
        %v1932 = vand.u32 %v1931, 65535
        %v1933 = vshrl.u32 %v1931, 16
        %v1934 = vand.u32 %v1930, 65535
        %v1935 = vshrl.u32 %v1930, 16
        %v1936 = vmul.u32 %v1932, %v1934
        %v1937 = vmul.u32 %v1932, %v1935
        %v1938 = vmul.u32 %v1933, %v1934
        %v1939 = vmul.u32 %v1933, %v1935
        %v1940 = vshll.u32 %v1937, 16
        %v1941 = vshrl.u32 %v1937, 16
        %v1942 = vshll.u32 %v1938, 16
        %v1943 = vshrl.u32 %v1938, 16
        %vm1944 = vc.u32 %v1936, %v1940
        %v1945 = vsel %vm1944, 1, 0
        %v1946 = vadd.s32 %v1936, %v1940
        %v1947 = vadd.s32 %v1939, %v1945
        %vm1948 = vc.u32 %v1946, %v1942
        %v1949 = vsel %vm1948, 1, 0
        %v1950 = vadd.s32 %v1946, %v1942
        %v1951 = vadd.s32 %v1947, %v1949
        %v1952 = vadd.s32 %v1951, %v1941
        %v1953 = vadd.s32 %v1952, %v1943
        %v1954 = vand.u32 %v1931, 65535
        %v1955 = vshrl.u32 %v1931, 16
        %v1956 = vand.u32 %v1926, 65535
        %v1957 = vshrl.u32 %v1926, 16
        %v1958 = vmul.u32 %v1954, %v1956
        %v1959 = vmul.u32 %v1954, %v1957
        %v1960 = vmul.u32 %v1955, %v1956
        %v1961 = vmul.u32 %v1955, %v1957
        %v1962 = vshll.u32 %v1959, 16
        %v1963 = vshrl.u32 %v1959, 16
        %v1964 = vshll.u32 %v1960, 16
        %v1965 = vshrl.u32 %v1960, 16
        %vm1966 = vc.u32 %v1958, %v1962
        %v1967 = vsel %vm1966, 1, 0
        %v1968 = vadd.s32 %v1958, %v1962
        %v1969 = vadd.s32 %v1961, %v1967
        %vm1970 = vc.u32 %v1968, %v1964
        %v1971 = vsel %vm1970, 1, 0
        %v1972 = vadd.s32 %v1968, %v1964
        %v1973 = vadd.s32 %v1969, %v1971
        %v1974 = vadd.s32 %v1973, %v1963
        %v1975 = vadd.s32 %v1974, %v1965
        %v1976 = vmul.u32 %v1931, %v1922
        %v1977 = vadd.s32 %v1953, %v1972
        %vm1978 = vc.u32 %v1953, %v1972
        %v1979 = vadd.s32 %v1975, 1
        %v1980 = vsel %vm1978, %v1979, %v1975
        %v1981 = vadd.s32 %v1976, %v1980
        %v1982 = vadd.s32 %v1981, 536870912
        %v1983 = vshrl.u32 %v1982, 30
        %v1984 = vshll.u32 %v1983, 30
        %v1985 = vsub.s32 %v1981, %v1984
        %vm1986 = vcmp.lt.s32.totalorder %v1985, 0
        %v1987 = vsub.s32 0, %v1985
        %v1988 = vsel %vm1986, %v1987, %v1985
        %v1989 = vclz %v1988
        %v1990 = vsub.s32 %v1989, 2
        %vm1991 = vcmp.gt.s32.totalorder 0, %v1990
        %v1992 = vsel %vm1991, 0, %v1990
        %v1993 = vsub.s32 32, %v1992
        %v1994 = vshll.u32 %v1985, %v1992
        %v1995 = vshrl.u32 %v1977, %v1993
        %v1996 = vor.u32 %v1994, %v1995
        %v1997 = vsub.s32 4294967266, %v1992
        %v1998 = vadd.s32 %v1997, 127
        %v1999 = vshll.u32 %v1998, 23
        %v2000 = vor.u32 4788187, %v1999
        %v2001 = vand.u32 2147483647, %v2000
        %v2003 = vcvt.s32.f32 %v1996
        %v2004 = vmul.f32 %v2003, %v2001
        %v2005 = vxor.u32 %v2004, 2147483648
        %v2006 = vsel %vm1885, %v2005, %v2004
        %v2007 = vsub.s32 4, %v1983
        %v2008 = vsel %vm1885, %v2007, %v1983
        %v2009 = vsel %vm1884, %v481, %v2006
        %v2010 = vsel %vm1884, 0, %v2008
        %v2011 = vmul.f32 %v2009, %v2009
        %v2012 = vmul.f32 %v2011, -0.001358992
        %v2013 = vadd.f32 %v2012, 0.041655596
        %v2014 = vmul.f32 %v2011, %v2013
        %v2015 = vadd.f32 %v2014, -0.4999988
        %v2016 = vmul.f32 %v2011, %v2015
        %v2017 = vadd.f32 1.0, %v2016
        %v2018 = vmul.f32 %v2009, %v2009
        %v2019 = vmul.f32 %v2018, -0.00019511016
        %v2020 = vadd.f32 %v2019, 0.008332121
        %v2021 = vmul.f32 %v2018, %v2020
        %v2022 = vadd.f32 %v2021, -0.16666654
        %v2023 = vmul.f32 %v2018, %v2022
        %v2024 = vadd.f32 %v2023, 1.0
        %v2025 = vmul.f32 %v2024, %v2009
        %vm2026 = vweird.f32 %v481
        %v2027 = vadd.s32 %v2010, 3
        %v2028 = vand.u32 %v2027, 3
        %vm2029 = vcmp.lt.s32.totalorder %v2028, 2
        %vm2030 = vcmp.eq.s32.totalorder %v2028, 0
        %v2031 = vxor.u32 %v2025, 2147483648
        %v2032 = vsel %vm2030, %v2017, %v2031
        %vm2033 = vcmp.eq.s32.totalorder %v2028, 2
        %v2034 = vxor.u32 %v2017, 2147483648
        %v2035 = vsel %vm2033, %v2034, %v2025
        %v2036 = vsel %vm2029, %v2032, %v2035
        %v2037 = vsel %vm2026, nan, %v2036
        %v2038 = vand.u32 2147483647, %v482
        %vm2039 = vcmp.le.f32.partialorder %v2038, 0.7853982
        %vm2040 = vcmp.lt.s32.totalorder %v482, 0
        %v2041 = vand.u32 %v482, 2139095040
        %v2042 = vshrl.u32 %v2041, 23
        %v2043 = vsub.s32 %v2042, 127
        %v2044 = vand.u32 2147483647, %v482
        %v2045 = vand.u32 %v2044, 8388607
        %v2046 = vor.u32 %v2045, 8388608
        %v2047 = vsub.s32 0, %v2046
        %v2048 = vadd.s32 %v2043, 1
        %vm2049 = vcmp.gt.s32.totalorder %v2048, 0
        %v2050 = vsel %vm2049, %v2048, 0
        %v2051 = vshrl.u32 %v2050, 5
        %v2052 = vand.u32 %v2050, 31
        %v2053 = vsub.s32 32, %v2052
        %v2054 = vshrl.u32 683565275, %v2053
        %v2055 = vshll.u32 683565275, %v2052
        %v2056 = vshrl.u32 2475754826, %v2053
        %v2057 = vor.u32 %v2055, %v2056
        %v2058 = vshll.u32 2475754826, %v2052
        %v2059 = vshrl.u32 2131351028, %v2053
        %v2060 = vor.u32 %v2058, %v2059
        %v2061 = vshll.u32 2131351028, %v2052
        %v2062 = vshrl.u32 2102212464, %v2053
        %v2063 = vor.u32 %v2061, %v2062
        %v2064 = vshll.u32 2102212464, %v2052
        %v2065 = vshrl.u32 920167782, %v2053
        %v2066 = vor.u32 %v2064, %v2065
        %v2067 = vshll.u32 920167782, %v2052
        %v2068 = vshrl.u32 1326507024, %v2053
        %v2069 = vor.u32 %v2067, %v2068
        %vm2070 = vcmp.lt.s32.totalorder %v2051, 1
        %vm2071 = vcmp.lt.s32.totalorder %v2051, 2
        %vm2072 = vcmp.lt.s32.totalorder %v2051, 3
        %vm2073 = vcmp.lt.s32.totalorder %v2051, 4
        %v2074 = vsel %vm2070, %v2054, %v2057
        %v2075 = vsel %vm2073, %v2063, 2102212464
        %v2076 = vsel %vm2072, %v2060, %v2075
        %v2077 = vsel %vm2071, %v2074, %v2076
        %v2078 = vsel %vm2070, %v2057, %v2060
        %v2079 = vsel %vm2073, %v2066, 920167782
        %v2080 = vsel %vm2072, %v2063, %v2079
        %v2081 = vsel %vm2071, %v2078, %v2080
        %v2082 = vsel %vm2070, %v2060, %v2063
        %v2083 = vsel %vm2073, %v2069, 1326507024
        %v2084 = vsel %vm2072, %v2066, %v2083
        %v2085 = vsel %vm2071, %v2082, %v2084
        %v2086 = vshll.u32 %v2046, 8
        %v2087 = vand.u32 %v2086, 65535
        %v2088 = vshrl.u32 %v2086, 16
        %v2089 = vand.u32 %v2085, 65535
        %v2090 = vshrl.u32 %v2085, 16
        %v2091 = vmul.u32 %v2087, %v2089
        %v2092 = vmul.u32 %v2087, %v2090
        %v2093 = vmul.u32 %v2088, %v2089
        %v2094 = vmul.u32 %v2088, %v2090
        %v2095 = vshll.u32 %v2092, 16
        %v2096 = vshrl.u32 %v2092, 16
        %v2097 = vshll.u32 %v2093, 16
        %v2098 = vshrl.u32 %v2093, 16
        %vm2099 = vc.u32 %v2091, %v2095
        %v2100 = vsel %vm2099, 1, 0
        %v2101 = vadd.s32 %v2091, %v2095
        %v2102 = vadd.s32 %v2094, %v2100
        %vm2103 = vc.u32 %v2101, %v2097
        %v2104 = vsel %vm2103, 1, 0
        %v2105 = vadd.s32 %v2101, %v2097
        %v2106 = vadd.s32 %v2102, %v2104
        %v2107 = vadd.s32 %v2106, %v2096
        %v2108 = vadd.s32 %v2107, %v2098
        %v2109 = vand.u32 %v2086, 65535
        %v2110 = vshrl.u32 %v2086, 16
        %v2111 = vand.u32 %v2081, 65535
        %v2112 = vshrl.u32 %v2081, 16
        %v2113 = vmul.u32 %v2109, %v2111
        %v2114 = vmul.u32 %v2109, %v2112
        %v2115 = vmul.u32 %v2110, %v2111
        %v2116 = vmul.u32 %v2110, %v2112
        %v2117 = vshll.u32 %v2114, 16
        %v2118 = vshrl.u32 %v2114, 16
        %v2119 = vshll.u32 %v2115, 16
        %v2120 = vshrl.u32 %v2115, 16
        %vm2121 = vc.u32 %v2113, %v2117
        %v2122 = vsel %vm2121, 1, 0
        %v2123 = vadd.s32 %v2113, %v2117
        %v2124 = vadd.s32 %v2116, %v2122
        %vm2125 = vc.u32 %v2123, %v2119
        %v2126 = vsel %vm2125, 1, 0
        %v2127 = vadd.s32 %v2123, %v2119
        %v2128 = vadd.s32 %v2124, %v2126
        %v2129 = vadd.s32 %v2128, %v2118
        %v2130 = vadd.s32 %v2129, %v2120
        %v2131 = vmul.u32 %v2086, %v2077
        %v2132 = vadd.s32 %v2108, %v2127
        %vm2133 = vc.u32 %v2108, %v2127
        %v2134 = vadd.s32 %v2130, 1
        %v2135 = vsel %vm2133, %v2134, %v2130
        %v2136 = vadd.s32 %v2131, %v2135
        %v2137 = vadd.s32 %v2136, 536870912
        %v2138 = vshrl.u32 %v2137, 30
        %v2139 = vshll.u32 %v2138, 30
        %v2140 = vsub.s32 %v2136, %v2139
        %vm2141 = vcmp.lt.s32.totalorder %v2140, 0
        %v2142 = vsub.s32 0, %v2140
        %v2143 = vsel %vm2141, %v2142, %v2140
        %v2144 = vclz %v2143
        %v2145 = vsub.s32 %v2144, 2
        %vm2146 = vcmp.gt.s32.totalorder 0, %v2145
        %v2147 = vsel %vm2146, 0, %v2145
        %v2148 = vsub.s32 32, %v2147
        %v2149 = vshll.u32 %v2140, %v2147
        %v2150 = vshrl.u32 %v2132, %v2148
        %v2151 = vor.u32 %v2149, %v2150
        %v2152 = vsub.s32 4294967266, %v2147
        %v2153 = vadd.s32 %v2152, 127
        %v2154 = vshll.u32 %v2153, 23
        %v2155 = vor.u32 4788187, %v2154
        %v2156 = vand.u32 2147483647, %v2155
        %v2158 = vcvt.s32.f32 %v2151
        %v2159 = vmul.f32 %v2158, %v2156
        %v2160 = vxor.u32 %v2159, 2147483648
        %v2161 = vsel %vm2040, %v2160, %v2159
        %v2162 = vsub.s32 4, %v2138
        %v2163 = vsel %vm2040, %v2162, %v2138
        %v2164 = vsel %vm2039, %v482, %v2161
        %v2165 = vsel %vm2039, 0, %v2163
        %v2166 = vmul.f32 %v2164, %v2164
        %v2167 = vmul.f32 %v2166, -0.001358992
        %v2168 = vadd.f32 %v2167, 0.041655596
        %v2169 = vmul.f32 %v2166, %v2168
        %v2170 = vadd.f32 %v2169, -0.4999988
        %v2171 = vmul.f32 %v2166, %v2170
        %v2172 = vadd.f32 1.0, %v2171
        %v2173 = vmul.f32 %v2164, %v2164
        %v2174 = vmul.f32 %v2173, -0.00019511016
        %v2175 = vadd.f32 %v2174, 0.008332121
        %v2176 = vmul.f32 %v2173, %v2175
        %v2177 = vadd.f32 %v2176, -0.16666654
        %v2178 = vmul.f32 %v2173, %v2177
        %v2179 = vadd.f32 %v2178, 1.0
        %v2180 = vmul.f32 %v2179, %v2164
        %vm2181 = vweird.f32 %v482
        %v2182 = vadd.s32 %v2165, 3
        %v2183 = vand.u32 %v2182, 3
        %vm2184 = vcmp.lt.s32.totalorder %v2183, 2
        %vm2185 = vcmp.eq.s32.totalorder %v2183, 0
        %v2186 = vxor.u32 %v2180, 2147483648
        %v2187 = vsel %vm2185, %v2172, %v2186
        %vm2188 = vcmp.eq.s32.totalorder %v2183, 2
        %v2189 = vxor.u32 %v2172, 2147483648
        %v2190 = vsel %vm2188, %v2189, %v2180
        %v2191 = vsel %vm2184, %v2187, %v2190
        %v2192 = vsel %vm2181, nan, %v2191
        %v2193 = vand.u32 2147483647, %v483
        %vm2194 = vcmp.le.f32.partialorder %v2193, 0.7853982
        %vm2195 = vcmp.lt.s32.totalorder %v483, 0
        %v2196 = vand.u32 %v483, 2139095040
        %v2197 = vshrl.u32 %v2196, 23
        %v2198 = vsub.s32 %v2197, 127
        %v2199 = vand.u32 2147483647, %v483
        %v2200 = vand.u32 %v2199, 8388607
        %v2201 = vor.u32 %v2200, 8388608
        %v2202 = vsub.s32 0, %v2201
        %v2203 = vadd.s32 %v2198, 1
        %vm2204 = vcmp.gt.s32.totalorder %v2203, 0
        %v2205 = vsel %vm2204, %v2203, 0
        %v2206 = vshrl.u32 %v2205, 5
        %v2207 = vand.u32 %v2205, 31
        %v2208 = vsub.s32 32, %v2207
        %v2209 = vshrl.u32 683565275, %v2208
        %v2210 = vshll.u32 683565275, %v2207
        %v2211 = vshrl.u32 2475754826, %v2208
        %v2212 = vor.u32 %v2210, %v2211
        %v2213 = vshll.u32 2475754826, %v2207
        %v2214 = vshrl.u32 2131351028, %v2208
        %v2215 = vor.u32 %v2213, %v2214
        %v2216 = vshll.u32 2131351028, %v2207
        %v2217 = vshrl.u32 2102212464, %v2208
        %v2218 = vor.u32 %v2216, %v2217
        %v2219 = vshll.u32 2102212464, %v2207
        %v2220 = vshrl.u32 920167782, %v2208
        %v2221 = vor.u32 %v2219, %v2220
        %v2222 = vshll.u32 920167782, %v2207
        %v2223 = vshrl.u32 1326507024, %v2208
        %v2224 = vor.u32 %v2222, %v2223
        %vm2225 = vcmp.lt.s32.totalorder %v2206, 1
        %vm2226 = vcmp.lt.s32.totalorder %v2206, 2
        %vm2227 = vcmp.lt.s32.totalorder %v2206, 3
        %vm2228 = vcmp.lt.s32.totalorder %v2206, 4
        %v2229 = vsel %vm2225, %v2209, %v2212
        %v2230 = vsel %vm2228, %v2218, 2102212464
        %v2231 = vsel %vm2227, %v2215, %v2230
        %v2232 = vsel %vm2226, %v2229, %v2231
        %v2233 = vsel %vm2225, %v2212, %v2215
        %v2234 = vsel %vm2228, %v2221, 920167782
        %v2235 = vsel %vm2227, %v2218, %v2234
        %v2236 = vsel %vm2226, %v2233, %v2235
        %v2237 = vsel %vm2225, %v2215, %v2218
        %v2238 = vsel %vm2228, %v2224, 1326507024
        %v2239 = vsel %vm2227, %v2221, %v2238
        %v2240 = vsel %vm2226, %v2237, %v2239
        %v2241 = vshll.u32 %v2201, 8
        %v2242 = vand.u32 %v2241, 65535
        %v2243 = vshrl.u32 %v2241, 16
        %v2244 = vand.u32 %v2240, 65535
        %v2245 = vshrl.u32 %v2240, 16
        %v2246 = vmul.u32 %v2242, %v2244
        %v2247 = vmul.u32 %v2242, %v2245
        %v2248 = vmul.u32 %v2243, %v2244
        %v2249 = vmul.u32 %v2243, %v2245
        %v2250 = vshll.u32 %v2247, 16
        %v2251 = vshrl.u32 %v2247, 16
        %v2252 = vshll.u32 %v2248, 16
        %v2253 = vshrl.u32 %v2248, 16
        %vm2254 = vc.u32 %v2246, %v2250
        %v2255 = vsel %vm2254, 1, 0
        %v2256 = vadd.s32 %v2246, %v2250
        %v2257 = vadd.s32 %v2249, %v2255
        %vm2258 = vc.u32 %v2256, %v2252
        %v2259 = vsel %vm2258, 1, 0
        %v2260 = vadd.s32 %v2256, %v2252
        %v2261 = vadd.s32 %v2257, %v2259
        %v2262 = vadd.s32 %v2261, %v2251
        %v2263 = vadd.s32 %v2262, %v2253
        %v2264 = vand.u32 %v2241, 65535
        %v2265 = vshrl.u32 %v2241, 16
        %v2266 = vand.u32 %v2236, 65535
        %v2267 = vshrl.u32 %v2236, 16
        %v2268 = vmul.u32 %v2264, %v2266
        %v2269 = vmul.u32 %v2264, %v2267
        %v2270 = vmul.u32 %v2265, %v2266
        %v2271 = vmul.u32 %v2265, %v2267
        %v2272 = vshll.u32 %v2269, 16
        %v2273 = vshrl.u32 %v2269, 16
        %v2274 = vshll.u32 %v2270, 16
        %v2275 = vshrl.u32 %v2270, 16
        %vm2276 = vc.u32 %v2268, %v2272
        %v2277 = vsel %vm2276, 1, 0
        %v2278 = vadd.s32 %v2268, %v2272
        %v2279 = vadd.s32 %v2271, %v2277
        %vm2280 = vc.u32 %v2278, %v2274
        %v2281 = vsel %vm2280, 1, 0
        %v2282 = vadd.s32 %v2278, %v2274
        %v2283 = vadd.s32 %v2279, %v2281
        %v2284 = vadd.s32 %v2283, %v2273
        %v2285 = vadd.s32 %v2284, %v2275
        %v2286 = vmul.u32 %v2241, %v2232
        %v2287 = vadd.s32 %v2263, %v2282
        %vm2288 = vc.u32 %v2263, %v2282
        %v2289 = vadd.s32 %v2285, 1
        %v2290 = vsel %vm2288, %v2289, %v2285
        %v2291 = vadd.s32 %v2286, %v2290
        %v2292 = vadd.s32 %v2291, 536870912
        %v2293 = vshrl.u32 %v2292, 30
        %v2294 = vshll.u32 %v2293, 30
        %v2295 = vsub.s32 %v2291, %v2294
        %vm2296 = vcmp.lt.s32.totalorder %v2295, 0
        %v2297 = vsub.s32 0, %v2295
        %v2298 = vsel %vm2296, %v2297, %v2295
        %v2299 = vclz %v2298
        %v2300 = vsub.s32 %v2299, 2
        %vm2301 = vcmp.gt.s32.totalorder 0, %v2300
        %v2302 = vsel %vm2301, 0, %v2300
        %v2303 = vsub.s32 32, %v2302
        %v2304 = vshll.u32 %v2295, %v2302
        %v2305 = vshrl.u32 %v2287, %v2303
        %v2306 = vor.u32 %v2304, %v2305
        %v2307 = vsub.s32 4294967266, %v2302
        %v2308 = vadd.s32 %v2307, 127
        %v2309 = vshll.u32 %v2308, 23
        %v2310 = vor.u32 4788187, %v2309
        %v2311 = vand.u32 2147483647, %v2310
        %v2313 = vcvt.s32.f32 %v2306
        %v2314 = vmul.f32 %v2313, %v2311
        %v2315 = vxor.u32 %v2314, 2147483648
        %v2316 = vsel %vm2195, %v2315, %v2314
        %v2317 = vsub.s32 4, %v2293
        %v2318 = vsel %vm2195, %v2317, %v2293
        %v2319 = vsel %vm2194, %v483, %v2316
        %v2320 = vsel %vm2194, 0, %v2318
        %v2321 = vmul.f32 %v2319, %v2319
        %v2322 = vmul.f32 %v2321, -0.001358992
        %v2323 = vadd.f32 %v2322, 0.041655596
        %v2324 = vmul.f32 %v2321, %v2323
        %v2325 = vadd.f32 %v2324, -0.4999988
        %v2326 = vmul.f32 %v2321, %v2325
        %v2327 = vadd.f32 1.0, %v2326
        %v2328 = vmul.f32 %v2319, %v2319
        %v2329 = vmul.f32 %v2328, -0.00019511016
        %v2330 = vadd.f32 %v2329, 0.008332121
        %v2331 = vmul.f32 %v2328, %v2330
        %v2332 = vadd.f32 %v2331, -0.16666654
        %v2333 = vmul.f32 %v2328, %v2332
        %v2334 = vadd.f32 %v2333, 1.0
        %v2335 = vmul.f32 %v2334, %v2319
        %vm2336 = vweird.f32 %v483
        %v2337 = vadd.s32 %v2320, 3
        %v2338 = vand.u32 %v2337, 3
        %vm2339 = vcmp.lt.s32.totalorder %v2338, 2
        %vm2340 = vcmp.eq.s32.totalorder %v2338, 0
        %v2341 = vxor.u32 %v2335, 2147483648
        %v2342 = vsel %vm2340, %v2327, %v2341
        %vm2343 = vcmp.eq.s32.totalorder %v2338, 2
        %v2344 = vxor.u32 %v2327, 2147483648
        %v2345 = vsel %vm2343, %v2344, %v2335
        %v2346 = vsel %vm2339, %v2342, %v2345
        %v2347 = vsel %vm2336, nan, %v2346
        %v2348 = vand.u32 2147483647, %v484
        %vm2349 = vcmp.le.f32.partialorder %v2348, 0.7853982
        %vm2350 = vcmp.lt.s32.totalorder %v484, 0
        %v2351 = vand.u32 %v484, 2139095040
        %v2352 = vshrl.u32 %v2351, 23
        %v2353 = vsub.s32 %v2352, 127
        %v2354 = vand.u32 2147483647, %v484
        %v2355 = vand.u32 %v2354, 8388607
        %v2356 = vor.u32 %v2355, 8388608
        %v2357 = vsub.s32 0, %v2356
        %v2358 = vadd.s32 %v2353, 1
        %vm2359 = vcmp.gt.s32.totalorder %v2358, 0
        %v2360 = vsel %vm2359, %v2358, 0
        %v2361 = vshrl.u32 %v2360, 5
        %v2362 = vand.u32 %v2360, 31
        %v2363 = vsub.s32 32, %v2362
        %v2364 = vshrl.u32 683565275, %v2363
        %v2365 = vshll.u32 683565275, %v2362
        %v2366 = vshrl.u32 2475754826, %v2363
        %v2367 = vor.u32 %v2365, %v2366
        %v2368 = vshll.u32 2475754826, %v2362
        %v2369 = vshrl.u32 2131351028, %v2363
        %v2370 = vor.u32 %v2368, %v2369
        %v2371 = vshll.u32 2131351028, %v2362
        %v2372 = vshrl.u32 2102212464, %v2363
        %v2373 = vor.u32 %v2371, %v2372
        %v2374 = vshll.u32 2102212464, %v2362
        %v2375 = vshrl.u32 920167782, %v2363
        %v2376 = vor.u32 %v2374, %v2375
        %v2377 = vshll.u32 920167782, %v2362
        %v2378 = vshrl.u32 1326507024, %v2363
        %v2379 = vor.u32 %v2377, %v2378
        %vm2380 = vcmp.lt.s32.totalorder %v2361, 1
        %vm2381 = vcmp.lt.s32.totalorder %v2361, 2
        %vm2382 = vcmp.lt.s32.totalorder %v2361, 3
        %vm2383 = vcmp.lt.s32.totalorder %v2361, 4
        %v2384 = vsel %vm2380, %v2364, %v2367
        %v2385 = vsel %vm2383, %v2373, 2102212464
        %v2386 = vsel %vm2382, %v2370, %v2385
        %v2387 = vsel %vm2381, %v2384, %v2386
        %v2388 = vsel %vm2380, %v2367, %v2370
        %v2389 = vsel %vm2383, %v2376, 920167782
        %v2390 = vsel %vm2382, %v2373, %v2389
        %v2391 = vsel %vm2381, %v2388, %v2390
        %v2392 = vsel %vm2380, %v2370, %v2373
        %v2393 = vsel %vm2383, %v2379, 1326507024
        %v2394 = vsel %vm2382, %v2376, %v2393
        %v2395 = vsel %vm2381, %v2392, %v2394
        %v2396 = vshll.u32 %v2356, 8
        %v2397 = vand.u32 %v2396, 65535
        %v2398 = vshrl.u32 %v2396, 16
        %v2399 = vand.u32 %v2395, 65535
        %v2400 = vshrl.u32 %v2395, 16
        %v2401 = vmul.u32 %v2397, %v2399
        %v2402 = vmul.u32 %v2397, %v2400
        %v2403 = vmul.u32 %v2398, %v2399
        %v2404 = vmul.u32 %v2398, %v2400
        %v2405 = vshll.u32 %v2402, 16
        %v2406 = vshrl.u32 %v2402, 16
        %v2407 = vshll.u32 %v2403, 16
        %v2408 = vshrl.u32 %v2403, 16
        %vm2409 = vc.u32 %v2401, %v2405
        %v2410 = vsel %vm2409, 1, 0
        %v2411 = vadd.s32 %v2401, %v2405
        %v2412 = vadd.s32 %v2404, %v2410
        %vm2413 = vc.u32 %v2411, %v2407
        %v2414 = vsel %vm2413, 1, 0
        %v2415 = vadd.s32 %v2411, %v2407
        %v2416 = vadd.s32 %v2412, %v2414
        %v2417 = vadd.s32 %v2416, %v2406
        %v2418 = vadd.s32 %v2417, %v2408
        %v2419 = vand.u32 %v2396, 65535
        %v2420 = vshrl.u32 %v2396, 16
        %v2421 = vand.u32 %v2391, 65535
        %v2422 = vshrl.u32 %v2391, 16
        %v2423 = vmul.u32 %v2419, %v2421
        %v2424 = vmul.u32 %v2419, %v2422
        %v2425 = vmul.u32 %v2420, %v2421
        %v2426 = vmul.u32 %v2420, %v2422
        %v2427 = vshll.u32 %v2424, 16
        %v2428 = vshrl.u32 %v2424, 16
        %v2429 = vshll.u32 %v2425, 16
        %v2430 = vshrl.u32 %v2425, 16
        %vm2431 = vc.u32 %v2423, %v2427
        %v2432 = vsel %vm2431, 1, 0
        %v2433 = vadd.s32 %v2423, %v2427
        %v2434 = vadd.s32 %v2426, %v2432
        %vm2435 = vc.u32 %v2433, %v2429
        %v2436 = vsel %vm2435, 1, 0
        %v2437 = vadd.s32 %v2433, %v2429
        %v2438 = vadd.s32 %v2434, %v2436
        %v2439 = vadd.s32 %v2438, %v2428
        %v2440 = vadd.s32 %v2439, %v2430
        %v2441 = vmul.u32 %v2396, %v2387
        %v2442 = vadd.s32 %v2418, %v2437
        %vm2443 = vc.u32 %v2418, %v2437
        %v2444 = vadd.s32 %v2440, 1
        %v2445 = vsel %vm2443, %v2444, %v2440
        %v2446 = vadd.s32 %v2441, %v2445
        %v2447 = vadd.s32 %v2446, 536870912
        %v2448 = vshrl.u32 %v2447, 30
        %v2449 = vshll.u32 %v2448, 30
        %v2450 = vsub.s32 %v2446, %v2449
        %vm2451 = vcmp.lt.s32.totalorder %v2450, 0
        %v2452 = vsub.s32 0, %v2450
        %v2453 = vsel %vm2451, %v2452, %v2450
        %v2454 = vclz %v2453
        %v2455 = vsub.s32 %v2454, 2
        %vm2456 = vcmp.gt.s32.totalorder 0, %v2455
        %v2457 = vsel %vm2456, 0, %v2455
        %v2458 = vsub.s32 32, %v2457
        %v2459 = vshll.u32 %v2450, %v2457
        %v2460 = vshrl.u32 %v2442, %v2458
        %v2461 = vor.u32 %v2459, %v2460
        %v2462 = vsub.s32 4294967266, %v2457
        %v2463 = vadd.s32 %v2462, 127
        %v2464 = vshll.u32 %v2463, 23
        %v2465 = vor.u32 4788187, %v2464
        %v2466 = vand.u32 2147483647, %v2465
        %v2468 = vcvt.s32.f32 %v2461
        %v2469 = vmul.f32 %v2468, %v2466
        %v2470 = vxor.u32 %v2469, 2147483648
        %v2471 = vsel %vm2350, %v2470, %v2469
        %v2472 = vsub.s32 4, %v2448
        %v2473 = vsel %vm2350, %v2472, %v2448
        %v2474 = vsel %vm2349, %v484, %v2471
        %v2475 = vsel %vm2349, 0, %v2473
        %v2476 = vmul.f32 %v2474, %v2474
        %v2477 = vmul.f32 %v2476, -0.001358992
        %v2478 = vadd.f32 %v2477, 0.041655596
        %v2479 = vmul.f32 %v2476, %v2478
        %v2480 = vadd.f32 %v2479, -0.4999988
        %v2481 = vmul.f32 %v2476, %v2480
        %v2482 = vadd.f32 1.0, %v2481
        %v2483 = vmul.f32 %v2474, %v2474
        %v2484 = vmul.f32 %v2483, -0.00019511016
        %v2485 = vadd.f32 %v2484, 0.008332121
        %v2486 = vmul.f32 %v2483, %v2485
        %v2487 = vadd.f32 %v2486, -0.16666654
        %v2488 = vmul.f32 %v2483, %v2487
        %v2489 = vadd.f32 %v2488, 1.0
        %v2490 = vmul.f32 %v2489, %v2474
        %vm2491 = vweird.f32 %v484
        %v2492 = vadd.s32 %v2475, 3
        %v2493 = vand.u32 %v2492, 3
        %vm2494 = vcmp.lt.s32.totalorder %v2493, 2
        %vm2495 = vcmp.eq.s32.totalorder %v2493, 0
        %v2496 = vxor.u32 %v2490, 2147483648
        %v2497 = vsel %vm2495, %v2482, %v2496
        %vm2498 = vcmp.eq.s32.totalorder %v2493, 2
        %v2499 = vxor.u32 %v2482, 2147483648
        %v2500 = vsel %vm2498, %v2499, %v2490
        %v2501 = vsel %vm2494, %v2497, %v2500
        %v2502 = vsel %vm2491, nan, %v2501
        %v2503 = vand.u32 2147483647, %v485
        %vm2504 = vcmp.le.f32.partialorder %v2503, 0.7853982
        %vm2505 = vcmp.lt.s32.totalorder %v485, 0
        %v2506 = vand.u32 %v485, 2139095040
        %v2507 = vshrl.u32 %v2506, 23
        %v2508 = vsub.s32 %v2507, 127
        %v2509 = vand.u32 2147483647, %v485
        %v2510 = vand.u32 %v2509, 8388607
        %v2511 = vor.u32 %v2510, 8388608
        %v2512 = vsub.s32 0, %v2511
        %v2513 = vadd.s32 %v2508, 1
        %vm2514 = vcmp.gt.s32.totalorder %v2513, 0
        %v2515 = vsel %vm2514, %v2513, 0
        %v2516 = vshrl.u32 %v2515, 5
        %v2517 = vand.u32 %v2515, 31
        %v2518 = vsub.s32 32, %v2517
        %v2519 = vshrl.u32 683565275, %v2518
        %v2520 = vshll.u32 683565275, %v2517
        %v2521 = vshrl.u32 2475754826, %v2518
        %v2522 = vor.u32 %v2520, %v2521
        %v2523 = vshll.u32 2475754826, %v2517
        %v2524 = vshrl.u32 2131351028, %v2518
        %v2525 = vor.u32 %v2523, %v2524
        %v2526 = vshll.u32 2131351028, %v2517
        %v2527 = vshrl.u32 2102212464, %v2518
        %v2528 = vor.u32 %v2526, %v2527
        %v2529 = vshll.u32 2102212464, %v2517
        %v2530 = vshrl.u32 920167782, %v2518
        %v2531 = vor.u32 %v2529, %v2530
        %v2532 = vshll.u32 920167782, %v2517
        %v2533 = vshrl.u32 1326507024, %v2518
        %v2534 = vor.u32 %v2532, %v2533
        %vm2535 = vcmp.lt.s32.totalorder %v2516, 1
        %vm2536 = vcmp.lt.s32.totalorder %v2516, 2
        %vm2537 = vcmp.lt.s32.totalorder %v2516, 3
        %vm2538 = vcmp.lt.s32.totalorder %v2516, 4
        %v2539 = vsel %vm2535, %v2519, %v2522
        %v2540 = vsel %vm2538, %v2528, 2102212464
        %v2541 = vsel %vm2537, %v2525, %v2540
        %v2542 = vsel %vm2536, %v2539, %v2541
        %v2543 = vsel %vm2535, %v2522, %v2525
        %v2544 = vsel %vm2538, %v2531, 920167782
        %v2545 = vsel %vm2537, %v2528, %v2544
        %v2546 = vsel %vm2536, %v2543, %v2545
        %v2547 = vsel %vm2535, %v2525, %v2528
        %v2548 = vsel %vm2538, %v2534, 1326507024
        %v2549 = vsel %vm2537, %v2531, %v2548
        %v2550 = vsel %vm2536, %v2547, %v2549
        %v2551 = vshll.u32 %v2511, 8
        %v2552 = vand.u32 %v2551, 65535
        %v2553 = vshrl.u32 %v2551, 16
        %v2554 = vand.u32 %v2550, 65535
        %v2555 = vshrl.u32 %v2550, 16
        %v2556 = vmul.u32 %v2552, %v2554
        %v2557 = vmul.u32 %v2552, %v2555
        %v2558 = vmul.u32 %v2553, %v2554
        %v2559 = vmul.u32 %v2553, %v2555
        %v2560 = vshll.u32 %v2557, 16
        %v2561 = vshrl.u32 %v2557, 16
        %v2562 = vshll.u32 %v2558, 16
        %v2563 = vshrl.u32 %v2558, 16
        %vm2564 = vc.u32 %v2556, %v2560
        %v2565 = vsel %vm2564, 1, 0
        %v2566 = vadd.s32 %v2556, %v2560
        %v2567 = vadd.s32 %v2559, %v2565
        %vm2568 = vc.u32 %v2566, %v2562
        %v2569 = vsel %vm2568, 1, 0
        %v2570 = vadd.s32 %v2566, %v2562
        %v2571 = vadd.s32 %v2567, %v2569
        %v2572 = vadd.s32 %v2571, %v2561
        %v2573 = vadd.s32 %v2572, %v2563
        %v2574 = vand.u32 %v2551, 65535
        %v2575 = vshrl.u32 %v2551, 16
        %v2576 = vand.u32 %v2546, 65535
        %v2577 = vshrl.u32 %v2546, 16
        %v2578 = vmul.u32 %v2574, %v2576
        %v2579 = vmul.u32 %v2574, %v2577
        %v2580 = vmul.u32 %v2575, %v2576
        %v2581 = vmul.u32 %v2575, %v2577
        %v2582 = vshll.u32 %v2579, 16
        %v2583 = vshrl.u32 %v2579, 16
        %v2584 = vshll.u32 %v2580, 16
        %v2585 = vshrl.u32 %v2580, 16
        %vm2586 = vc.u32 %v2578, %v2582
        %v2587 = vsel %vm2586, 1, 0
        %v2588 = vadd.s32 %v2578, %v2582
        %v2589 = vadd.s32 %v2581, %v2587
        %vm2590 = vc.u32 %v2588, %v2584
        %v2591 = vsel %vm2590, 1, 0
        %v2592 = vadd.s32 %v2588, %v2584
        %v2593 = vadd.s32 %v2589, %v2591
        %v2594 = vadd.s32 %v2593, %v2583
        %v2595 = vadd.s32 %v2594, %v2585
        %v2596 = vmul.u32 %v2551, %v2542
        %v2597 = vadd.s32 %v2573, %v2592
        %vm2598 = vc.u32 %v2573, %v2592
        %v2599 = vadd.s32 %v2595, 1
        %v2600 = vsel %vm2598, %v2599, %v2595
        %v2601 = vadd.s32 %v2596, %v2600
        %v2602 = vadd.s32 %v2601, 536870912
        %v2603 = vshrl.u32 %v2602, 30
        %v2604 = vshll.u32 %v2603, 30
        %v2605 = vsub.s32 %v2601, %v2604
        %vm2606 = vcmp.lt.s32.totalorder %v2605, 0
        %v2607 = vsub.s32 0, %v2605
        %v2608 = vsel %vm2606, %v2607, %v2605
        %v2609 = vclz %v2608
        %v2610 = vsub.s32 %v2609, 2
        %vm2611 = vcmp.gt.s32.totalorder 0, %v2610
        %v2612 = vsel %vm2611, 0, %v2610
        %v2613 = vsub.s32 32, %v2612
        %v2614 = vshll.u32 %v2605, %v2612
        %v2615 = vshrl.u32 %v2597, %v2613
        %v2616 = vor.u32 %v2614, %v2615
        %v2617 = vsub.s32 4294967266, %v2612
        %v2618 = vadd.s32 %v2617, 127
        %v2619 = vshll.u32 %v2618, 23
        %v2620 = vor.u32 4788187, %v2619
        %v2621 = vand.u32 2147483647, %v2620
        %v2623 = vcvt.s32.f32 %v2616
        %v2624 = vmul.f32 %v2623, %v2621
        %v2625 = vxor.u32 %v2624, 2147483648
        %v2626 = vsel %vm2505, %v2625, %v2624
        %v2627 = vsub.s32 4, %v2603
        %v2628 = vsel %vm2505, %v2627, %v2603
        %v2629 = vsel %vm2504, %v485, %v2626
        %v2630 = vsel %vm2504, 0, %v2628
        %v2631 = vmul.f32 %v2629, %v2629
        %v2632 = vmul.f32 %v2631, -0.001358992
        %v2633 = vadd.f32 %v2632, 0.041655596
        %v2634 = vmul.f32 %v2631, %v2633
        %v2635 = vadd.f32 %v2634, -0.4999988
        %v2636 = vmul.f32 %v2631, %v2635
        %v2637 = vadd.f32 1.0, %v2636
        %v2638 = vmul.f32 %v2629, %v2629
        %v2639 = vmul.f32 %v2638, -0.00019511016
        %v2640 = vadd.f32 %v2639, 0.008332121
        %v2641 = vmul.f32 %v2638, %v2640
        %v2642 = vadd.f32 %v2641, -0.16666654
        %v2643 = vmul.f32 %v2638, %v2642
        %v2644 = vadd.f32 %v2643, 1.0
        %v2645 = vmul.f32 %v2644, %v2629
        %vm2646 = vweird.f32 %v485
        %v2647 = vadd.s32 %v2630, 3
        %v2648 = vand.u32 %v2647, 3
        %vm2649 = vcmp.lt.s32.totalorder %v2648, 2
        %vm2650 = vcmp.eq.s32.totalorder %v2648, 0
        %v2651 = vxor.u32 %v2645, 2147483648
        %v2652 = vsel %vm2650, %v2637, %v2651
        %vm2653 = vcmp.eq.s32.totalorder %v2648, 2
        %v2654 = vxor.u32 %v2637, 2147483648
        %v2655 = vsel %vm2653, %v2654, %v2645
        %v2656 = vsel %vm2649, %v2652, %v2655
        %v2657 = vsel %vm2646, nan, %v2656
        %v2658 = vand.u32 2147483647, %v486
        %vm2659 = vcmp.le.f32.partialorder %v2658, 0.7853982
        %vm2660 = vcmp.lt.s32.totalorder %v486, 0
        %v2661 = vand.u32 %v486, 2139095040
        %v2662 = vshrl.u32 %v2661, 23
        %v2663 = vsub.s32 %v2662, 127
        %v2664 = vand.u32 2147483647, %v486
        %v2665 = vand.u32 %v2664, 8388607
        %v2666 = vor.u32 %v2665, 8388608
        %v2667 = vsub.s32 0, %v2666
        %v2668 = vadd.s32 %v2663, 1
        %vm2669 = vcmp.gt.s32.totalorder %v2668, 0
        %v2670 = vsel %vm2669, %v2668, 0
        %v2671 = vshrl.u32 %v2670, 5
        %v2672 = vand.u32 %v2670, 31
        %v2673 = vsub.s32 32, %v2672
        %v2674 = vshrl.u32 683565275, %v2673
        %v2675 = vshll.u32 683565275, %v2672
        %v2676 = vshrl.u32 2475754826, %v2673
        %v2677 = vor.u32 %v2675, %v2676
        %v2678 = vshll.u32 2475754826, %v2672
        %v2679 = vshrl.u32 2131351028, %v2673
        %v2680 = vor.u32 %v2678, %v2679
        %v2681 = vshll.u32 2131351028, %v2672
        %v2682 = vshrl.u32 2102212464, %v2673
        %v2683 = vor.u32 %v2681, %v2682
        %v2684 = vshll.u32 2102212464, %v2672
        %v2685 = vshrl.u32 920167782, %v2673
        %v2686 = vor.u32 %v2684, %v2685
        %v2687 = vshll.u32 920167782, %v2672
        %v2688 = vshrl.u32 1326507024, %v2673
        %v2689 = vor.u32 %v2687, %v2688
        %vm2690 = vcmp.lt.s32.totalorder %v2671, 1
        %vm2691 = vcmp.lt.s32.totalorder %v2671, 2
        %vm2692 = vcmp.lt.s32.totalorder %v2671, 3
        %vm2693 = vcmp.lt.s32.totalorder %v2671, 4
        %v2694 = vsel %vm2690, %v2674, %v2677
        %v2695 = vsel %vm2693, %v2683, 2102212464
        %v2696 = vsel %vm2692, %v2680, %v2695
        %v2697 = vsel %vm2691, %v2694, %v2696
        %v2698 = vsel %vm2690, %v2677, %v2680
        %v2699 = vsel %vm2693, %v2686, 920167782
        %v2700 = vsel %vm2692, %v2683, %v2699
        %v2701 = vsel %vm2691, %v2698, %v2700
        %v2702 = vsel %vm2690, %v2680, %v2683
        %v2703 = vsel %vm2693, %v2689, 1326507024
        %v2704 = vsel %vm2692, %v2686, %v2703
        %v2705 = vsel %vm2691, %v2702, %v2704
        %v2706 = vshll.u32 %v2666, 8
        %v2707 = vand.u32 %v2706, 65535
        %v2708 = vshrl.u32 %v2706, 16
        %v2709 = vand.u32 %v2705, 65535
        %v2710 = vshrl.u32 %v2705, 16
        %v2711 = vmul.u32 %v2707, %v2709
        %v2712 = vmul.u32 %v2707, %v2710
        %v2713 = vmul.u32 %v2708, %v2709
        %v2714 = vmul.u32 %v2708, %v2710
        %v2715 = vshll.u32 %v2712, 16
        %v2716 = vshrl.u32 %v2712, 16
        %v2717 = vshll.u32 %v2713, 16
        %v2718 = vshrl.u32 %v2713, 16
        %vm2719 = vc.u32 %v2711, %v2715
        %v2720 = vsel %vm2719, 1, 0
        %v2721 = vadd.s32 %v2711, %v2715
        %v2722 = vadd.s32 %v2714, %v2720
        %vm2723 = vc.u32 %v2721, %v2717
        %v2724 = vsel %vm2723, 1, 0
        %v2725 = vadd.s32 %v2721, %v2717
        %v2726 = vadd.s32 %v2722, %v2724
        %v2727 = vadd.s32 %v2726, %v2716
        %v2728 = vadd.s32 %v2727, %v2718
        %v2729 = vand.u32 %v2706, 65535
        %v2730 = vshrl.u32 %v2706, 16
        %v2731 = vand.u32 %v2701, 65535
        %v2732 = vshrl.u32 %v2701, 16
        %v2733 = vmul.u32 %v2729, %v2731
        %v2734 = vmul.u32 %v2729, %v2732
        %v2735 = vmul.u32 %v2730, %v2731
        %v2736 = vmul.u32 %v2730, %v2732
        %v2737 = vshll.u32 %v2734, 16
        %v2738 = vshrl.u32 %v2734, 16
        %v2739 = vshll.u32 %v2735, 16
        %v2740 = vshrl.u32 %v2735, 16
        %vm2741 = vc.u32 %v2733, %v2737
        %v2742 = vsel %vm2741, 1, 0
        %v2743 = vadd.s32 %v2733, %v2737
        %v2744 = vadd.s32 %v2736, %v2742
        %vm2745 = vc.u32 %v2743, %v2739
        %v2746 = vsel %vm2745, 1, 0
        %v2747 = vadd.s32 %v2743, %v2739
        %v2748 = vadd.s32 %v2744, %v2746
        %v2749 = vadd.s32 %v2748, %v2738
        %v2750 = vadd.s32 %v2749, %v2740
        %v2751 = vmul.u32 %v2706, %v2697
        %v2752 = vadd.s32 %v2728, %v2747
        %vm2753 = vc.u32 %v2728, %v2747
        %v2754 = vadd.s32 %v2750, 1
        %v2755 = vsel %vm2753, %v2754, %v2750
        %v2756 = vadd.s32 %v2751, %v2755
        %v2757 = vadd.s32 %v2756, 536870912
        %v2758 = vshrl.u32 %v2757, 30
        %v2759 = vshll.u32 %v2758, 30
        %v2760 = vsub.s32 %v2756, %v2759
        %vm2761 = vcmp.lt.s32.totalorder %v2760, 0
        %v2762 = vsub.s32 0, %v2760
        %v2763 = vsel %vm2761, %v2762, %v2760
        %v2764 = vclz %v2763
        %v2765 = vsub.s32 %v2764, 2
        %vm2766 = vcmp.gt.s32.totalorder 0, %v2765
        %v2767 = vsel %vm2766, 0, %v2765
        %v2768 = vsub.s32 32, %v2767
        %v2769 = vshll.u32 %v2760, %v2767
        %v2770 = vshrl.u32 %v2752, %v2768
        %v2771 = vor.u32 %v2769, %v2770
        %v2772 = vsub.s32 4294967266, %v2767
        %v2773 = vadd.s32 %v2772, 127
        %v2774 = vshll.u32 %v2773, 23
        %v2775 = vor.u32 4788187, %v2774
        %v2776 = vand.u32 2147483647, %v2775
        %v2778 = vcvt.s32.f32 %v2771
        %v2779 = vmul.f32 %v2778, %v2776
        %v2780 = vxor.u32 %v2779, 2147483648
        %v2781 = vsel %vm2660, %v2780, %v2779
        %v2782 = vsub.s32 4, %v2758
        %v2783 = vsel %vm2660, %v2782, %v2758
        %v2784 = vsel %vm2659, %v486, %v2781
        %v2785 = vsel %vm2659, 0, %v2783
        %v2786 = vmul.f32 %v2784, %v2784
        %v2787 = vmul.f32 %v2786, -0.001358992
        %v2788 = vadd.f32 %v2787, 0.041655596
        %v2789 = vmul.f32 %v2786, %v2788
        %v2790 = vadd.f32 %v2789, -0.4999988
        %v2791 = vmul.f32 %v2786, %v2790
        %v2792 = vadd.f32 1.0, %v2791
        %v2793 = vmul.f32 %v2784, %v2784
        %v2794 = vmul.f32 %v2793, -0.00019511016
        %v2795 = vadd.f32 %v2794, 0.008332121
        %v2796 = vmul.f32 %v2793, %v2795
        %v2797 = vadd.f32 %v2796, -0.16666654
        %v2798 = vmul.f32 %v2793, %v2797
        %v2799 = vadd.f32 %v2798, 1.0
        %v2800 = vmul.f32 %v2799, %v2784
        %vm2801 = vweird.f32 %v486
        %v2802 = vadd.s32 %v2785, 3
        %v2803 = vand.u32 %v2802, 3
        %vm2804 = vcmp.lt.s32.totalorder %v2803, 2
        %vm2805 = vcmp.eq.s32.totalorder %v2803, 0
        %v2806 = vxor.u32 %v2800, 2147483648
        %v2807 = vsel %vm2805, %v2792, %v2806
        %vm2808 = vcmp.eq.s32.totalorder %v2803, 2
        %v2809 = vxor.u32 %v2792, 2147483648
        %v2810 = vsel %vm2808, %v2809, %v2800
        %v2811 = vsel %vm2804, %v2807, %v2810
        %v2812 = vsel %vm2801, nan, %v2811
        %v2813 = vand.u32 2147483647, %v487
        %vm2814 = vcmp.le.f32.partialorder %v2813, 0.7853982
        %vm2815 = vcmp.lt.s32.totalorder %v487, 0
        %v2816 = vand.u32 %v487, 2139095040
        %v2817 = vshrl.u32 %v2816, 23
        %v2818 = vsub.s32 %v2817, 127
        %v2819 = vand.u32 2147483647, %v487
        %v2820 = vand.u32 %v2819, 8388607
        %v2821 = vor.u32 %v2820, 8388608
        %v2822 = vsub.s32 0, %v2821
        %v2823 = vadd.s32 %v2818, 1
        %vm2824 = vcmp.gt.s32.totalorder %v2823, 0
        %v2825 = vsel %vm2824, %v2823, 0
        %v2826 = vshrl.u32 %v2825, 5
        %v2827 = vand.u32 %v2825, 31
        %v2828 = vsub.s32 32, %v2827
        %v2829 = vshrl.u32 683565275, %v2828
        %v2830 = vshll.u32 683565275, %v2827
        %v2831 = vshrl.u32 2475754826, %v2828
        %v2832 = vor.u32 %v2830, %v2831
        %v2833 = vshll.u32 2475754826, %v2827
        %v2834 = vshrl.u32 2131351028, %v2828
        %v2835 = vor.u32 %v2833, %v2834
        %v2836 = vshll.u32 2131351028, %v2827
        %v2837 = vshrl.u32 2102212464, %v2828
        %v2838 = vor.u32 %v2836, %v2837
        %v2839 = vshll.u32 2102212464, %v2827
        %v2840 = vshrl.u32 920167782, %v2828
        %v2841 = vor.u32 %v2839, %v2840
        %v2842 = vshll.u32 920167782, %v2827
        %v2843 = vshrl.u32 1326507024, %v2828
        %v2844 = vor.u32 %v2842, %v2843
        %vm2845 = vcmp.lt.s32.totalorder %v2826, 1
        %vm2846 = vcmp.lt.s32.totalorder %v2826, 2
        %vm2847 = vcmp.lt.s32.totalorder %v2826, 3
        %vm2848 = vcmp.lt.s32.totalorder %v2826, 4
        %v2849 = vsel %vm2845, %v2829, %v2832
        %v2850 = vsel %vm2848, %v2838, 2102212464
        %v2851 = vsel %vm2847, %v2835, %v2850
        %v2852 = vsel %vm2846, %v2849, %v2851
        %v2853 = vsel %vm2845, %v2832, %v2835
        %v2854 = vsel %vm2848, %v2841, 920167782
        %v2855 = vsel %vm2847, %v2838, %v2854
        %v2856 = vsel %vm2846, %v2853, %v2855
        %v2857 = vsel %vm2845, %v2835, %v2838
        %v2858 = vsel %vm2848, %v2844, 1326507024
        %v2859 = vsel %vm2847, %v2841, %v2858
        %v2860 = vsel %vm2846, %v2857, %v2859
        %v2861 = vshll.u32 %v2821, 8
        %v2862 = vand.u32 %v2861, 65535
        %v2863 = vshrl.u32 %v2861, 16
        %v2864 = vand.u32 %v2860, 65535
        %v2865 = vshrl.u32 %v2860, 16
        %v2866 = vmul.u32 %v2862, %v2864
        %v2867 = vmul.u32 %v2862, %v2865
        %v2868 = vmul.u32 %v2863, %v2864
        %v2869 = vmul.u32 %v2863, %v2865
        %v2870 = vshll.u32 %v2867, 16
        %v2871 = vshrl.u32 %v2867, 16
        %v2872 = vshll.u32 %v2868, 16
        %v2873 = vshrl.u32 %v2868, 16
        %vm2874 = vc.u32 %v2866, %v2870
        %v2875 = vsel %vm2874, 1, 0
        %v2876 = vadd.s32 %v2866, %v2870
        %v2877 = vadd.s32 %v2869, %v2875
        %vm2878 = vc.u32 %v2876, %v2872
        %v2879 = vsel %vm2878, 1, 0
        %v2880 = vadd.s32 %v2876, %v2872
        %v2881 = vadd.s32 %v2877, %v2879
        %v2882 = vadd.s32 %v2881, %v2871
        %v2883 = vadd.s32 %v2882, %v2873
        %v2884 = vand.u32 %v2861, 65535
        %v2885 = vshrl.u32 %v2861, 16
        %v2886 = vand.u32 %v2856, 65535
        %v2887 = vshrl.u32 %v2856, 16
        %v2888 = vmul.u32 %v2884, %v2886
        %v2889 = vmul.u32 %v2884, %v2887
        %v2890 = vmul.u32 %v2885, %v2886
        %v2891 = vmul.u32 %v2885, %v2887
        %v2892 = vshll.u32 %v2889, 16
        %v2893 = vshrl.u32 %v2889, 16
        %v2894 = vshll.u32 %v2890, 16
        %v2895 = vshrl.u32 %v2890, 16
        %vm2896 = vc.u32 %v2888, %v2892
        %v2897 = vsel %vm2896, 1, 0
        %v2898 = vadd.s32 %v2888, %v2892
        %v2899 = vadd.s32 %v2891, %v2897
        %vm2900 = vc.u32 %v2898, %v2894
        %v2901 = vsel %vm2900, 1, 0
        %v2902 = vadd.s32 %v2898, %v2894
        %v2903 = vadd.s32 %v2899, %v2901
        %v2904 = vadd.s32 %v2903, %v2893
        %v2905 = vadd.s32 %v2904, %v2895
        %v2906 = vmul.u32 %v2861, %v2852
        %v2907 = vadd.s32 %v2883, %v2902
        %vm2908 = vc.u32 %v2883, %v2902
        %v2909 = vadd.s32 %v2905, 1
        %v2910 = vsel %vm2908, %v2909, %v2905
        %v2911 = vadd.s32 %v2906, %v2910
        %v2912 = vadd.s32 %v2911, 536870912
        %v2913 = vshrl.u32 %v2912, 30
        %v2914 = vshll.u32 %v2913, 30
        %v2915 = vsub.s32 %v2911, %v2914
        %vm2916 = vcmp.lt.s32.totalorder %v2915, 0
        %v2917 = vsub.s32 0, %v2915
        %v2918 = vsel %vm2916, %v2917, %v2915
        %v2919 = vclz %v2918
        %v2920 = vsub.s32 %v2919, 2
        %vm2921 = vcmp.gt.s32.totalorder 0, %v2920
        %v2922 = vsel %vm2921, 0, %v2920
        %v2923 = vsub.s32 32, %v2922
        %v2924 = vshll.u32 %v2915, %v2922
        %v2925 = vshrl.u32 %v2907, %v2923
        %v2926 = vor.u32 %v2924, %v2925
        %v2927 = vsub.s32 4294967266, %v2922
        %v2928 = vadd.s32 %v2927, 127
        %v2929 = vshll.u32 %v2928, 23
        %v2930 = vor.u32 4788187, %v2929
        %v2931 = vand.u32 2147483647, %v2930
        %v2933 = vcvt.s32.f32 %v2926
        %v2934 = vmul.f32 %v2933, %v2931
        %v2935 = vxor.u32 %v2934, 2147483648
        %v2936 = vsel %vm2815, %v2935, %v2934
        %v2937 = vsub.s32 4, %v2913
        %v2938 = vsel %vm2815, %v2937, %v2913
        %v2939 = vsel %vm2814, %v487, %v2936
        %v2940 = vsel %vm2814, 0, %v2938
        %v2941 = vmul.f32 %v2939, %v2939
        %v2942 = vmul.f32 %v2941, -0.001358992
        %v2943 = vadd.f32 %v2942, 0.041655596
        %v2944 = vmul.f32 %v2941, %v2943
        %v2945 = vadd.f32 %v2944, -0.4999988
        %v2946 = vmul.f32 %v2941, %v2945
        %v2947 = vadd.f32 1.0, %v2946
        %v2948 = vmul.f32 %v2939, %v2939
        %v2949 = vmul.f32 %v2948, -0.00019511016
        %v2950 = vadd.f32 %v2949, 0.008332121
        %v2951 = vmul.f32 %v2948, %v2950
        %v2952 = vadd.f32 %v2951, -0.16666654
        %v2953 = vmul.f32 %v2948, %v2952
        %v2954 = vadd.f32 %v2953, 1.0
        %v2955 = vmul.f32 %v2954, %v2939
        %vm2956 = vweird.f32 %v487
        %v2957 = vadd.s32 %v2940, 3
        %v2958 = vand.u32 %v2957, 3
        %vm2959 = vcmp.lt.s32.totalorder %v2958, 2
        %vm2960 = vcmp.eq.s32.totalorder %v2958, 0
        %v2961 = vxor.u32 %v2955, 2147483648
        %v2962 = vsel %vm2960, %v2947, %v2961
        %vm2963 = vcmp.eq.s32.totalorder %v2958, 2
        %v2964 = vxor.u32 %v2947, 2147483648
        %v2965 = vsel %vm2963, %v2964, %v2955
        %v2966 = vsel %vm2959, %v2962, %v2965
        %v2967 = vsel %vm2956, nan, %v2966
        %v2968 = vld [vmem:[%s3] sm:$0xff]
        %v2969 = vld [vmem:[%s3 + $0x8] sm:$0xff]
        %v2970 = vld [vmem:[%s3 + $0x10] sm:$0xff]
        %v2971 = vld [vmem:[%s3 + $0x18] sm:$0xff]
        %v2972 = vld [vmem:[%s4] sm:$0xff]
        %v2973 = vld [vmem:[%s4 + $0x8] sm:$0xff]
        %v2974 = vld [vmem:[%s4 + $0x10] sm:$0xff]
        %v2975 = vld [vmem:[%s4 + $0x18] sm:$0xff]
        %2977 = vset.pattern.permute.xlu0 0
        %2978 = vperm.xlu0 %2977, %v2972
        %v2979 = vpop.permute.xlu0 %2978
        %2982 = vset.pattern.permute.xlu0 0
        %2983 = vperm.xlu0 %2982, %v2973
        %v2984 = vpop.permute.xlu0 %2983
        %2987 = vset.pattern.permute.xlu0 0
        %2988 = vperm.xlu0 %2987, %v2974
        %v2989 = vpop.permute.xlu0 %2988
        %2992 = vset.pattern.permute.xlu0 0
        %2993 = vperm.xlu0 %2992, %v2975
        %v2994 = vpop.permute.xlu0 %2993
        %vm2996 = vcmask 261120
        %v2998 = vsel %vm2996, %v2968, 0
        %v3001 = vsel %vm2996, %v2969, 0
        %v3004 = vsel %vm2996, %v2970, 0
        %v3007 = vsel %vm2996, %v2971, 0
        %3009 = vmatpush.msra.mxu0 0.0
        %3010 = vmatpush.msra.mxu0 0.0
        %3011 = vmatpush.msra.mxu0 0.0
        %3012 = vmatpush.msra.mxu0 0.0
        %3013 = vmatpush.msra.mxu0 0.0
        %3014 = vmatpush.msra.mxu0 0.0
        %3015 = vmatpush.msra.mxu0 0.0
        %3016 = vmatpush.msra.mxu0 0.0
        %3017 = vmatpush.msra.mxu0 0.0
        %3018 = vmatpush.msra.mxu0 0.0
        %3019 = vmatpush.msra.mxu0 0.0
        %3020 = vmatpush.msra.mxu0 0.0
        %3021 = vmatpush.msra.mxu0 %v2502
        %3022 = vmatpush.msra.mxu0 %v1882
        %3023 = vmatpush.msra.mxu0 %v1262
        %3024 = vmatpush.msra.mxu0 %v642
        %3025 = vmatmul.f32.gmra.mxu0 %v2998
        %v3026 = vpop.f32.mrf.mxu0
        %v3027 = vadd.f32 %v2979, %v3026
        %3028 = vmatmul.f32.gmra.mxu0 %v3001
        %v3029 = vpop.f32.mrf.mxu0
        %v3030 = vadd.f32 %v2984, %v3029
        %3031 = vmatmul.f32.gmra.mxu0 %v3004
        %v3032 = vpop.f32.mrf.mxu0
        %v3033 = vadd.f32 %v2989, %v3032
        %3034 = vmatmul.f32.gmra.mxu0 %v3007
        %v3035 = vpop.f32.mrf.mxu0
        %v3036 = vadd.f32 %v2994, %v3035
        %3037 = vdwg.mxu0
        %3038 = vmatpush.msra.mxu0 0.0
        %3039 = vmatpush.msra.mxu0 0.0
        %3040 = vmatpush.msra.mxu0 0.0
        %3041 = vmatpush.msra.mxu0 0.0
        %3042 = vmatpush.msra.mxu0 0.0
        %3043 = vmatpush.msra.mxu0 0.0
        %3044 = vmatpush.msra.mxu0 0.0
        %3045 = vmatpush.msra.mxu0 0.0
        %3046 = vmatpush.msra.mxu0 0.0
        %3047 = vmatpush.msra.mxu0 0.0
        %3048 = vmatpush.msra.mxu0 0.0
        %3049 = vmatpush.msra.mxu0 0.0
        %3050 = vmatpush.msra.mxu0 %v2657
        %3051 = vmatpush.msra.mxu0 %v2037
        %3052 = vmatpush.msra.mxu0 %v1417
        %3053 = vmatpush.msra.mxu0 %v797
        %3054 = vmatmul.f32.gmra.mxu0 %v2998
        %v3055 = vpop.f32.mrf.mxu0
        %v3056 = vadd.f32 %v2979, %v3055
        %3057 = vmatmul.f32.gmra.mxu0 %v3001
        %v3058 = vpop.f32.mrf.mxu0
        %v3059 = vadd.f32 %v2984, %v3058
        %3060 = vmatmul.f32.gmra.mxu0 %v3004
        %v3061 = vpop.f32.mrf.mxu0
        %v3062 = vadd.f32 %v2989, %v3061
        %3063 = vmatmul.f32.gmra.mxu0 %v3007
        %v3064 = vpop.f32.mrf.mxu0
        %v3065 = vadd.f32 %v2994, %v3064
        %3066 = vdwg.mxu0
        %3067 = vmatpush.msra.mxu0 0.0
        %3068 = vmatpush.msra.mxu0 0.0
        %3069 = vmatpush.msra.mxu0 0.0
        %3070 = vmatpush.msra.mxu0 0.0
        %3071 = vmatpush.msra.mxu0 0.0
        %3072 = vmatpush.msra.mxu0 0.0
        %3073 = vmatpush.msra.mxu0 0.0
        %3074 = vmatpush.msra.mxu0 0.0
        %3075 = vmatpush.msra.mxu0 0.0
        %3076 = vmatpush.msra.mxu0 0.0
        %3077 = vmatpush.msra.mxu0 0.0
        %3078 = vmatpush.msra.mxu0 0.0
        %3079 = vmatpush.msra.mxu0 %v2812
        %3080 = vmatpush.msra.mxu0 %v2192
        %3081 = vmatpush.msra.mxu0 %v1572
        %3082 = vmatpush.msra.mxu0 %v952
        %3083 = vmatmul.f32.gmra.mxu0 %v2998
        %v3084 = vpop.f32.mrf.mxu0
        %v3085 = vadd.f32 %v2979, %v3084
        %3086 = vmatmul.f32.gmra.mxu0 %v3001
        %v3087 = vpop.f32.mrf.mxu0
        %v3088 = vadd.f32 %v2984, %v3087
        %3089 = vmatmul.f32.gmra.mxu0 %v3004
        %v3090 = vpop.f32.mrf.mxu0
        %v3091 = vadd.f32 %v2989, %v3090
        %3092 = vmatmul.f32.gmra.mxu0 %v3007
        %v3093 = vpop.f32.mrf.mxu0
        %v3094 = vadd.f32 %v2994, %v3093
        %3095 = vdwg.mxu0
        %3096 = vmatpush.msra.mxu0 0.0
        %3097 = vmatpush.msra.mxu0 0.0
        %3098 = vmatpush.msra.mxu0 0.0
        %3099 = vmatpush.msra.mxu0 0.0
        %3100 = vmatpush.msra.mxu0 0.0
        %3101 = vmatpush.msra.mxu0 0.0
        %3102 = vmatpush.msra.mxu0 0.0
        %3103 = vmatpush.msra.mxu0 0.0
        %3104 = vmatpush.msra.mxu0 0.0
        %3105 = vmatpush.msra.mxu0 0.0
        %3106 = vmatpush.msra.mxu0 0.0
        %3107 = vmatpush.msra.mxu0 0.0
        %3108 = vmatpush.msra.mxu0 %v2967
        %3109 = vmatpush.msra.mxu0 %v2347
        %3110 = vmatpush.msra.mxu0 %v1727
        %3111 = vmatpush.msra.mxu0 %v1107
        %3112 = vmatmul.f32.gmra.mxu0 %v2998
        %v3113 = vpop.f32.mrf.mxu0
        %v3114 = vadd.f32 %v2979, %v3113
        %3115 = vmatmul.f32.gmra.mxu0 %v3001
        %v3116 = vpop.f32.mrf.mxu0
        %v3117 = vadd.f32 %v2984, %v3116
        %3118 = vmatmul.f32.gmra.mxu0 %v3004
        %v3119 = vpop.f32.mrf.mxu0
        %v3120 = vadd.f32 %v2989, %v3119
        %3121 = vmatmul.f32.gmra.mxu0 %v3007
        %v3122 = vpop.f32.mrf.mxu0
        %v3123 = vadd.f32 %v2994, %v3122
        %3124 = vdwg.mxu0
        %v3125 = vand.u32 2147483647, %v3027
        %vm3126 = vcmp.le.f32.partialorder %v3125, 0.7853982
        %vm3127 = vcmp.lt.s32.totalorder %v3027, 0
        %v3128 = vand.u32 %v3027, 2139095040
        %v3129 = vshrl.u32 %v3128, 23
        %v3130 = vsub.s32 %v3129, 127
        %v3131 = vand.u32 2147483647, %v3027
        %v3132 = vand.u32 %v3131, 8388607
        %v3133 = vor.u32 %v3132, 8388608
        %v3134 = vsub.s32 0, %v3133
        %v3135 = vadd.s32 %v3130, 1
        %vm3136 = vcmp.gt.s32.totalorder %v3135, 0
        %v3137 = vsel %vm3136, %v3135, 0
        %v3138 = vshrl.u32 %v3137, 5
        %v3139 = vand.u32 %v3137, 31
        %v3140 = vsub.s32 32, %v3139
        %v3141 = vshrl.u32 683565275, %v3140
        %v3142 = vshll.u32 683565275, %v3139
        %v3143 = vshrl.u32 2475754826, %v3140
        %v3144 = vor.u32 %v3142, %v3143
        %v3145 = vshll.u32 2475754826, %v3139
        %v3146 = vshrl.u32 2131351028, %v3140
        %v3147 = vor.u32 %v3145, %v3146
        %v3148 = vshll.u32 2131351028, %v3139
        %v3149 = vshrl.u32 2102212464, %v3140
        %v3150 = vor.u32 %v3148, %v3149
        %v3151 = vshll.u32 2102212464, %v3139
        %v3152 = vshrl.u32 920167782, %v3140
        %v3153 = vor.u32 %v3151, %v3152
        %v3154 = vshll.u32 920167782, %v3139
        %v3155 = vshrl.u32 1326507024, %v3140
        %v3156 = vor.u32 %v3154, %v3155
        %vm3157 = vcmp.lt.s32.totalorder %v3138, 1
        %vm3158 = vcmp.lt.s32.totalorder %v3138, 2
        %vm3159 = vcmp.lt.s32.totalorder %v3138, 3
        %vm3160 = vcmp.lt.s32.totalorder %v3138, 4
        %v3161 = vsel %vm3157, %v3141, %v3144
        %v3162 = vsel %vm3160, %v3150, 2102212464
        %v3163 = vsel %vm3159, %v3147, %v3162
        %v3164 = vsel %vm3158, %v3161, %v3163
        %v3165 = vsel %vm3157, %v3144, %v3147
        %v3166 = vsel %vm3160, %v3153, 920167782
        %v3167 = vsel %vm3159, %v3150, %v3166
        %v3168 = vsel %vm3158, %v3165, %v3167
        %v3169 = vsel %vm3157, %v3147, %v3150
        %v3170 = vsel %vm3160, %v3156, 1326507024
        %v3171 = vsel %vm3159, %v3153, %v3170
        %v3172 = vsel %vm3158, %v3169, %v3171
        %v3173 = vshll.u32 %v3133, 8
        %v3174 = vand.u32 %v3173, 65535
        %v3175 = vshrl.u32 %v3173, 16
        %v3176 = vand.u32 %v3172, 65535
        %v3177 = vshrl.u32 %v3172, 16
        %v3178 = vmul.u32 %v3174, %v3176
        %v3179 = vmul.u32 %v3174, %v3177
        %v3180 = vmul.u32 %v3175, %v3176
        %v3181 = vmul.u32 %v3175, %v3177
        %v3182 = vshll.u32 %v3179, 16
        %v3183 = vshrl.u32 %v3179, 16
        %v3184 = vshll.u32 %v3180, 16
        %v3185 = vshrl.u32 %v3180, 16
        %vm3186 = vc.u32 %v3178, %v3182
        %v3187 = vsel %vm3186, 1, 0
        %v3188 = vadd.s32 %v3178, %v3182
        %v3189 = vadd.s32 %v3181, %v3187
        %vm3190 = vc.u32 %v3188, %v3184
        %v3191 = vsel %vm3190, 1, 0
        %v3192 = vadd.s32 %v3188, %v3184
        %v3193 = vadd.s32 %v3189, %v3191
        %v3194 = vadd.s32 %v3193, %v3183
        %v3195 = vadd.s32 %v3194, %v3185
        %v3196 = vand.u32 %v3173, 65535
        %v3197 = vshrl.u32 %v3173, 16
        %v3198 = vand.u32 %v3168, 65535
        %v3199 = vshrl.u32 %v3168, 16
        %v3200 = vmul.u32 %v3196, %v3198
        %v3201 = vmul.u32 %v3196, %v3199
        %v3202 = vmul.u32 %v3197, %v3198
        %v3203 = vmul.u32 %v3197, %v3199
        %v3204 = vshll.u32 %v3201, 16
        %v3205 = vshrl.u32 %v3201, 16
        %v3206 = vshll.u32 %v3202, 16
        %v3207 = vshrl.u32 %v3202, 16
        %vm3208 = vc.u32 %v3200, %v3204
        %v3209 = vsel %vm3208, 1, 0
        %v3210 = vadd.s32 %v3200, %v3204
        %v3211 = vadd.s32 %v3203, %v3209
        %vm3212 = vc.u32 %v3210, %v3206
        %v3213 = vsel %vm3212, 1, 0
        %v3214 = vadd.s32 %v3210, %v3206
        %v3215 = vadd.s32 %v3211, %v3213
        %v3216 = vadd.s32 %v3215, %v3205
        %v3217 = vadd.s32 %v3216, %v3207
        %v3218 = vmul.u32 %v3173, %v3164
        %v3219 = vadd.s32 %v3195, %v3214
        %vm3220 = vc.u32 %v3195, %v3214
        %v3221 = vadd.s32 %v3217, 1
        %v3222 = vsel %vm3220, %v3221, %v3217
        %v3223 = vadd.s32 %v3218, %v3222
        %v3224 = vadd.s32 %v3223, 536870912
        %v3225 = vshrl.u32 %v3224, 30
        %v3226 = vshll.u32 %v3225, 30
        %v3227 = vsub.s32 %v3223, %v3226
        %vm3228 = vcmp.lt.s32.totalorder %v3227, 0
        %v3229 = vsub.s32 0, %v3227
        %v3230 = vsel %vm3228, %v3229, %v3227
        %v3231 = vclz %v3230
        %v3232 = vsub.s32 %v3231, 2
        %vm3233 = vcmp.gt.s32.totalorder 0, %v3232
        %v3234 = vsel %vm3233, 0, %v3232
        %v3235 = vsub.s32 32, %v3234
        %v3236 = vshll.u32 %v3227, %v3234
        %v3237 = vshrl.u32 %v3219, %v3235
        %v3238 = vor.u32 %v3236, %v3237
        %v3239 = vsub.s32 4294967266, %v3234
        %v3240 = vadd.s32 %v3239, 127
        %v3241 = vshll.u32 %v3240, 23
        %v3242 = vor.u32 4788187, %v3241
        %v3243 = vand.u32 2147483647, %v3242
        %v3245 = vcvt.s32.f32 %v3238
        %v3246 = vmul.f32 %v3245, %v3243
        %v3247 = vxor.u32 %v3246, 2147483648
        %v3248 = vsel %vm3127, %v3247, %v3246
        %v3249 = vsub.s32 4, %v3225
        %v3250 = vsel %vm3127, %v3249, %v3225
        %v3251 = vsel %vm3126, %v3027, %v3248
        %v3252 = vsel %vm3126, 0, %v3250
        %v3253 = vmul.f32 %v3251, %v3251
        %v3254 = vmul.f32 %v3253, -0.001358992
        %v3255 = vadd.f32 %v3254, 0.041655596
        %v3256 = vmul.f32 %v3253, %v3255
        %v3257 = vadd.f32 %v3256, -0.4999988
        %v3258 = vmul.f32 %v3253, %v3257
        %v3259 = vadd.f32 1.0, %v3258
        %v3260 = vmul.f32 %v3251, %v3251
        %v3261 = vmul.f32 %v3260, -0.00019511016
        %v3262 = vadd.f32 %v3261, 0.008332121
        %v3263 = vmul.f32 %v3260, %v3262
        %v3264 = vadd.f32 %v3263, -0.16666654
        %v3265 = vmul.f32 %v3260, %v3264
        %v3266 = vadd.f32 %v3265, 1.0
        %v3267 = vmul.f32 %v3266, %v3251
        %vm3268 = vweird.f32 %v3027
        %v3269 = vadd.s32 %v3252, 3
        %v3270 = vand.u32 %v3269, 3
        %vm3271 = vcmp.lt.s32.totalorder %v3270, 2
        %vm3272 = vcmp.eq.s32.totalorder %v3270, 0
        %v3273 = vxor.u32 %v3267, 2147483648
        %v3274 = vsel %vm3272, %v3259, %v3273
        %vm3275 = vcmp.eq.s32.totalorder %v3270, 2
        %v3276 = vxor.u32 %v3259, 2147483648
        %v3277 = vsel %vm3275, %v3276, %v3267
        %v3278 = vsel %vm3271, %v3274, %v3277
        %v3279 = vsel %vm3268, nan, %v3278
        %v3280 = vand.u32 2147483647, %v3056
        %vm3281 = vcmp.le.f32.partialorder %v3280, 0.7853982
        %vm3282 = vcmp.lt.s32.totalorder %v3056, 0
        %v3283 = vand.u32 %v3056, 2139095040
        %v3284 = vshrl.u32 %v3283, 23
        %v3285 = vsub.s32 %v3284, 127
        %v3286 = vand.u32 2147483647, %v3056
        %v3287 = vand.u32 %v3286, 8388607
        %v3288 = vor.u32 %v3287, 8388608
        %v3289 = vsub.s32 0, %v3288
        %v3290 = vadd.s32 %v3285, 1
        %vm3291 = vcmp.gt.s32.totalorder %v3290, 0
        %v3292 = vsel %vm3291, %v3290, 0
        %v3293 = vshrl.u32 %v3292, 5
        %v3294 = vand.u32 %v3292, 31
        %v3295 = vsub.s32 32, %v3294
        %v3296 = vshrl.u32 683565275, %v3295
        %v3297 = vshll.u32 683565275, %v3294
        %v3298 = vshrl.u32 2475754826, %v3295
        %v3299 = vor.u32 %v3297, %v3298
        %v3300 = vshll.u32 2475754826, %v3294
        %v3301 = vshrl.u32 2131351028, %v3295
        %v3302 = vor.u32 %v3300, %v3301
        %v3303 = vshll.u32 2131351028, %v3294
        %v3304 = vshrl.u32 2102212464, %v3295
        %v3305 = vor.u32 %v3303, %v3304
        %v3306 = vshll.u32 2102212464, %v3294
        %v3307 = vshrl.u32 920167782, %v3295
        %v3308 = vor.u32 %v3306, %v3307
        %v3309 = vshll.u32 920167782, %v3294
        %v3310 = vshrl.u32 1326507024, %v3295
        %v3311 = vor.u32 %v3309, %v3310
        %vm3312 = vcmp.lt.s32.totalorder %v3293, 1
        %vm3313 = vcmp.lt.s32.totalorder %v3293, 2
        %vm3314 = vcmp.lt.s32.totalorder %v3293, 3
        %vm3315 = vcmp.lt.s32.totalorder %v3293, 4
        %v3316 = vsel %vm3312, %v3296, %v3299
        %v3317 = vsel %vm3315, %v3305, 2102212464
        %v3318 = vsel %vm3314, %v3302, %v3317
        %v3319 = vsel %vm3313, %v3316, %v3318
        %v3320 = vsel %vm3312, %v3299, %v3302
        %v3321 = vsel %vm3315, %v3308, 920167782
        %v3322 = vsel %vm3314, %v3305, %v3321
        %v3323 = vsel %vm3313, %v3320, %v3322
        %v3324 = vsel %vm3312, %v3302, %v3305
        %v3325 = vsel %vm3315, %v3311, 1326507024
        %v3326 = vsel %vm3314, %v3308, %v3325
        %v3327 = vsel %vm3313, %v3324, %v3326
        %v3328 = vshll.u32 %v3288, 8
        %v3329 = vand.u32 %v3328, 65535
        %v3330 = vshrl.u32 %v3328, 16
        %v3331 = vand.u32 %v3327, 65535
        %v3332 = vshrl.u32 %v3327, 16
        %v3333 = vmul.u32 %v3329, %v3331
        %v3334 = vmul.u32 %v3329, %v3332
        %v3335 = vmul.u32 %v3330, %v3331
        %v3336 = vmul.u32 %v3330, %v3332
        %v3337 = vshll.u32 %v3334, 16
        %v3338 = vshrl.u32 %v3334, 16
        %v3339 = vshll.u32 %v3335, 16
        %v3340 = vshrl.u32 %v3335, 16
        %vm3341 = vc.u32 %v3333, %v3337
        %v3342 = vsel %vm3341, 1, 0
        %v3343 = vadd.s32 %v3333, %v3337
        %v3344 = vadd.s32 %v3336, %v3342
        %vm3345 = vc.u32 %v3343, %v3339
        %v3346 = vsel %vm3345, 1, 0
        %v3347 = vadd.s32 %v3343, %v3339
        %v3348 = vadd.s32 %v3344, %v3346
        %v3349 = vadd.s32 %v3348, %v3338
        %v3350 = vadd.s32 %v3349, %v3340
        %v3351 = vand.u32 %v3328, 65535
        %v3352 = vshrl.u32 %v3328, 16
        %v3353 = vand.u32 %v3323, 65535
        %v3354 = vshrl.u32 %v3323, 16
        %v3355 = vmul.u32 %v3351, %v3353
        %v3356 = vmul.u32 %v3351, %v3354
        %v3357 = vmul.u32 %v3352, %v3353
        %v3358 = vmul.u32 %v3352, %v3354
        %v3359 = vshll.u32 %v3356, 16
        %v3360 = vshrl.u32 %v3356, 16
        %v3361 = vshll.u32 %v3357, 16
        %v3362 = vshrl.u32 %v3357, 16
        %vm3363 = vc.u32 %v3355, %v3359
        %v3364 = vsel %vm3363, 1, 0
        %v3365 = vadd.s32 %v3355, %v3359
        %v3366 = vadd.s32 %v3358, %v3364
        %vm3367 = vc.u32 %v3365, %v3361
        %v3368 = vsel %vm3367, 1, 0
        %v3369 = vadd.s32 %v3365, %v3361
        %v3370 = vadd.s32 %v3366, %v3368
        %v3371 = vadd.s32 %v3370, %v3360
        %v3372 = vadd.s32 %v3371, %v3362
        %v3373 = vmul.u32 %v3328, %v3319
        %v3374 = vadd.s32 %v3350, %v3369
        %vm3375 = vc.u32 %v3350, %v3369
        %v3376 = vadd.s32 %v3372, 1
        %v3377 = vsel %vm3375, %v3376, %v3372
        %v3378 = vadd.s32 %v3373, %v3377
        %v3379 = vadd.s32 %v3378, 536870912
        %v3380 = vshrl.u32 %v3379, 30
        %v3381 = vshll.u32 %v3380, 30
        %v3382 = vsub.s32 %v3378, %v3381
        %vm3383 = vcmp.lt.s32.totalorder %v3382, 0
        %v3384 = vsub.s32 0, %v3382
        %v3385 = vsel %vm3383, %v3384, %v3382
        %v3386 = vclz %v3385
        %v3387 = vsub.s32 %v3386, 2
        %vm3388 = vcmp.gt.s32.totalorder 0, %v3387
        %v3389 = vsel %vm3388, 0, %v3387
        %v3390 = vsub.s32 32, %v3389
        %v3391 = vshll.u32 %v3382, %v3389
        %v3392 = vshrl.u32 %v3374, %v3390
        %v3393 = vor.u32 %v3391, %v3392
        %v3394 = vsub.s32 4294967266, %v3389
        %v3395 = vadd.s32 %v3394, 127
        %v3396 = vshll.u32 %v3395, 23
        %v3397 = vor.u32 4788187, %v3396
        %v3398 = vand.u32 2147483647, %v3397
        %v3400 = vcvt.s32.f32 %v3393
        %v3401 = vmul.f32 %v3400, %v3398
        %v3402 = vxor.u32 %v3401, 2147483648
        %v3403 = vsel %vm3282, %v3402, %v3401
        %v3404 = vsub.s32 4, %v3380
        %v3405 = vsel %vm3282, %v3404, %v3380
        %v3406 = vsel %vm3281, %v3056, %v3403
        %v3407 = vsel %vm3281, 0, %v3405
        %v3408 = vmul.f32 %v3406, %v3406
        %v3409 = vmul.f32 %v3408, -0.001358992
        %v3410 = vadd.f32 %v3409, 0.041655596
        %v3411 = vmul.f32 %v3408, %v3410
        %v3412 = vadd.f32 %v3411, -0.4999988
        %v3413 = vmul.f32 %v3408, %v3412
        %v3414 = vadd.f32 1.0, %v3413
        %v3415 = vmul.f32 %v3406, %v3406
        %v3416 = vmul.f32 %v3415, -0.00019511016
        %v3417 = vadd.f32 %v3416, 0.008332121
        %v3418 = vmul.f32 %v3415, %v3417
        %v3419 = vadd.f32 %v3418, -0.16666654
        %v3420 = vmul.f32 %v3415, %v3419
        %v3421 = vadd.f32 %v3420, 1.0
        %v3422 = vmul.f32 %v3421, %v3406
        %vm3423 = vweird.f32 %v3056
        %v3424 = vadd.s32 %v3407, 3
        %v3425 = vand.u32 %v3424, 3
        %vm3426 = vcmp.lt.s32.totalorder %v3425, 2
        %vm3427 = vcmp.eq.s32.totalorder %v3425, 0
        %v3428 = vxor.u32 %v3422, 2147483648
        %v3429 = vsel %vm3427, %v3414, %v3428
        %vm3430 = vcmp.eq.s32.totalorder %v3425, 2
        %v3431 = vxor.u32 %v3414, 2147483648
        %v3432 = vsel %vm3430, %v3431, %v3422
        %v3433 = vsel %vm3426, %v3429, %v3432
        %v3434 = vsel %vm3423, nan, %v3433
        %v3435 = vand.u32 2147483647, %v3085
        %vm3436 = vcmp.le.f32.partialorder %v3435, 0.7853982
        %vm3437 = vcmp.lt.s32.totalorder %v3085, 0
        %v3438 = vand.u32 %v3085, 2139095040
        %v3439 = vshrl.u32 %v3438, 23
        %v3440 = vsub.s32 %v3439, 127
        %v3441 = vand.u32 2147483647, %v3085
        %v3442 = vand.u32 %v3441, 8388607
        %v3443 = vor.u32 %v3442, 8388608
        %v3444 = vsub.s32 0, %v3443
        %v3445 = vadd.s32 %v3440, 1
        %vm3446 = vcmp.gt.s32.totalorder %v3445, 0
        %v3447 = vsel %vm3446, %v3445, 0
        %v3448 = vshrl.u32 %v3447, 5
        %v3449 = vand.u32 %v3447, 31
        %v3450 = vsub.s32 32, %v3449
        %v3451 = vshrl.u32 683565275, %v3450
        %v3452 = vshll.u32 683565275, %v3449
        %v3453 = vshrl.u32 2475754826, %v3450
        %v3454 = vor.u32 %v3452, %v3453
        %v3455 = vshll.u32 2475754826, %v3449
        %v3456 = vshrl.u32 2131351028, %v3450
        %v3457 = vor.u32 %v3455, %v3456
        %v3458 = vshll.u32 2131351028, %v3449
        %v3459 = vshrl.u32 2102212464, %v3450
        %v3460 = vor.u32 %v3458, %v3459
        %v3461 = vshll.u32 2102212464, %v3449
        %v3462 = vshrl.u32 920167782, %v3450
        %v3463 = vor.u32 %v3461, %v3462
        %v3464 = vshll.u32 920167782, %v3449
        %v3465 = vshrl.u32 1326507024, %v3450
        %v3466 = vor.u32 %v3464, %v3465
        %vm3467 = vcmp.lt.s32.totalorder %v3448, 1
        %vm3468 = vcmp.lt.s32.totalorder %v3448, 2
        %vm3469 = vcmp.lt.s32.totalorder %v3448, 3
        %vm3470 = vcmp.lt.s32.totalorder %v3448, 4
        %v3471 = vsel %vm3467, %v3451, %v3454
        %v3472 = vsel %vm3470, %v3460, 2102212464
        %v3473 = vsel %vm3469, %v3457, %v3472
        %v3474 = vsel %vm3468, %v3471, %v3473
        %v3475 = vsel %vm3467, %v3454, %v3457
        %v3476 = vsel %vm3470, %v3463, 920167782
        %v3477 = vsel %vm3469, %v3460, %v3476
        %v3478 = vsel %vm3468, %v3475, %v3477
        %v3479 = vsel %vm3467, %v3457, %v3460
        %v3480 = vsel %vm3470, %v3466, 1326507024
        %v3481 = vsel %vm3469, %v3463, %v3480
        %v3482 = vsel %vm3468, %v3479, %v3481
        %v3483 = vshll.u32 %v3443, 8
        %v3484 = vand.u32 %v3483, 65535
        %v3485 = vshrl.u32 %v3483, 16
        %v3486 = vand.u32 %v3482, 65535
        %v3487 = vshrl.u32 %v3482, 16
        %v3488 = vmul.u32 %v3484, %v3486
        %v3489 = vmul.u32 %v3484, %v3487
        %v3490 = vmul.u32 %v3485, %v3486
        %v3491 = vmul.u32 %v3485, %v3487
        %v3492 = vshll.u32 %v3489, 16
        %v3493 = vshrl.u32 %v3489, 16
        %v3494 = vshll.u32 %v3490, 16
        %v3495 = vshrl.u32 %v3490, 16
        %vm3496 = vc.u32 %v3488, %v3492
        %v3497 = vsel %vm3496, 1, 0
        %v3498 = vadd.s32 %v3488, %v3492
        %v3499 = vadd.s32 %v3491, %v3497
        %vm3500 = vc.u32 %v3498, %v3494
        %v3501 = vsel %vm3500, 1, 0
        %v3502 = vadd.s32 %v3498, %v3494
        %v3503 = vadd.s32 %v3499, %v3501
        %v3504 = vadd.s32 %v3503, %v3493
        %v3505 = vadd.s32 %v3504, %v3495
        %v3506 = vand.u32 %v3483, 65535
        %v3507 = vshrl.u32 %v3483, 16
        %v3508 = vand.u32 %v3478, 65535
        %v3509 = vshrl.u32 %v3478, 16
        %v3510 = vmul.u32 %v3506, %v3508
        %v3511 = vmul.u32 %v3506, %v3509
        %v3512 = vmul.u32 %v3507, %v3508
        %v3513 = vmul.u32 %v3507, %v3509
        %v3514 = vshll.u32 %v3511, 16
        %v3515 = vshrl.u32 %v3511, 16
        %v3516 = vshll.u32 %v3512, 16
        %v3517 = vshrl.u32 %v3512, 16
        %vm3518 = vc.u32 %v3510, %v3514
        %v3519 = vsel %vm3518, 1, 0
        %v3520 = vadd.s32 %v3510, %v3514
        %v3521 = vadd.s32 %v3513, %v3519
        %vm3522 = vc.u32 %v3520, %v3516
        %v3523 = vsel %vm3522, 1, 0
        %v3524 = vadd.s32 %v3520, %v3516
        %v3525 = vadd.s32 %v3521, %v3523
        %v3526 = vadd.s32 %v3525, %v3515
        %v3527 = vadd.s32 %v3526, %v3517
        %v3528 = vmul.u32 %v3483, %v3474
        %v3529 = vadd.s32 %v3505, %v3524
        %vm3530 = vc.u32 %v3505, %v3524
        %v3531 = vadd.s32 %v3527, 1
        %v3532 = vsel %vm3530, %v3531, %v3527
        %v3533 = vadd.s32 %v3528, %v3532
        %v3534 = vadd.s32 %v3533, 536870912
        %v3535 = vshrl.u32 %v3534, 30
        %v3536 = vshll.u32 %v3535, 30
        %v3537 = vsub.s32 %v3533, %v3536
        %vm3538 = vcmp.lt.s32.totalorder %v3537, 0
        %v3539 = vsub.s32 0, %v3537
        %v3540 = vsel %vm3538, %v3539, %v3537
        %v3541 = vclz %v3540
        %v3542 = vsub.s32 %v3541, 2
        %vm3543 = vcmp.gt.s32.totalorder 0, %v3542
        %v3544 = vsel %vm3543, 0, %v3542
        %v3545 = vsub.s32 32, %v3544
        %v3546 = vshll.u32 %v3537, %v3544
        %v3547 = vshrl.u32 %v3529, %v3545
        %v3548 = vor.u32 %v3546, %v3547
        %v3549 = vsub.s32 4294967266, %v3544
        %v3550 = vadd.s32 %v3549, 127
        %v3551 = vshll.u32 %v3550, 23
        %v3552 = vor.u32 4788187, %v3551
        %v3553 = vand.u32 2147483647, %v3552
        %v3555 = vcvt.s32.f32 %v3548
        %v3556 = vmul.f32 %v3555, %v3553
        %v3557 = vxor.u32 %v3556, 2147483648
        %v3558 = vsel %vm3437, %v3557, %v3556
        %v3559 = vsub.s32 4, %v3535
        %v3560 = vsel %vm3437, %v3559, %v3535
        %v3561 = vsel %vm3436, %v3085, %v3558
        %v3562 = vsel %vm3436, 0, %v3560
        %v3563 = vmul.f32 %v3561, %v3561
        %v3564 = vmul.f32 %v3563, -0.001358992
        %v3565 = vadd.f32 %v3564, 0.041655596
        %v3566 = vmul.f32 %v3563, %v3565
        %v3567 = vadd.f32 %v3566, -0.4999988
        %v3568 = vmul.f32 %v3563, %v3567
        %v3569 = vadd.f32 1.0, %v3568
        %v3570 = vmul.f32 %v3561, %v3561
        %v3571 = vmul.f32 %v3570, -0.00019511016
        %v3572 = vadd.f32 %v3571, 0.008332121
        %v3573 = vmul.f32 %v3570, %v3572
        %v3574 = vadd.f32 %v3573, -0.16666654
        %v3575 = vmul.f32 %v3570, %v3574
        %v3576 = vadd.f32 %v3575, 1.0
        %v3577 = vmul.f32 %v3576, %v3561
        %vm3578 = vweird.f32 %v3085
        %v3579 = vadd.s32 %v3562, 3
        %v3580 = vand.u32 %v3579, 3
        %vm3581 = vcmp.lt.s32.totalorder %v3580, 2
        %vm3582 = vcmp.eq.s32.totalorder %v3580, 0
        %v3583 = vxor.u32 %v3577, 2147483648
        %v3584 = vsel %vm3582, %v3569, %v3583
        %vm3585 = vcmp.eq.s32.totalorder %v3580, 2
        %v3586 = vxor.u32 %v3569, 2147483648
        %v3587 = vsel %vm3585, %v3586, %v3577
        %v3588 = vsel %vm3581, %v3584, %v3587
        %v3589 = vsel %vm3578, nan, %v3588
        %v3590 = vand.u32 2147483647, %v3114
        %vm3591 = vcmp.le.f32.partialorder %v3590, 0.7853982
        %vm3592 = vcmp.lt.s32.totalorder %v3114, 0
        %v3593 = vand.u32 %v3114, 2139095040
        %v3594 = vshrl.u32 %v3593, 23
        %v3595 = vsub.s32 %v3594, 127
        %v3596 = vand.u32 2147483647, %v3114
        %v3597 = vand.u32 %v3596, 8388607
        %v3598 = vor.u32 %v3597, 8388608
        %v3599 = vsub.s32 0, %v3598
        %v3600 = vadd.s32 %v3595, 1
        %vm3601 = vcmp.gt.s32.totalorder %v3600, 0
        %v3602 = vsel %vm3601, %v3600, 0
        %v3603 = vshrl.u32 %v3602, 5
        %v3604 = vand.u32 %v3602, 31
        %v3605 = vsub.s32 32, %v3604
        %v3606 = vshrl.u32 683565275, %v3605
        %v3607 = vshll.u32 683565275, %v3604
        %v3608 = vshrl.u32 2475754826, %v3605
        %v3609 = vor.u32 %v3607, %v3608
        %v3610 = vshll.u32 2475754826, %v3604
        %v3611 = vshrl.u32 2131351028, %v3605
        %v3612 = vor.u32 %v3610, %v3611
        %v3613 = vshll.u32 2131351028, %v3604
        %v3614 = vshrl.u32 2102212464, %v3605
        %v3615 = vor.u32 %v3613, %v3614
        %v3616 = vshll.u32 2102212464, %v3604
        %v3617 = vshrl.u32 920167782, %v3605
        %v3618 = vor.u32 %v3616, %v3617
        %v3619 = vshll.u32 920167782, %v3604
        %v3620 = vshrl.u32 1326507024, %v3605
        %v3621 = vor.u32 %v3619, %v3620
        %vm3622 = vcmp.lt.s32.totalorder %v3603, 1
        %vm3623 = vcmp.lt.s32.totalorder %v3603, 2
        %vm3624 = vcmp.lt.s32.totalorder %v3603, 3
        %vm3625 = vcmp.lt.s32.totalorder %v3603, 4
        %v3626 = vsel %vm3622, %v3606, %v3609
        %v3627 = vsel %vm3625, %v3615, 2102212464
        %v3628 = vsel %vm3624, %v3612, %v3627
        %v3629 = vsel %vm3623, %v3626, %v3628
        %v3630 = vsel %vm3622, %v3609, %v3612
        %v3631 = vsel %vm3625, %v3618, 920167782
        %v3632 = vsel %vm3624, %v3615, %v3631
        %v3633 = vsel %vm3623, %v3630, %v3632
        %v3634 = vsel %vm3622, %v3612, %v3615
        %v3635 = vsel %vm3625, %v3621, 1326507024
        %v3636 = vsel %vm3624, %v3618, %v3635
        %v3637 = vsel %vm3623, %v3634, %v3636
        %v3638 = vshll.u32 %v3598, 8
        %v3639 = vand.u32 %v3638, 65535
        %v3640 = vshrl.u32 %v3638, 16
        %v3641 = vand.u32 %v3637, 65535
        %v3642 = vshrl.u32 %v3637, 16
        %v3643 = vmul.u32 %v3639, %v3641
        %v3644 = vmul.u32 %v3639, %v3642
        %v3645 = vmul.u32 %v3640, %v3641
        %v3646 = vmul.u32 %v3640, %v3642
        %v3647 = vshll.u32 %v3644, 16
        %v3648 = vshrl.u32 %v3644, 16
        %v3649 = vshll.u32 %v3645, 16
        %v3650 = vshrl.u32 %v3645, 16
        %vm3651 = vc.u32 %v3643, %v3647
        %v3652 = vsel %vm3651, 1, 0
        %v3653 = vadd.s32 %v3643, %v3647
        %v3654 = vadd.s32 %v3646, %v3652
        %vm3655 = vc.u32 %v3653, %v3649
        %v3656 = vsel %vm3655, 1, 0
        %v3657 = vadd.s32 %v3653, %v3649
        %v3658 = vadd.s32 %v3654, %v3656
        %v3659 = vadd.s32 %v3658, %v3648
        %v3660 = vadd.s32 %v3659, %v3650
        %v3661 = vand.u32 %v3638, 65535
        %v3662 = vshrl.u32 %v3638, 16
        %v3663 = vand.u32 %v3633, 65535
        %v3664 = vshrl.u32 %v3633, 16
        %v3665 = vmul.u32 %v3661, %v3663
        %v3666 = vmul.u32 %v3661, %v3664
        %v3667 = vmul.u32 %v3662, %v3663
        %v3668 = vmul.u32 %v3662, %v3664
        %v3669 = vshll.u32 %v3666, 16
        %v3670 = vshrl.u32 %v3666, 16
        %v3671 = vshll.u32 %v3667, 16
        %v3672 = vshrl.u32 %v3667, 16
        %vm3673 = vc.u32 %v3665, %v3669
        %v3674 = vsel %vm3673, 1, 0
        %v3675 = vadd.s32 %v3665, %v3669
        %v3676 = vadd.s32 %v3668, %v3674
        %vm3677 = vc.u32 %v3675, %v3671
        %v3678 = vsel %vm3677, 1, 0
        %v3679 = vadd.s32 %v3675, %v3671
        %v3680 = vadd.s32 %v3676, %v3678
        %v3681 = vadd.s32 %v3680, %v3670
        %v3682 = vadd.s32 %v3681, %v3672
        %v3683 = vmul.u32 %v3638, %v3629
        %v3684 = vadd.s32 %v3660, %v3679
        %vm3685 = vc.u32 %v3660, %v3679
        %v3686 = vadd.s32 %v3682, 1
        %v3687 = vsel %vm3685, %v3686, %v3682
        %v3688 = vadd.s32 %v3683, %v3687
        %v3689 = vadd.s32 %v3688, 536870912
        %v3690 = vshrl.u32 %v3689, 30
        %v3691 = vshll.u32 %v3690, 30
        %v3692 = vsub.s32 %v3688, %v3691
        %vm3693 = vcmp.lt.s32.totalorder %v3692, 0
        %v3694 = vsub.s32 0, %v3692
        %v3695 = vsel %vm3693, %v3694, %v3692
        %v3696 = vclz %v3695
        %v3697 = vsub.s32 %v3696, 2
        %vm3698 = vcmp.gt.s32.totalorder 0, %v3697
        %v3699 = vsel %vm3698, 0, %v3697
        %v3700 = vsub.s32 32, %v3699
        %v3701 = vshll.u32 %v3692, %v3699
        %v3702 = vshrl.u32 %v3684, %v3700
        %v3703 = vor.u32 %v3701, %v3702
        %v3704 = vsub.s32 4294967266, %v3699
        %v3705 = vadd.s32 %v3704, 127
        %v3706 = vshll.u32 %v3705, 23
        %v3707 = vor.u32 4788187, %v3706
        %v3708 = vand.u32 2147483647, %v3707
        %v3710 = vcvt.s32.f32 %v3703
        %v3711 = vmul.f32 %v3710, %v3708
        %v3712 = vxor.u32 %v3711, 2147483648
        %v3713 = vsel %vm3592, %v3712, %v3711
        %v3714 = vsub.s32 4, %v3690
        %v3715 = vsel %vm3592, %v3714, %v3690
        %v3716 = vsel %vm3591, %v3114, %v3713
        %v3717 = vsel %vm3591, 0, %v3715
        %v3718 = vmul.f32 %v3716, %v3716
        %v3719 = vmul.f32 %v3718, -0.001358992
        %v3720 = vadd.f32 %v3719, 0.041655596
        %v3721 = vmul.f32 %v3718, %v3720
        %v3722 = vadd.f32 %v3721, -0.4999988
        %v3723 = vmul.f32 %v3718, %v3722
        %v3724 = vadd.f32 1.0, %v3723
        %v3725 = vmul.f32 %v3716, %v3716
        %v3726 = vmul.f32 %v3725, -0.00019511016
        %v3727 = vadd.f32 %v3726, 0.008332121
        %v3728 = vmul.f32 %v3725, %v3727
        %v3729 = vadd.f32 %v3728, -0.16666654
        %v3730 = vmul.f32 %v3725, %v3729
        %v3731 = vadd.f32 %v3730, 1.0
        %v3732 = vmul.f32 %v3731, %v3716
        %vm3733 = vweird.f32 %v3114
        %v3734 = vadd.s32 %v3717, 3
        %v3735 = vand.u32 %v3734, 3
        %vm3736 = vcmp.lt.s32.totalorder %v3735, 2
        %vm3737 = vcmp.eq.s32.totalorder %v3735, 0
        %v3738 = vxor.u32 %v3732, 2147483648
        %v3739 = vsel %vm3737, %v3724, %v3738
        %vm3740 = vcmp.eq.s32.totalorder %v3735, 2
        %v3741 = vxor.u32 %v3724, 2147483648
        %v3742 = vsel %vm3740, %v3741, %v3732
        %v3743 = vsel %vm3736, %v3739, %v3742
        %v3744 = vsel %vm3733, nan, %v3743
        %v3745 = vand.u32 2147483647, %v3030
        %vm3746 = vcmp.le.f32.partialorder %v3745, 0.7853982
        %vm3747 = vcmp.lt.s32.totalorder %v3030, 0
        %v3748 = vand.u32 %v3030, 2139095040
        %v3749 = vshrl.u32 %v3748, 23
        %v3750 = vsub.s32 %v3749, 127
        %v3751 = vand.u32 2147483647, %v3030
        %v3752 = vand.u32 %v3751, 8388607
        %v3753 = vor.u32 %v3752, 8388608
        %v3754 = vsub.s32 0, %v3753
        %v3755 = vadd.s32 %v3750, 1
        %vm3756 = vcmp.gt.s32.totalorder %v3755, 0
        %v3757 = vsel %vm3756, %v3755, 0
        %v3758 = vshrl.u32 %v3757, 5
        %v3759 = vand.u32 %v3757, 31
        %v3760 = vsub.s32 32, %v3759
        %v3761 = vshrl.u32 683565275, %v3760
        %v3762 = vshll.u32 683565275, %v3759
        %v3763 = vshrl.u32 2475754826, %v3760
        %v3764 = vor.u32 %v3762, %v3763
        %v3765 = vshll.u32 2475754826, %v3759
        %v3766 = vshrl.u32 2131351028, %v3760
        %v3767 = vor.u32 %v3765, %v3766
        %v3768 = vshll.u32 2131351028, %v3759
        %v3769 = vshrl.u32 2102212464, %v3760
        %v3770 = vor.u32 %v3768, %v3769
        %v3771 = vshll.u32 2102212464, %v3759
        %v3772 = vshrl.u32 920167782, %v3760
        %v3773 = vor.u32 %v3771, %v3772
        %v3774 = vshll.u32 920167782, %v3759
        %v3775 = vshrl.u32 1326507024, %v3760
        %v3776 = vor.u32 %v3774, %v3775
        %vm3777 = vcmp.lt.s32.totalorder %v3758, 1
        %vm3778 = vcmp.lt.s32.totalorder %v3758, 2
        %vm3779 = vcmp.lt.s32.totalorder %v3758, 3
        %vm3780 = vcmp.lt.s32.totalorder %v3758, 4
        %v3781 = vsel %vm3777, %v3761, %v3764
        %v3782 = vsel %vm3780, %v3770, 2102212464
        %v3783 = vsel %vm3779, %v3767, %v3782
        %v3784 = vsel %vm3778, %v3781, %v3783
        %v3785 = vsel %vm3777, %v3764, %v3767
        %v3786 = vsel %vm3780, %v3773, 920167782
        %v3787 = vsel %vm3779, %v3770, %v3786
        %v3788 = vsel %vm3778, %v3785, %v3787
        %v3789 = vsel %vm3777, %v3767, %v3770
        %v3790 = vsel %vm3780, %v3776, 1326507024
        %v3791 = vsel %vm3779, %v3773, %v3790
        %v3792 = vsel %vm3778, %v3789, %v3791
        %v3793 = vshll.u32 %v3753, 8
        %v3794 = vand.u32 %v3793, 65535
        %v3795 = vshrl.u32 %v3793, 16
        %v3796 = vand.u32 %v3792, 65535
        %v3797 = vshrl.u32 %v3792, 16
        %v3798 = vmul.u32 %v3794, %v3796
        %v3799 = vmul.u32 %v3794, %v3797
        %v3800 = vmul.u32 %v3795, %v3796
        %v3801 = vmul.u32 %v3795, %v3797
        %v3802 = vshll.u32 %v3799, 16
        %v3803 = vshrl.u32 %v3799, 16
        %v3804 = vshll.u32 %v3800, 16
        %v3805 = vshrl.u32 %v3800, 16
        %vm3806 = vc.u32 %v3798, %v3802
        %v3807 = vsel %vm3806, 1, 0
        %v3808 = vadd.s32 %v3798, %v3802
        %v3809 = vadd.s32 %v3801, %v3807
        %vm3810 = vc.u32 %v3808, %v3804
        %v3811 = vsel %vm3810, 1, 0
        %v3812 = vadd.s32 %v3808, %v3804
        %v3813 = vadd.s32 %v3809, %v3811
        %v3814 = vadd.s32 %v3813, %v3803
        %v3815 = vadd.s32 %v3814, %v3805
        %v3816 = vand.u32 %v3793, 65535
        %v3817 = vshrl.u32 %v3793, 16
        %v3818 = vand.u32 %v3788, 65535
        %v3819 = vshrl.u32 %v3788, 16
        %v3820 = vmul.u32 %v3816, %v3818
        %v3821 = vmul.u32 %v3816, %v3819
        %v3822 = vmul.u32 %v3817, %v3818
        %v3823 = vmul.u32 %v3817, %v3819
        %v3824 = vshll.u32 %v3821, 16
        %v3825 = vshrl.u32 %v3821, 16
        %v3826 = vshll.u32 %v3822, 16
        %v3827 = vshrl.u32 %v3822, 16
        %vm3828 = vc.u32 %v3820, %v3824
        %v3829 = vsel %vm3828, 1, 0
        %v3830 = vadd.s32 %v3820, %v3824
        %v3831 = vadd.s32 %v3823, %v3829
        %vm3832 = vc.u32 %v3830, %v3826
        %v3833 = vsel %vm3832, 1, 0
        %v3834 = vadd.s32 %v3830, %v3826
        %v3835 = vadd.s32 %v3831, %v3833
        %v3836 = vadd.s32 %v3835, %v3825
        %v3837 = vadd.s32 %v3836, %v3827
        %v3838 = vmul.u32 %v3793, %v3784
        %v3839 = vadd.s32 %v3815, %v3834
        %vm3840 = vc.u32 %v3815, %v3834
        %v3841 = vadd.s32 %v3837, 1
        %v3842 = vsel %vm3840, %v3841, %v3837
        %v3843 = vadd.s32 %v3838, %v3842
        %v3844 = vadd.s32 %v3843, 536870912
        %v3845 = vshrl.u32 %v3844, 30
        %v3846 = vshll.u32 %v3845, 30
        %v3847 = vsub.s32 %v3843, %v3846
        %vm3848 = vcmp.lt.s32.totalorder %v3847, 0
        %v3849 = vsub.s32 0, %v3847
        %v3850 = vsel %vm3848, %v3849, %v3847
        %v3851 = vclz %v3850
        %v3852 = vsub.s32 %v3851, 2
        %vm3853 = vcmp.gt.s32.totalorder 0, %v3852
        %v3854 = vsel %vm3853, 0, %v3852
        %v3855 = vsub.s32 32, %v3854
        %v3856 = vshll.u32 %v3847, %v3854
        %v3857 = vshrl.u32 %v3839, %v3855
        %v3858 = vor.u32 %v3856, %v3857
        %v3859 = vsub.s32 4294967266, %v3854
        %v3860 = vadd.s32 %v3859, 127
        %v3861 = vshll.u32 %v3860, 23
        %v3862 = vor.u32 4788187, %v3861
        %v3863 = vand.u32 2147483647, %v3862
        %v3865 = vcvt.s32.f32 %v3858
        %v3866 = vmul.f32 %v3865, %v3863
        %v3867 = vxor.u32 %v3866, 2147483648
        %v3868 = vsel %vm3747, %v3867, %v3866
        %v3869 = vsub.s32 4, %v3845
        %v3870 = vsel %vm3747, %v3869, %v3845
        %v3871 = vsel %vm3746, %v3030, %v3868
        %v3872 = vsel %vm3746, 0, %v3870
        %v3873 = vmul.f32 %v3871, %v3871
        %v3874 = vmul.f32 %v3873, -0.001358992
        %v3875 = vadd.f32 %v3874, 0.041655596
        %v3876 = vmul.f32 %v3873, %v3875
        %v3877 = vadd.f32 %v3876, -0.4999988
        %v3878 = vmul.f32 %v3873, %v3877
        %v3879 = vadd.f32 1.0, %v3878
        %v3880 = vmul.f32 %v3871, %v3871
        %v3881 = vmul.f32 %v3880, -0.00019511016
        %v3882 = vadd.f32 %v3881, 0.008332121
        %v3883 = vmul.f32 %v3880, %v3882
        %v3884 = vadd.f32 %v3883, -0.16666654
        %v3885 = vmul.f32 %v3880, %v3884
        %v3886 = vadd.f32 %v3885, 1.0
        %v3887 = vmul.f32 %v3886, %v3871
        %vm3888 = vweird.f32 %v3030
        %v3889 = vadd.s32 %v3872, 3
        %v3890 = vand.u32 %v3889, 3
        %vm3891 = vcmp.lt.s32.totalorder %v3890, 2
        %vm3892 = vcmp.eq.s32.totalorder %v3890, 0
        %v3893 = vxor.u32 %v3887, 2147483648
        %v3894 = vsel %vm3892, %v3879, %v3893
        %vm3895 = vcmp.eq.s32.totalorder %v3890, 2
        %v3896 = vxor.u32 %v3879, 2147483648
        %v3897 = vsel %vm3895, %v3896, %v3887
        %v3898 = vsel %vm3891, %v3894, %v3897
        %v3899 = vsel %vm3888, nan, %v3898
        %v3900 = vand.u32 2147483647, %v3059
        %vm3901 = vcmp.le.f32.partialorder %v3900, 0.7853982
        %vm3902 = vcmp.lt.s32.totalorder %v3059, 0
        %v3903 = vand.u32 %v3059, 2139095040
        %v3904 = vshrl.u32 %v3903, 23
        %v3905 = vsub.s32 %v3904, 127
        %v3906 = vand.u32 2147483647, %v3059
        %v3907 = vand.u32 %v3906, 8388607
        %v3908 = vor.u32 %v3907, 8388608
        %v3909 = vsub.s32 0, %v3908
        %v3910 = vadd.s32 %v3905, 1
        %vm3911 = vcmp.gt.s32.totalorder %v3910, 0
        %v3912 = vsel %vm3911, %v3910, 0
        %v3913 = vshrl.u32 %v3912, 5
        %v3914 = vand.u32 %v3912, 31
        %v3915 = vsub.s32 32, %v3914
        %v3916 = vshrl.u32 683565275, %v3915
        %v3917 = vshll.u32 683565275, %v3914
        %v3918 = vshrl.u32 2475754826, %v3915
        %v3919 = vor.u32 %v3917, %v3918
        %v3920 = vshll.u32 2475754826, %v3914
        %v3921 = vshrl.u32 2131351028, %v3915
        %v3922 = vor.u32 %v3920, %v3921
        %v3923 = vshll.u32 2131351028, %v3914
        %v3924 = vshrl.u32 2102212464, %v3915
        %v3925 = vor.u32 %v3923, %v3924
        %v3926 = vshll.u32 2102212464, %v3914
        %v3927 = vshrl.u32 920167782, %v3915
        %v3928 = vor.u32 %v3926, %v3927
        %v3929 = vshll.u32 920167782, %v3914
        %v3930 = vshrl.u32 1326507024, %v3915
        %v3931 = vor.u32 %v3929, %v3930
        %vm3932 = vcmp.lt.s32.totalorder %v3913, 1
        %vm3933 = vcmp.lt.s32.totalorder %v3913, 2
        %vm3934 = vcmp.lt.s32.totalorder %v3913, 3
        %vm3935 = vcmp.lt.s32.totalorder %v3913, 4
        %v3936 = vsel %vm3932, %v3916, %v3919
        %v3937 = vsel %vm3935, %v3925, 2102212464
        %v3938 = vsel %vm3934, %v3922, %v3937
        %v3939 = vsel %vm3933, %v3936, %v3938
        %v3940 = vsel %vm3932, %v3919, %v3922
        %v3941 = vsel %vm3935, %v3928, 920167782
        %v3942 = vsel %vm3934, %v3925, %v3941
        %v3943 = vsel %vm3933, %v3940, %v3942
        %v3944 = vsel %vm3932, %v3922, %v3925
        %v3945 = vsel %vm3935, %v3931, 1326507024
        %v3946 = vsel %vm3934, %v3928, %v3945
        %v3947 = vsel %vm3933, %v3944, %v3946
        %v3948 = vshll.u32 %v3908, 8
        %v3949 = vand.u32 %v3948, 65535
        %v3950 = vshrl.u32 %v3948, 16
        %v3951 = vand.u32 %v3947, 65535
        %v3952 = vshrl.u32 %v3947, 16
        %v3953 = vmul.u32 %v3949, %v3951
        %v3954 = vmul.u32 %v3949, %v3952
        %v3955 = vmul.u32 %v3950, %v3951
        %v3956 = vmul.u32 %v3950, %v3952
        %v3957 = vshll.u32 %v3954, 16
        %v3958 = vshrl.u32 %v3954, 16
        %v3959 = vshll.u32 %v3955, 16
        %v3960 = vshrl.u32 %v3955, 16
        %vm3961 = vc.u32 %v3953, %v3957
        %v3962 = vsel %vm3961, 1, 0
        %v3963 = vadd.s32 %v3953, %v3957
        %v3964 = vadd.s32 %v3956, %v3962
        %vm3965 = vc.u32 %v3963, %v3959
        %v3966 = vsel %vm3965, 1, 0
        %v3967 = vadd.s32 %v3963, %v3959
        %v3968 = vadd.s32 %v3964, %v3966
        %v3969 = vadd.s32 %v3968, %v3958
        %v3970 = vadd.s32 %v3969, %v3960
        %v3971 = vand.u32 %v3948, 65535
        %v3972 = vshrl.u32 %v3948, 16
        %v3973 = vand.u32 %v3943, 65535
        %v3974 = vshrl.u32 %v3943, 16
        %v3975 = vmul.u32 %v3971, %v3973
        %v3976 = vmul.u32 %v3971, %v3974
        %v3977 = vmul.u32 %v3972, %v3973
        %v3978 = vmul.u32 %v3972, %v3974
        %v3979 = vshll.u32 %v3976, 16
        %v3980 = vshrl.u32 %v3976, 16
        %v3981 = vshll.u32 %v3977, 16
        %v3982 = vshrl.u32 %v3977, 16
        %vm3983 = vc.u32 %v3975, %v3979
        %v3984 = vsel %vm3983, 1, 0
        %v3985 = vadd.s32 %v3975, %v3979
        %v3986 = vadd.s32 %v3978, %v3984
        %vm3987 = vc.u32 %v3985, %v3981
        %v3988 = vsel %vm3987, 1, 0
        %v3989 = vadd.s32 %v3985, %v3981
        %v3990 = vadd.s32 %v3986, %v3988
        %v3991 = vadd.s32 %v3990, %v3980
        %v3992 = vadd.s32 %v3991, %v3982
        %v3993 = vmul.u32 %v3948, %v3939
        %v3994 = vadd.s32 %v3970, %v3989
        %vm3995 = vc.u32 %v3970, %v3989
        %v3996 = vadd.s32 %v3992, 1
        %v3997 = vsel %vm3995, %v3996, %v3992
        %v3998 = vadd.s32 %v3993, %v3997
        %v3999 = vadd.s32 %v3998, 536870912
        %v4000 = vshrl.u32 %v3999, 30
        %v4001 = vshll.u32 %v4000, 30
        %v4002 = vsub.s32 %v3998, %v4001
        %vm4003 = vcmp.lt.s32.totalorder %v4002, 0
        %v4004 = vsub.s32 0, %v4002
        %v4005 = vsel %vm4003, %v4004, %v4002
        %v4006 = vclz %v4005
        %v4007 = vsub.s32 %v4006, 2
        %vm4008 = vcmp.gt.s32.totalorder 0, %v4007
        %v4009 = vsel %vm4008, 0, %v4007
        %v4010 = vsub.s32 32, %v4009
        %v4011 = vshll.u32 %v4002, %v4009
        %v4012 = vshrl.u32 %v3994, %v4010
        %v4013 = vor.u32 %v4011, %v4012
        %v4014 = vsub.s32 4294967266, %v4009
        %v4015 = vadd.s32 %v4014, 127
        %v4016 = vshll.u32 %v4015, 23
        %v4017 = vor.u32 4788187, %v4016
        %v4018 = vand.u32 2147483647, %v4017
        %v4020 = vcvt.s32.f32 %v4013
        %v4021 = vmul.f32 %v4020, %v4018
        %v4022 = vxor.u32 %v4021, 2147483648
        %v4023 = vsel %vm3902, %v4022, %v4021
        %v4024 = vsub.s32 4, %v4000
        %v4025 = vsel %vm3902, %v4024, %v4000
        %v4026 = vsel %vm3901, %v3059, %v4023
        %v4027 = vsel %vm3901, 0, %v4025
        %v4028 = vmul.f32 %v4026, %v4026
        %v4029 = vmul.f32 %v4028, -0.001358992
        %v4030 = vadd.f32 %v4029, 0.041655596
        %v4031 = vmul.f32 %v4028, %v4030
        %v4032 = vadd.f32 %v4031, -0.4999988
        %v4033 = vmul.f32 %v4028, %v4032
        %v4034 = vadd.f32 1.0, %v4033
        %v4035 = vmul.f32 %v4026, %v4026
        %v4036 = vmul.f32 %v4035, -0.00019511016
        %v4037 = vadd.f32 %v4036, 0.008332121
        %v4038 = vmul.f32 %v4035, %v4037
        %v4039 = vadd.f32 %v4038, -0.16666654
        %v4040 = vmul.f32 %v4035, %v4039
        %v4041 = vadd.f32 %v4040, 1.0
        %v4042 = vmul.f32 %v4041, %v4026
        %vm4043 = vweird.f32 %v3059
        %v4044 = vadd.s32 %v4027, 3
        %v4045 = vand.u32 %v4044, 3
        %vm4046 = vcmp.lt.s32.totalorder %v4045, 2
        %vm4047 = vcmp.eq.s32.totalorder %v4045, 0
        %v4048 = vxor.u32 %v4042, 2147483648
        %v4049 = vsel %vm4047, %v4034, %v4048
        %vm4050 = vcmp.eq.s32.totalorder %v4045, 2
        %v4051 = vxor.u32 %v4034, 2147483648
        %v4052 = vsel %vm4050, %v4051, %v4042
        %v4053 = vsel %vm4046, %v4049, %v4052
        %v4054 = vsel %vm4043, nan, %v4053
        %v4055 = vand.u32 2147483647, %v3088
        %vm4056 = vcmp.le.f32.partialorder %v4055, 0.7853982
        %vm4057 = vcmp.lt.s32.totalorder %v3088, 0
        %v4058 = vand.u32 %v3088, 2139095040
        %v4059 = vshrl.u32 %v4058, 23
        %v4060 = vsub.s32 %v4059, 127
        %v4061 = vand.u32 2147483647, %v3088
        %v4062 = vand.u32 %v4061, 8388607
        %v4063 = vor.u32 %v4062, 8388608
        %v4064 = vsub.s32 0, %v4063
        %v4065 = vadd.s32 %v4060, 1
        %vm4066 = vcmp.gt.s32.totalorder %v4065, 0
        %v4067 = vsel %vm4066, %v4065, 0
        %v4068 = vshrl.u32 %v4067, 5
        %v4069 = vand.u32 %v4067, 31
        %v4070 = vsub.s32 32, %v4069
        %v4071 = vshrl.u32 683565275, %v4070
        %v4072 = vshll.u32 683565275, %v4069
        %v4073 = vshrl.u32 2475754826, %v4070
        %v4074 = vor.u32 %v4072, %v4073
        %v4075 = vshll.u32 2475754826, %v4069
        %v4076 = vshrl.u32 2131351028, %v4070
        %v4077 = vor.u32 %v4075, %v4076
        %v4078 = vshll.u32 2131351028, %v4069
        %v4079 = vshrl.u32 2102212464, %v4070
        %v4080 = vor.u32 %v4078, %v4079
        %v4081 = vshll.u32 2102212464, %v4069
        %v4082 = vshrl.u32 920167782, %v4070
        %v4083 = vor.u32 %v4081, %v4082
        %v4084 = vshll.u32 920167782, %v4069
        %v4085 = vshrl.u32 1326507024, %v4070
        %v4086 = vor.u32 %v4084, %v4085
        %vm4087 = vcmp.lt.s32.totalorder %v4068, 1
        %vm4088 = vcmp.lt.s32.totalorder %v4068, 2
        %vm4089 = vcmp.lt.s32.totalorder %v4068, 3
        %vm4090 = vcmp.lt.s32.totalorder %v4068, 4
        %v4091 = vsel %vm4087, %v4071, %v4074
        %v4092 = vsel %vm4090, %v4080, 2102212464
        %v4093 = vsel %vm4089, %v4077, %v4092
        %v4094 = vsel %vm4088, %v4091, %v4093
        %v4095 = vsel %vm4087, %v4074, %v4077
        %v4096 = vsel %vm4090, %v4083, 920167782
        %v4097 = vsel %vm4089, %v4080, %v4096
        %v4098 = vsel %vm4088, %v4095, %v4097
        %v4099 = vsel %vm4087, %v4077, %v4080
        %v4100 = vsel %vm4090, %v4086, 1326507024
        %v4101 = vsel %vm4089, %v4083, %v4100
        %v4102 = vsel %vm4088, %v4099, %v4101
        %v4103 = vshll.u32 %v4063, 8
        %v4104 = vand.u32 %v4103, 65535
        %v4105 = vshrl.u32 %v4103, 16
        %v4106 = vand.u32 %v4102, 65535
        %v4107 = vshrl.u32 %v4102, 16
        %v4108 = vmul.u32 %v4104, %v4106
        %v4109 = vmul.u32 %v4104, %v4107
        %v4110 = vmul.u32 %v4105, %v4106
        %v4111 = vmul.u32 %v4105, %v4107
        %v4112 = vshll.u32 %v4109, 16
        %v4113 = vshrl.u32 %v4109, 16
        %v4114 = vshll.u32 %v4110, 16
        %v4115 = vshrl.u32 %v4110, 16
        %vm4116 = vc.u32 %v4108, %v4112
        %v4117 = vsel %vm4116, 1, 0
        %v4118 = vadd.s32 %v4108, %v4112
        %v4119 = vadd.s32 %v4111, %v4117
        %vm4120 = vc.u32 %v4118, %v4114
        %v4121 = vsel %vm4120, 1, 0
        %v4122 = vadd.s32 %v4118, %v4114
        %v4123 = vadd.s32 %v4119, %v4121
        %v4124 = vadd.s32 %v4123, %v4113
        %v4125 = vadd.s32 %v4124, %v4115
        %v4126 = vand.u32 %v4103, 65535
        %v4127 = vshrl.u32 %v4103, 16
        %v4128 = vand.u32 %v4098, 65535
        %v4129 = vshrl.u32 %v4098, 16
        %v4130 = vmul.u32 %v4126, %v4128
        %v4131 = vmul.u32 %v4126, %v4129
        %v4132 = vmul.u32 %v4127, %v4128
        %v4133 = vmul.u32 %v4127, %v4129
        %v4134 = vshll.u32 %v4131, 16
        %v4135 = vshrl.u32 %v4131, 16
        %v4136 = vshll.u32 %v4132, 16
        %v4137 = vshrl.u32 %v4132, 16
        %vm4138 = vc.u32 %v4130, %v4134
        %v4139 = vsel %vm4138, 1, 0
        %v4140 = vadd.s32 %v4130, %v4134
        %v4141 = vadd.s32 %v4133, %v4139
        %vm4142 = vc.u32 %v4140, %v4136
        %v4143 = vsel %vm4142, 1, 0
        %v4144 = vadd.s32 %v4140, %v4136
        %v4145 = vadd.s32 %v4141, %v4143
        %v4146 = vadd.s32 %v4145, %v4135
        %v4147 = vadd.s32 %v4146, %v4137
        %v4148 = vmul.u32 %v4103, %v4094
        %v4149 = vadd.s32 %v4125, %v4144
        %vm4150 = vc.u32 %v4125, %v4144
        %v4151 = vadd.s32 %v4147, 1
        %v4152 = vsel %vm4150, %v4151, %v4147
        %v4153 = vadd.s32 %v4148, %v4152
        %v4154 = vadd.s32 %v4153, 536870912
        %v4155 = vshrl.u32 %v4154, 30
        %v4156 = vshll.u32 %v4155, 30
        %v4157 = vsub.s32 %v4153, %v4156
        %vm4158 = vcmp.lt.s32.totalorder %v4157, 0
        %v4159 = vsub.s32 0, %v4157
        %v4160 = vsel %vm4158, %v4159, %v4157
        %v4161 = vclz %v4160
        %v4162 = vsub.s32 %v4161, 2
        %vm4163 = vcmp.gt.s32.totalorder 0, %v4162
        %v4164 = vsel %vm4163, 0, %v4162
        %v4165 = vsub.s32 32, %v4164
        %v4166 = vshll.u32 %v4157, %v4164
        %v4167 = vshrl.u32 %v4149, %v4165
        %v4168 = vor.u32 %v4166, %v4167
        %v4169 = vsub.s32 4294967266, %v4164
        %v4170 = vadd.s32 %v4169, 127
        %v4171 = vshll.u32 %v4170, 23
        %v4172 = vor.u32 4788187, %v4171
        %v4173 = vand.u32 2147483647, %v4172
        %v4175 = vcvt.s32.f32 %v4168
        %v4176 = vmul.f32 %v4175, %v4173
        %v4177 = vxor.u32 %v4176, 2147483648
        %v4178 = vsel %vm4057, %v4177, %v4176
        %v4179 = vsub.s32 4, %v4155
        %v4180 = vsel %vm4057, %v4179, %v4155
        %v4181 = vsel %vm4056, %v3088, %v4178
        %v4182 = vsel %vm4056, 0, %v4180
        %v4183 = vmul.f32 %v4181, %v4181
        %v4184 = vmul.f32 %v4183, -0.001358992
        %v4185 = vadd.f32 %v4184, 0.041655596
        %v4186 = vmul.f32 %v4183, %v4185
        %v4187 = vadd.f32 %v4186, -0.4999988
        %v4188 = vmul.f32 %v4183, %v4187
        %v4189 = vadd.f32 1.0, %v4188
        %v4190 = vmul.f32 %v4181, %v4181
        %v4191 = vmul.f32 %v4190, -0.00019511016
        %v4192 = vadd.f32 %v4191, 0.008332121
        %v4193 = vmul.f32 %v4190, %v4192
        %v4194 = vadd.f32 %v4193, -0.16666654
        %v4195 = vmul.f32 %v4190, %v4194
        %v4196 = vadd.f32 %v4195, 1.0
        %v4197 = vmul.f32 %v4196, %v4181
        %vm4198 = vweird.f32 %v3088
        %v4199 = vadd.s32 %v4182, 3
        %v4200 = vand.u32 %v4199, 3
        %vm4201 = vcmp.lt.s32.totalorder %v4200, 2
        %vm4202 = vcmp.eq.s32.totalorder %v4200, 0
        %v4203 = vxor.u32 %v4197, 2147483648
        %v4204 = vsel %vm4202, %v4189, %v4203
        %vm4205 = vcmp.eq.s32.totalorder %v4200, 2
        %v4206 = vxor.u32 %v4189, 2147483648
        %v4207 = vsel %vm4205, %v4206, %v4197
        %v4208 = vsel %vm4201, %v4204, %v4207
        %v4209 = vsel %vm4198, nan, %v4208
        %v4210 = vand.u32 2147483647, %v3117
        %vm4211 = vcmp.le.f32.partialorder %v4210, 0.7853982
        %vm4212 = vcmp.lt.s32.totalorder %v3117, 0
        %v4213 = vand.u32 %v3117, 2139095040
        %v4214 = vshrl.u32 %v4213, 23
        %v4215 = vsub.s32 %v4214, 127
        %v4216 = vand.u32 2147483647, %v3117
        %v4217 = vand.u32 %v4216, 8388607
        %v4218 = vor.u32 %v4217, 8388608
        %v4219 = vsub.s32 0, %v4218
        %v4220 = vadd.s32 %v4215, 1
        %vm4221 = vcmp.gt.s32.totalorder %v4220, 0
        %v4222 = vsel %vm4221, %v4220, 0
        %v4223 = vshrl.u32 %v4222, 5
        %v4224 = vand.u32 %v4222, 31
        %v4225 = vsub.s32 32, %v4224
        %v4226 = vshrl.u32 683565275, %v4225
        %v4227 = vshll.u32 683565275, %v4224
        %v4228 = vshrl.u32 2475754826, %v4225
        %v4229 = vor.u32 %v4227, %v4228
        %v4230 = vshll.u32 2475754826, %v4224
        %v4231 = vshrl.u32 2131351028, %v4225
        %v4232 = vor.u32 %v4230, %v4231
        %v4233 = vshll.u32 2131351028, %v4224
        %v4234 = vshrl.u32 2102212464, %v4225
        %v4235 = vor.u32 %v4233, %v4234
        %v4236 = vshll.u32 2102212464, %v4224
        %v4237 = vshrl.u32 920167782, %v4225
        %v4238 = vor.u32 %v4236, %v4237
        %v4239 = vshll.u32 920167782, %v4224
        %v4240 = vshrl.u32 1326507024, %v4225
        %v4241 = vor.u32 %v4239, %v4240
        %vm4242 = vcmp.lt.s32.totalorder %v4223, 1
        %vm4243 = vcmp.lt.s32.totalorder %v4223, 2
        %vm4244 = vcmp.lt.s32.totalorder %v4223, 3
        %vm4245 = vcmp.lt.s32.totalorder %v4223, 4
        %v4246 = vsel %vm4242, %v4226, %v4229
        %v4247 = vsel %vm4245, %v4235, 2102212464
        %v4248 = vsel %vm4244, %v4232, %v4247
        %v4249 = vsel %vm4243, %v4246, %v4248
        %v4250 = vsel %vm4242, %v4229, %v4232
        %v4251 = vsel %vm4245, %v4238, 920167782
        %v4252 = vsel %vm4244, %v4235, %v4251
        %v4253 = vsel %vm4243, %v4250, %v4252
        %v4254 = vsel %vm4242, %v4232, %v4235
        %v4255 = vsel %vm4245, %v4241, 1326507024
        %v4256 = vsel %vm4244, %v4238, %v4255
        %v4257 = vsel %vm4243, %v4254, %v4256
        %v4258 = vshll.u32 %v4218, 8
        %v4259 = vand.u32 %v4258, 65535
        %v4260 = vshrl.u32 %v4258, 16
        %v4261 = vand.u32 %v4257, 65535
        %v4262 = vshrl.u32 %v4257, 16
        %v4263 = vmul.u32 %v4259, %v4261
        %v4264 = vmul.u32 %v4259, %v4262
        %v4265 = vmul.u32 %v4260, %v4261
        %v4266 = vmul.u32 %v4260, %v4262
        %v4267 = vshll.u32 %v4264, 16
        %v4268 = vshrl.u32 %v4264, 16
        %v4269 = vshll.u32 %v4265, 16
        %v4270 = vshrl.u32 %v4265, 16
        %vm4271 = vc.u32 %v4263, %v4267
        %v4272 = vsel %vm4271, 1, 0
        %v4273 = vadd.s32 %v4263, %v4267
        %v4274 = vadd.s32 %v4266, %v4272
        %vm4275 = vc.u32 %v4273, %v4269
        %v4276 = vsel %vm4275, 1, 0
        %v4277 = vadd.s32 %v4273, %v4269
        %v4278 = vadd.s32 %v4274, %v4276
        %v4279 = vadd.s32 %v4278, %v4268
        %v4280 = vadd.s32 %v4279, %v4270
        %v4281 = vand.u32 %v4258, 65535
        %v4282 = vshrl.u32 %v4258, 16
        %v4283 = vand.u32 %v4253, 65535
        %v4284 = vshrl.u32 %v4253, 16
        %v4285 = vmul.u32 %v4281, %v4283
        %v4286 = vmul.u32 %v4281, %v4284
        %v4287 = vmul.u32 %v4282, %v4283
        %v4288 = vmul.u32 %v4282, %v4284
        %v4289 = vshll.u32 %v4286, 16
        %v4290 = vshrl.u32 %v4286, 16
        %v4291 = vshll.u32 %v4287, 16
        %v4292 = vshrl.u32 %v4287, 16
        %vm4293 = vc.u32 %v4285, %v4289
        %v4294 = vsel %vm4293, 1, 0
        %v4295 = vadd.s32 %v4285, %v4289
        %v4296 = vadd.s32 %v4288, %v4294
        %vm4297 = vc.u32 %v4295, %v4291
        %v4298 = vsel %vm4297, 1, 0
        %v4299 = vadd.s32 %v4295, %v4291
        %v4300 = vadd.s32 %v4296, %v4298
        %v4301 = vadd.s32 %v4300, %v4290
        %v4302 = vadd.s32 %v4301, %v4292
        %v4303 = vmul.u32 %v4258, %v4249
        %v4304 = vadd.s32 %v4280, %v4299
        %vm4305 = vc.u32 %v4280, %v4299
        %v4306 = vadd.s32 %v4302, 1
        %v4307 = vsel %vm4305, %v4306, %v4302
        %v4308 = vadd.s32 %v4303, %v4307
        %v4309 = vadd.s32 %v4308, 536870912
        %v4310 = vshrl.u32 %v4309, 30
        %v4311 = vshll.u32 %v4310, 30
        %v4312 = vsub.s32 %v4308, %v4311
        %vm4313 = vcmp.lt.s32.totalorder %v4312, 0
        %v4314 = vsub.s32 0, %v4312
        %v4315 = vsel %vm4313, %v4314, %v4312
        %v4316 = vclz %v4315
        %v4317 = vsub.s32 %v4316, 2
        %vm4318 = vcmp.gt.s32.totalorder 0, %v4317
        %v4319 = vsel %vm4318, 0, %v4317
        %v4320 = vsub.s32 32, %v4319
        %v4321 = vshll.u32 %v4312, %v4319
        %v4322 = vshrl.u32 %v4304, %v4320
        %v4323 = vor.u32 %v4321, %v4322
        %v4324 = vsub.s32 4294967266, %v4319
        %v4325 = vadd.s32 %v4324, 127
        %v4326 = vshll.u32 %v4325, 23
        %v4327 = vor.u32 4788187, %v4326
        %v4328 = vand.u32 2147483647, %v4327
        %v4330 = vcvt.s32.f32 %v4323
        %v4331 = vmul.f32 %v4330, %v4328
        %v4332 = vxor.u32 %v4331, 2147483648
        %v4333 = vsel %vm4212, %v4332, %v4331
        %v4334 = vsub.s32 4, %v4310
        %v4335 = vsel %vm4212, %v4334, %v4310
        %v4336 = vsel %vm4211, %v3117, %v4333
        %v4337 = vsel %vm4211, 0, %v4335
        %v4338 = vmul.f32 %v4336, %v4336
        %v4339 = vmul.f32 %v4338, -0.001358992
        %v4340 = vadd.f32 %v4339, 0.041655596
        %v4341 = vmul.f32 %v4338, %v4340
        %v4342 = vadd.f32 %v4341, -0.4999988
        %v4343 = vmul.f32 %v4338, %v4342
        %v4344 = vadd.f32 1.0, %v4343
        %v4345 = vmul.f32 %v4336, %v4336
        %v4346 = vmul.f32 %v4345, -0.00019511016
        %v4347 = vadd.f32 %v4346, 0.008332121
        %v4348 = vmul.f32 %v4345, %v4347
        %v4349 = vadd.f32 %v4348, -0.16666654
        %v4350 = vmul.f32 %v4345, %v4349
        %v4351 = vadd.f32 %v4350, 1.0
        %v4352 = vmul.f32 %v4351, %v4336
        %vm4353 = vweird.f32 %v3117
        %v4354 = vadd.s32 %v4337, 3
        %v4355 = vand.u32 %v4354, 3
        %vm4356 = vcmp.lt.s32.totalorder %v4355, 2
        %vm4357 = vcmp.eq.s32.totalorder %v4355, 0
        %v4358 = vxor.u32 %v4352, 2147483648
        %v4359 = vsel %vm4357, %v4344, %v4358
        %vm4360 = vcmp.eq.s32.totalorder %v4355, 2
        %v4361 = vxor.u32 %v4344, 2147483648
        %v4362 = vsel %vm4360, %v4361, %v4352
        %v4363 = vsel %vm4356, %v4359, %v4362
        %v4364 = vsel %vm4353, nan, %v4363
        %v4365 = vand.u32 2147483647, %v3033
        %vm4366 = vcmp.le.f32.partialorder %v4365, 0.7853982
        %vm4367 = vcmp.lt.s32.totalorder %v3033, 0
        %v4368 = vand.u32 %v3033, 2139095040
        %v4369 = vshrl.u32 %v4368, 23
        %v4370 = vsub.s32 %v4369, 127
        %v4371 = vand.u32 2147483647, %v3033
        %v4372 = vand.u32 %v4371, 8388607
        %v4373 = vor.u32 %v4372, 8388608
        %v4374 = vsub.s32 0, %v4373
        %v4375 = vadd.s32 %v4370, 1
        %vm4376 = vcmp.gt.s32.totalorder %v4375, 0
        %v4377 = vsel %vm4376, %v4375, 0
        %v4378 = vshrl.u32 %v4377, 5
        %v4379 = vand.u32 %v4377, 31
        %v4380 = vsub.s32 32, %v4379
        %v4381 = vshrl.u32 683565275, %v4380
        %v4382 = vshll.u32 683565275, %v4379
        %v4383 = vshrl.u32 2475754826, %v4380
        %v4384 = vor.u32 %v4382, %v4383
        %v4385 = vshll.u32 2475754826, %v4379
        %v4386 = vshrl.u32 2131351028, %v4380
        %v4387 = vor.u32 %v4385, %v4386
        %v4388 = vshll.u32 2131351028, %v4379
        %v4389 = vshrl.u32 2102212464, %v4380
        %v4390 = vor.u32 %v4388, %v4389
        %v4391 = vshll.u32 2102212464, %v4379
        %v4392 = vshrl.u32 920167782, %v4380
        %v4393 = vor.u32 %v4391, %v4392
        %v4394 = vshll.u32 920167782, %v4379
        %v4395 = vshrl.u32 1326507024, %v4380
        %v4396 = vor.u32 %v4394, %v4395
        %vm4397 = vcmp.lt.s32.totalorder %v4378, 1
        %vm4398 = vcmp.lt.s32.totalorder %v4378, 2
        %vm4399 = vcmp.lt.s32.totalorder %v4378, 3
        %vm4400 = vcmp.lt.s32.totalorder %v4378, 4
        %v4401 = vsel %vm4397, %v4381, %v4384
        %v4402 = vsel %vm4400, %v4390, 2102212464
        %v4403 = vsel %vm4399, %v4387, %v4402
        %v4404 = vsel %vm4398, %v4401, %v4403
        %v4405 = vsel %vm4397, %v4384, %v4387
        %v4406 = vsel %vm4400, %v4393, 920167782
        %v4407 = vsel %vm4399, %v4390, %v4406
        %v4408 = vsel %vm4398, %v4405, %v4407
        %v4409 = vsel %vm4397, %v4387, %v4390
        %v4410 = vsel %vm4400, %v4396, 1326507024
        %v4411 = vsel %vm4399, %v4393, %v4410
        %v4412 = vsel %vm4398, %v4409, %v4411
        %v4413 = vshll.u32 %v4373, 8
        %v4414 = vand.u32 %v4413, 65535
        %v4415 = vshrl.u32 %v4413, 16
        %v4416 = vand.u32 %v4412, 65535
        %v4417 = vshrl.u32 %v4412, 16
        %v4418 = vmul.u32 %v4414, %v4416
        %v4419 = vmul.u32 %v4414, %v4417
        %v4420 = vmul.u32 %v4415, %v4416
        %v4421 = vmul.u32 %v4415, %v4417
        %v4422 = vshll.u32 %v4419, 16
        %v4423 = vshrl.u32 %v4419, 16
        %v4424 = vshll.u32 %v4420, 16
        %v4425 = vshrl.u32 %v4420, 16
        %vm4426 = vc.u32 %v4418, %v4422
        %v4427 = vsel %vm4426, 1, 0
        %v4428 = vadd.s32 %v4418, %v4422
        %v4429 = vadd.s32 %v4421, %v4427
        %vm4430 = vc.u32 %v4428, %v4424
        %v4431 = vsel %vm4430, 1, 0
        %v4432 = vadd.s32 %v4428, %v4424
        %v4433 = vadd.s32 %v4429, %v4431
        %v4434 = vadd.s32 %v4433, %v4423
        %v4435 = vadd.s32 %v4434, %v4425
        %v4436 = vand.u32 %v4413, 65535
        %v4437 = vshrl.u32 %v4413, 16
        %v4438 = vand.u32 %v4408, 65535
        %v4439 = vshrl.u32 %v4408, 16
        %v4440 = vmul.u32 %v4436, %v4438
        %v4441 = vmul.u32 %v4436, %v4439
        %v4442 = vmul.u32 %v4437, %v4438
        %v4443 = vmul.u32 %v4437, %v4439
        %v4444 = vshll.u32 %v4441, 16
        %v4445 = vshrl.u32 %v4441, 16
        %v4446 = vshll.u32 %v4442, 16
        %v4447 = vshrl.u32 %v4442, 16
        %vm4448 = vc.u32 %v4440, %v4444
        %v4449 = vsel %vm4448, 1, 0
        %v4450 = vadd.s32 %v4440, %v4444
        %v4451 = vadd.s32 %v4443, %v4449
        %vm4452 = vc.u32 %v4450, %v4446
        %v4453 = vsel %vm4452, 1, 0
        %v4454 = vadd.s32 %v4450, %v4446
        %v4455 = vadd.s32 %v4451, %v4453
        %v4456 = vadd.s32 %v4455, %v4445
        %v4457 = vadd.s32 %v4456, %v4447
        %v4458 = vmul.u32 %v4413, %v4404
        %v4459 = vadd.s32 %v4435, %v4454
        %vm4460 = vc.u32 %v4435, %v4454
        %v4461 = vadd.s32 %v4457, 1
        %v4462 = vsel %vm4460, %v4461, %v4457
        %v4463 = vadd.s32 %v4458, %v4462
        %v4464 = vadd.s32 %v4463, 536870912
        %v4465 = vshrl.u32 %v4464, 30
        %v4466 = vshll.u32 %v4465, 30
        %v4467 = vsub.s32 %v4463, %v4466
        %vm4468 = vcmp.lt.s32.totalorder %v4467, 0
        %v4469 = vsub.s32 0, %v4467
        %v4470 = vsel %vm4468, %v4469, %v4467
        %v4471 = vclz %v4470
        %v4472 = vsub.s32 %v4471, 2
        %vm4473 = vcmp.gt.s32.totalorder 0, %v4472
        %v4474 = vsel %vm4473, 0, %v4472
        %v4475 = vsub.s32 32, %v4474
        %v4476 = vshll.u32 %v4467, %v4474
        %v4477 = vshrl.u32 %v4459, %v4475
        %v4478 = vor.u32 %v4476, %v4477
        %v4479 = vsub.s32 4294967266, %v4474
        %v4480 = vadd.s32 %v4479, 127
        %v4481 = vshll.u32 %v4480, 23
        %v4482 = vor.u32 4788187, %v4481
        %v4483 = vand.u32 2147483647, %v4482
        %v4485 = vcvt.s32.f32 %v4478
        %v4486 = vmul.f32 %v4485, %v4483
        %v4487 = vxor.u32 %v4486, 2147483648
        %v4488 = vsel %vm4367, %v4487, %v4486
        %v4489 = vsub.s32 4, %v4465
        %v4490 = vsel %vm4367, %v4489, %v4465
        %v4491 = vsel %vm4366, %v3033, %v4488
        %v4492 = vsel %vm4366, 0, %v4490
        %v4493 = vmul.f32 %v4491, %v4491
        %v4494 = vmul.f32 %v4493, -0.001358992
        %v4495 = vadd.f32 %v4494, 0.041655596
        %v4496 = vmul.f32 %v4493, %v4495
        %v4497 = vadd.f32 %v4496, -0.4999988
        %v4498 = vmul.f32 %v4493, %v4497
        %v4499 = vadd.f32 1.0, %v4498
        %v4500 = vmul.f32 %v4491, %v4491
        %v4501 = vmul.f32 %v4500, -0.00019511016
        %v4502 = vadd.f32 %v4501, 0.008332121
        %v4503 = vmul.f32 %v4500, %v4502
        %v4504 = vadd.f32 %v4503, -0.16666654
        %v4505 = vmul.f32 %v4500, %v4504
        %v4506 = vadd.f32 %v4505, 1.0
        %v4507 = vmul.f32 %v4506, %v4491
        %vm4508 = vweird.f32 %v3033
        %v4509 = vadd.s32 %v4492, 3
        %v4510 = vand.u32 %v4509, 3
        %vm4511 = vcmp.lt.s32.totalorder %v4510, 2
        %vm4512 = vcmp.eq.s32.totalorder %v4510, 0
        %v4513 = vxor.u32 %v4507, 2147483648
        %v4514 = vsel %vm4512, %v4499, %v4513
        %vm4515 = vcmp.eq.s32.totalorder %v4510, 2
        %v4516 = vxor.u32 %v4499, 2147483648
        %v4517 = vsel %vm4515, %v4516, %v4507
        %v4518 = vsel %vm4511, %v4514, %v4517
        %v4519 = vsel %vm4508, nan, %v4518
        %v4520 = vand.u32 2147483647, %v3062
        %vm4521 = vcmp.le.f32.partialorder %v4520, 0.7853982
        %vm4522 = vcmp.lt.s32.totalorder %v3062, 0
        %v4523 = vand.u32 %v3062, 2139095040
        %v4524 = vshrl.u32 %v4523, 23
        %v4525 = vsub.s32 %v4524, 127
        %v4526 = vand.u32 2147483647, %v3062
        %v4527 = vand.u32 %v4526, 8388607
        %v4528 = vor.u32 %v4527, 8388608
        %v4529 = vsub.s32 0, %v4528
        %v4530 = vadd.s32 %v4525, 1
        %vm4531 = vcmp.gt.s32.totalorder %v4530, 0
        %v4532 = vsel %vm4531, %v4530, 0
        %v4533 = vshrl.u32 %v4532, 5
        %v4534 = vand.u32 %v4532, 31
        %v4535 = vsub.s32 32, %v4534
        %v4536 = vshrl.u32 683565275, %v4535
        %v4537 = vshll.u32 683565275, %v4534
        %v4538 = vshrl.u32 2475754826, %v4535
        %v4539 = vor.u32 %v4537, %v4538
        %v4540 = vshll.u32 2475754826, %v4534
        %v4541 = vshrl.u32 2131351028, %v4535
        %v4542 = vor.u32 %v4540, %v4541
        %v4543 = vshll.u32 2131351028, %v4534
        %v4544 = vshrl.u32 2102212464, %v4535
        %v4545 = vor.u32 %v4543, %v4544
        %v4546 = vshll.u32 2102212464, %v4534
        %v4547 = vshrl.u32 920167782, %v4535
        %v4548 = vor.u32 %v4546, %v4547
        %v4549 = vshll.u32 920167782, %v4534
        %v4550 = vshrl.u32 1326507024, %v4535
        %v4551 = vor.u32 %v4549, %v4550
        %vm4552 = vcmp.lt.s32.totalorder %v4533, 1
        %vm4553 = vcmp.lt.s32.totalorder %v4533, 2
        %vm4554 = vcmp.lt.s32.totalorder %v4533, 3
        %vm4555 = vcmp.lt.s32.totalorder %v4533, 4
        %v4556 = vsel %vm4552, %v4536, %v4539
        %v4557 = vsel %vm4555, %v4545, 2102212464
        %v4558 = vsel %vm4554, %v4542, %v4557
        %v4559 = vsel %vm4553, %v4556, %v4558
        %v4560 = vsel %vm4552, %v4539, %v4542
        %v4561 = vsel %vm4555, %v4548, 920167782
        %v4562 = vsel %vm4554, %v4545, %v4561
        %v4563 = vsel %vm4553, %v4560, %v4562
        %v4564 = vsel %vm4552, %v4542, %v4545
        %v4565 = vsel %vm4555, %v4551, 1326507024
        %v4566 = vsel %vm4554, %v4548, %v4565
        %v4567 = vsel %vm4553, %v4564, %v4566
        %v4568 = vshll.u32 %v4528, 8
        %v4569 = vand.u32 %v4568, 65535
        %v4570 = vshrl.u32 %v4568, 16
        %v4571 = vand.u32 %v4567, 65535
        %v4572 = vshrl.u32 %v4567, 16
        %v4573 = vmul.u32 %v4569, %v4571
        %v4574 = vmul.u32 %v4569, %v4572
        %v4575 = vmul.u32 %v4570, %v4571
        %v4576 = vmul.u32 %v4570, %v4572
        %v4577 = vshll.u32 %v4574, 16
        %v4578 = vshrl.u32 %v4574, 16
        %v4579 = vshll.u32 %v4575, 16
        %v4580 = vshrl.u32 %v4575, 16
        %vm4581 = vc.u32 %v4573, %v4577
        %v4582 = vsel %vm4581, 1, 0
        %v4583 = vadd.s32 %v4573, %v4577
        %v4584 = vadd.s32 %v4576, %v4582
        %vm4585 = vc.u32 %v4583, %v4579
        %v4586 = vsel %vm4585, 1, 0
        %v4587 = vadd.s32 %v4583, %v4579
        %v4588 = vadd.s32 %v4584, %v4586
        %v4589 = vadd.s32 %v4588, %v4578
        %v4590 = vadd.s32 %v4589, %v4580
        %v4591 = vand.u32 %v4568, 65535
        %v4592 = vshrl.u32 %v4568, 16
        %v4593 = vand.u32 %v4563, 65535
        %v4594 = vshrl.u32 %v4563, 16
        %v4595 = vmul.u32 %v4591, %v4593
        %v4596 = vmul.u32 %v4591, %v4594
        %v4597 = vmul.u32 %v4592, %v4593
        %v4598 = vmul.u32 %v4592, %v4594
        %v4599 = vshll.u32 %v4596, 16
        %v4600 = vshrl.u32 %v4596, 16
        %v4601 = vshll.u32 %v4597, 16
        %v4602 = vshrl.u32 %v4597, 16
        %vm4603 = vc.u32 %v4595, %v4599
        %v4604 = vsel %vm4603, 1, 0
        %v4605 = vadd.s32 %v4595, %v4599
        %v4606 = vadd.s32 %v4598, %v4604
        %vm4607 = vc.u32 %v4605, %v4601
        %v4608 = vsel %vm4607, 1, 0
        %v4609 = vadd.s32 %v4605, %v4601
        %v4610 = vadd.s32 %v4606, %v4608
        %v4611 = vadd.s32 %v4610, %v4600
        %v4612 = vadd.s32 %v4611, %v4602
        %v4613 = vmul.u32 %v4568, %v4559
        %v4614 = vadd.s32 %v4590, %v4609
        %vm4615 = vc.u32 %v4590, %v4609
        %v4616 = vadd.s32 %v4612, 1
        %v4617 = vsel %vm4615, %v4616, %v4612
        %v4618 = vadd.s32 %v4613, %v4617
        %v4619 = vadd.s32 %v4618, 536870912
        %v4620 = vshrl.u32 %v4619, 30
        %v4621 = vshll.u32 %v4620, 30
        %v4622 = vsub.s32 %v4618, %v4621
        %vm4623 = vcmp.lt.s32.totalorder %v4622, 0
        %v4624 = vsub.s32 0, %v4622
        %v4625 = vsel %vm4623, %v4624, %v4622
        %v4626 = vclz %v4625
        %v4627 = vsub.s32 %v4626, 2
        %vm4628 = vcmp.gt.s32.totalorder 0, %v4627
        %v4629 = vsel %vm4628, 0, %v4627
        %v4630 = vsub.s32 32, %v4629
        %v4631 = vshll.u32 %v4622, %v4629
        %v4632 = vshrl.u32 %v4614, %v4630
        %v4633 = vor.u32 %v4631, %v4632
        %v4634 = vsub.s32 4294967266, %v4629
        %v4635 = vadd.s32 %v4634, 127
        %v4636 = vshll.u32 %v4635, 23
        %v4637 = vor.u32 4788187, %v4636
        %v4638 = vand.u32 2147483647, %v4637
        %v4640 = vcvt.s32.f32 %v4633
        %v4641 = vmul.f32 %v4640, %v4638
        %v4642 = vxor.u32 %v4641, 2147483648
        %v4643 = vsel %vm4522, %v4642, %v4641
        %v4644 = vsub.s32 4, %v4620
        %v4645 = vsel %vm4522, %v4644, %v4620
        %v4646 = vsel %vm4521, %v3062, %v4643
        %v4647 = vsel %vm4521, 0, %v4645
        %v4648 = vmul.f32 %v4646, %v4646
        %v4649 = vmul.f32 %v4648, -0.001358992
        %v4650 = vadd.f32 %v4649, 0.041655596
        %v4651 = vmul.f32 %v4648, %v4650
        %v4652 = vadd.f32 %v4651, -0.4999988
        %v4653 = vmul.f32 %v4648, %v4652
        %v4654 = vadd.f32 1.0, %v4653
        %v4655 = vmul.f32 %v4646, %v4646
        %v4656 = vmul.f32 %v4655, -0.00019511016
        %v4657 = vadd.f32 %v4656, 0.008332121
        %v4658 = vmul.f32 %v4655, %v4657
        %v4659 = vadd.f32 %v4658, -0.16666654
        %v4660 = vmul.f32 %v4655, %v4659
        %v4661 = vadd.f32 %v4660, 1.0
        %v4662 = vmul.f32 %v4661, %v4646
        %vm4663 = vweird.f32 %v3062
        %v4664 = vadd.s32 %v4647, 3
        %v4665 = vand.u32 %v4664, 3
        %vm4666 = vcmp.lt.s32.totalorder %v4665, 2
        %vm4667 = vcmp.eq.s32.totalorder %v4665, 0
        %v4668 = vxor.u32 %v4662, 2147483648
        %v4669 = vsel %vm4667, %v4654, %v4668
        %vm4670 = vcmp.eq.s32.totalorder %v4665, 2
        %v4671 = vxor.u32 %v4654, 2147483648
        %v4672 = vsel %vm4670, %v4671, %v4662
        %v4673 = vsel %vm4666, %v4669, %v4672
        %v4674 = vsel %vm4663, nan, %v4673
        %v4675 = vand.u32 2147483647, %v3091
        %vm4676 = vcmp.le.f32.partialorder %v4675, 0.7853982
        %vm4677 = vcmp.lt.s32.totalorder %v3091, 0
        %v4678 = vand.u32 %v3091, 2139095040
        %v4679 = vshrl.u32 %v4678, 23
        %v4680 = vsub.s32 %v4679, 127
        %v4681 = vand.u32 2147483647, %v3091
        %v4682 = vand.u32 %v4681, 8388607
        %v4683 = vor.u32 %v4682, 8388608
        %v4684 = vsub.s32 0, %v4683
        %v4685 = vadd.s32 %v4680, 1
        %vm4686 = vcmp.gt.s32.totalorder %v4685, 0
        %v4687 = vsel %vm4686, %v4685, 0
        %v4688 = vshrl.u32 %v4687, 5
        %v4689 = vand.u32 %v4687, 31
        %v4690 = vsub.s32 32, %v4689
        %v4691 = vshrl.u32 683565275, %v4690
        %v4692 = vshll.u32 683565275, %v4689
        %v4693 = vshrl.u32 2475754826, %v4690
        %v4694 = vor.u32 %v4692, %v4693
        %v4695 = vshll.u32 2475754826, %v4689
        %v4696 = vshrl.u32 2131351028, %v4690
        %v4697 = vor.u32 %v4695, %v4696
        %v4698 = vshll.u32 2131351028, %v4689
        %v4699 = vshrl.u32 2102212464, %v4690
        %v4700 = vor.u32 %v4698, %v4699
        %v4701 = vshll.u32 2102212464, %v4689
        %v4702 = vshrl.u32 920167782, %v4690
        %v4703 = vor.u32 %v4701, %v4702
        %v4704 = vshll.u32 920167782, %v4689
        %v4705 = vshrl.u32 1326507024, %v4690
        %v4706 = vor.u32 %v4704, %v4705
        %vm4707 = vcmp.lt.s32.totalorder %v4688, 1
        %vm4708 = vcmp.lt.s32.totalorder %v4688, 2
        %vm4709 = vcmp.lt.s32.totalorder %v4688, 3
        %vm4710 = vcmp.lt.s32.totalorder %v4688, 4
        %v4711 = vsel %vm4707, %v4691, %v4694
        %v4712 = vsel %vm4710, %v4700, 2102212464
        %v4713 = vsel %vm4709, %v4697, %v4712
        %v4714 = vsel %vm4708, %v4711, %v4713
        %v4715 = vsel %vm4707, %v4694, %v4697
        %v4716 = vsel %vm4710, %v4703, 920167782
        %v4717 = vsel %vm4709, %v4700, %v4716
        %v4718 = vsel %vm4708, %v4715, %v4717
        %v4719 = vsel %vm4707, %v4697, %v4700
        %v4720 = vsel %vm4710, %v4706, 1326507024
        %v4721 = vsel %vm4709, %v4703, %v4720
        %v4722 = vsel %vm4708, %v4719, %v4721
        %v4723 = vshll.u32 %v4683, 8
        %v4724 = vand.u32 %v4723, 65535
        %v4725 = vshrl.u32 %v4723, 16
        %v4726 = vand.u32 %v4722, 65535
        %v4727 = vshrl.u32 %v4722, 16
        %v4728 = vmul.u32 %v4724, %v4726
        %v4729 = vmul.u32 %v4724, %v4727
        %v4730 = vmul.u32 %v4725, %v4726
        %v4731 = vmul.u32 %v4725, %v4727
        %v4732 = vshll.u32 %v4729, 16
        %v4733 = vshrl.u32 %v4729, 16
        %v4734 = vshll.u32 %v4730, 16
        %v4735 = vshrl.u32 %v4730, 16
        %vm4736 = vc.u32 %v4728, %v4732
        %v4737 = vsel %vm4736, 1, 0
        %v4738 = vadd.s32 %v4728, %v4732
        %v4739 = vadd.s32 %v4731, %v4737
        %vm4740 = vc.u32 %v4738, %v4734
        %v4741 = vsel %vm4740, 1, 0
        %v4742 = vadd.s32 %v4738, %v4734
        %v4743 = vadd.s32 %v4739, %v4741
        %v4744 = vadd.s32 %v4743, %v4733
        %v4745 = vadd.s32 %v4744, %v4735
        %v4746 = vand.u32 %v4723, 65535
        %v4747 = vshrl.u32 %v4723, 16
        %v4748 = vand.u32 %v4718, 65535
        %v4749 = vshrl.u32 %v4718, 16
        %v4750 = vmul.u32 %v4746, %v4748
        %v4751 = vmul.u32 %v4746, %v4749
        %v4752 = vmul.u32 %v4747, %v4748
        %v4753 = vmul.u32 %v4747, %v4749
        %v4754 = vshll.u32 %v4751, 16
        %v4755 = vshrl.u32 %v4751, 16
        %v4756 = vshll.u32 %v4752, 16
        %v4757 = vshrl.u32 %v4752, 16
        %vm4758 = vc.u32 %v4750, %v4754
        %v4759 = vsel %vm4758, 1, 0
        %v4760 = vadd.s32 %v4750, %v4754
        %v4761 = vadd.s32 %v4753, %v4759
        %vm4762 = vc.u32 %v4760, %v4756
        %v4763 = vsel %vm4762, 1, 0
        %v4764 = vadd.s32 %v4760, %v4756
        %v4765 = vadd.s32 %v4761, %v4763
        %v4766 = vadd.s32 %v4765, %v4755
        %v4767 = vadd.s32 %v4766, %v4757
        %v4768 = vmul.u32 %v4723, %v4714
        %v4769 = vadd.s32 %v4745, %v4764
        %vm4770 = vc.u32 %v4745, %v4764
        %v4771 = vadd.s32 %v4767, 1
        %v4772 = vsel %vm4770, %v4771, %v4767
        %v4773 = vadd.s32 %v4768, %v4772
        %v4774 = vadd.s32 %v4773, 536870912
        %v4775 = vshrl.u32 %v4774, 30
        %v4776 = vshll.u32 %v4775, 30
        %v4777 = vsub.s32 %v4773, %v4776
        %vm4778 = vcmp.lt.s32.totalorder %v4777, 0
        %v4779 = vsub.s32 0, %v4777
        %v4780 = vsel %vm4778, %v4779, %v4777
        %v4781 = vclz %v4780
        %v4782 = vsub.s32 %v4781, 2
        %vm4783 = vcmp.gt.s32.totalorder 0, %v4782
        %v4784 = vsel %vm4783, 0, %v4782
        %v4785 = vsub.s32 32, %v4784
        %v4786 = vshll.u32 %v4777, %v4784
        %v4787 = vshrl.u32 %v4769, %v4785
        %v4788 = vor.u32 %v4786, %v4787
        %v4789 = vsub.s32 4294967266, %v4784
        %v4790 = vadd.s32 %v4789, 127
        %v4791 = vshll.u32 %v4790, 23
        %v4792 = vor.u32 4788187, %v4791
        %v4793 = vand.u32 2147483647, %v4792
        %v4795 = vcvt.s32.f32 %v4788
        %v4796 = vmul.f32 %v4795, %v4793
        %v4797 = vxor.u32 %v4796, 2147483648
        %v4798 = vsel %vm4677, %v4797, %v4796
        %v4799 = vsub.s32 4, %v4775
        %v4800 = vsel %vm4677, %v4799, %v4775
        %v4801 = vsel %vm4676, %v3091, %v4798
        %v4802 = vsel %vm4676, 0, %v4800
        %v4803 = vmul.f32 %v4801, %v4801
        %v4804 = vmul.f32 %v4803, -0.001358992
        %v4805 = vadd.f32 %v4804, 0.041655596
        %v4806 = vmul.f32 %v4803, %v4805
        %v4807 = vadd.f32 %v4806, -0.4999988
        %v4808 = vmul.f32 %v4803, %v4807
        %v4809 = vadd.f32 1.0, %v4808
        %v4810 = vmul.f32 %v4801, %v4801
        %v4811 = vmul.f32 %v4810, -0.00019511016
        %v4812 = vadd.f32 %v4811, 0.008332121
        %v4813 = vmul.f32 %v4810, %v4812
        %v4814 = vadd.f32 %v4813, -0.16666654
        %v4815 = vmul.f32 %v4810, %v4814
        %v4816 = vadd.f32 %v4815, 1.0
        %v4817 = vmul.f32 %v4816, %v4801
        %vm4818 = vweird.f32 %v3091
        %v4819 = vadd.s32 %v4802, 3
        %v4820 = vand.u32 %v4819, 3
        %vm4821 = vcmp.lt.s32.totalorder %v4820, 2
        %vm4822 = vcmp.eq.s32.totalorder %v4820, 0
        %v4823 = vxor.u32 %v4817, 2147483648
        %v4824 = vsel %vm4822, %v4809, %v4823
        %vm4825 = vcmp.eq.s32.totalorder %v4820, 2
        %v4826 = vxor.u32 %v4809, 2147483648
        %v4827 = vsel %vm4825, %v4826, %v4817
        %v4828 = vsel %vm4821, %v4824, %v4827
        %v4829 = vsel %vm4818, nan, %v4828
        %v4830 = vand.u32 2147483647, %v3120
        %vm4831 = vcmp.le.f32.partialorder %v4830, 0.7853982
        %vm4832 = vcmp.lt.s32.totalorder %v3120, 0
        %v4833 = vand.u32 %v3120, 2139095040
        %v4834 = vshrl.u32 %v4833, 23
        %v4835 = vsub.s32 %v4834, 127
        %v4836 = vand.u32 2147483647, %v3120
        %v4837 = vand.u32 %v4836, 8388607
        %v4838 = vor.u32 %v4837, 8388608
        %v4839 = vsub.s32 0, %v4838
        %v4840 = vadd.s32 %v4835, 1
        %vm4841 = vcmp.gt.s32.totalorder %v4840, 0
        %v4842 = vsel %vm4841, %v4840, 0
        %v4843 = vshrl.u32 %v4842, 5
        %v4844 = vand.u32 %v4842, 31
        %v4845 = vsub.s32 32, %v4844
        %v4846 = vshrl.u32 683565275, %v4845
        %v4847 = vshll.u32 683565275, %v4844
        %v4848 = vshrl.u32 2475754826, %v4845
        %v4849 = vor.u32 %v4847, %v4848
        %v4850 = vshll.u32 2475754826, %v4844
        %v4851 = vshrl.u32 2131351028, %v4845
        %v4852 = vor.u32 %v4850, %v4851
        %v4853 = vshll.u32 2131351028, %v4844
        %v4854 = vshrl.u32 2102212464, %v4845
        %v4855 = vor.u32 %v4853, %v4854
        %v4856 = vshll.u32 2102212464, %v4844
        %v4857 = vshrl.u32 920167782, %v4845
        %v4858 = vor.u32 %v4856, %v4857
        %v4859 = vshll.u32 920167782, %v4844
        %v4860 = vshrl.u32 1326507024, %v4845
        %v4861 = vor.u32 %v4859, %v4860
        %vm4862 = vcmp.lt.s32.totalorder %v4843, 1
        %vm4863 = vcmp.lt.s32.totalorder %v4843, 2
        %vm4864 = vcmp.lt.s32.totalorder %v4843, 3
        %vm4865 = vcmp.lt.s32.totalorder %v4843, 4
        %v4866 = vsel %vm4862, %v4846, %v4849
        %v4867 = vsel %vm4865, %v4855, 2102212464
        %v4868 = vsel %vm4864, %v4852, %v4867
        %v4869 = vsel %vm4863, %v4866, %v4868
        %v4870 = vsel %vm4862, %v4849, %v4852
        %v4871 = vsel %vm4865, %v4858, 920167782
        %v4872 = vsel %vm4864, %v4855, %v4871
        %v4873 = vsel %vm4863, %v4870, %v4872
        %v4874 = vsel %vm4862, %v4852, %v4855
        %v4875 = vsel %vm4865, %v4861, 1326507024
        %v4876 = vsel %vm4864, %v4858, %v4875
        %v4877 = vsel %vm4863, %v4874, %v4876
        %v4878 = vshll.u32 %v4838, 8
        %v4879 = vand.u32 %v4878, 65535
        %v4880 = vshrl.u32 %v4878, 16
        %v4881 = vand.u32 %v4877, 65535
        %v4882 = vshrl.u32 %v4877, 16
        %v4883 = vmul.u32 %v4879, %v4881
        %v4884 = vmul.u32 %v4879, %v4882
        %v4885 = vmul.u32 %v4880, %v4881
        %v4886 = vmul.u32 %v4880, %v4882
        %v4887 = vshll.u32 %v4884, 16
        %v4888 = vshrl.u32 %v4884, 16
        %v4889 = vshll.u32 %v4885, 16
        %v4890 = vshrl.u32 %v4885, 16
        %vm4891 = vc.u32 %v4883, %v4887
        %v4892 = vsel %vm4891, 1, 0
        %v4893 = vadd.s32 %v4883, %v4887
        %v4894 = vadd.s32 %v4886, %v4892
        %vm4895 = vc.u32 %v4893, %v4889
        %v4896 = vsel %vm4895, 1, 0
        %v4897 = vadd.s32 %v4893, %v4889
        %v4898 = vadd.s32 %v4894, %v4896
        %v4899 = vadd.s32 %v4898, %v4888
        %v4900 = vadd.s32 %v4899, %v4890
        %v4901 = vand.u32 %v4878, 65535
        %v4902 = vshrl.u32 %v4878, 16
        %v4903 = vand.u32 %v4873, 65535
        %v4904 = vshrl.u32 %v4873, 16
        %v4905 = vmul.u32 %v4901, %v4903
        %v4906 = vmul.u32 %v4901, %v4904
        %v4907 = vmul.u32 %v4902, %v4903
        %v4908 = vmul.u32 %v4902, %v4904
        %v4909 = vshll.u32 %v4906, 16
        %v4910 = vshrl.u32 %v4906, 16
        %v4911 = vshll.u32 %v4907, 16
        %v4912 = vshrl.u32 %v4907, 16
        %vm4913 = vc.u32 %v4905, %v4909
        %v4914 = vsel %vm4913, 1, 0
        %v4915 = vadd.s32 %v4905, %v4909
        %v4916 = vadd.s32 %v4908, %v4914
        %vm4917 = vc.u32 %v4915, %v4911
        %v4918 = vsel %vm4917, 1, 0
        %v4919 = vadd.s32 %v4915, %v4911
        %v4920 = vadd.s32 %v4916, %v4918
        %v4921 = vadd.s32 %v4920, %v4910
        %v4922 = vadd.s32 %v4921, %v4912
        %v4923 = vmul.u32 %v4878, %v4869
        %v4924 = vadd.s32 %v4900, %v4919
        %vm4925 = vc.u32 %v4900, %v4919
        %v4926 = vadd.s32 %v4922, 1
        %v4927 = vsel %vm4925, %v4926, %v4922
        %v4928 = vadd.s32 %v4923, %v4927
        %v4929 = vadd.s32 %v4928, 536870912
        %v4930 = vshrl.u32 %v4929, 30
        %v4931 = vshll.u32 %v4930, 30
        %v4932 = vsub.s32 %v4928, %v4931
        %vm4933 = vcmp.lt.s32.totalorder %v4932, 0
        %v4934 = vsub.s32 0, %v4932
        %v4935 = vsel %vm4933, %v4934, %v4932
        %v4936 = vclz %v4935
        %v4937 = vsub.s32 %v4936, 2
        %vm4938 = vcmp.gt.s32.totalorder 0, %v4937
        %v4939 = vsel %vm4938, 0, %v4937
        %v4940 = vsub.s32 32, %v4939
        %v4941 = vshll.u32 %v4932, %v4939
        %v4942 = vshrl.u32 %v4924, %v4940
        %v4943 = vor.u32 %v4941, %v4942
        %v4944 = vsub.s32 4294967266, %v4939
        %v4945 = vadd.s32 %v4944, 127
        %v4946 = vshll.u32 %v4945, 23
        %v4947 = vor.u32 4788187, %v4946
        %v4948 = vand.u32 2147483647, %v4947
        %v4950 = vcvt.s32.f32 %v4943
        %v4951 = vmul.f32 %v4950, %v4948
        %v4952 = vxor.u32 %v4951, 2147483648
        %v4953 = vsel %vm4832, %v4952, %v4951
        %v4954 = vsub.s32 4, %v4930
        %v4955 = vsel %vm4832, %v4954, %v4930
        %v4956 = vsel %vm4831, %v3120, %v4953
        %v4957 = vsel %vm4831, 0, %v4955
        %v4958 = vmul.f32 %v4956, %v4956
        %v4959 = vmul.f32 %v4958, -0.001358992
        %v4960 = vadd.f32 %v4959, 0.041655596
        %v4961 = vmul.f32 %v4958, %v4960
        %v4962 = vadd.f32 %v4961, -0.4999988
        %v4963 = vmul.f32 %v4958, %v4962
        %v4964 = vadd.f32 1.0, %v4963
        %v4965 = vmul.f32 %v4956, %v4956
        %v4966 = vmul.f32 %v4965, -0.00019511016
        %v4967 = vadd.f32 %v4966, 0.008332121
        %v4968 = vmul.f32 %v4965, %v4967
        %v4969 = vadd.f32 %v4968, -0.16666654
        %v4970 = vmul.f32 %v4965, %v4969
        %v4971 = vadd.f32 %v4970, 1.0
        %v4972 = vmul.f32 %v4971, %v4956
        %vm4973 = vweird.f32 %v3120
        %v4974 = vadd.s32 %v4957, 3
        %v4975 = vand.u32 %v4974, 3
        %vm4976 = vcmp.lt.s32.totalorder %v4975, 2
        %vm4977 = vcmp.eq.s32.totalorder %v4975, 0
        %v4978 = vxor.u32 %v4972, 2147483648
        %v4979 = vsel %vm4977, %v4964, %v4978
        %vm4980 = vcmp.eq.s32.totalorder %v4975, 2
        %v4981 = vxor.u32 %v4964, 2147483648
        %v4982 = vsel %vm4980, %v4981, %v4972
        %v4983 = vsel %vm4976, %v4979, %v4982
        %v4984 = vsel %vm4973, nan, %v4983
        %v4985 = vand.u32 2147483647, %v3036
        %vm4986 = vcmp.le.f32.partialorder %v4985, 0.7853982
        %vm4987 = vcmp.lt.s32.totalorder %v3036, 0
        %v4988 = vand.u32 %v3036, 2139095040
        %v4989 = vshrl.u32 %v4988, 23
        %v4990 = vsub.s32 %v4989, 127
        %v4991 = vand.u32 2147483647, %v3036
        %v4992 = vand.u32 %v4991, 8388607
        %v4993 = vor.u32 %v4992, 8388608
        %v4994 = vsub.s32 0, %v4993
        %v4995 = vadd.s32 %v4990, 1
        %vm4996 = vcmp.gt.s32.totalorder %v4995, 0
        %v4997 = vsel %vm4996, %v4995, 0
        %v4998 = vshrl.u32 %v4997, 5
        %v4999 = vand.u32 %v4997, 31
        %v5000 = vsub.s32 32, %v4999
        %v5001 = vshrl.u32 683565275, %v5000
        %v5002 = vshll.u32 683565275, %v4999
        %v5003 = vshrl.u32 2475754826, %v5000
        %v5004 = vor.u32 %v5002, %v5003
        %v5005 = vshll.u32 2475754826, %v4999
        %v5006 = vshrl.u32 2131351028, %v5000
        %v5007 = vor.u32 %v5005, %v5006
        %v5008 = vshll.u32 2131351028, %v4999
        %v5009 = vshrl.u32 2102212464, %v5000
        %v5010 = vor.u32 %v5008, %v5009
        %v5011 = vshll.u32 2102212464, %v4999
        %v5012 = vshrl.u32 920167782, %v5000
        %v5013 = vor.u32 %v5011, %v5012
        %v5014 = vshll.u32 920167782, %v4999
        %v5015 = vshrl.u32 1326507024, %v5000
        %v5016 = vor.u32 %v5014, %v5015
        %vm5017 = vcmp.lt.s32.totalorder %v4998, 1
        %vm5018 = vcmp.lt.s32.totalorder %v4998, 2
        %vm5019 = vcmp.lt.s32.totalorder %v4998, 3
        %vm5020 = vcmp.lt.s32.totalorder %v4998, 4
        %v5021 = vsel %vm5017, %v5001, %v5004
        %v5022 = vsel %vm5020, %v5010, 2102212464
        %v5023 = vsel %vm5019, %v5007, %v5022
        %v5024 = vsel %vm5018, %v5021, %v5023
        %v5025 = vsel %vm5017, %v5004, %v5007
        %v5026 = vsel %vm5020, %v5013, 920167782
        %v5027 = vsel %vm5019, %v5010, %v5026
        %v5028 = vsel %vm5018, %v5025, %v5027
        %v5029 = vsel %vm5017, %v5007, %v5010
        %v5030 = vsel %vm5020, %v5016, 1326507024
        %v5031 = vsel %vm5019, %v5013, %v5030
        %v5032 = vsel %vm5018, %v5029, %v5031
        %v5033 = vshll.u32 %v4993, 8
        %v5034 = vand.u32 %v5033, 65535
        %v5035 = vshrl.u32 %v5033, 16
        %v5036 = vand.u32 %v5032, 65535
        %v5037 = vshrl.u32 %v5032, 16
        %v5038 = vmul.u32 %v5034, %v5036
        %v5039 = vmul.u32 %v5034, %v5037
        %v5040 = vmul.u32 %v5035, %v5036
        %v5041 = vmul.u32 %v5035, %v5037
        %v5042 = vshll.u32 %v5039, 16
        %v5043 = vshrl.u32 %v5039, 16
        %v5044 = vshll.u32 %v5040, 16
        %v5045 = vshrl.u32 %v5040, 16
        %vm5046 = vc.u32 %v5038, %v5042
        %v5047 = vsel %vm5046, 1, 0
        %v5048 = vadd.s32 %v5038, %v5042
        %v5049 = vadd.s32 %v5041, %v5047
        %vm5050 = vc.u32 %v5048, %v5044
        %v5051 = vsel %vm5050, 1, 0
        %v5052 = vadd.s32 %v5048, %v5044
        %v5053 = vadd.s32 %v5049, %v5051
        %v5054 = vadd.s32 %v5053, %v5043
        %v5055 = vadd.s32 %v5054, %v5045
        %v5056 = vand.u32 %v5033, 65535
        %v5057 = vshrl.u32 %v5033, 16
        %v5058 = vand.u32 %v5028, 65535
        %v5059 = vshrl.u32 %v5028, 16
        %v5060 = vmul.u32 %v5056, %v5058
        %v5061 = vmul.u32 %v5056, %v5059
        %v5062 = vmul.u32 %v5057, %v5058
        %v5063 = vmul.u32 %v5057, %v5059
        %v5064 = vshll.u32 %v5061, 16
        %v5065 = vshrl.u32 %v5061, 16
        %v5066 = vshll.u32 %v5062, 16
        %v5067 = vshrl.u32 %v5062, 16
        %vm5068 = vc.u32 %v5060, %v5064
        %v5069 = vsel %vm5068, 1, 0
        %v5070 = vadd.s32 %v5060, %v5064
        %v5071 = vadd.s32 %v5063, %v5069
        %vm5072 = vc.u32 %v5070, %v5066
        %v5073 = vsel %vm5072, 1, 0
        %v5074 = vadd.s32 %v5070, %v5066
        %v5075 = vadd.s32 %v5071, %v5073
        %v5076 = vadd.s32 %v5075, %v5065
        %v5077 = vadd.s32 %v5076, %v5067
        %v5078 = vmul.u32 %v5033, %v5024
        %v5079 = vadd.s32 %v5055, %v5074
        %vm5080 = vc.u32 %v5055, %v5074
        %v5081 = vadd.s32 %v5077, 1
        %v5082 = vsel %vm5080, %v5081, %v5077
        %v5083 = vadd.s32 %v5078, %v5082
        %v5084 = vadd.s32 %v5083, 536870912
        %v5085 = vshrl.u32 %v5084, 30
        %v5086 = vshll.u32 %v5085, 30
        %v5087 = vsub.s32 %v5083, %v5086
        %vm5088 = vcmp.lt.s32.totalorder %v5087, 0
        %v5089 = vsub.s32 0, %v5087
        %v5090 = vsel %vm5088, %v5089, %v5087
        %v5091 = vclz %v5090
        %v5092 = vsub.s32 %v5091, 2
        %vm5093 = vcmp.gt.s32.totalorder 0, %v5092
        %v5094 = vsel %vm5093, 0, %v5092
        %v5095 = vsub.s32 32, %v5094
        %v5096 = vshll.u32 %v5087, %v5094
        %v5097 = vshrl.u32 %v5079, %v5095
        %v5098 = vor.u32 %v5096, %v5097
        %v5099 = vsub.s32 4294967266, %v5094
        %v5100 = vadd.s32 %v5099, 127
        %v5101 = vshll.u32 %v5100, 23
        %v5102 = vor.u32 4788187, %v5101
        %v5103 = vand.u32 2147483647, %v5102
        %v5105 = vcvt.s32.f32 %v5098
        %v5106 = vmul.f32 %v5105, %v5103
        %v5107 = vxor.u32 %v5106, 2147483648
        %v5108 = vsel %vm4987, %v5107, %v5106
        %v5109 = vsub.s32 4, %v5085
        %v5110 = vsel %vm4987, %v5109, %v5085
        %v5111 = vsel %vm4986, %v3036, %v5108
        %v5112 = vsel %vm4986, 0, %v5110
        %v5113 = vmul.f32 %v5111, %v5111
        %v5114 = vmul.f32 %v5113, -0.001358992
        %v5115 = vadd.f32 %v5114, 0.041655596
        %v5116 = vmul.f32 %v5113, %v5115
        %v5117 = vadd.f32 %v5116, -0.4999988
        %v5118 = vmul.f32 %v5113, %v5117
        %v5119 = vadd.f32 1.0, %v5118
        %v5120 = vmul.f32 %v5111, %v5111
        %v5121 = vmul.f32 %v5120, -0.00019511016
        %v5122 = vadd.f32 %v5121, 0.008332121
        %v5123 = vmul.f32 %v5120, %v5122
        %v5124 = vadd.f32 %v5123, -0.16666654
        %v5125 = vmul.f32 %v5120, %v5124
        %v5126 = vadd.f32 %v5125, 1.0
        %v5127 = vmul.f32 %v5126, %v5111
        %vm5128 = vweird.f32 %v3036
        %v5129 = vadd.s32 %v5112, 3
        %v5130 = vand.u32 %v5129, 3
        %vm5131 = vcmp.lt.s32.totalorder %v5130, 2
        %vm5132 = vcmp.eq.s32.totalorder %v5130, 0
        %v5133 = vxor.u32 %v5127, 2147483648
        %v5134 = vsel %vm5132, %v5119, %v5133
        %vm5135 = vcmp.eq.s32.totalorder %v5130, 2
        %v5136 = vxor.u32 %v5119, 2147483648
        %v5137 = vsel %vm5135, %v5136, %v5127
        %v5138 = vsel %vm5131, %v5134, %v5137
        %v5139 = vsel %vm5128, nan, %v5138
        %v5140 = vand.u32 2147483647, %v3065
        %vm5141 = vcmp.le.f32.partialorder %v5140, 0.7853982
        %vm5142 = vcmp.lt.s32.totalorder %v3065, 0
        %v5143 = vand.u32 %v3065, 2139095040
        %v5144 = vshrl.u32 %v5143, 23
        %v5145 = vsub.s32 %v5144, 127
        %v5146 = vand.u32 2147483647, %v3065
        %v5147 = vand.u32 %v5146, 8388607
        %v5148 = vor.u32 %v5147, 8388608
        %v5149 = vsub.s32 0, %v5148
        %v5150 = vadd.s32 %v5145, 1
        %vm5151 = vcmp.gt.s32.totalorder %v5150, 0
        %v5152 = vsel %vm5151, %v5150, 0
        %v5153 = vshrl.u32 %v5152, 5
        %v5154 = vand.u32 %v5152, 31
        %v5155 = vsub.s32 32, %v5154
        %v5156 = vshrl.u32 683565275, %v5155
        %v5157 = vshll.u32 683565275, %v5154
        %v5158 = vshrl.u32 2475754826, %v5155
        %v5159 = vor.u32 %v5157, %v5158
        %v5160 = vshll.u32 2475754826, %v5154
        %v5161 = vshrl.u32 2131351028, %v5155
        %v5162 = vor.u32 %v5160, %v5161
        %v5163 = vshll.u32 2131351028, %v5154
        %v5164 = vshrl.u32 2102212464, %v5155
        %v5165 = vor.u32 %v5163, %v5164
        %v5166 = vshll.u32 2102212464, %v5154
        %v5167 = vshrl.u32 920167782, %v5155
        %v5168 = vor.u32 %v5166, %v5167
        %v5169 = vshll.u32 920167782, %v5154
        %v5170 = vshrl.u32 1326507024, %v5155
        %v5171 = vor.u32 %v5169, %v5170
        %vm5172 = vcmp.lt.s32.totalorder %v5153, 1
        %vm5173 = vcmp.lt.s32.totalorder %v5153, 2
        %vm5174 = vcmp.lt.s32.totalorder %v5153, 3
        %vm5175 = vcmp.lt.s32.totalorder %v5153, 4
        %v5176 = vsel %vm5172, %v5156, %v5159
        %v5177 = vsel %vm5175, %v5165, 2102212464
        %v5178 = vsel %vm5174, %v5162, %v5177
        %v5179 = vsel %vm5173, %v5176, %v5178
        %v5180 = vsel %vm5172, %v5159, %v5162
        %v5181 = vsel %vm5175, %v5168, 920167782
        %v5182 = vsel %vm5174, %v5165, %v5181
        %v5183 = vsel %vm5173, %v5180, %v5182
        %v5184 = vsel %vm5172, %v5162, %v5165
        %v5185 = vsel %vm5175, %v5171, 1326507024
        %v5186 = vsel %vm5174, %v5168, %v5185
        %v5187 = vsel %vm5173, %v5184, %v5186
        %v5188 = vshll.u32 %v5148, 8
        %v5189 = vand.u32 %v5188, 65535
        %v5190 = vshrl.u32 %v5188, 16
        %v5191 = vand.u32 %v5187, 65535
        %v5192 = vshrl.u32 %v5187, 16
        %v5193 = vmul.u32 %v5189, %v5191
        %v5194 = vmul.u32 %v5189, %v5192
        %v5195 = vmul.u32 %v5190, %v5191
        %v5196 = vmul.u32 %v5190, %v5192
        %v5197 = vshll.u32 %v5194, 16
        %v5198 = vshrl.u32 %v5194, 16
        %v5199 = vshll.u32 %v5195, 16
        %v5200 = vshrl.u32 %v5195, 16
        %vm5201 = vc.u32 %v5193, %v5197
        %v5202 = vsel %vm5201, 1, 0
        %v5203 = vadd.s32 %v5193, %v5197
        %v5204 = vadd.s32 %v5196, %v5202
        %vm5205 = vc.u32 %v5203, %v5199
        %v5206 = vsel %vm5205, 1, 0
        %v5207 = vadd.s32 %v5203, %v5199
        %v5208 = vadd.s32 %v5204, %v5206
        %v5209 = vadd.s32 %v5208, %v5198
        %v5210 = vadd.s32 %v5209, %v5200
        %v5211 = vand.u32 %v5188, 65535
        %v5212 = vshrl.u32 %v5188, 16
        %v5213 = vand.u32 %v5183, 65535
        %v5214 = vshrl.u32 %v5183, 16
        %v5215 = vmul.u32 %v5211, %v5213
        %v5216 = vmul.u32 %v5211, %v5214
        %v5217 = vmul.u32 %v5212, %v5213
        %v5218 = vmul.u32 %v5212, %v5214
        %v5219 = vshll.u32 %v5216, 16
        %v5220 = vshrl.u32 %v5216, 16
        %v5221 = vshll.u32 %v5217, 16
        %v5222 = vshrl.u32 %v5217, 16
        %vm5223 = vc.u32 %v5215, %v5219
        %v5224 = vsel %vm5223, 1, 0
        %v5225 = vadd.s32 %v5215, %v5219
        %v5226 = vadd.s32 %v5218, %v5224
        %vm5227 = vc.u32 %v5225, %v5221
        %v5228 = vsel %vm5227, 1, 0
        %v5229 = vadd.s32 %v5225, %v5221
        %v5230 = vadd.s32 %v5226, %v5228
        %v5231 = vadd.s32 %v5230, %v5220
        %v5232 = vadd.s32 %v5231, %v5222
        %v5233 = vmul.u32 %v5188, %v5179
        %v5234 = vadd.s32 %v5210, %v5229
        %vm5235 = vc.u32 %v5210, %v5229
        %v5236 = vadd.s32 %v5232, 1
        %v5237 = vsel %vm5235, %v5236, %v5232
        %v5238 = vadd.s32 %v5233, %v5237
        %v5239 = vadd.s32 %v5238, 536870912
        %v5240 = vshrl.u32 %v5239, 30
        %v5241 = vshll.u32 %v5240, 30
        %v5242 = vsub.s32 %v5238, %v5241
        %vm5243 = vcmp.lt.s32.totalorder %v5242, 0
        %v5244 = vsub.s32 0, %v5242
        %v5245 = vsel %vm5243, %v5244, %v5242
        %v5246 = vclz %v5245
        %v5247 = vsub.s32 %v5246, 2
        %vm5248 = vcmp.gt.s32.totalorder 0, %v5247
        %v5249 = vsel %vm5248, 0, %v5247
        %v5250 = vsub.s32 32, %v5249
        %v5251 = vshll.u32 %v5242, %v5249
        %v5252 = vshrl.u32 %v5234, %v5250
        %v5253 = vor.u32 %v5251, %v5252
        %v5254 = vsub.s32 4294967266, %v5249
        %v5255 = vadd.s32 %v5254, 127
        %v5256 = vshll.u32 %v5255, 23
        %v5257 = vor.u32 4788187, %v5256
        %v5258 = vand.u32 2147483647, %v5257
        %v5260 = vcvt.s32.f32 %v5253
        %v5261 = vmul.f32 %v5260, %v5258
        %v5262 = vxor.u32 %v5261, 2147483648
        %v5263 = vsel %vm5142, %v5262, %v5261
        %v5264 = vsub.s32 4, %v5240
        %v5265 = vsel %vm5142, %v5264, %v5240
        %v5266 = vsel %vm5141, %v3065, %v5263
        %v5267 = vsel %vm5141, 0, %v5265
        %v5268 = vmul.f32 %v5266, %v5266
        %v5269 = vmul.f32 %v5268, -0.001358992
        %v5270 = vadd.f32 %v5269, 0.041655596
        %v5271 = vmul.f32 %v5268, %v5270
        %v5272 = vadd.f32 %v5271, -0.4999988
        %v5273 = vmul.f32 %v5268, %v5272
        %v5274 = vadd.f32 1.0, %v5273
        %v5275 = vmul.f32 %v5266, %v5266
        %v5276 = vmul.f32 %v5275, -0.00019511016
        %v5277 = vadd.f32 %v5276, 0.008332121
        %v5278 = vmul.f32 %v5275, %v5277
        %v5279 = vadd.f32 %v5278, -0.16666654
        %v5280 = vmul.f32 %v5275, %v5279
        %v5281 = vadd.f32 %v5280, 1.0
        %v5282 = vmul.f32 %v5281, %v5266
        %vm5283 = vweird.f32 %v3065
        %v5284 = vadd.s32 %v5267, 3
        %v5285 = vand.u32 %v5284, 3
        %vm5286 = vcmp.lt.s32.totalorder %v5285, 2
        %vm5287 = vcmp.eq.s32.totalorder %v5285, 0
        %v5288 = vxor.u32 %v5282, 2147483648
        %v5289 = vsel %vm5287, %v5274, %v5288
        %vm5290 = vcmp.eq.s32.totalorder %v5285, 2
        %v5291 = vxor.u32 %v5274, 2147483648
        %v5292 = vsel %vm5290, %v5291, %v5282
        %v5293 = vsel %vm5286, %v5289, %v5292
        %v5294 = vsel %vm5283, nan, %v5293
        %v5295 = vand.u32 2147483647, %v3094
        %vm5296 = vcmp.le.f32.partialorder %v5295, 0.7853982
        %vm5297 = vcmp.lt.s32.totalorder %v3094, 0
        %v5298 = vand.u32 %v3094, 2139095040
        %v5299 = vshrl.u32 %v5298, 23
        %v5300 = vsub.s32 %v5299, 127
        %v5301 = vand.u32 2147483647, %v3094
        %v5302 = vand.u32 %v5301, 8388607
        %v5303 = vor.u32 %v5302, 8388608
        %v5304 = vsub.s32 0, %v5303
        %v5305 = vadd.s32 %v5300, 1
        %vm5306 = vcmp.gt.s32.totalorder %v5305, 0
        %v5307 = vsel %vm5306, %v5305, 0
        %v5308 = vshrl.u32 %v5307, 5
        %v5309 = vand.u32 %v5307, 31
        %v5310 = vsub.s32 32, %v5309
        %v5311 = vshrl.u32 683565275, %v5310
        %v5312 = vshll.u32 683565275, %v5309
        %v5313 = vshrl.u32 2475754826, %v5310
        %v5314 = vor.u32 %v5312, %v5313
        %v5315 = vshll.u32 2475754826, %v5309
        %v5316 = vshrl.u32 2131351028, %v5310
        %v5317 = vor.u32 %v5315, %v5316
        %v5318 = vshll.u32 2131351028, %v5309
        %v5319 = vshrl.u32 2102212464, %v5310
        %v5320 = vor.u32 %v5318, %v5319
        %v5321 = vshll.u32 2102212464, %v5309
        %v5322 = vshrl.u32 920167782, %v5310
        %v5323 = vor.u32 %v5321, %v5322
        %v5324 = vshll.u32 920167782, %v5309
        %v5325 = vshrl.u32 1326507024, %v5310
        %v5326 = vor.u32 %v5324, %v5325
        %vm5327 = vcmp.lt.s32.totalorder %v5308, 1
        %vm5328 = vcmp.lt.s32.totalorder %v5308, 2
        %vm5329 = vcmp.lt.s32.totalorder %v5308, 3
        %vm5330 = vcmp.lt.s32.totalorder %v5308, 4
        %v5331 = vsel %vm5327, %v5311, %v5314
        %v5332 = vsel %vm5330, %v5320, 2102212464
        %v5333 = vsel %vm5329, %v5317, %v5332
        %v5334 = vsel %vm5328, %v5331, %v5333
        %v5335 = vsel %vm5327, %v5314, %v5317
        %v5336 = vsel %vm5330, %v5323, 920167782
        %v5337 = vsel %vm5329, %v5320, %v5336
        %v5338 = vsel %vm5328, %v5335, %v5337
        %v5339 = vsel %vm5327, %v5317, %v5320
        %v5340 = vsel %vm5330, %v5326, 1326507024
        %v5341 = vsel %vm5329, %v5323, %v5340
        %v5342 = vsel %vm5328, %v5339, %v5341
        %v5343 = vshll.u32 %v5303, 8
        %v5344 = vand.u32 %v5343, 65535
        %v5345 = vshrl.u32 %v5343, 16
        %v5346 = vand.u32 %v5342, 65535
        %v5347 = vshrl.u32 %v5342, 16
        %v5348 = vmul.u32 %v5344, %v5346
        %v5349 = vmul.u32 %v5344, %v5347
        %v5350 = vmul.u32 %v5345, %v5346
        %v5351 = vmul.u32 %v5345, %v5347
        %v5352 = vshll.u32 %v5349, 16
        %v5353 = vshrl.u32 %v5349, 16
        %v5354 = vshll.u32 %v5350, 16
        %v5355 = vshrl.u32 %v5350, 16
        %vm5356 = vc.u32 %v5348, %v5352
        %v5357 = vsel %vm5356, 1, 0
        %v5358 = vadd.s32 %v5348, %v5352
        %v5359 = vadd.s32 %v5351, %v5357
        %vm5360 = vc.u32 %v5358, %v5354
        %v5361 = vsel %vm5360, 1, 0
        %v5362 = vadd.s32 %v5358, %v5354
        %v5363 = vadd.s32 %v5359, %v5361
        %v5364 = vadd.s32 %v5363, %v5353
        %v5365 = vadd.s32 %v5364, %v5355
        %v5366 = vand.u32 %v5343, 65535
        %v5367 = vshrl.u32 %v5343, 16
        %v5368 = vand.u32 %v5338, 65535
        %v5369 = vshrl.u32 %v5338, 16
        %v5370 = vmul.u32 %v5366, %v5368
        %v5371 = vmul.u32 %v5366, %v5369
        %v5372 = vmul.u32 %v5367, %v5368
        %v5373 = vmul.u32 %v5367, %v5369
        %v5374 = vshll.u32 %v5371, 16
        %v5375 = vshrl.u32 %v5371, 16
        %v5376 = vshll.u32 %v5372, 16
        %v5377 = vshrl.u32 %v5372, 16
        %vm5378 = vc.u32 %v5370, %v5374
        %v5379 = vsel %vm5378, 1, 0
        %v5380 = vadd.s32 %v5370, %v5374
        %v5381 = vadd.s32 %v5373, %v5379
        %vm5382 = vc.u32 %v5380, %v5376
        %v5383 = vsel %vm5382, 1, 0
        %v5384 = vadd.s32 %v5380, %v5376
        %v5385 = vadd.s32 %v5381, %v5383
        %v5386 = vadd.s32 %v5385, %v5375
        %v5387 = vadd.s32 %v5386, %v5377
        %v5388 = vmul.u32 %v5343, %v5334
        %v5389 = vadd.s32 %v5365, %v5384
        %vm5390 = vc.u32 %v5365, %v5384
        %v5391 = vadd.s32 %v5387, 1
        %v5392 = vsel %vm5390, %v5391, %v5387
        %v5393 = vadd.s32 %v5388, %v5392
        %v5394 = vadd.s32 %v5393, 536870912
        %v5395 = vshrl.u32 %v5394, 30
        %v5396 = vshll.u32 %v5395, 30
        %v5397 = vsub.s32 %v5393, %v5396
        %vm5398 = vcmp.lt.s32.totalorder %v5397, 0
        %v5399 = vsub.s32 0, %v5397
        %v5400 = vsel %vm5398, %v5399, %v5397
        %v5401 = vclz %v5400
        %v5402 = vsub.s32 %v5401, 2
        %vm5403 = vcmp.gt.s32.totalorder 0, %v5402
        %v5404 = vsel %vm5403, 0, %v5402
        %v5405 = vsub.s32 32, %v5404
        %v5406 = vshll.u32 %v5397, %v5404
        %v5407 = vshrl.u32 %v5389, %v5405
        %v5408 = vor.u32 %v5406, %v5407
        %v5409 = vsub.s32 4294967266, %v5404
        %v5410 = vadd.s32 %v5409, 127
        %v5411 = vshll.u32 %v5410, 23
        %v5412 = vor.u32 4788187, %v5411
        %v5413 = vand.u32 2147483647, %v5412
        %v5415 = vcvt.s32.f32 %v5408
        %v5416 = vmul.f32 %v5415, %v5413
        %v5417 = vxor.u32 %v5416, 2147483648
        %v5418 = vsel %vm5297, %v5417, %v5416
        %v5419 = vsub.s32 4, %v5395
        %v5420 = vsel %vm5297, %v5419, %v5395
        %v5421 = vsel %vm5296, %v3094, %v5418
        %v5422 = vsel %vm5296, 0, %v5420
        %v5423 = vmul.f32 %v5421, %v5421
        %v5424 = vmul.f32 %v5423, -0.001358992
        %v5425 = vadd.f32 %v5424, 0.041655596
        %v5426 = vmul.f32 %v5423, %v5425
        %v5427 = vadd.f32 %v5426, -0.4999988
        %v5428 = vmul.f32 %v5423, %v5427
        %v5429 = vadd.f32 1.0, %v5428
        %v5430 = vmul.f32 %v5421, %v5421
        %v5431 = vmul.f32 %v5430, -0.00019511016
        %v5432 = vadd.f32 %v5431, 0.008332121
        %v5433 = vmul.f32 %v5430, %v5432
        %v5434 = vadd.f32 %v5433, -0.16666654
        %v5435 = vmul.f32 %v5430, %v5434
        %v5436 = vadd.f32 %v5435, 1.0
        %v5437 = vmul.f32 %v5436, %v5421
        %vm5438 = vweird.f32 %v3094
        %v5439 = vadd.s32 %v5422, 3
        %v5440 = vand.u32 %v5439, 3
        %vm5441 = vcmp.lt.s32.totalorder %v5440, 2
        %vm5442 = vcmp.eq.s32.totalorder %v5440, 0
        %v5443 = vxor.u32 %v5437, 2147483648
        %v5444 = vsel %vm5442, %v5429, %v5443
        %vm5445 = vcmp.eq.s32.totalorder %v5440, 2
        %v5446 = vxor.u32 %v5429, 2147483648
        %v5447 = vsel %vm5445, %v5446, %v5437
        %v5448 = vsel %vm5441, %v5444, %v5447
        %v5449 = vsel %vm5438, nan, %v5448
        %v5450 = vand.u32 2147483647, %v3123
        %vm5451 = vcmp.le.f32.partialorder %v5450, 0.7853982
        %vm5452 = vcmp.lt.s32.totalorder %v3123, 0
        %v5453 = vand.u32 %v3123, 2139095040
        %v5454 = vshrl.u32 %v5453, 23
        %v5455 = vsub.s32 %v5454, 127
        %v5456 = vand.u32 2147483647, %v3123
        %v5457 = vand.u32 %v5456, 8388607
        %v5458 = vor.u32 %v5457, 8388608
        %v5459 = vsub.s32 0, %v5458
        %v5460 = vadd.s32 %v5455, 1
        %vm5461 = vcmp.gt.s32.totalorder %v5460, 0
        %v5462 = vsel %vm5461, %v5460, 0
        %v5463 = vshrl.u32 %v5462, 5
        %v5464 = vand.u32 %v5462, 31
        %v5465 = vsub.s32 32, %v5464
        %v5466 = vshrl.u32 683565275, %v5465
        %v5467 = vshll.u32 683565275, %v5464
        %v5468 = vshrl.u32 2475754826, %v5465
        %v5469 = vor.u32 %v5467, %v5468
        %v5470 = vshll.u32 2475754826, %v5464
        %v5471 = vshrl.u32 2131351028, %v5465
        %v5472 = vor.u32 %v5470, %v5471
        %v5473 = vshll.u32 2131351028, %v5464
        %v5474 = vshrl.u32 2102212464, %v5465
        %v5475 = vor.u32 %v5473, %v5474
        %v5476 = vshll.u32 2102212464, %v5464
        %v5477 = vshrl.u32 920167782, %v5465
        %v5478 = vor.u32 %v5476, %v5477
        %v5479 = vshll.u32 920167782, %v5464
        %v5480 = vshrl.u32 1326507024, %v5465
        %v5481 = vor.u32 %v5479, %v5480
        %vm5482 = vcmp.lt.s32.totalorder %v5463, 1
        %vm5483 = vcmp.lt.s32.totalorder %v5463, 2
        %vm5484 = vcmp.lt.s32.totalorder %v5463, 3
        %vm5485 = vcmp.lt.s32.totalorder %v5463, 4
        %v5486 = vsel %vm5482, %v5466, %v5469
        %v5487 = vsel %vm5485, %v5475, 2102212464
        %v5488 = vsel %vm5484, %v5472, %v5487
        %v5489 = vsel %vm5483, %v5486, %v5488
        %v5490 = vsel %vm5482, %v5469, %v5472
        %v5491 = vsel %vm5485, %v5478, 920167782
        %v5492 = vsel %vm5484, %v5475, %v5491
        %v5493 = vsel %vm5483, %v5490, %v5492
        %v5494 = vsel %vm5482, %v5472, %v5475
        %v5495 = vsel %vm5485, %v5481, 1326507024
        %v5496 = vsel %vm5484, %v5478, %v5495
        %v5497 = vsel %vm5483, %v5494, %v5496
        %v5498 = vshll.u32 %v5458, 8
        %v5499 = vand.u32 %v5498, 65535
        %v5500 = vshrl.u32 %v5498, 16
        %v5501 = vand.u32 %v5497, 65535
        %v5502 = vshrl.u32 %v5497, 16
        %v5503 = vmul.u32 %v5499, %v5501
        %v5504 = vmul.u32 %v5499, %v5502
        %v5505 = vmul.u32 %v5500, %v5501
        %v5506 = vmul.u32 %v5500, %v5502
        %v5507 = vshll.u32 %v5504, 16
        %v5508 = vshrl.u32 %v5504, 16
        %v5509 = vshll.u32 %v5505, 16
        %v5510 = vshrl.u32 %v5505, 16
        %vm5511 = vc.u32 %v5503, %v5507
        %v5512 = vsel %vm5511, 1, 0
        %v5513 = vadd.s32 %v5503, %v5507
        %v5514 = vadd.s32 %v5506, %v5512
        %vm5515 = vc.u32 %v5513, %v5509
        %v5516 = vsel %vm5515, 1, 0
        %v5517 = vadd.s32 %v5513, %v5509
        %v5518 = vadd.s32 %v5514, %v5516
        %v5519 = vadd.s32 %v5518, %v5508
        %v5520 = vadd.s32 %v5519, %v5510
        %v5521 = vand.u32 %v5498, 65535
        %v5522 = vshrl.u32 %v5498, 16
        %v5523 = vand.u32 %v5493, 65535
        %v5524 = vshrl.u32 %v5493, 16
        %v5525 = vmul.u32 %v5521, %v5523
        %v5526 = vmul.u32 %v5521, %v5524
        %v5527 = vmul.u32 %v5522, %v5523
        %v5528 = vmul.u32 %v5522, %v5524
        %v5529 = vshll.u32 %v5526, 16
        %v5530 = vshrl.u32 %v5526, 16
        %v5531 = vshll.u32 %v5527, 16
        %v5532 = vshrl.u32 %v5527, 16
        %vm5533 = vc.u32 %v5525, %v5529
        %v5534 = vsel %vm5533, 1, 0
        %v5535 = vadd.s32 %v5525, %v5529
        %v5536 = vadd.s32 %v5528, %v5534
        %vm5537 = vc.u32 %v5535, %v5531
        %v5538 = vsel %vm5537, 1, 0
        %v5539 = vadd.s32 %v5535, %v5531
        %v5540 = vadd.s32 %v5536, %v5538
        %v5541 = vadd.s32 %v5540, %v5530
        %v5542 = vadd.s32 %v5541, %v5532
        %v5543 = vmul.u32 %v5498, %v5489
        %v5544 = vadd.s32 %v5520, %v5539
        %vm5545 = vc.u32 %v5520, %v5539
        %v5546 = vadd.s32 %v5542, 1
        %v5547 = vsel %vm5545, %v5546, %v5542
        %v5548 = vadd.s32 %v5543, %v5547
        %v5549 = vadd.s32 %v5548, 536870912
        %v5550 = vshrl.u32 %v5549, 30
        %v5551 = vshll.u32 %v5550, 30
        %v5552 = vsub.s32 %v5548, %v5551
        %vm5553 = vcmp.lt.s32.totalorder %v5552, 0
        %v5554 = vsub.s32 0, %v5552
        %v5555 = vsel %vm5553, %v5554, %v5552
        %v5556 = vclz %v5555
        %v5557 = vsub.s32 %v5556, 2
        %vm5558 = vcmp.gt.s32.totalorder 0, %v5557
        %v5559 = vsel %vm5558, 0, %v5557
        %v5560 = vsub.s32 32, %v5559
        %v5561 = vshll.u32 %v5552, %v5559
        %v5562 = vshrl.u32 %v5544, %v5560
        %v5563 = vor.u32 %v5561, %v5562
        %v5564 = vsub.s32 4294967266, %v5559
        %v5565 = vadd.s32 %v5564, 127
        %v5566 = vshll.u32 %v5565, 23
        %v5567 = vor.u32 4788187, %v5566
        %v5568 = vand.u32 2147483647, %v5567
        %v5570 = vcvt.s32.f32 %v5563
        %v5571 = vmul.f32 %v5570, %v5568
        %v5572 = vxor.u32 %v5571, 2147483648
        %v5573 = vsel %vm5452, %v5572, %v5571
        %v5574 = vsub.s32 4, %v5550
        %v5575 = vsel %vm5452, %v5574, %v5550
        %v5576 = vsel %vm5451, %v3123, %v5573
        %v5577 = vsel %vm5451, 0, %v5575
        %v5578 = vmul.f32 %v5576, %v5576
        %v5579 = vmul.f32 %v5578, -0.001358992
        %v5580 = vadd.f32 %v5579, 0.041655596
        %v5581 = vmul.f32 %v5578, %v5580
        %v5582 = vadd.f32 %v5581, -0.4999988
        %v5583 = vmul.f32 %v5578, %v5582
        %v5584 = vadd.f32 1.0, %v5583
        %v5585 = vmul.f32 %v5576, %v5576
        %v5586 = vmul.f32 %v5585, -0.00019511016
        %v5587 = vadd.f32 %v5586, 0.008332121
        %v5588 = vmul.f32 %v5585, %v5587
        %v5589 = vadd.f32 %v5588, -0.16666654
        %v5590 = vmul.f32 %v5585, %v5589
        %v5591 = vadd.f32 %v5590, 1.0
        %v5592 = vmul.f32 %v5591, %v5576
        %vm5593 = vweird.f32 %v3123
        %v5594 = vadd.s32 %v5577, 3
        %v5595 = vand.u32 %v5594, 3
        %vm5596 = vcmp.lt.s32.totalorder %v5595, 2
        %vm5597 = vcmp.eq.s32.totalorder %v5595, 0
        %v5598 = vxor.u32 %v5592, 2147483648
        %v5599 = vsel %vm5597, %v5584, %v5598
        %vm5600 = vcmp.eq.s32.totalorder %v5595, 2
        %v5601 = vxor.u32 %v5584, 2147483648
        %v5602 = vsel %vm5600, %v5601, %v5592
        %v5603 = vsel %vm5596, %v5599, %v5602
        %v5604 = vsel %vm5593, nan, %v5603
        %v5605 = vld [vmem:[%s5] sm:$0xff]
        %v5606 = vld [vmem:[%s5 + $0x8] sm:$0xff]
        %v5607 = vld [vmem:[%s5 + $0x10] sm:$0xff]
        %v5608 = vld [vmem:[%s5 + $0x18] sm:$0xff]
        %v5609 = vld [vmem:[%s6] sm:$0xff]
        %v5610 = vld [vmem:[%s6 + $0x8] sm:$0xff]
        %v5611 = vld [vmem:[%s6 + $0x10] sm:$0xff]
        %v5612 = vld [vmem:[%s6 + $0x18] sm:$0xff]
        %5614 = vset.pattern.permute.xlu0 0
        %5615 = vperm.xlu0 %5614, %v5609
        %v5616 = vpop.permute.xlu0 %5615
        %5619 = vset.pattern.permute.xlu0 0
        %5620 = vperm.xlu0 %5619, %v5610
        %v5621 = vpop.permute.xlu0 %5620
        %5624 = vset.pattern.permute.xlu0 0
        %5625 = vperm.xlu0 %5624, %v5611
        %v5626 = vpop.permute.xlu0 %5625
        %5629 = vset.pattern.permute.xlu0 0
        %5630 = vperm.xlu0 %5629, %v5612
        %v5631 = vpop.permute.xlu0 %5630
        %v5634 = vsel %vm2996, %v5605, 0
        %v5637 = vsel %vm2996, %v5606, 0
        %v5640 = vsel %vm2996, %v5607, 0
        %v5643 = vsel %vm2996, %v5608, 0
        %5645 = vmatpush.msra.mxu0 0.0
        %5646 = vmatpush.msra.mxu0 0.0
        %5647 = vmatpush.msra.mxu0 0.0
        %5648 = vmatpush.msra.mxu0 0.0
        %5649 = vmatpush.msra.mxu0 0.0
        %5650 = vmatpush.msra.mxu0 0.0
        %5651 = vmatpush.msra.mxu0 0.0
        %5652 = vmatpush.msra.mxu0 0.0
        %5653 = vmatpush.msra.mxu0 0.0
        %5654 = vmatpush.msra.mxu0 0.0
        %5655 = vmatpush.msra.mxu0 0.0
        %5656 = vmatpush.msra.mxu0 0.0
        %5657 = vmatpush.msra.mxu0 %v5139
        %5658 = vmatpush.msra.mxu0 %v4519
        %5659 = vmatpush.msra.mxu0 %v3899
        %5660 = vmatpush.msra.mxu0 %v3279
        %5661 = vmatmul.f32.gmra.mxu0 %v5634
        %v5662 = vpop.f32.mrf.mxu0
        %v5663 = vadd.f32 %v5616, %v5662
        %5664 = vmatmul.f32.gmra.mxu0 %v5637
        %v5665 = vpop.f32.mrf.mxu0
        %v5666 = vadd.f32 %v5621, %v5665
        %5667 = vmatmul.f32.gmra.mxu0 %v5640
        %v5668 = vpop.f32.mrf.mxu0
        %v5669 = vadd.f32 %v5626, %v5668
        %5670 = vmatmul.f32.gmra.mxu0 %v5643
        %v5671 = vpop.f32.mrf.mxu0
        %v5672 = vadd.f32 %v5631, %v5671
        %5673 = vdwg.mxu0
        %5674 = vmatpush.msra.mxu0 0.0
        %5675 = vmatpush.msra.mxu0 0.0
        %5676 = vmatpush.msra.mxu0 0.0
        %5677 = vmatpush.msra.mxu0 0.0
        %5678 = vmatpush.msra.mxu0 0.0
        %5679 = vmatpush.msra.mxu0 0.0
        %5680 = vmatpush.msra.mxu0 0.0
        %5681 = vmatpush.msra.mxu0 0.0
        %5682 = vmatpush.msra.mxu0 0.0
        %5683 = vmatpush.msra.mxu0 0.0
        %5684 = vmatpush.msra.mxu0 0.0
        %5685 = vmatpush.msra.mxu0 0.0
        %5686 = vmatpush.msra.mxu0 %v5294
        %5687 = vmatpush.msra.mxu0 %v4674
        %5688 = vmatpush.msra.mxu0 %v4054
        %5689 = vmatpush.msra.mxu0 %v3434
        %5690 = vmatmul.f32.gmra.mxu0 %v5634
        %v5691 = vpop.f32.mrf.mxu0
        %v5692 = vadd.f32 %v5616, %v5691
        %5693 = vmatmul.f32.gmra.mxu0 %v5637
        %v5694 = vpop.f32.mrf.mxu0
        %v5695 = vadd.f32 %v5621, %v5694
        %5696 = vmatmul.f32.gmra.mxu0 %v5640
        %v5697 = vpop.f32.mrf.mxu0
        %v5698 = vadd.f32 %v5626, %v5697
        %5699 = vmatmul.f32.gmra.mxu0 %v5643
        %v5700 = vpop.f32.mrf.mxu0
        %v5701 = vadd.f32 %v5631, %v5700
        %5702 = vdwg.mxu0
        %5703 = vmatpush.msra.mxu0 0.0
        %5704 = vmatpush.msra.mxu0 0.0
        %5705 = vmatpush.msra.mxu0 0.0
        %5706 = vmatpush.msra.mxu0 0.0
        %5707 = vmatpush.msra.mxu0 0.0
        %5708 = vmatpush.msra.mxu0 0.0
        %5709 = vmatpush.msra.mxu0 0.0
        %5710 = vmatpush.msra.mxu0 0.0
        %5711 = vmatpush.msra.mxu0 0.0
        %5712 = vmatpush.msra.mxu0 0.0
        %5713 = vmatpush.msra.mxu0 0.0
        %5714 = vmatpush.msra.mxu0 0.0
        %5715 = vmatpush.msra.mxu0 %v5449
        %5716 = vmatpush.msra.mxu0 %v4829
        %5717 = vmatpush.msra.mxu0 %v4209
        %5718 = vmatpush.msra.mxu0 %v3589
        %5719 = vmatmul.f32.gmra.mxu0 %v5634
        %v5720 = vpop.f32.mrf.mxu0
        %v5721 = vadd.f32 %v5616, %v5720
        %5722 = vmatmul.f32.gmra.mxu0 %v5637
        %v5723 = vpop.f32.mrf.mxu0
        %v5724 = vadd.f32 %v5621, %v5723
        %5725 = vmatmul.f32.gmra.mxu0 %v5640
        %v5726 = vpop.f32.mrf.mxu0
        %v5727 = vadd.f32 %v5626, %v5726
        %5728 = vmatmul.f32.gmra.mxu0 %v5643
        %v5729 = vpop.f32.mrf.mxu0
        %v5730 = vadd.f32 %v5631, %v5729
        %5731 = vdwg.mxu0
        %5732 = vmatpush.msra.mxu0 0.0
        %5733 = vmatpush.msra.mxu0 0.0
        %5734 = vmatpush.msra.mxu0 0.0
        %5735 = vmatpush.msra.mxu0 0.0
        %5736 = vmatpush.msra.mxu0 0.0
        %5737 = vmatpush.msra.mxu0 0.0
        %5738 = vmatpush.msra.mxu0 0.0
        %5739 = vmatpush.msra.mxu0 0.0
        %5740 = vmatpush.msra.mxu0 0.0
        %5741 = vmatpush.msra.mxu0 0.0
        %5742 = vmatpush.msra.mxu0 0.0
        %5743 = vmatpush.msra.mxu0 0.0
        %5744 = vmatpush.msra.mxu0 %v5604
        %5745 = vmatpush.msra.mxu0 %v4984
        %5746 = vmatpush.msra.mxu0 %v4364
        %5747 = vmatpush.msra.mxu0 %v3744
        %5748 = vmatmul.f32.gmra.mxu0 %v5634
        %v5749 = vpop.f32.mrf.mxu0
        %v5750 = vadd.f32 %v5616, %v5749
        %5751 = vmatmul.f32.gmra.mxu0 %v5637
        %v5752 = vpop.f32.mrf.mxu0
        %v5753 = vadd.f32 %v5621, %v5752
        %5754 = vmatmul.f32.gmra.mxu0 %v5640
        %v5755 = vpop.f32.mrf.mxu0
        %v5756 = vadd.f32 %v5626, %v5755
        %5757 = vmatmul.f32.gmra.mxu0 %v5643
        %v5758 = vpop.f32.mrf.mxu0
        %v5759 = vadd.f32 %v5631, %v5758
        %5760 = vdwg.mxu0
        %v5761 = vand.u32 2147483647, %v5663
        %vm5762 = vcmp.le.f32.partialorder %v5761, 0.7853982
        %vm5763 = vcmp.lt.s32.totalorder %v5663, 0
        %v5764 = vand.u32 %v5663, 2139095040
        %v5765 = vshrl.u32 %v5764, 23
        %v5766 = vsub.s32 %v5765, 127
        %v5767 = vand.u32 2147483647, %v5663
        %v5768 = vand.u32 %v5767, 8388607
        %v5769 = vor.u32 %v5768, 8388608
        %v5770 = vsub.s32 0, %v5769
        %v5771 = vadd.s32 %v5766, 1
        %vm5772 = vcmp.gt.s32.totalorder %v5771, 0
        %v5773 = vsel %vm5772, %v5771, 0
        %v5774 = vshrl.u32 %v5773, 5
        %v5775 = vand.u32 %v5773, 31
        %v5776 = vsub.s32 32, %v5775
        %v5777 = vshrl.u32 683565275, %v5776
        %v5778 = vshll.u32 683565275, %v5775
        %v5779 = vshrl.u32 2475754826, %v5776
        %v5780 = vor.u32 %v5778, %v5779
        %v5781 = vshll.u32 2475754826, %v5775
        %v5782 = vshrl.u32 2131351028, %v5776
        %v5783 = vor.u32 %v5781, %v5782
        %v5784 = vshll.u32 2131351028, %v5775
        %v5785 = vshrl.u32 2102212464, %v5776
        %v5786 = vor.u32 %v5784, %v5785
        %v5787 = vshll.u32 2102212464, %v5775
        %v5788 = vshrl.u32 920167782, %v5776
        %v5789 = vor.u32 %v5787, %v5788
        %v5790 = vshll.u32 920167782, %v5775
        %v5791 = vshrl.u32 1326507024, %v5776
        %v5792 = vor.u32 %v5790, %v5791
        %vm5793 = vcmp.lt.s32.totalorder %v5774, 1
        %vm5794 = vcmp.lt.s32.totalorder %v5774, 2
        %vm5795 = vcmp.lt.s32.totalorder %v5774, 3
        %vm5796 = vcmp.lt.s32.totalorder %v5774, 4
        %v5797 = vsel %vm5793, %v5777, %v5780
        %v5798 = vsel %vm5796, %v5786, 2102212464
        %v5799 = vsel %vm5795, %v5783, %v5798
        %v5800 = vsel %vm5794, %v5797, %v5799
        %v5801 = vsel %vm5793, %v5780, %v5783
        %v5802 = vsel %vm5796, %v5789, 920167782
        %v5803 = vsel %vm5795, %v5786, %v5802
        %v5804 = vsel %vm5794, %v5801, %v5803
        %v5805 = vsel %vm5793, %v5783, %v5786
        %v5806 = vsel %vm5796, %v5792, 1326507024
        %v5807 = vsel %vm5795, %v5789, %v5806
        %v5808 = vsel %vm5794, %v5805, %v5807
        %v5809 = vshll.u32 %v5769, 8
        %v5810 = vand.u32 %v5809, 65535
        %v5811 = vshrl.u32 %v5809, 16
        %v5812 = vand.u32 %v5808, 65535
        %v5813 = vshrl.u32 %v5808, 16
        %v5814 = vmul.u32 %v5810, %v5812
        %v5815 = vmul.u32 %v5810, %v5813
        %v5816 = vmul.u32 %v5811, %v5812
        %v5817 = vmul.u32 %v5811, %v5813
        %v5818 = vshll.u32 %v5815, 16
        %v5819 = vshrl.u32 %v5815, 16
        %v5820 = vshll.u32 %v5816, 16
        %v5821 = vshrl.u32 %v5816, 16
        %vm5822 = vc.u32 %v5814, %v5818
        %v5823 = vsel %vm5822, 1, 0
        %v5824 = vadd.s32 %v5814, %v5818
        %v5825 = vadd.s32 %v5817, %v5823
        %vm5826 = vc.u32 %v5824, %v5820
        %v5827 = vsel %vm5826, 1, 0
        %v5828 = vadd.s32 %v5824, %v5820
        %v5829 = vadd.s32 %v5825, %v5827
        %v5830 = vadd.s32 %v5829, %v5819
        %v5831 = vadd.s32 %v5830, %v5821
        %v5832 = vand.u32 %v5809, 65535
        %v5833 = vshrl.u32 %v5809, 16
        %v5834 = vand.u32 %v5804, 65535
        %v5835 = vshrl.u32 %v5804, 16
        %v5836 = vmul.u32 %v5832, %v5834
        %v5837 = vmul.u32 %v5832, %v5835
        %v5838 = vmul.u32 %v5833, %v5834
        %v5839 = vmul.u32 %v5833, %v5835
        %v5840 = vshll.u32 %v5837, 16
        %v5841 = vshrl.u32 %v5837, 16
        %v5842 = vshll.u32 %v5838, 16
        %v5843 = vshrl.u32 %v5838, 16
        %vm5844 = vc.u32 %v5836, %v5840
        %v5845 = vsel %vm5844, 1, 0
        %v5846 = vadd.s32 %v5836, %v5840
        %v5847 = vadd.s32 %v5839, %v5845
        %vm5848 = vc.u32 %v5846, %v5842
        %v5849 = vsel %vm5848, 1, 0
        %v5850 = vadd.s32 %v5846, %v5842
        %v5851 = vadd.s32 %v5847, %v5849
        %v5852 = vadd.s32 %v5851, %v5841
        %v5853 = vadd.s32 %v5852, %v5843
        %v5854 = vmul.u32 %v5809, %v5800
        %v5855 = vadd.s32 %v5831, %v5850
        %vm5856 = vc.u32 %v5831, %v5850
        %v5857 = vadd.s32 %v5853, 1
        %v5858 = vsel %vm5856, %v5857, %v5853
        %v5859 = vadd.s32 %v5854, %v5858
        %v5860 = vadd.s32 %v5859, 536870912
        %v5861 = vshrl.u32 %v5860, 30
        %v5862 = vshll.u32 %v5861, 30
        %v5863 = vsub.s32 %v5859, %v5862
        %vm5864 = vcmp.lt.s32.totalorder %v5863, 0
        %v5865 = vsub.s32 0, %v5863
        %v5866 = vsel %vm5864, %v5865, %v5863
        %v5867 = vclz %v5866
        %v5868 = vsub.s32 %v5867, 2
        %vm5869 = vcmp.gt.s32.totalorder 0, %v5868
        %v5870 = vsel %vm5869, 0, %v5868
        %v5871 = vsub.s32 32, %v5870
        %v5872 = vshll.u32 %v5863, %v5870
        %v5873 = vshrl.u32 %v5855, %v5871
        %v5874 = vor.u32 %v5872, %v5873
        %v5875 = vsub.s32 4294967266, %v5870
        %v5876 = vadd.s32 %v5875, 127
        %v5877 = vshll.u32 %v5876, 23
        %v5878 = vor.u32 4788187, %v5877
        %v5879 = vand.u32 2147483647, %v5878
        %v5881 = vcvt.s32.f32 %v5874
        %v5882 = vmul.f32 %v5881, %v5879
        %v5883 = vxor.u32 %v5882, 2147483648
        %v5884 = vsel %vm5763, %v5883, %v5882
        %v5885 = vsub.s32 4, %v5861
        %v5886 = vsel %vm5763, %v5885, %v5861
        %v5887 = vsel %vm5762, %v5663, %v5884
        %v5888 = vsel %vm5762, 0, %v5886
        %v5889 = vmul.f32 %v5887, %v5887
        %v5890 = vmul.f32 %v5889, -0.001358992
        %v5891 = vadd.f32 %v5890, 0.041655596
        %v5892 = vmul.f32 %v5889, %v5891
        %v5893 = vadd.f32 %v5892, -0.4999988
        %v5894 = vmul.f32 %v5889, %v5893
        %v5895 = vadd.f32 1.0, %v5894
        %v5896 = vmul.f32 %v5887, %v5887
        %v5897 = vmul.f32 %v5896, -0.00019511016
        %v5898 = vadd.f32 %v5897, 0.008332121
        %v5899 = vmul.f32 %v5896, %v5898
        %v5900 = vadd.f32 %v5899, -0.16666654
        %v5901 = vmul.f32 %v5896, %v5900
        %v5902 = vadd.f32 %v5901, 1.0
        %v5903 = vmul.f32 %v5902, %v5887
        %vm5904 = vweird.f32 %v5663
        %v5905 = vadd.s32 %v5888, 3
        %v5906 = vand.u32 %v5905, 3
        %vm5907 = vcmp.lt.s32.totalorder %v5906, 2
        %vm5908 = vcmp.eq.s32.totalorder %v5906, 0
        %v5909 = vxor.u32 %v5903, 2147483648
        %v5910 = vsel %vm5908, %v5895, %v5909
        %vm5911 = vcmp.eq.s32.totalorder %v5906, 2
        %v5912 = vxor.u32 %v5895, 2147483648
        %v5913 = vsel %vm5911, %v5912, %v5903
        %v5914 = vsel %vm5907, %v5910, %v5913
        %v5915 = vsel %vm5904, nan, %v5914
        %v5916 = vand.u32 2147483647, %v5692
        %vm5917 = vcmp.le.f32.partialorder %v5916, 0.7853982
        %vm5918 = vcmp.lt.s32.totalorder %v5692, 0
        %v5919 = vand.u32 %v5692, 2139095040
        %v5920 = vshrl.u32 %v5919, 23
        %v5921 = vsub.s32 %v5920, 127
        %v5922 = vand.u32 2147483647, %v5692
        %v5923 = vand.u32 %v5922, 8388607
        %v5924 = vor.u32 %v5923, 8388608
        %v5925 = vsub.s32 0, %v5924
        %v5926 = vadd.s32 %v5921, 1
        %vm5927 = vcmp.gt.s32.totalorder %v5926, 0
        %v5928 = vsel %vm5927, %v5926, 0
        %v5929 = vshrl.u32 %v5928, 5
        %v5930 = vand.u32 %v5928, 31
        %v5931 = vsub.s32 32, %v5930
        %v5932 = vshrl.u32 683565275, %v5931
        %v5933 = vshll.u32 683565275, %v5930
        %v5934 = vshrl.u32 2475754826, %v5931
        %v5935 = vor.u32 %v5933, %v5934
        %v5936 = vshll.u32 2475754826, %v5930
        %v5937 = vshrl.u32 2131351028, %v5931
        %v5938 = vor.u32 %v5936, %v5937
        %v5939 = vshll.u32 2131351028, %v5930
        %v5940 = vshrl.u32 2102212464, %v5931
        %v5941 = vor.u32 %v5939, %v5940
        %v5942 = vshll.u32 2102212464, %v5930
        %v5943 = vshrl.u32 920167782, %v5931
        %v5944 = vor.u32 %v5942, %v5943
        %v5945 = vshll.u32 920167782, %v5930
        %v5946 = vshrl.u32 1326507024, %v5931
        %v5947 = vor.u32 %v5945, %v5946
        %vm5948 = vcmp.lt.s32.totalorder %v5929, 1
        %vm5949 = vcmp.lt.s32.totalorder %v5929, 2
        %vm5950 = vcmp.lt.s32.totalorder %v5929, 3
        %vm5951 = vcmp.lt.s32.totalorder %v5929, 4
        %v5952 = vsel %vm5948, %v5932, %v5935
        %v5953 = vsel %vm5951, %v5941, 2102212464
        %v5954 = vsel %vm5950, %v5938, %v5953
        %v5955 = vsel %vm5949, %v5952, %v5954
        %v5956 = vsel %vm5948, %v5935, %v5938
        %v5957 = vsel %vm5951, %v5944, 920167782
        %v5958 = vsel %vm5950, %v5941, %v5957
        %v5959 = vsel %vm5949, %v5956, %v5958
        %v5960 = vsel %vm5948, %v5938, %v5941
        %v5961 = vsel %vm5951, %v5947, 1326507024
        %v5962 = vsel %vm5950, %v5944, %v5961
        %v5963 = vsel %vm5949, %v5960, %v5962
        %v5964 = vshll.u32 %v5924, 8
        %v5965 = vand.u32 %v5964, 65535
        %v5966 = vshrl.u32 %v5964, 16
        %v5967 = vand.u32 %v5963, 65535
        %v5968 = vshrl.u32 %v5963, 16
        %v5969 = vmul.u32 %v5965, %v5967
        %v5970 = vmul.u32 %v5965, %v5968
        %v5971 = vmul.u32 %v5966, %v5967
        %v5972 = vmul.u32 %v5966, %v5968
        %v5973 = vshll.u32 %v5970, 16
        %v5974 = vshrl.u32 %v5970, 16
        %v5975 = vshll.u32 %v5971, 16
        %v5976 = vshrl.u32 %v5971, 16
        %vm5977 = vc.u32 %v5969, %v5973
        %v5978 = vsel %vm5977, 1, 0
        %v5979 = vadd.s32 %v5969, %v5973
        %v5980 = vadd.s32 %v5972, %v5978
        %vm5981 = vc.u32 %v5979, %v5975
        %v5982 = vsel %vm5981, 1, 0
        %v5983 = vadd.s32 %v5979, %v5975
        %v5984 = vadd.s32 %v5980, %v5982
        %v5985 = vadd.s32 %v5984, %v5974
        %v5986 = vadd.s32 %v5985, %v5976
        %v5987 = vand.u32 %v5964, 65535
        %v5988 = vshrl.u32 %v5964, 16
        %v5989 = vand.u32 %v5959, 65535
        %v5990 = vshrl.u32 %v5959, 16
        %v5991 = vmul.u32 %v5987, %v5989
        %v5992 = vmul.u32 %v5987, %v5990
        %v5993 = vmul.u32 %v5988, %v5989
        %v5994 = vmul.u32 %v5988, %v5990
        %v5995 = vshll.u32 %v5992, 16
        %v5996 = vshrl.u32 %v5992, 16
        %v5997 = vshll.u32 %v5993, 16
        %v5998 = vshrl.u32 %v5993, 16
        %vm5999 = vc.u32 %v5991, %v5995
        %v6000 = vsel %vm5999, 1, 0
        %v6001 = vadd.s32 %v5991, %v5995
        %v6002 = vadd.s32 %v5994, %v6000
        %vm6003 = vc.u32 %v6001, %v5997
        %v6004 = vsel %vm6003, 1, 0
        %v6005 = vadd.s32 %v6001, %v5997
        %v6006 = vadd.s32 %v6002, %v6004
        %v6007 = vadd.s32 %v6006, %v5996
        %v6008 = vadd.s32 %v6007, %v5998
        %v6009 = vmul.u32 %v5964, %v5955
        %v6010 = vadd.s32 %v5986, %v6005
        %vm6011 = vc.u32 %v5986, %v6005
        %v6012 = vadd.s32 %v6008, 1
        %v6013 = vsel %vm6011, %v6012, %v6008
        %v6014 = vadd.s32 %v6009, %v6013
        %v6015 = vadd.s32 %v6014, 536870912
        %v6016 = vshrl.u32 %v6015, 30
        %v6017 = vshll.u32 %v6016, 30
        %v6018 = vsub.s32 %v6014, %v6017
        %vm6019 = vcmp.lt.s32.totalorder %v6018, 0
        %v6020 = vsub.s32 0, %v6018
        %v6021 = vsel %vm6019, %v6020, %v6018
        %v6022 = vclz %v6021
        %v6023 = vsub.s32 %v6022, 2
        %vm6024 = vcmp.gt.s32.totalorder 0, %v6023
        %v6025 = vsel %vm6024, 0, %v6023
        %v6026 = vsub.s32 32, %v6025
        %v6027 = vshll.u32 %v6018, %v6025
        %v6028 = vshrl.u32 %v6010, %v6026
        %v6029 = vor.u32 %v6027, %v6028
        %v6030 = vsub.s32 4294967266, %v6025
        %v6031 = vadd.s32 %v6030, 127
        %v6032 = vshll.u32 %v6031, 23
        %v6033 = vor.u32 4788187, %v6032
        %v6034 = vand.u32 2147483647, %v6033
        %v6036 = vcvt.s32.f32 %v6029
        %v6037 = vmul.f32 %v6036, %v6034
        %v6038 = vxor.u32 %v6037, 2147483648
        %v6039 = vsel %vm5918, %v6038, %v6037
        %v6040 = vsub.s32 4, %v6016
        %v6041 = vsel %vm5918, %v6040, %v6016
        %v6042 = vsel %vm5917, %v5692, %v6039
        %v6043 = vsel %vm5917, 0, %v6041
        %v6044 = vmul.f32 %v6042, %v6042
        %v6045 = vmul.f32 %v6044, -0.001358992
        %v6046 = vadd.f32 %v6045, 0.041655596
        %v6047 = vmul.f32 %v6044, %v6046
        %v6048 = vadd.f32 %v6047, -0.4999988
        %v6049 = vmul.f32 %v6044, %v6048
        %v6050 = vadd.f32 1.0, %v6049
        %v6051 = vmul.f32 %v6042, %v6042
        %v6052 = vmul.f32 %v6051, -0.00019511016
        %v6053 = vadd.f32 %v6052, 0.008332121
        %v6054 = vmul.f32 %v6051, %v6053
        %v6055 = vadd.f32 %v6054, -0.16666654
        %v6056 = vmul.f32 %v6051, %v6055
        %v6057 = vadd.f32 %v6056, 1.0
        %v6058 = vmul.f32 %v6057, %v6042
        %vm6059 = vweird.f32 %v5692
        %v6060 = vadd.s32 %v6043, 3
        %v6061 = vand.u32 %v6060, 3
        %vm6062 = vcmp.lt.s32.totalorder %v6061, 2
        %vm6063 = vcmp.eq.s32.totalorder %v6061, 0
        %v6064 = vxor.u32 %v6058, 2147483648
        %v6065 = vsel %vm6063, %v6050, %v6064
        %vm6066 = vcmp.eq.s32.totalorder %v6061, 2
        %v6067 = vxor.u32 %v6050, 2147483648
        %v6068 = vsel %vm6066, %v6067, %v6058
        %v6069 = vsel %vm6062, %v6065, %v6068
        %v6070 = vsel %vm6059, nan, %v6069
        %v6071 = vand.u32 2147483647, %v5721
        %vm6072 = vcmp.le.f32.partialorder %v6071, 0.7853982
        %vm6073 = vcmp.lt.s32.totalorder %v5721, 0
        %v6074 = vand.u32 %v5721, 2139095040
        %v6075 = vshrl.u32 %v6074, 23
        %v6076 = vsub.s32 %v6075, 127
        %v6077 = vand.u32 2147483647, %v5721
        %v6078 = vand.u32 %v6077, 8388607
        %v6079 = vor.u32 %v6078, 8388608
        %v6080 = vsub.s32 0, %v6079
        %v6081 = vadd.s32 %v6076, 1
        %vm6082 = vcmp.gt.s32.totalorder %v6081, 0
        %v6083 = vsel %vm6082, %v6081, 0
        %v6084 = vshrl.u32 %v6083, 5
        %v6085 = vand.u32 %v6083, 31
        %v6086 = vsub.s32 32, %v6085
        %v6087 = vshrl.u32 683565275, %v6086
        %v6088 = vshll.u32 683565275, %v6085
        %v6089 = vshrl.u32 2475754826, %v6086
        %v6090 = vor.u32 %v6088, %v6089
        %v6091 = vshll.u32 2475754826, %v6085
        %v6092 = vshrl.u32 2131351028, %v6086
        %v6093 = vor.u32 %v6091, %v6092
        %v6094 = vshll.u32 2131351028, %v6085
        %v6095 = vshrl.u32 2102212464, %v6086
        %v6096 = vor.u32 %v6094, %v6095
        %v6097 = vshll.u32 2102212464, %v6085
        %v6098 = vshrl.u32 920167782, %v6086
        %v6099 = vor.u32 %v6097, %v6098
        %v6100 = vshll.u32 920167782, %v6085
        %v6101 = vshrl.u32 1326507024, %v6086
        %v6102 = vor.u32 %v6100, %v6101
        %vm6103 = vcmp.lt.s32.totalorder %v6084, 1
        %vm6104 = vcmp.lt.s32.totalorder %v6084, 2
        %vm6105 = vcmp.lt.s32.totalorder %v6084, 3
        %vm6106 = vcmp.lt.s32.totalorder %v6084, 4
        %v6107 = vsel %vm6103, %v6087, %v6090
        %v6108 = vsel %vm6106, %v6096, 2102212464
        %v6109 = vsel %vm6105, %v6093, %v6108
        %v6110 = vsel %vm6104, %v6107, %v6109
        %v6111 = vsel %vm6103, %v6090, %v6093
        %v6112 = vsel %vm6106, %v6099, 920167782
        %v6113 = vsel %vm6105, %v6096, %v6112
        %v6114 = vsel %vm6104, %v6111, %v6113
        %v6115 = vsel %vm6103, %v6093, %v6096
        %v6116 = vsel %vm6106, %v6102, 1326507024
        %v6117 = vsel %vm6105, %v6099, %v6116
        %v6118 = vsel %vm6104, %v6115, %v6117
        %v6119 = vshll.u32 %v6079, 8
        %v6120 = vand.u32 %v6119, 65535
        %v6121 = vshrl.u32 %v6119, 16
        %v6122 = vand.u32 %v6118, 65535
        %v6123 = vshrl.u32 %v6118, 16
        %v6124 = vmul.u32 %v6120, %v6122
        %v6125 = vmul.u32 %v6120, %v6123
        %v6126 = vmul.u32 %v6121, %v6122
        %v6127 = vmul.u32 %v6121, %v6123
        %v6128 = vshll.u32 %v6125, 16
        %v6129 = vshrl.u32 %v6125, 16
        %v6130 = vshll.u32 %v6126, 16
        %v6131 = vshrl.u32 %v6126, 16
        %vm6132 = vc.u32 %v6124, %v6128
        %v6133 = vsel %vm6132, 1, 0
        %v6134 = vadd.s32 %v6124, %v6128
        %v6135 = vadd.s32 %v6127, %v6133
        %vm6136 = vc.u32 %v6134, %v6130
        %v6137 = vsel %vm6136, 1, 0
        %v6138 = vadd.s32 %v6134, %v6130
        %v6139 = vadd.s32 %v6135, %v6137
        %v6140 = vadd.s32 %v6139, %v6129
        %v6141 = vadd.s32 %v6140, %v6131
        %v6142 = vand.u32 %v6119, 65535
        %v6143 = vshrl.u32 %v6119, 16
        %v6144 = vand.u32 %v6114, 65535
        %v6145 = vshrl.u32 %v6114, 16
        %v6146 = vmul.u32 %v6142, %v6144
        %v6147 = vmul.u32 %v6142, %v6145
        %v6148 = vmul.u32 %v6143, %v6144
        %v6149 = vmul.u32 %v6143, %v6145
        %v6150 = vshll.u32 %v6147, 16
        %v6151 = vshrl.u32 %v6147, 16
        %v6152 = vshll.u32 %v6148, 16
        %v6153 = vshrl.u32 %v6148, 16
        %vm6154 = vc.u32 %v6146, %v6150
        %v6155 = vsel %vm6154, 1, 0
        %v6156 = vadd.s32 %v6146, %v6150
        %v6157 = vadd.s32 %v6149, %v6155
        %vm6158 = vc.u32 %v6156, %v6152
        %v6159 = vsel %vm6158, 1, 0
        %v6160 = vadd.s32 %v6156, %v6152
        %v6161 = vadd.s32 %v6157, %v6159
        %v6162 = vadd.s32 %v6161, %v6151
        %v6163 = vadd.s32 %v6162, %v6153
        %v6164 = vmul.u32 %v6119, %v6110
        %v6165 = vadd.s32 %v6141, %v6160
        %vm6166 = vc.u32 %v6141, %v6160
        %v6167 = vadd.s32 %v6163, 1
        %v6168 = vsel %vm6166, %v6167, %v6163
        %v6169 = vadd.s32 %v6164, %v6168
        %v6170 = vadd.s32 %v6169, 536870912
        %v6171 = vshrl.u32 %v6170, 30
        %v6172 = vshll.u32 %v6171, 30
        %v6173 = vsub.s32 %v6169, %v6172
        %vm6174 = vcmp.lt.s32.totalorder %v6173, 0
        %v6175 = vsub.s32 0, %v6173
        %v6176 = vsel %vm6174, %v6175, %v6173
        %v6177 = vclz %v6176
        %v6178 = vsub.s32 %v6177, 2
        %vm6179 = vcmp.gt.s32.totalorder 0, %v6178
        %v6180 = vsel %vm6179, 0, %v6178
        %v6181 = vsub.s32 32, %v6180
        %v6182 = vshll.u32 %v6173, %v6180
        %v6183 = vshrl.u32 %v6165, %v6181
        %v6184 = vor.u32 %v6182, %v6183
        %v6185 = vsub.s32 4294967266, %v6180
        %v6186 = vadd.s32 %v6185, 127
        %v6187 = vshll.u32 %v6186, 23
        %v6188 = vor.u32 4788187, %v6187
        %v6189 = vand.u32 2147483647, %v6188
        %v6191 = vcvt.s32.f32 %v6184
        %v6192 = vmul.f32 %v6191, %v6189
        %v6193 = vxor.u32 %v6192, 2147483648
        %v6194 = vsel %vm6073, %v6193, %v6192
        %v6195 = vsub.s32 4, %v6171
        %v6196 = vsel %vm6073, %v6195, %v6171
        %v6197 = vsel %vm6072, %v5721, %v6194
        %v6198 = vsel %vm6072, 0, %v6196
        %v6199 = vmul.f32 %v6197, %v6197
        %v6200 = vmul.f32 %v6199, -0.001358992
        %v6201 = vadd.f32 %v6200, 0.041655596
        %v6202 = vmul.f32 %v6199, %v6201
        %v6203 = vadd.f32 %v6202, -0.4999988
        %v6204 = vmul.f32 %v6199, %v6203
        %v6205 = vadd.f32 1.0, %v6204
        %v6206 = vmul.f32 %v6197, %v6197
        %v6207 = vmul.f32 %v6206, -0.00019511016
        %v6208 = vadd.f32 %v6207, 0.008332121
        %v6209 = vmul.f32 %v6206, %v6208
        %v6210 = vadd.f32 %v6209, -0.16666654
        %v6211 = vmul.f32 %v6206, %v6210
        %v6212 = vadd.f32 %v6211, 1.0
        %v6213 = vmul.f32 %v6212, %v6197
        %vm6214 = vweird.f32 %v5721
        %v6215 = vadd.s32 %v6198, 3
        %v6216 = vand.u32 %v6215, 3
        %vm6217 = vcmp.lt.s32.totalorder %v6216, 2
        %vm6218 = vcmp.eq.s32.totalorder %v6216, 0
        %v6219 = vxor.u32 %v6213, 2147483648
        %v6220 = vsel %vm6218, %v6205, %v6219
        %vm6221 = vcmp.eq.s32.totalorder %v6216, 2
        %v6222 = vxor.u32 %v6205, 2147483648
        %v6223 = vsel %vm6221, %v6222, %v6213
        %v6224 = vsel %vm6217, %v6220, %v6223
        %v6225 = vsel %vm6214, nan, %v6224
        %v6226 = vand.u32 2147483647, %v5750
        %vm6227 = vcmp.le.f32.partialorder %v6226, 0.7853982
        %vm6228 = vcmp.lt.s32.totalorder %v5750, 0
        %v6229 = vand.u32 %v5750, 2139095040
        %v6230 = vshrl.u32 %v6229, 23
        %v6231 = vsub.s32 %v6230, 127
        %v6232 = vand.u32 2147483647, %v5750
        %v6233 = vand.u32 %v6232, 8388607
        %v6234 = vor.u32 %v6233, 8388608
        %v6235 = vsub.s32 0, %v6234
        %v6236 = vadd.s32 %v6231, 1
        %vm6237 = vcmp.gt.s32.totalorder %v6236, 0
        %v6238 = vsel %vm6237, %v6236, 0
        %v6239 = vshrl.u32 %v6238, 5
        %v6240 = vand.u32 %v6238, 31
        %v6241 = vsub.s32 32, %v6240
        %v6242 = vshrl.u32 683565275, %v6241
        %v6243 = vshll.u32 683565275, %v6240
        %v6244 = vshrl.u32 2475754826, %v6241
        %v6245 = vor.u32 %v6243, %v6244
        %v6246 = vshll.u32 2475754826, %v6240
        %v6247 = vshrl.u32 2131351028, %v6241
        %v6248 = vor.u32 %v6246, %v6247
        %v6249 = vshll.u32 2131351028, %v6240
        %v6250 = vshrl.u32 2102212464, %v6241
        %v6251 = vor.u32 %v6249, %v6250
        %v6252 = vshll.u32 2102212464, %v6240
        %v6253 = vshrl.u32 920167782, %v6241
        %v6254 = vor.u32 %v6252, %v6253
        %v6255 = vshll.u32 920167782, %v6240
        %v6256 = vshrl.u32 1326507024, %v6241
        %v6257 = vor.u32 %v6255, %v6256
        %vm6258 = vcmp.lt.s32.totalorder %v6239, 1
        %vm6259 = vcmp.lt.s32.totalorder %v6239, 2
        %vm6260 = vcmp.lt.s32.totalorder %v6239, 3
        %vm6261 = vcmp.lt.s32.totalorder %v6239, 4
        %v6262 = vsel %vm6258, %v6242, %v6245
        %v6263 = vsel %vm6261, %v6251, 2102212464
        %v6264 = vsel %vm6260, %v6248, %v6263
        %v6265 = vsel %vm6259, %v6262, %v6264
        %v6266 = vsel %vm6258, %v6245, %v6248
        %v6267 = vsel %vm6261, %v6254, 920167782
        %v6268 = vsel %vm6260, %v6251, %v6267
        %v6269 = vsel %vm6259, %v6266, %v6268
        %v6270 = vsel %vm6258, %v6248, %v6251
        %v6271 = vsel %vm6261, %v6257, 1326507024
        %v6272 = vsel %vm6260, %v6254, %v6271
        %v6273 = vsel %vm6259, %v6270, %v6272
        %v6274 = vshll.u32 %v6234, 8
        %v6275 = vand.u32 %v6274, 65535
        %v6276 = vshrl.u32 %v6274, 16
        %v6277 = vand.u32 %v6273, 65535
        %v6278 = vshrl.u32 %v6273, 16
        %v6279 = vmul.u32 %v6275, %v6277
        %v6280 = vmul.u32 %v6275, %v6278
        %v6281 = vmul.u32 %v6276, %v6277
        %v6282 = vmul.u32 %v6276, %v6278
        %v6283 = vshll.u32 %v6280, 16
        %v6284 = vshrl.u32 %v6280, 16
        %v6285 = vshll.u32 %v6281, 16
        %v6286 = vshrl.u32 %v6281, 16
        %vm6287 = vc.u32 %v6279, %v6283
        %v6288 = vsel %vm6287, 1, 0
        %v6289 = vadd.s32 %v6279, %v6283
        %v6290 = vadd.s32 %v6282, %v6288
        %vm6291 = vc.u32 %v6289, %v6285
        %v6292 = vsel %vm6291, 1, 0
        %v6293 = vadd.s32 %v6289, %v6285
        %v6294 = vadd.s32 %v6290, %v6292
        %v6295 = vadd.s32 %v6294, %v6284
        %v6296 = vadd.s32 %v6295, %v6286
        %v6297 = vand.u32 %v6274, 65535
        %v6298 = vshrl.u32 %v6274, 16
        %v6299 = vand.u32 %v6269, 65535
        %v6300 = vshrl.u32 %v6269, 16
        %v6301 = vmul.u32 %v6297, %v6299
        %v6302 = vmul.u32 %v6297, %v6300
        %v6303 = vmul.u32 %v6298, %v6299
        %v6304 = vmul.u32 %v6298, %v6300
        %v6305 = vshll.u32 %v6302, 16
        %v6306 = vshrl.u32 %v6302, 16
        %v6307 = vshll.u32 %v6303, 16
        %v6308 = vshrl.u32 %v6303, 16
        %vm6309 = vc.u32 %v6301, %v6305
        %v6310 = vsel %vm6309, 1, 0
        %v6311 = vadd.s32 %v6301, %v6305
        %v6312 = vadd.s32 %v6304, %v6310
        %vm6313 = vc.u32 %v6311, %v6307
        %v6314 = vsel %vm6313, 1, 0
        %v6315 = vadd.s32 %v6311, %v6307
        %v6316 = vadd.s32 %v6312, %v6314
        %v6317 = vadd.s32 %v6316, %v6306
        %v6318 = vadd.s32 %v6317, %v6308
        %v6319 = vmul.u32 %v6274, %v6265
        %v6320 = vadd.s32 %v6296, %v6315
        %vm6321 = vc.u32 %v6296, %v6315
        %v6322 = vadd.s32 %v6318, 1
        %v6323 = vsel %vm6321, %v6322, %v6318
        %v6324 = vadd.s32 %v6319, %v6323
        %v6325 = vadd.s32 %v6324, 536870912
        %v6326 = vshrl.u32 %v6325, 30
        %v6327 = vshll.u32 %v6326, 30
        %v6328 = vsub.s32 %v6324, %v6327
        %vm6329 = vcmp.lt.s32.totalorder %v6328, 0
        %v6330 = vsub.s32 0, %v6328
        %v6331 = vsel %vm6329, %v6330, %v6328
        %v6332 = vclz %v6331
        %v6333 = vsub.s32 %v6332, 2
        %vm6334 = vcmp.gt.s32.totalorder 0, %v6333
        %v6335 = vsel %vm6334, 0, %v6333
        %v6336 = vsub.s32 32, %v6335
        %v6337 = vshll.u32 %v6328, %v6335
        %v6338 = vshrl.u32 %v6320, %v6336
        %v6339 = vor.u32 %v6337, %v6338
        %v6340 = vsub.s32 4294967266, %v6335
        %v6341 = vadd.s32 %v6340, 127
        %v6342 = vshll.u32 %v6341, 23
        %v6343 = vor.u32 4788187, %v6342
        %v6344 = vand.u32 2147483647, %v6343
        %v6346 = vcvt.s32.f32 %v6339
        %v6347 = vmul.f32 %v6346, %v6344
        %v6348 = vxor.u32 %v6347, 2147483648
        %v6349 = vsel %vm6228, %v6348, %v6347
        %v6350 = vsub.s32 4, %v6326
        %v6351 = vsel %vm6228, %v6350, %v6326
        %v6352 = vsel %vm6227, %v5750, %v6349
        %v6353 = vsel %vm6227, 0, %v6351
        %v6354 = vmul.f32 %v6352, %v6352
        %v6355 = vmul.f32 %v6354, -0.001358992
        %v6356 = vadd.f32 %v6355, 0.041655596
        %v6357 = vmul.f32 %v6354, %v6356
        %v6358 = vadd.f32 %v6357, -0.4999988
        %v6359 = vmul.f32 %v6354, %v6358
        %v6360 = vadd.f32 1.0, %v6359
        %v6361 = vmul.f32 %v6352, %v6352
        %v6362 = vmul.f32 %v6361, -0.00019511016
        %v6363 = vadd.f32 %v6362, 0.008332121
        %v6364 = vmul.f32 %v6361, %v6363
        %v6365 = vadd.f32 %v6364, -0.16666654
        %v6366 = vmul.f32 %v6361, %v6365
        %v6367 = vadd.f32 %v6366, 1.0
        %v6368 = vmul.f32 %v6367, %v6352
        %vm6369 = vweird.f32 %v5750
        %v6370 = vadd.s32 %v6353, 3
        %v6371 = vand.u32 %v6370, 3
        %vm6372 = vcmp.lt.s32.totalorder %v6371, 2
        %vm6373 = vcmp.eq.s32.totalorder %v6371, 0
        %v6374 = vxor.u32 %v6368, 2147483648
        %v6375 = vsel %vm6373, %v6360, %v6374
        %vm6376 = vcmp.eq.s32.totalorder %v6371, 2
        %v6377 = vxor.u32 %v6360, 2147483648
        %v6378 = vsel %vm6376, %v6377, %v6368
        %v6379 = vsel %vm6372, %v6375, %v6378
        %v6380 = vsel %vm6369, nan, %v6379
        %v6381 = vand.u32 2147483647, %v5666
        %vm6382 = vcmp.le.f32.partialorder %v6381, 0.7853982
        %vm6383 = vcmp.lt.s32.totalorder %v5666, 0
        %v6384 = vand.u32 %v5666, 2139095040
        %v6385 = vshrl.u32 %v6384, 23
        %v6386 = vsub.s32 %v6385, 127
        %v6387 = vand.u32 2147483647, %v5666
        %v6388 = vand.u32 %v6387, 8388607
        %v6389 = vor.u32 %v6388, 8388608
        %v6390 = vsub.s32 0, %v6389
        %v6391 = vadd.s32 %v6386, 1
        %vm6392 = vcmp.gt.s32.totalorder %v6391, 0
        %v6393 = vsel %vm6392, %v6391, 0
        %v6394 = vshrl.u32 %v6393, 5
        %v6395 = vand.u32 %v6393, 31
        %v6396 = vsub.s32 32, %v6395
        %v6397 = vshrl.u32 683565275, %v6396
        %v6398 = vshll.u32 683565275, %v6395
        %v6399 = vshrl.u32 2475754826, %v6396
        %v6400 = vor.u32 %v6398, %v6399
        %v6401 = vshll.u32 2475754826, %v6395
        %v6402 = vshrl.u32 2131351028, %v6396
        %v6403 = vor.u32 %v6401, %v6402
        %v6404 = vshll.u32 2131351028, %v6395
        %v6405 = vshrl.u32 2102212464, %v6396
        %v6406 = vor.u32 %v6404, %v6405
        %v6407 = vshll.u32 2102212464, %v6395
        %v6408 = vshrl.u32 920167782, %v6396
        %v6409 = vor.u32 %v6407, %v6408
        %v6410 = vshll.u32 920167782, %v6395
        %v6411 = vshrl.u32 1326507024, %v6396
        %v6412 = vor.u32 %v6410, %v6411
        %vm6413 = vcmp.lt.s32.totalorder %v6394, 1
        %vm6414 = vcmp.lt.s32.totalorder %v6394, 2
        %vm6415 = vcmp.lt.s32.totalorder %v6394, 3
        %vm6416 = vcmp.lt.s32.totalorder %v6394, 4
        %v6417 = vsel %vm6413, %v6397, %v6400
        %v6418 = vsel %vm6416, %v6406, 2102212464
        %v6419 = vsel %vm6415, %v6403, %v6418
        %v6420 = vsel %vm6414, %v6417, %v6419
        %v6421 = vsel %vm6413, %v6400, %v6403
        %v6422 = vsel %vm6416, %v6409, 920167782
        %v6423 = vsel %vm6415, %v6406, %v6422
        %v6424 = vsel %vm6414, %v6421, %v6423
        %v6425 = vsel %vm6413, %v6403, %v6406
        %v6426 = vsel %vm6416, %v6412, 1326507024
        %v6427 = vsel %vm6415, %v6409, %v6426
        %v6428 = vsel %vm6414, %v6425, %v6427
        %v6429 = vshll.u32 %v6389, 8
        %v6430 = vand.u32 %v6429, 65535
        %v6431 = vshrl.u32 %v6429, 16
        %v6432 = vand.u32 %v6428, 65535
        %v6433 = vshrl.u32 %v6428, 16
        %v6434 = vmul.u32 %v6430, %v6432
        %v6435 = vmul.u32 %v6430, %v6433
        %v6436 = vmul.u32 %v6431, %v6432
        %v6437 = vmul.u32 %v6431, %v6433
        %v6438 = vshll.u32 %v6435, 16
        %v6439 = vshrl.u32 %v6435, 16
        %v6440 = vshll.u32 %v6436, 16
        %v6441 = vshrl.u32 %v6436, 16
        %vm6442 = vc.u32 %v6434, %v6438
        %v6443 = vsel %vm6442, 1, 0
        %v6444 = vadd.s32 %v6434, %v6438
        %v6445 = vadd.s32 %v6437, %v6443
        %vm6446 = vc.u32 %v6444, %v6440
        %v6447 = vsel %vm6446, 1, 0
        %v6448 = vadd.s32 %v6444, %v6440
        %v6449 = vadd.s32 %v6445, %v6447
        %v6450 = vadd.s32 %v6449, %v6439
        %v6451 = vadd.s32 %v6450, %v6441
        %v6452 = vand.u32 %v6429, 65535
        %v6453 = vshrl.u32 %v6429, 16
        %v6454 = vand.u32 %v6424, 65535
        %v6455 = vshrl.u32 %v6424, 16
        %v6456 = vmul.u32 %v6452, %v6454
        %v6457 = vmul.u32 %v6452, %v6455
        %v6458 = vmul.u32 %v6453, %v6454
        %v6459 = vmul.u32 %v6453, %v6455
        %v6460 = vshll.u32 %v6457, 16
        %v6461 = vshrl.u32 %v6457, 16
        %v6462 = vshll.u32 %v6458, 16
        %v6463 = vshrl.u32 %v6458, 16
        %vm6464 = vc.u32 %v6456, %v6460
        %v6465 = vsel %vm6464, 1, 0
        %v6466 = vadd.s32 %v6456, %v6460
        %v6467 = vadd.s32 %v6459, %v6465
        %vm6468 = vc.u32 %v6466, %v6462
        %v6469 = vsel %vm6468, 1, 0
        %v6470 = vadd.s32 %v6466, %v6462
        %v6471 = vadd.s32 %v6467, %v6469
        %v6472 = vadd.s32 %v6471, %v6461
        %v6473 = vadd.s32 %v6472, %v6463
        %v6474 = vmul.u32 %v6429, %v6420
        %v6475 = vadd.s32 %v6451, %v6470
        %vm6476 = vc.u32 %v6451, %v6470
        %v6477 = vadd.s32 %v6473, 1
        %v6478 = vsel %vm6476, %v6477, %v6473
        %v6479 = vadd.s32 %v6474, %v6478
        %v6480 = vadd.s32 %v6479, 536870912
        %v6481 = vshrl.u32 %v6480, 30
        %v6482 = vshll.u32 %v6481, 30
        %v6483 = vsub.s32 %v6479, %v6482
        %vm6484 = vcmp.lt.s32.totalorder %v6483, 0
        %v6485 = vsub.s32 0, %v6483
        %v6486 = vsel %vm6484, %v6485, %v6483
        %v6487 = vclz %v6486
        %v6488 = vsub.s32 %v6487, 2
        %vm6489 = vcmp.gt.s32.totalorder 0, %v6488
        %v6490 = vsel %vm6489, 0, %v6488
        %v6491 = vsub.s32 32, %v6490
        %v6492 = vshll.u32 %v6483, %v6490
        %v6493 = vshrl.u32 %v6475, %v6491
        %v6494 = vor.u32 %v6492, %v6493
        %v6495 = vsub.s32 4294967266, %v6490
        %v6496 = vadd.s32 %v6495, 127
        %v6497 = vshll.u32 %v6496, 23
        %v6498 = vor.u32 4788187, %v6497
        %v6499 = vand.u32 2147483647, %v6498
        %v6501 = vcvt.s32.f32 %v6494
        %v6502 = vmul.f32 %v6501, %v6499
        %v6503 = vxor.u32 %v6502, 2147483648
        %v6504 = vsel %vm6383, %v6503, %v6502
        %v6505 = vsub.s32 4, %v6481
        %v6506 = vsel %vm6383, %v6505, %v6481
        %v6507 = vsel %vm6382, %v5666, %v6504
        %v6508 = vsel %vm6382, 0, %v6506
        %v6509 = vmul.f32 %v6507, %v6507
        %v6510 = vmul.f32 %v6509, -0.001358992
        %v6511 = vadd.f32 %v6510, 0.041655596
        %v6512 = vmul.f32 %v6509, %v6511
        %v6513 = vadd.f32 %v6512, -0.4999988
        %v6514 = vmul.f32 %v6509, %v6513
        %v6515 = vadd.f32 1.0, %v6514
        %v6516 = vmul.f32 %v6507, %v6507
        %v6517 = vmul.f32 %v6516, -0.00019511016
        %v6518 = vadd.f32 %v6517, 0.008332121
        %v6519 = vmul.f32 %v6516, %v6518
        %v6520 = vadd.f32 %v6519, -0.16666654
        %v6521 = vmul.f32 %v6516, %v6520
        %v6522 = vadd.f32 %v6521, 1.0
        %v6523 = vmul.f32 %v6522, %v6507
        %vm6524 = vweird.f32 %v5666
        %v6525 = vadd.s32 %v6508, 3
        %v6526 = vand.u32 %v6525, 3
        %vm6527 = vcmp.lt.s32.totalorder %v6526, 2
        %vm6528 = vcmp.eq.s32.totalorder %v6526, 0
        %v6529 = vxor.u32 %v6523, 2147483648
        %v6530 = vsel %vm6528, %v6515, %v6529
        %vm6531 = vcmp.eq.s32.totalorder %v6526, 2
        %v6532 = vxor.u32 %v6515, 2147483648
        %v6533 = vsel %vm6531, %v6532, %v6523
        %v6534 = vsel %vm6527, %v6530, %v6533
        %v6535 = vsel %vm6524, nan, %v6534
        %v6536 = vand.u32 2147483647, %v5695
        %vm6537 = vcmp.le.f32.partialorder %v6536, 0.7853982
        %vm6538 = vcmp.lt.s32.totalorder %v5695, 0
        %v6539 = vand.u32 %v5695, 2139095040
        %v6540 = vshrl.u32 %v6539, 23
        %v6541 = vsub.s32 %v6540, 127
        %v6542 = vand.u32 2147483647, %v5695
        %v6543 = vand.u32 %v6542, 8388607
        %v6544 = vor.u32 %v6543, 8388608
        %v6545 = vsub.s32 0, %v6544
        %v6546 = vadd.s32 %v6541, 1
        %vm6547 = vcmp.gt.s32.totalorder %v6546, 0
        %v6548 = vsel %vm6547, %v6546, 0
        %v6549 = vshrl.u32 %v6548, 5
        %v6550 = vand.u32 %v6548, 31
        %v6551 = vsub.s32 32, %v6550
        %v6552 = vshrl.u32 683565275, %v6551
        %v6553 = vshll.u32 683565275, %v6550
        %v6554 = vshrl.u32 2475754826, %v6551
        %v6555 = vor.u32 %v6553, %v6554
        %v6556 = vshll.u32 2475754826, %v6550
        %v6557 = vshrl.u32 2131351028, %v6551
        %v6558 = vor.u32 %v6556, %v6557
        %v6559 = vshll.u32 2131351028, %v6550
        %v6560 = vshrl.u32 2102212464, %v6551
        %v6561 = vor.u32 %v6559, %v6560
        %v6562 = vshll.u32 2102212464, %v6550
        %v6563 = vshrl.u32 920167782, %v6551
        %v6564 = vor.u32 %v6562, %v6563
        %v6565 = vshll.u32 920167782, %v6550
        %v6566 = vshrl.u32 1326507024, %v6551
        %v6567 = vor.u32 %v6565, %v6566
        %vm6568 = vcmp.lt.s32.totalorder %v6549, 1
        %vm6569 = vcmp.lt.s32.totalorder %v6549, 2
        %vm6570 = vcmp.lt.s32.totalorder %v6549, 3
        %vm6571 = vcmp.lt.s32.totalorder %v6549, 4
        %v6572 = vsel %vm6568, %v6552, %v6555
        %v6573 = vsel %vm6571, %v6561, 2102212464
        %v6574 = vsel %vm6570, %v6558, %v6573
        %v6575 = vsel %vm6569, %v6572, %v6574
        %v6576 = vsel %vm6568, %v6555, %v6558
        %v6577 = vsel %vm6571, %v6564, 920167782
        %v6578 = vsel %vm6570, %v6561, %v6577
        %v6579 = vsel %vm6569, %v6576, %v6578
        %v6580 = vsel %vm6568, %v6558, %v6561
        %v6581 = vsel %vm6571, %v6567, 1326507024
        %v6582 = vsel %vm6570, %v6564, %v6581
        %v6583 = vsel %vm6569, %v6580, %v6582
        %v6584 = vshll.u32 %v6544, 8
        %v6585 = vand.u32 %v6584, 65535
        %v6586 = vshrl.u32 %v6584, 16
        %v6587 = vand.u32 %v6583, 65535
        %v6588 = vshrl.u32 %v6583, 16
        %v6589 = vmul.u32 %v6585, %v6587
        %v6590 = vmul.u32 %v6585, %v6588
        %v6591 = vmul.u32 %v6586, %v6587
        %v6592 = vmul.u32 %v6586, %v6588
        %v6593 = vshll.u32 %v6590, 16
        %v6594 = vshrl.u32 %v6590, 16
        %v6595 = vshll.u32 %v6591, 16
        %v6596 = vshrl.u32 %v6591, 16
        %vm6597 = vc.u32 %v6589, %v6593
        %v6598 = vsel %vm6597, 1, 0
        %v6599 = vadd.s32 %v6589, %v6593
        %v6600 = vadd.s32 %v6592, %v6598
        %vm6601 = vc.u32 %v6599, %v6595
        %v6602 = vsel %vm6601, 1, 0
        %v6603 = vadd.s32 %v6599, %v6595
        %v6604 = vadd.s32 %v6600, %v6602
        %v6605 = vadd.s32 %v6604, %v6594
        %v6606 = vadd.s32 %v6605, %v6596
        %v6607 = vand.u32 %v6584, 65535
        %v6608 = vshrl.u32 %v6584, 16
        %v6609 = vand.u32 %v6579, 65535
        %v6610 = vshrl.u32 %v6579, 16
        %v6611 = vmul.u32 %v6607, %v6609
        %v6612 = vmul.u32 %v6607, %v6610
        %v6613 = vmul.u32 %v6608, %v6609
        %v6614 = vmul.u32 %v6608, %v6610
        %v6615 = vshll.u32 %v6612, 16
        %v6616 = vshrl.u32 %v6612, 16
        %v6617 = vshll.u32 %v6613, 16
        %v6618 = vshrl.u32 %v6613, 16
        %vm6619 = vc.u32 %v6611, %v6615
        %v6620 = vsel %vm6619, 1, 0
        %v6621 = vadd.s32 %v6611, %v6615
        %v6622 = vadd.s32 %v6614, %v6620
        %vm6623 = vc.u32 %v6621, %v6617
        %v6624 = vsel %vm6623, 1, 0
        %v6625 = vadd.s32 %v6621, %v6617
        %v6626 = vadd.s32 %v6622, %v6624
        %v6627 = vadd.s32 %v6626, %v6616
        %v6628 = vadd.s32 %v6627, %v6618
        %v6629 = vmul.u32 %v6584, %v6575
        %v6630 = vadd.s32 %v6606, %v6625
        %vm6631 = vc.u32 %v6606, %v6625
        %v6632 = vadd.s32 %v6628, 1
        %v6633 = vsel %vm6631, %v6632, %v6628
        %v6634 = vadd.s32 %v6629, %v6633
        %v6635 = vadd.s32 %v6634, 536870912
        %v6636 = vshrl.u32 %v6635, 30
        %v6637 = vshll.u32 %v6636, 30
        %v6638 = vsub.s32 %v6634, %v6637
        %vm6639 = vcmp.lt.s32.totalorder %v6638, 0
        %v6640 = vsub.s32 0, %v6638
        %v6641 = vsel %vm6639, %v6640, %v6638
        %v6642 = vclz %v6641
        %v6643 = vsub.s32 %v6642, 2
        %vm6644 = vcmp.gt.s32.totalorder 0, %v6643
        %v6645 = vsel %vm6644, 0, %v6643
        %v6646 = vsub.s32 32, %v6645
        %v6647 = vshll.u32 %v6638, %v6645
        %v6648 = vshrl.u32 %v6630, %v6646
        %v6649 = vor.u32 %v6647, %v6648
        %v6650 = vsub.s32 4294967266, %v6645
        %v6651 = vadd.s32 %v6650, 127
        %v6652 = vshll.u32 %v6651, 23
        %v6653 = vor.u32 4788187, %v6652
        %v6654 = vand.u32 2147483647, %v6653
        %v6656 = vcvt.s32.f32 %v6649
        %v6657 = vmul.f32 %v6656, %v6654
        %v6658 = vxor.u32 %v6657, 2147483648
        %v6659 = vsel %vm6538, %v6658, %v6657
        %v6660 = vsub.s32 4, %v6636
        %v6661 = vsel %vm6538, %v6660, %v6636
        %v6662 = vsel %vm6537, %v5695, %v6659
        %v6663 = vsel %vm6537, 0, %v6661
        %v6664 = vmul.f32 %v6662, %v6662
        %v6665 = vmul.f32 %v6664, -0.001358992
        %v6666 = vadd.f32 %v6665, 0.041655596
        %v6667 = vmul.f32 %v6664, %v6666
        %v6668 = vadd.f32 %v6667, -0.4999988
        %v6669 = vmul.f32 %v6664, %v6668
        %v6670 = vadd.f32 1.0, %v6669
        %v6671 = vmul.f32 %v6662, %v6662
        %v6672 = vmul.f32 %v6671, -0.00019511016
        %v6673 = vadd.f32 %v6672, 0.008332121
        %v6674 = vmul.f32 %v6671, %v6673
        %v6675 = vadd.f32 %v6674, -0.16666654
        %v6676 = vmul.f32 %v6671, %v6675
        %v6677 = vadd.f32 %v6676, 1.0
        %v6678 = vmul.f32 %v6677, %v6662
        %vm6679 = vweird.f32 %v5695
        %v6680 = vadd.s32 %v6663, 3
        %v6681 = vand.u32 %v6680, 3
        %vm6682 = vcmp.lt.s32.totalorder %v6681, 2
        %vm6683 = vcmp.eq.s32.totalorder %v6681, 0
        %v6684 = vxor.u32 %v6678, 2147483648
        %v6685 = vsel %vm6683, %v6670, %v6684
        %vm6686 = vcmp.eq.s32.totalorder %v6681, 2
        %v6687 = vxor.u32 %v6670, 2147483648
        %v6688 = vsel %vm6686, %v6687, %v6678
        %v6689 = vsel %vm6682, %v6685, %v6688
        %v6690 = vsel %vm6679, nan, %v6689
        %v6691 = vand.u32 2147483647, %v5724
        %vm6692 = vcmp.le.f32.partialorder %v6691, 0.7853982
        %vm6693 = vcmp.lt.s32.totalorder %v5724, 0
        %v6694 = vand.u32 %v5724, 2139095040
        %v6695 = vshrl.u32 %v6694, 23
        %v6696 = vsub.s32 %v6695, 127
        %v6697 = vand.u32 2147483647, %v5724
        %v6698 = vand.u32 %v6697, 8388607
        %v6699 = vor.u32 %v6698, 8388608
        %v6700 = vsub.s32 0, %v6699
        %v6701 = vadd.s32 %v6696, 1
        %vm6702 = vcmp.gt.s32.totalorder %v6701, 0
        %v6703 = vsel %vm6702, %v6701, 0
        %v6704 = vshrl.u32 %v6703, 5
        %v6705 = vand.u32 %v6703, 31
        %v6706 = vsub.s32 32, %v6705
        %v6707 = vshrl.u32 683565275, %v6706
        %v6708 = vshll.u32 683565275, %v6705
        %v6709 = vshrl.u32 2475754826, %v6706
        %v6710 = vor.u32 %v6708, %v6709
        %v6711 = vshll.u32 2475754826, %v6705
        %v6712 = vshrl.u32 2131351028, %v6706
        %v6713 = vor.u32 %v6711, %v6712
        %v6714 = vshll.u32 2131351028, %v6705
        %v6715 = vshrl.u32 2102212464, %v6706
        %v6716 = vor.u32 %v6714, %v6715
        %v6717 = vshll.u32 2102212464, %v6705
        %v6718 = vshrl.u32 920167782, %v6706
        %v6719 = vor.u32 %v6717, %v6718
        %v6720 = vshll.u32 920167782, %v6705
        %v6721 = vshrl.u32 1326507024, %v6706
        %v6722 = vor.u32 %v6720, %v6721
        %vm6723 = vcmp.lt.s32.totalorder %v6704, 1
        %vm6724 = vcmp.lt.s32.totalorder %v6704, 2
        %vm6725 = vcmp.lt.s32.totalorder %v6704, 3
        %vm6726 = vcmp.lt.s32.totalorder %v6704, 4
        %v6727 = vsel %vm6723, %v6707, %v6710
        %v6728 = vsel %vm6726, %v6716, 2102212464
        %v6729 = vsel %vm6725, %v6713, %v6728
        %v6730 = vsel %vm6724, %v6727, %v6729
        %v6731 = vsel %vm6723, %v6710, %v6713
        %v6732 = vsel %vm6726, %v6719, 920167782
        %v6733 = vsel %vm6725, %v6716, %v6732
        %v6734 = vsel %vm6724, %v6731, %v6733
        %v6735 = vsel %vm6723, %v6713, %v6716
        %v6736 = vsel %vm6726, %v6722, 1326507024
        %v6737 = vsel %vm6725, %v6719, %v6736
        %v6738 = vsel %vm6724, %v6735, %v6737
        %v6739 = vshll.u32 %v6699, 8
        %v6740 = vand.u32 %v6739, 65535
        %v6741 = vshrl.u32 %v6739, 16
        %v6742 = vand.u32 %v6738, 65535
        %v6743 = vshrl.u32 %v6738, 16
        %v6744 = vmul.u32 %v6740, %v6742
        %v6745 = vmul.u32 %v6740, %v6743
        %v6746 = vmul.u32 %v6741, %v6742
        %v6747 = vmul.u32 %v6741, %v6743
        %v6748 = vshll.u32 %v6745, 16
        %v6749 = vshrl.u32 %v6745, 16
        %v6750 = vshll.u32 %v6746, 16
        %v6751 = vshrl.u32 %v6746, 16
        %vm6752 = vc.u32 %v6744, %v6748
        %v6753 = vsel %vm6752, 1, 0
        %v6754 = vadd.s32 %v6744, %v6748
        %v6755 = vadd.s32 %v6747, %v6753
        %vm6756 = vc.u32 %v6754, %v6750
        %v6757 = vsel %vm6756, 1, 0
        %v6758 = vadd.s32 %v6754, %v6750
        %v6759 = vadd.s32 %v6755, %v6757
        %v6760 = vadd.s32 %v6759, %v6749
        %v6761 = vadd.s32 %v6760, %v6751
        %v6762 = vand.u32 %v6739, 65535
        %v6763 = vshrl.u32 %v6739, 16
        %v6764 = vand.u32 %v6734, 65535
        %v6765 = vshrl.u32 %v6734, 16
        %v6766 = vmul.u32 %v6762, %v6764
        %v6767 = vmul.u32 %v6762, %v6765
        %v6768 = vmul.u32 %v6763, %v6764
        %v6769 = vmul.u32 %v6763, %v6765
        %v6770 = vshll.u32 %v6767, 16
        %v6771 = vshrl.u32 %v6767, 16
        %v6772 = vshll.u32 %v6768, 16
        %v6773 = vshrl.u32 %v6768, 16
        %vm6774 = vc.u32 %v6766, %v6770
        %v6775 = vsel %vm6774, 1, 0
        %v6776 = vadd.s32 %v6766, %v6770
        %v6777 = vadd.s32 %v6769, %v6775
        %vm6778 = vc.u32 %v6776, %v6772
        %v6779 = vsel %vm6778, 1, 0
        %v6780 = vadd.s32 %v6776, %v6772
        %v6781 = vadd.s32 %v6777, %v6779
        %v6782 = vadd.s32 %v6781, %v6771
        %v6783 = vadd.s32 %v6782, %v6773
        %v6784 = vmul.u32 %v6739, %v6730
        %v6785 = vadd.s32 %v6761, %v6780
        %vm6786 = vc.u32 %v6761, %v6780
        %v6787 = vadd.s32 %v6783, 1
        %v6788 = vsel %vm6786, %v6787, %v6783
        %v6789 = vadd.s32 %v6784, %v6788
        %v6790 = vadd.s32 %v6789, 536870912
        %v6791 = vshrl.u32 %v6790, 30
        %v6792 = vshll.u32 %v6791, 30
        %v6793 = vsub.s32 %v6789, %v6792
        %vm6794 = vcmp.lt.s32.totalorder %v6793, 0
        %v6795 = vsub.s32 0, %v6793
        %v6796 = vsel %vm6794, %v6795, %v6793
        %v6797 = vclz %v6796
        %v6798 = vsub.s32 %v6797, 2
        %vm6799 = vcmp.gt.s32.totalorder 0, %v6798
        %v6800 = vsel %vm6799, 0, %v6798
        %v6801 = vsub.s32 32, %v6800
        %v6802 = vshll.u32 %v6793, %v6800
        %v6803 = vshrl.u32 %v6785, %v6801
        %v6804 = vor.u32 %v6802, %v6803
        %v6805 = vsub.s32 4294967266, %v6800
        %v6806 = vadd.s32 %v6805, 127
        %v6807 = vshll.u32 %v6806, 23
        %v6808 = vor.u32 4788187, %v6807
        %v6809 = vand.u32 2147483647, %v6808
        %v6811 = vcvt.s32.f32 %v6804
        %v6812 = vmul.f32 %v6811, %v6809
        %v6813 = vxor.u32 %v6812, 2147483648
        %v6814 = vsel %vm6693, %v6813, %v6812
        %v6815 = vsub.s32 4, %v6791
        %v6816 = vsel %vm6693, %v6815, %v6791
        %v6817 = vsel %vm6692, %v5724, %v6814
        %v6818 = vsel %vm6692, 0, %v6816
        %v6819 = vmul.f32 %v6817, %v6817
        %v6820 = vmul.f32 %v6819, -0.001358992
        %v6821 = vadd.f32 %v6820, 0.041655596
        %v6822 = vmul.f32 %v6819, %v6821
        %v6823 = vadd.f32 %v6822, -0.4999988
        %v6824 = vmul.f32 %v6819, %v6823
        %v6825 = vadd.f32 1.0, %v6824
        %v6826 = vmul.f32 %v6817, %v6817
        %v6827 = vmul.f32 %v6826, -0.00019511016
        %v6828 = vadd.f32 %v6827, 0.008332121
        %v6829 = vmul.f32 %v6826, %v6828
        %v6830 = vadd.f32 %v6829, -0.16666654
        %v6831 = vmul.f32 %v6826, %v6830
        %v6832 = vadd.f32 %v6831, 1.0
        %v6833 = vmul.f32 %v6832, %v6817
        %vm6834 = vweird.f32 %v5724
        %v6835 = vadd.s32 %v6818, 3
        %v6836 = vand.u32 %v6835, 3
        %vm6837 = vcmp.lt.s32.totalorder %v6836, 2
        %vm6838 = vcmp.eq.s32.totalorder %v6836, 0
        %v6839 = vxor.u32 %v6833, 2147483648
        %v6840 = vsel %vm6838, %v6825, %v6839
        %vm6841 = vcmp.eq.s32.totalorder %v6836, 2
        %v6842 = vxor.u32 %v6825, 2147483648
        %v6843 = vsel %vm6841, %v6842, %v6833
        %v6844 = vsel %vm6837, %v6840, %v6843
        %v6845 = vsel %vm6834, nan, %v6844
        %v6846 = vand.u32 2147483647, %v5753
        %vm6847 = vcmp.le.f32.partialorder %v6846, 0.7853982
        %vm6848 = vcmp.lt.s32.totalorder %v5753, 0
        %v6849 = vand.u32 %v5753, 2139095040
        %v6850 = vshrl.u32 %v6849, 23
        %v6851 = vsub.s32 %v6850, 127
        %v6852 = vand.u32 2147483647, %v5753
        %v6853 = vand.u32 %v6852, 8388607
        %v6854 = vor.u32 %v6853, 8388608
        %v6855 = vsub.s32 0, %v6854
        %v6856 = vadd.s32 %v6851, 1
        %vm6857 = vcmp.gt.s32.totalorder %v6856, 0
        %v6858 = vsel %vm6857, %v6856, 0
        %v6859 = vshrl.u32 %v6858, 5
        %v6860 = vand.u32 %v6858, 31
        %v6861 = vsub.s32 32, %v6860
        %v6862 = vshrl.u32 683565275, %v6861
        %v6863 = vshll.u32 683565275, %v6860
        %v6864 = vshrl.u32 2475754826, %v6861
        %v6865 = vor.u32 %v6863, %v6864
        %v6866 = vshll.u32 2475754826, %v6860
        %v6867 = vshrl.u32 2131351028, %v6861
        %v6868 = vor.u32 %v6866, %v6867
        %v6869 = vshll.u32 2131351028, %v6860
        %v6870 = vshrl.u32 2102212464, %v6861
        %v6871 = vor.u32 %v6869, %v6870
        %v6872 = vshll.u32 2102212464, %v6860
        %v6873 = vshrl.u32 920167782, %v6861
        %v6874 = vor.u32 %v6872, %v6873
        %v6875 = vshll.u32 920167782, %v6860
        %v6876 = vshrl.u32 1326507024, %v6861
        %v6877 = vor.u32 %v6875, %v6876
        %vm6878 = vcmp.lt.s32.totalorder %v6859, 1
        %vm6879 = vcmp.lt.s32.totalorder %v6859, 2
        %vm6880 = vcmp.lt.s32.totalorder %v6859, 3
        %vm6881 = vcmp.lt.s32.totalorder %v6859, 4
        %v6882 = vsel %vm6878, %v6862, %v6865
        %v6883 = vsel %vm6881, %v6871, 2102212464
        %v6884 = vsel %vm6880, %v6868, %v6883
        %v6885 = vsel %vm6879, %v6882, %v6884
        %v6886 = vsel %vm6878, %v6865, %v6868
        %v6887 = vsel %vm6881, %v6874, 920167782
        %v6888 = vsel %vm6880, %v6871, %v6887
        %v6889 = vsel %vm6879, %v6886, %v6888
        %v6890 = vsel %vm6878, %v6868, %v6871
        %v6891 = vsel %vm6881, %v6877, 1326507024
        %v6892 = vsel %vm6880, %v6874, %v6891
        %v6893 = vsel %vm6879, %v6890, %v6892
        %v6894 = vshll.u32 %v6854, 8
        %v6895 = vand.u32 %v6894, 65535
        %v6896 = vshrl.u32 %v6894, 16
        %v6897 = vand.u32 %v6893, 65535
        %v6898 = vshrl.u32 %v6893, 16
        %v6899 = vmul.u32 %v6895, %v6897
        %v6900 = vmul.u32 %v6895, %v6898
        %v6901 = vmul.u32 %v6896, %v6897
        %v6902 = vmul.u32 %v6896, %v6898
        %v6903 = vshll.u32 %v6900, 16
        %v6904 = vshrl.u32 %v6900, 16
        %v6905 = vshll.u32 %v6901, 16
        %v6906 = vshrl.u32 %v6901, 16
        %vm6907 = vc.u32 %v6899, %v6903
        %v6908 = vsel %vm6907, 1, 0
        %v6909 = vadd.s32 %v6899, %v6903
        %v6910 = vadd.s32 %v6902, %v6908
        %vm6911 = vc.u32 %v6909, %v6905
        %v6912 = vsel %vm6911, 1, 0
        %v6913 = vadd.s32 %v6909, %v6905
        %v6914 = vadd.s32 %v6910, %v6912
        %v6915 = vadd.s32 %v6914, %v6904
        %v6916 = vadd.s32 %v6915, %v6906
        %v6917 = vand.u32 %v6894, 65535
        %v6918 = vshrl.u32 %v6894, 16
        %v6919 = vand.u32 %v6889, 65535
        %v6920 = vshrl.u32 %v6889, 16
        %v6921 = vmul.u32 %v6917, %v6919
        %v6922 = vmul.u32 %v6917, %v6920
        %v6923 = vmul.u32 %v6918, %v6919
        %v6924 = vmul.u32 %v6918, %v6920
        %v6925 = vshll.u32 %v6922, 16
        %v6926 = vshrl.u32 %v6922, 16
        %v6927 = vshll.u32 %v6923, 16
        %v6928 = vshrl.u32 %v6923, 16
        %vm6929 = vc.u32 %v6921, %v6925
        %v6930 = vsel %vm6929, 1, 0
        %v6931 = vadd.s32 %v6921, %v6925
        %v6932 = vadd.s32 %v6924, %v6930
        %vm6933 = vc.u32 %v6931, %v6927
        %v6934 = vsel %vm6933, 1, 0
        %v6935 = vadd.s32 %v6931, %v6927
        %v6936 = vadd.s32 %v6932, %v6934
        %v6937 = vadd.s32 %v6936, %v6926
        %v6938 = vadd.s32 %v6937, %v6928
        %v6939 = vmul.u32 %v6894, %v6885
        %v6940 = vadd.s32 %v6916, %v6935
        %vm6941 = vc.u32 %v6916, %v6935
        %v6942 = vadd.s32 %v6938, 1
        %v6943 = vsel %vm6941, %v6942, %v6938
        %v6944 = vadd.s32 %v6939, %v6943
        %v6945 = vadd.s32 %v6944, 536870912
        %v6946 = vshrl.u32 %v6945, 30
        %v6947 = vshll.u32 %v6946, 30
        %v6948 = vsub.s32 %v6944, %v6947
        %vm6949 = vcmp.lt.s32.totalorder %v6948, 0
        %v6950 = vsub.s32 0, %v6948
        %v6951 = vsel %vm6949, %v6950, %v6948
        %v6952 = vclz %v6951
        %v6953 = vsub.s32 %v6952, 2
        %vm6954 = vcmp.gt.s32.totalorder 0, %v6953
        %v6955 = vsel %vm6954, 0, %v6953
        %v6956 = vsub.s32 32, %v6955
        %v6957 = vshll.u32 %v6948, %v6955
        %v6958 = vshrl.u32 %v6940, %v6956
        %v6959 = vor.u32 %v6957, %v6958
        %v6960 = vsub.s32 4294967266, %v6955
        %v6961 = vadd.s32 %v6960, 127
        %v6962 = vshll.u32 %v6961, 23
        %v6963 = vor.u32 4788187, %v6962
        %v6964 = vand.u32 2147483647, %v6963
        %v6966 = vcvt.s32.f32 %v6959
        %v6967 = vmul.f32 %v6966, %v6964
        %v6968 = vxor.u32 %v6967, 2147483648
        %v6969 = vsel %vm6848, %v6968, %v6967
        %v6970 = vsub.s32 4, %v6946
        %v6971 = vsel %vm6848, %v6970, %v6946
        %v6972 = vsel %vm6847, %v5753, %v6969
        %v6973 = vsel %vm6847, 0, %v6971
        %v6974 = vmul.f32 %v6972, %v6972
        %v6975 = vmul.f32 %v6974, -0.001358992
        %v6976 = vadd.f32 %v6975, 0.041655596
        %v6977 = vmul.f32 %v6974, %v6976
        %v6978 = vadd.f32 %v6977, -0.4999988
        %v6979 = vmul.f32 %v6974, %v6978
        %v6980 = vadd.f32 1.0, %v6979
        %v6981 = vmul.f32 %v6972, %v6972
        %v6982 = vmul.f32 %v6981, -0.00019511016
        %v6983 = vadd.f32 %v6982, 0.008332121
        %v6984 = vmul.f32 %v6981, %v6983
        %v6985 = vadd.f32 %v6984, -0.16666654
        %v6986 = vmul.f32 %v6981, %v6985
        %v6987 = vadd.f32 %v6986, 1.0
        %v6988 = vmul.f32 %v6987, %v6972
        %vm6989 = vweird.f32 %v5753
        %v6990 = vadd.s32 %v6973, 3
        %v6991 = vand.u32 %v6990, 3
        %vm6992 = vcmp.lt.s32.totalorder %v6991, 2
        %vm6993 = vcmp.eq.s32.totalorder %v6991, 0
        %v6994 = vxor.u32 %v6988, 2147483648
        %v6995 = vsel %vm6993, %v6980, %v6994
        %vm6996 = vcmp.eq.s32.totalorder %v6991, 2
        %v6997 = vxor.u32 %v6980, 2147483648
        %v6998 = vsel %vm6996, %v6997, %v6988
        %v6999 = vsel %vm6992, %v6995, %v6998
        %v7000 = vsel %vm6989, nan, %v6999
        %v7001 = vand.u32 2147483647, %v5669
        %vm7002 = vcmp.le.f32.partialorder %v7001, 0.7853982
        %vm7003 = vcmp.lt.s32.totalorder %v5669, 0
        %v7004 = vand.u32 %v5669, 2139095040
        %v7005 = vshrl.u32 %v7004, 23
        %v7006 = vsub.s32 %v7005, 127
        %v7007 = vand.u32 2147483647, %v5669
        %v7008 = vand.u32 %v7007, 8388607
        %v7009 = vor.u32 %v7008, 8388608
        %v7010 = vsub.s32 0, %v7009
        %v7011 = vadd.s32 %v7006, 1
        %vm7012 = vcmp.gt.s32.totalorder %v7011, 0
        %v7013 = vsel %vm7012, %v7011, 0
        %v7014 = vshrl.u32 %v7013, 5
        %v7015 = vand.u32 %v7013, 31
        %v7016 = vsub.s32 32, %v7015
        %v7017 = vshrl.u32 683565275, %v7016
        %v7018 = vshll.u32 683565275, %v7015
        %v7019 = vshrl.u32 2475754826, %v7016
        %v7020 = vor.u32 %v7018, %v7019
        %v7021 = vshll.u32 2475754826, %v7015
        %v7022 = vshrl.u32 2131351028, %v7016
        %v7023 = vor.u32 %v7021, %v7022
        %v7024 = vshll.u32 2131351028, %v7015
        %v7025 = vshrl.u32 2102212464, %v7016
        %v7026 = vor.u32 %v7024, %v7025
        %v7027 = vshll.u32 2102212464, %v7015
        %v7028 = vshrl.u32 920167782, %v7016
        %v7029 = vor.u32 %v7027, %v7028
        %v7030 = vshll.u32 920167782, %v7015
        %v7031 = vshrl.u32 1326507024, %v7016
        %v7032 = vor.u32 %v7030, %v7031
        %vm7033 = vcmp.lt.s32.totalorder %v7014, 1
        %vm7034 = vcmp.lt.s32.totalorder %v7014, 2
        %vm7035 = vcmp.lt.s32.totalorder %v7014, 3
        %vm7036 = vcmp.lt.s32.totalorder %v7014, 4
        %v7037 = vsel %vm7033, %v7017, %v7020
        %v7038 = vsel %vm7036, %v7026, 2102212464
        %v7039 = vsel %vm7035, %v7023, %v7038
        %v7040 = vsel %vm7034, %v7037, %v7039
        %v7041 = vsel %vm7033, %v7020, %v7023
        %v7042 = vsel %vm7036, %v7029, 920167782
        %v7043 = vsel %vm7035, %v7026, %v7042
        %v7044 = vsel %vm7034, %v7041, %v7043
        %v7045 = vsel %vm7033, %v7023, %v7026
        %v7046 = vsel %vm7036, %v7032, 1326507024
        %v7047 = vsel %vm7035, %v7029, %v7046
        %v7048 = vsel %vm7034, %v7045, %v7047
        %v7049 = vshll.u32 %v7009, 8
        %v7050 = vand.u32 %v7049, 65535
        %v7051 = vshrl.u32 %v7049, 16
        %v7052 = vand.u32 %v7048, 65535
        %v7053 = vshrl.u32 %v7048, 16
        %v7054 = vmul.u32 %v7050, %v7052
        %v7055 = vmul.u32 %v7050, %v7053
        %v7056 = vmul.u32 %v7051, %v7052
        %v7057 = vmul.u32 %v7051, %v7053
        %v7058 = vshll.u32 %v7055, 16
        %v7059 = vshrl.u32 %v7055, 16
        %v7060 = vshll.u32 %v7056, 16
        %v7061 = vshrl.u32 %v7056, 16
        %vm7062 = vc.u32 %v7054, %v7058
        %v7063 = vsel %vm7062, 1, 0
        %v7064 = vadd.s32 %v7054, %v7058
        %v7065 = vadd.s32 %v7057, %v7063
        %vm7066 = vc.u32 %v7064, %v7060
        %v7067 = vsel %vm7066, 1, 0
        %v7068 = vadd.s32 %v7064, %v7060
        %v7069 = vadd.s32 %v7065, %v7067
        %v7070 = vadd.s32 %v7069, %v7059
        %v7071 = vadd.s32 %v7070, %v7061
        %v7072 = vand.u32 %v7049, 65535
        %v7073 = vshrl.u32 %v7049, 16
        %v7074 = vand.u32 %v7044, 65535
        %v7075 = vshrl.u32 %v7044, 16
        %v7076 = vmul.u32 %v7072, %v7074
        %v7077 = vmul.u32 %v7072, %v7075
        %v7078 = vmul.u32 %v7073, %v7074
        %v7079 = vmul.u32 %v7073, %v7075
        %v7080 = vshll.u32 %v7077, 16
        %v7081 = vshrl.u32 %v7077, 16
        %v7082 = vshll.u32 %v7078, 16
        %v7083 = vshrl.u32 %v7078, 16
        %vm7084 = vc.u32 %v7076, %v7080
        %v7085 = vsel %vm7084, 1, 0
        %v7086 = vadd.s32 %v7076, %v7080
        %v7087 = vadd.s32 %v7079, %v7085
        %vm7088 = vc.u32 %v7086, %v7082
        %v7089 = vsel %vm7088, 1, 0
        %v7090 = vadd.s32 %v7086, %v7082
        %v7091 = vadd.s32 %v7087, %v7089
        %v7092 = vadd.s32 %v7091, %v7081
        %v7093 = vadd.s32 %v7092, %v7083
        %v7094 = vmul.u32 %v7049, %v7040
        %v7095 = vadd.s32 %v7071, %v7090
        %vm7096 = vc.u32 %v7071, %v7090
        %v7097 = vadd.s32 %v7093, 1
        %v7098 = vsel %vm7096, %v7097, %v7093
        %v7099 = vadd.s32 %v7094, %v7098
        %v7100 = vadd.s32 %v7099, 536870912
        %v7101 = vshrl.u32 %v7100, 30
        %v7102 = vshll.u32 %v7101, 30
        %v7103 = vsub.s32 %v7099, %v7102
        %vm7104 = vcmp.lt.s32.totalorder %v7103, 0
        %v7105 = vsub.s32 0, %v7103
        %v7106 = vsel %vm7104, %v7105, %v7103
        %v7107 = vclz %v7106
        %v7108 = vsub.s32 %v7107, 2
        %vm7109 = vcmp.gt.s32.totalorder 0, %v7108
        %v7110 = vsel %vm7109, 0, %v7108
        %v7111 = vsub.s32 32, %v7110
        %v7112 = vshll.u32 %v7103, %v7110
        %v7113 = vshrl.u32 %v7095, %v7111
        %v7114 = vor.u32 %v7112, %v7113
        %v7115 = vsub.s32 4294967266, %v7110
        %v7116 = vadd.s32 %v7115, 127
        %v7117 = vshll.u32 %v7116, 23
        %v7118 = vor.u32 4788187, %v7117
        %v7119 = vand.u32 2147483647, %v7118
        %v7121 = vcvt.s32.f32 %v7114
        %v7122 = vmul.f32 %v7121, %v7119
        %v7123 = vxor.u32 %v7122, 2147483648
        %v7124 = vsel %vm7003, %v7123, %v7122
        %v7125 = vsub.s32 4, %v7101
        %v7126 = vsel %vm7003, %v7125, %v7101
        %v7127 = vsel %vm7002, %v5669, %v7124
        %v7128 = vsel %vm7002, 0, %v7126
        %v7129 = vmul.f32 %v7127, %v7127
        %v7130 = vmul.f32 %v7129, -0.001358992
        %v7131 = vadd.f32 %v7130, 0.041655596
        %v7132 = vmul.f32 %v7129, %v7131
        %v7133 = vadd.f32 %v7132, -0.4999988
        %v7134 = vmul.f32 %v7129, %v7133
        %v7135 = vadd.f32 1.0, %v7134
        %v7136 = vmul.f32 %v7127, %v7127
        %v7137 = vmul.f32 %v7136, -0.00019511016
        %v7138 = vadd.f32 %v7137, 0.008332121
        %v7139 = vmul.f32 %v7136, %v7138
        %v7140 = vadd.f32 %v7139, -0.16666654
        %v7141 = vmul.f32 %v7136, %v7140
        %v7142 = vadd.f32 %v7141, 1.0
        %v7143 = vmul.f32 %v7142, %v7127
        %vm7144 = vweird.f32 %v5669
        %v7145 = vadd.s32 %v7128, 3
        %v7146 = vand.u32 %v7145, 3
        %vm7147 = vcmp.lt.s32.totalorder %v7146, 2
        %vm7148 = vcmp.eq.s32.totalorder %v7146, 0
        %v7149 = vxor.u32 %v7143, 2147483648
        %v7150 = vsel %vm7148, %v7135, %v7149
        %vm7151 = vcmp.eq.s32.totalorder %v7146, 2
        %v7152 = vxor.u32 %v7135, 2147483648
        %v7153 = vsel %vm7151, %v7152, %v7143
        %v7154 = vsel %vm7147, %v7150, %v7153
        %v7155 = vsel %vm7144, nan, %v7154
        %v7156 = vand.u32 2147483647, %v5698
        %vm7157 = vcmp.le.f32.partialorder %v7156, 0.7853982
        %vm7158 = vcmp.lt.s32.totalorder %v5698, 0
        %v7159 = vand.u32 %v5698, 2139095040
        %v7160 = vshrl.u32 %v7159, 23
        %v7161 = vsub.s32 %v7160, 127
        %v7162 = vand.u32 2147483647, %v5698
        %v7163 = vand.u32 %v7162, 8388607
        %v7164 = vor.u32 %v7163, 8388608
        %v7165 = vsub.s32 0, %v7164
        %v7166 = vadd.s32 %v7161, 1
        %vm7167 = vcmp.gt.s32.totalorder %v7166, 0
        %v7168 = vsel %vm7167, %v7166, 0
        %v7169 = vshrl.u32 %v7168, 5
        %v7170 = vand.u32 %v7168, 31
        %v7171 = vsub.s32 32, %v7170
        %v7172 = vshrl.u32 683565275, %v7171
        %v7173 = vshll.u32 683565275, %v7170
        %v7174 = vshrl.u32 2475754826, %v7171
        %v7175 = vor.u32 %v7173, %v7174
        %v7176 = vshll.u32 2475754826, %v7170
        %v7177 = vshrl.u32 2131351028, %v7171
        %v7178 = vor.u32 %v7176, %v7177
        %v7179 = vshll.u32 2131351028, %v7170
        %v7180 = vshrl.u32 2102212464, %v7171
        %v7181 = vor.u32 %v7179, %v7180
        %v7182 = vshll.u32 2102212464, %v7170
        %v7183 = vshrl.u32 920167782, %v7171
        %v7184 = vor.u32 %v7182, %v7183
        %v7185 = vshll.u32 920167782, %v7170
        %v7186 = vshrl.u32 1326507024, %v7171
        %v7187 = vor.u32 %v7185, %v7186
        %vm7188 = vcmp.lt.s32.totalorder %v7169, 1
        %vm7189 = vcmp.lt.s32.totalorder %v7169, 2
        %vm7190 = vcmp.lt.s32.totalorder %v7169, 3
        %vm7191 = vcmp.lt.s32.totalorder %v7169, 4
        %v7192 = vsel %vm7188, %v7172, %v7175
        %v7193 = vsel %vm7191, %v7181, 2102212464
        %v7194 = vsel %vm7190, %v7178, %v7193
        %v7195 = vsel %vm7189, %v7192, %v7194
        %v7196 = vsel %vm7188, %v7175, %v7178
        %v7197 = vsel %vm7191, %v7184, 920167782
        %v7198 = vsel %vm7190, %v7181, %v7197
        %v7199 = vsel %vm7189, %v7196, %v7198
        %v7200 = vsel %vm7188, %v7178, %v7181
        %v7201 = vsel %vm7191, %v7187, 1326507024
        %v7202 = vsel %vm7190, %v7184, %v7201
        %v7203 = vsel %vm7189, %v7200, %v7202
        %v7204 = vshll.u32 %v7164, 8
        %v7205 = vand.u32 %v7204, 65535
        %v7206 = vshrl.u32 %v7204, 16
        %v7207 = vand.u32 %v7203, 65535
        %v7208 = vshrl.u32 %v7203, 16
        %v7209 = vmul.u32 %v7205, %v7207
        %v7210 = vmul.u32 %v7205, %v7208
        %v7211 = vmul.u32 %v7206, %v7207
        %v7212 = vmul.u32 %v7206, %v7208
        %v7213 = vshll.u32 %v7210, 16
        %v7214 = vshrl.u32 %v7210, 16
        %v7215 = vshll.u32 %v7211, 16
        %v7216 = vshrl.u32 %v7211, 16
        %vm7217 = vc.u32 %v7209, %v7213
        %v7218 = vsel %vm7217, 1, 0
        %v7219 = vadd.s32 %v7209, %v7213
        %v7220 = vadd.s32 %v7212, %v7218
        %vm7221 = vc.u32 %v7219, %v7215
        %v7222 = vsel %vm7221, 1, 0
        %v7223 = vadd.s32 %v7219, %v7215
        %v7224 = vadd.s32 %v7220, %v7222
        %v7225 = vadd.s32 %v7224, %v7214
        %v7226 = vadd.s32 %v7225, %v7216
        %v7227 = vand.u32 %v7204, 65535
        %v7228 = vshrl.u32 %v7204, 16
        %v7229 = vand.u32 %v7199, 65535
        %v7230 = vshrl.u32 %v7199, 16
        %v7231 = vmul.u32 %v7227, %v7229
        %v7232 = vmul.u32 %v7227, %v7230
        %v7233 = vmul.u32 %v7228, %v7229
        %v7234 = vmul.u32 %v7228, %v7230
        %v7235 = vshll.u32 %v7232, 16
        %v7236 = vshrl.u32 %v7232, 16
        %v7237 = vshll.u32 %v7233, 16
        %v7238 = vshrl.u32 %v7233, 16
        %vm7239 = vc.u32 %v7231, %v7235
        %v7240 = vsel %vm7239, 1, 0
        %v7241 = vadd.s32 %v7231, %v7235
        %v7242 = vadd.s32 %v7234, %v7240
        %vm7243 = vc.u32 %v7241, %v7237
        %v7244 = vsel %vm7243, 1, 0
        %v7245 = vadd.s32 %v7241, %v7237
        %v7246 = vadd.s32 %v7242, %v7244
        %v7247 = vadd.s32 %v7246, %v7236
        %v7248 = vadd.s32 %v7247, %v7238
        %v7249 = vmul.u32 %v7204, %v7195
        %v7250 = vadd.s32 %v7226, %v7245
        %vm7251 = vc.u32 %v7226, %v7245
        %v7252 = vadd.s32 %v7248, 1
        %v7253 = vsel %vm7251, %v7252, %v7248
        %v7254 = vadd.s32 %v7249, %v7253
        %v7255 = vadd.s32 %v7254, 536870912
        %v7256 = vshrl.u32 %v7255, 30
        %v7257 = vshll.u32 %v7256, 30
        %v7258 = vsub.s32 %v7254, %v7257
        %vm7259 = vcmp.lt.s32.totalorder %v7258, 0
        %v7260 = vsub.s32 0, %v7258
        %v7261 = vsel %vm7259, %v7260, %v7258
        %v7262 = vclz %v7261
        %v7263 = vsub.s32 %v7262, 2
        %vm7264 = vcmp.gt.s32.totalorder 0, %v7263
        %v7265 = vsel %vm7264, 0, %v7263
        %v7266 = vsub.s32 32, %v7265
        %v7267 = vshll.u32 %v7258, %v7265
        %v7268 = vshrl.u32 %v7250, %v7266
        %v7269 = vor.u32 %v7267, %v7268
        %v7270 = vsub.s32 4294967266, %v7265
        %v7271 = vadd.s32 %v7270, 127
        %v7272 = vshll.u32 %v7271, 23
        %v7273 = vor.u32 4788187, %v7272
        %v7274 = vand.u32 2147483647, %v7273
        %v7276 = vcvt.s32.f32 %v7269
        %v7277 = vmul.f32 %v7276, %v7274
        %v7278 = vxor.u32 %v7277, 2147483648
        %v7279 = vsel %vm7158, %v7278, %v7277
        %v7280 = vsub.s32 4, %v7256
        %v7281 = vsel %vm7158, %v7280, %v7256
        %v7282 = vsel %vm7157, %v5698, %v7279
        %v7283 = vsel %vm7157, 0, %v7281
        %v7284 = vmul.f32 %v7282, %v7282
        %v7285 = vmul.f32 %v7284, -0.001358992
        %v7286 = vadd.f32 %v7285, 0.041655596
        %v7287 = vmul.f32 %v7284, %v7286
        %v7288 = vadd.f32 %v7287, -0.4999988
        %v7289 = vmul.f32 %v7284, %v7288
        %v7290 = vadd.f32 1.0, %v7289
        %v7291 = vmul.f32 %v7282, %v7282
        %v7292 = vmul.f32 %v7291, -0.00019511016
        %v7293 = vadd.f32 %v7292, 0.008332121
        %v7294 = vmul.f32 %v7291, %v7293
        %v7295 = vadd.f32 %v7294, -0.16666654
        %v7296 = vmul.f32 %v7291, %v7295
        %v7297 = vadd.f32 %v7296, 1.0
        %v7298 = vmul.f32 %v7297, %v7282
        %vm7299 = vweird.f32 %v5698
        %v7300 = vadd.s32 %v7283, 3
        %v7301 = vand.u32 %v7300, 3
        %vm7302 = vcmp.lt.s32.totalorder %v7301, 2
        %vm7303 = vcmp.eq.s32.totalorder %v7301, 0
        %v7304 = vxor.u32 %v7298, 2147483648
        %v7305 = vsel %vm7303, %v7290, %v7304
        %vm7306 = vcmp.eq.s32.totalorder %v7301, 2
        %v7307 = vxor.u32 %v7290, 2147483648
        %v7308 = vsel %vm7306, %v7307, %v7298
        %v7309 = vsel %vm7302, %v7305, %v7308
        %v7310 = vsel %vm7299, nan, %v7309
        %v7311 = vand.u32 2147483647, %v5727
        %vm7312 = vcmp.le.f32.partialorder %v7311, 0.7853982
        %vm7313 = vcmp.lt.s32.totalorder %v5727, 0
        %v7314 = vand.u32 %v5727, 2139095040
        %v7315 = vshrl.u32 %v7314, 23
        %v7316 = vsub.s32 %v7315, 127
        %v7317 = vand.u32 2147483647, %v5727
        %v7318 = vand.u32 %v7317, 8388607
        %v7319 = vor.u32 %v7318, 8388608
        %v7320 = vsub.s32 0, %v7319
        %v7321 = vadd.s32 %v7316, 1
        %vm7322 = vcmp.gt.s32.totalorder %v7321, 0
        %v7323 = vsel %vm7322, %v7321, 0
        %v7324 = vshrl.u32 %v7323, 5
        %v7325 = vand.u32 %v7323, 31
        %v7326 = vsub.s32 32, %v7325
        %v7327 = vshrl.u32 683565275, %v7326
        %v7328 = vshll.u32 683565275, %v7325
        %v7329 = vshrl.u32 2475754826, %v7326
        %v7330 = vor.u32 %v7328, %v7329
        %v7331 = vshll.u32 2475754826, %v7325
        %v7332 = vshrl.u32 2131351028, %v7326
        %v7333 = vor.u32 %v7331, %v7332
        %v7334 = vshll.u32 2131351028, %v7325
        %v7335 = vshrl.u32 2102212464, %v7326
        %v7336 = vor.u32 %v7334, %v7335
        %v7337 = vshll.u32 2102212464, %v7325
        %v7338 = vshrl.u32 920167782, %v7326
        %v7339 = vor.u32 %v7337, %v7338
        %v7340 = vshll.u32 920167782, %v7325
        %v7341 = vshrl.u32 1326507024, %v7326
        %v7342 = vor.u32 %v7340, %v7341
        %vm7343 = vcmp.lt.s32.totalorder %v7324, 1
        %vm7344 = vcmp.lt.s32.totalorder %v7324, 2
        %vm7345 = vcmp.lt.s32.totalorder %v7324, 3
        %vm7346 = vcmp.lt.s32.totalorder %v7324, 4
        %v7347 = vsel %vm7343, %v7327, %v7330
        %v7348 = vsel %vm7346, %v7336, 2102212464
        %v7349 = vsel %vm7345, %v7333, %v7348
        %v7350 = vsel %vm7344, %v7347, %v7349
        %v7351 = vsel %vm7343, %v7330, %v7333
        %v7352 = vsel %vm7346, %v7339, 920167782
        %v7353 = vsel %vm7345, %v7336, %v7352
        %v7354 = vsel %vm7344, %v7351, %v7353
        %v7355 = vsel %vm7343, %v7333, %v7336
        %v7356 = vsel %vm7346, %v7342, 1326507024
        %v7357 = vsel %vm7345, %v7339, %v7356
        %v7358 = vsel %vm7344, %v7355, %v7357
        %v7359 = vshll.u32 %v7319, 8
        %v7360 = vand.u32 %v7359, 65535
        %v7361 = vshrl.u32 %v7359, 16
        %v7362 = vand.u32 %v7358, 65535
        %v7363 = vshrl.u32 %v7358, 16
        %v7364 = vmul.u32 %v7360, %v7362
        %v7365 = vmul.u32 %v7360, %v7363
        %v7366 = vmul.u32 %v7361, %v7362
        %v7367 = vmul.u32 %v7361, %v7363
        %v7368 = vshll.u32 %v7365, 16
        %v7369 = vshrl.u32 %v7365, 16
        %v7370 = vshll.u32 %v7366, 16
        %v7371 = vshrl.u32 %v7366, 16
        %vm7372 = vc.u32 %v7364, %v7368
        %v7373 = vsel %vm7372, 1, 0
        %v7374 = vadd.s32 %v7364, %v7368
        %v7375 = vadd.s32 %v7367, %v7373
        %vm7376 = vc.u32 %v7374, %v7370
        %v7377 = vsel %vm7376, 1, 0
        %v7378 = vadd.s32 %v7374, %v7370
        %v7379 = vadd.s32 %v7375, %v7377
        %v7380 = vadd.s32 %v7379, %v7369
        %v7381 = vadd.s32 %v7380, %v7371
        %v7382 = vand.u32 %v7359, 65535
        %v7383 = vshrl.u32 %v7359, 16
        %v7384 = vand.u32 %v7354, 65535
        %v7385 = vshrl.u32 %v7354, 16
        %v7386 = vmul.u32 %v7382, %v7384
        %v7387 = vmul.u32 %v7382, %v7385
        %v7388 = vmul.u32 %v7383, %v7384
        %v7389 = vmul.u32 %v7383, %v7385
        %v7390 = vshll.u32 %v7387, 16
        %v7391 = vshrl.u32 %v7387, 16
        %v7392 = vshll.u32 %v7388, 16
        %v7393 = vshrl.u32 %v7388, 16
        %vm7394 = vc.u32 %v7386, %v7390
        %v7395 = vsel %vm7394, 1, 0
        %v7396 = vadd.s32 %v7386, %v7390
        %v7397 = vadd.s32 %v7389, %v7395
        %vm7398 = vc.u32 %v7396, %v7392
        %v7399 = vsel %vm7398, 1, 0
        %v7400 = vadd.s32 %v7396, %v7392
        %v7401 = vadd.s32 %v7397, %v7399
        %v7402 = vadd.s32 %v7401, %v7391
        %v7403 = vadd.s32 %v7402, %v7393
        %v7404 = vmul.u32 %v7359, %v7350
        %v7405 = vadd.s32 %v7381, %v7400
        %vm7406 = vc.u32 %v7381, %v7400
        %v7407 = vadd.s32 %v7403, 1
        %v7408 = vsel %vm7406, %v7407, %v7403
        %v7409 = vadd.s32 %v7404, %v7408
        %v7410 = vadd.s32 %v7409, 536870912
        %v7411 = vshrl.u32 %v7410, 30
        %v7412 = vshll.u32 %v7411, 30
        %v7413 = vsub.s32 %v7409, %v7412
        %vm7414 = vcmp.lt.s32.totalorder %v7413, 0
        %v7415 = vsub.s32 0, %v7413
        %v7416 = vsel %vm7414, %v7415, %v7413
        %v7417 = vclz %v7416
        %v7418 = vsub.s32 %v7417, 2
        %vm7419 = vcmp.gt.s32.totalorder 0, %v7418
        %v7420 = vsel %vm7419, 0, %v7418
        %v7421 = vsub.s32 32, %v7420
        %v7422 = vshll.u32 %v7413, %v7420
        %v7423 = vshrl.u32 %v7405, %v7421
        %v7424 = vor.u32 %v7422, %v7423
        %v7425 = vsub.s32 4294967266, %v7420
        %v7426 = vadd.s32 %v7425, 127
        %v7427 = vshll.u32 %v7426, 23
        %v7428 = vor.u32 4788187, %v7427
        %v7429 = vand.u32 2147483647, %v7428
        %v7431 = vcvt.s32.f32 %v7424
        %v7432 = vmul.f32 %v7431, %v7429
        %v7433 = vxor.u32 %v7432, 2147483648
        %v7434 = vsel %vm7313, %v7433, %v7432
        %v7435 = vsub.s32 4, %v7411
        %v7436 = vsel %vm7313, %v7435, %v7411
        %v7437 = vsel %vm7312, %v5727, %v7434
        %v7438 = vsel %vm7312, 0, %v7436
        %v7439 = vmul.f32 %v7437, %v7437
        %v7440 = vmul.f32 %v7439, -0.001358992
        %v7441 = vadd.f32 %v7440, 0.041655596
        %v7442 = vmul.f32 %v7439, %v7441
        %v7443 = vadd.f32 %v7442, -0.4999988
        %v7444 = vmul.f32 %v7439, %v7443
        %v7445 = vadd.f32 1.0, %v7444
        %v7446 = vmul.f32 %v7437, %v7437
        %v7447 = vmul.f32 %v7446, -0.00019511016
        %v7448 = vadd.f32 %v7447, 0.008332121
        %v7449 = vmul.f32 %v7446, %v7448
        %v7450 = vadd.f32 %v7449, -0.16666654
        %v7451 = vmul.f32 %v7446, %v7450
        %v7452 = vadd.f32 %v7451, 1.0
        %v7453 = vmul.f32 %v7452, %v7437
        %vm7454 = vweird.f32 %v5727
        %v7455 = vadd.s32 %v7438, 3
        %v7456 = vand.u32 %v7455, 3
        %vm7457 = vcmp.lt.s32.totalorder %v7456, 2
        %vm7458 = vcmp.eq.s32.totalorder %v7456, 0
        %v7459 = vxor.u32 %v7453, 2147483648
        %v7460 = vsel %vm7458, %v7445, %v7459
        %vm7461 = vcmp.eq.s32.totalorder %v7456, 2
        %v7462 = vxor.u32 %v7445, 2147483648
        %v7463 = vsel %vm7461, %v7462, %v7453
        %v7464 = vsel %vm7457, %v7460, %v7463
        %v7465 = vsel %vm7454, nan, %v7464
        %v7466 = vand.u32 2147483647, %v5756
        %vm7467 = vcmp.le.f32.partialorder %v7466, 0.7853982
        %vm7468 = vcmp.lt.s32.totalorder %v5756, 0
        %v7469 = vand.u32 %v5756, 2139095040
        %v7470 = vshrl.u32 %v7469, 23
        %v7471 = vsub.s32 %v7470, 127
        %v7472 = vand.u32 2147483647, %v5756
        %v7473 = vand.u32 %v7472, 8388607
        %v7474 = vor.u32 %v7473, 8388608
        %v7475 = vsub.s32 0, %v7474
        %v7476 = vadd.s32 %v7471, 1
        %vm7477 = vcmp.gt.s32.totalorder %v7476, 0
        %v7478 = vsel %vm7477, %v7476, 0
        %v7479 = vshrl.u32 %v7478, 5
        %v7480 = vand.u32 %v7478, 31
        %v7481 = vsub.s32 32, %v7480
        %v7482 = vshrl.u32 683565275, %v7481
        %v7483 = vshll.u32 683565275, %v7480
        %v7484 = vshrl.u32 2475754826, %v7481
        %v7485 = vor.u32 %v7483, %v7484
        %v7486 = vshll.u32 2475754826, %v7480
        %v7487 = vshrl.u32 2131351028, %v7481
        %v7488 = vor.u32 %v7486, %v7487
        %v7489 = vshll.u32 2131351028, %v7480
        %v7490 = vshrl.u32 2102212464, %v7481
        %v7491 = vor.u32 %v7489, %v7490
        %v7492 = vshll.u32 2102212464, %v7480
        %v7493 = vshrl.u32 920167782, %v7481
        %v7494 = vor.u32 %v7492, %v7493
        %v7495 = vshll.u32 920167782, %v7480
        %v7496 = vshrl.u32 1326507024, %v7481
        %v7497 = vor.u32 %v7495, %v7496
        %vm7498 = vcmp.lt.s32.totalorder %v7479, 1
        %vm7499 = vcmp.lt.s32.totalorder %v7479, 2
        %vm7500 = vcmp.lt.s32.totalorder %v7479, 3
        %vm7501 = vcmp.lt.s32.totalorder %v7479, 4
        %v7502 = vsel %vm7498, %v7482, %v7485
        %v7503 = vsel %vm7501, %v7491, 2102212464
        %v7504 = vsel %vm7500, %v7488, %v7503
        %v7505 = vsel %vm7499, %v7502, %v7504
        %v7506 = vsel %vm7498, %v7485, %v7488
        %v7507 = vsel %vm7501, %v7494, 920167782
        %v7508 = vsel %vm7500, %v7491, %v7507
        %v7509 = vsel %vm7499, %v7506, %v7508
        %v7510 = vsel %vm7498, %v7488, %v7491
        %v7511 = vsel %vm7501, %v7497, 1326507024
        %v7512 = vsel %vm7500, %v7494, %v7511
        %v7513 = vsel %vm7499, %v7510, %v7512
        %v7514 = vshll.u32 %v7474, 8
        %v7515 = vand.u32 %v7514, 65535
        %v7516 = vshrl.u32 %v7514, 16
        %v7517 = vand.u32 %v7513, 65535
        %v7518 = vshrl.u32 %v7513, 16
        %v7519 = vmul.u32 %v7515, %v7517
        %v7520 = vmul.u32 %v7515, %v7518
        %v7521 = vmul.u32 %v7516, %v7517
        %v7522 = vmul.u32 %v7516, %v7518
        %v7523 = vshll.u32 %v7520, 16
        %v7524 = vshrl.u32 %v7520, 16
        %v7525 = vshll.u32 %v7521, 16
        %v7526 = vshrl.u32 %v7521, 16
        %vm7527 = vc.u32 %v7519, %v7523
        %v7528 = vsel %vm7527, 1, 0
        %v7529 = vadd.s32 %v7519, %v7523
        %v7530 = vadd.s32 %v7522, %v7528
        %vm7531 = vc.u32 %v7529, %v7525
        %v7532 = vsel %vm7531, 1, 0
        %v7533 = vadd.s32 %v7529, %v7525
        %v7534 = vadd.s32 %v7530, %v7532
        %v7535 = vadd.s32 %v7534, %v7524
        %v7536 = vadd.s32 %v7535, %v7526
        %v7537 = vand.u32 %v7514, 65535
        %v7538 = vshrl.u32 %v7514, 16
        %v7539 = vand.u32 %v7509, 65535
        %v7540 = vshrl.u32 %v7509, 16
        %v7541 = vmul.u32 %v7537, %v7539
        %v7542 = vmul.u32 %v7537, %v7540
        %v7543 = vmul.u32 %v7538, %v7539
        %v7544 = vmul.u32 %v7538, %v7540
        %v7545 = vshll.u32 %v7542, 16
        %v7546 = vshrl.u32 %v7542, 16
        %v7547 = vshll.u32 %v7543, 16
        %v7548 = vshrl.u32 %v7543, 16
        %vm7549 = vc.u32 %v7541, %v7545
        %v7550 = vsel %vm7549, 1, 0
        %v7551 = vadd.s32 %v7541, %v7545
        %v7552 = vadd.s32 %v7544, %v7550
        %vm7553 = vc.u32 %v7551, %v7547
        %v7554 = vsel %vm7553, 1, 0
        %v7555 = vadd.s32 %v7551, %v7547
        %v7556 = vadd.s32 %v7552, %v7554
        %v7557 = vadd.s32 %v7556, %v7546
        %v7558 = vadd.s32 %v7557, %v7548
        %v7559 = vmul.u32 %v7514, %v7505
        %v7560 = vadd.s32 %v7536, %v7555
        %vm7561 = vc.u32 %v7536, %v7555
        %v7562 = vadd.s32 %v7558, 1
        %v7563 = vsel %vm7561, %v7562, %v7558
        %v7564 = vadd.s32 %v7559, %v7563
        %v7565 = vadd.s32 %v7564, 536870912
        %v7566 = vshrl.u32 %v7565, 30
        %v7567 = vshll.u32 %v7566, 30
        %v7568 = vsub.s32 %v7564, %v7567
        %vm7569 = vcmp.lt.s32.totalorder %v7568, 0
        %v7570 = vsub.s32 0, %v7568
        %v7571 = vsel %vm7569, %v7570, %v7568
        %v7572 = vclz %v7571
        %v7573 = vsub.s32 %v7572, 2
        %vm7574 = vcmp.gt.s32.totalorder 0, %v7573
        %v7575 = vsel %vm7574, 0, %v7573
        %v7576 = vsub.s32 32, %v7575
        %v7577 = vshll.u32 %v7568, %v7575
        %v7578 = vshrl.u32 %v7560, %v7576
        %v7579 = vor.u32 %v7577, %v7578
        %v7580 = vsub.s32 4294967266, %v7575
        %v7581 = vadd.s32 %v7580, 127
        %v7582 = vshll.u32 %v7581, 23
        %v7583 = vor.u32 4788187, %v7582
        %v7584 = vand.u32 2147483647, %v7583
        %v7586 = vcvt.s32.f32 %v7579
        %v7587 = vmul.f32 %v7586, %v7584
        %v7588 = vxor.u32 %v7587, 2147483648
        %v7589 = vsel %vm7468, %v7588, %v7587
        %v7590 = vsub.s32 4, %v7566
        %v7591 = vsel %vm7468, %v7590, %v7566
        %v7592 = vsel %vm7467, %v5756, %v7589
        %v7593 = vsel %vm7467, 0, %v7591
        %v7594 = vmul.f32 %v7592, %v7592
        %v7595 = vmul.f32 %v7594, -0.001358992
        %v7596 = vadd.f32 %v7595, 0.041655596
        %v7597 = vmul.f32 %v7594, %v7596
        %v7598 = vadd.f32 %v7597, -0.4999988
        %v7599 = vmul.f32 %v7594, %v7598
        %v7600 = vadd.f32 1.0, %v7599
        %v7601 = vmul.f32 %v7592, %v7592
        %v7602 = vmul.f32 %v7601, -0.00019511016
        %v7603 = vadd.f32 %v7602, 0.008332121
        %v7604 = vmul.f32 %v7601, %v7603
        %v7605 = vadd.f32 %v7604, -0.16666654
        %v7606 = vmul.f32 %v7601, %v7605
        %v7607 = vadd.f32 %v7606, 1.0
        %v7608 = vmul.f32 %v7607, %v7592
        %vm7609 = vweird.f32 %v5756
        %v7610 = vadd.s32 %v7593, 3
        %v7611 = vand.u32 %v7610, 3
        %vm7612 = vcmp.lt.s32.totalorder %v7611, 2
        %vm7613 = vcmp.eq.s32.totalorder %v7611, 0
        %v7614 = vxor.u32 %v7608, 2147483648
        %v7615 = vsel %vm7613, %v7600, %v7614
        %vm7616 = vcmp.eq.s32.totalorder %v7611, 2
        %v7617 = vxor.u32 %v7600, 2147483648
        %v7618 = vsel %vm7616, %v7617, %v7608
        %v7619 = vsel %vm7612, %v7615, %v7618
        %v7620 = vsel %vm7609, nan, %v7619
        %v7621 = vand.u32 2147483647, %v5672
        %vm7622 = vcmp.le.f32.partialorder %v7621, 0.7853982
        %vm7623 = vcmp.lt.s32.totalorder %v5672, 0
        %v7624 = vand.u32 %v5672, 2139095040
        %v7625 = vshrl.u32 %v7624, 23
        %v7626 = vsub.s32 %v7625, 127
        %v7627 = vand.u32 2147483647, %v5672
        %v7628 = vand.u32 %v7627, 8388607
        %v7629 = vor.u32 %v7628, 8388608
        %v7630 = vsub.s32 0, %v7629
        %v7631 = vadd.s32 %v7626, 1
        %vm7632 = vcmp.gt.s32.totalorder %v7631, 0
        %v7633 = vsel %vm7632, %v7631, 0
        %v7634 = vshrl.u32 %v7633, 5
        %v7635 = vand.u32 %v7633, 31
        %v7636 = vsub.s32 32, %v7635
        %v7637 = vshrl.u32 683565275, %v7636
        %v7638 = vshll.u32 683565275, %v7635
        %v7639 = vshrl.u32 2475754826, %v7636
        %v7640 = vor.u32 %v7638, %v7639
        %v7641 = vshll.u32 2475754826, %v7635
        %v7642 = vshrl.u32 2131351028, %v7636
        %v7643 = vor.u32 %v7641, %v7642
        %v7644 = vshll.u32 2131351028, %v7635
        %v7645 = vshrl.u32 2102212464, %v7636
        %v7646 = vor.u32 %v7644, %v7645
        %v7647 = vshll.u32 2102212464, %v7635
        %v7648 = vshrl.u32 920167782, %v7636
        %v7649 = vor.u32 %v7647, %v7648
        %v7650 = vshll.u32 920167782, %v7635
        %v7651 = vshrl.u32 1326507024, %v7636
        %v7652 = vor.u32 %v7650, %v7651
        %vm7653 = vcmp.lt.s32.totalorder %v7634, 1
        %vm7654 = vcmp.lt.s32.totalorder %v7634, 2
        %vm7655 = vcmp.lt.s32.totalorder %v7634, 3
        %vm7656 = vcmp.lt.s32.totalorder %v7634, 4
        %v7657 = vsel %vm7653, %v7637, %v7640
        %v7658 = vsel %vm7656, %v7646, 2102212464
        %v7659 = vsel %vm7655, %v7643, %v7658
        %v7660 = vsel %vm7654, %v7657, %v7659
        %v7661 = vsel %vm7653, %v7640, %v7643
        %v7662 = vsel %vm7656, %v7649, 920167782
        %v7663 = vsel %vm7655, %v7646, %v7662
        %v7664 = vsel %vm7654, %v7661, %v7663
        %v7665 = vsel %vm7653, %v7643, %v7646
        %v7666 = vsel %vm7656, %v7652, 1326507024
        %v7667 = vsel %vm7655, %v7649, %v7666
        %v7668 = vsel %vm7654, %v7665, %v7667
        %v7669 = vshll.u32 %v7629, 8
        %v7670 = vand.u32 %v7669, 65535
        %v7671 = vshrl.u32 %v7669, 16
        %v7672 = vand.u32 %v7668, 65535
        %v7673 = vshrl.u32 %v7668, 16
        %v7674 = vmul.u32 %v7670, %v7672
        %v7675 = vmul.u32 %v7670, %v7673
        %v7676 = vmul.u32 %v7671, %v7672
        %v7677 = vmul.u32 %v7671, %v7673
        %v7678 = vshll.u32 %v7675, 16
        %v7679 = vshrl.u32 %v7675, 16
        %v7680 = vshll.u32 %v7676, 16
        %v7681 = vshrl.u32 %v7676, 16
        %vm7682 = vc.u32 %v7674, %v7678
        %v7683 = vsel %vm7682, 1, 0
        %v7684 = vadd.s32 %v7674, %v7678
        %v7685 = vadd.s32 %v7677, %v7683
        %vm7686 = vc.u32 %v7684, %v7680
        %v7687 = vsel %vm7686, 1, 0
        %v7688 = vadd.s32 %v7684, %v7680
        %v7689 = vadd.s32 %v7685, %v7687
        %v7690 = vadd.s32 %v7689, %v7679
        %v7691 = vadd.s32 %v7690, %v7681
        %v7692 = vand.u32 %v7669, 65535
        %v7693 = vshrl.u32 %v7669, 16
        %v7694 = vand.u32 %v7664, 65535
        %v7695 = vshrl.u32 %v7664, 16
        %v7696 = vmul.u32 %v7692, %v7694
        %v7697 = vmul.u32 %v7692, %v7695
        %v7698 = vmul.u32 %v7693, %v7694
        %v7699 = vmul.u32 %v7693, %v7695
        %v7700 = vshll.u32 %v7697, 16
        %v7701 = vshrl.u32 %v7697, 16
        %v7702 = vshll.u32 %v7698, 16
        %v7703 = vshrl.u32 %v7698, 16
        %vm7704 = vc.u32 %v7696, %v7700
        %v7705 = vsel %vm7704, 1, 0
        %v7706 = vadd.s32 %v7696, %v7700
        %v7707 = vadd.s32 %v7699, %v7705
        %vm7708 = vc.u32 %v7706, %v7702
        %v7709 = vsel %vm7708, 1, 0
        %v7710 = vadd.s32 %v7706, %v7702
        %v7711 = vadd.s32 %v7707, %v7709
        %v7712 = vadd.s32 %v7711, %v7701
        %v7713 = vadd.s32 %v7712, %v7703
        %v7714 = vmul.u32 %v7669, %v7660
        %v7715 = vadd.s32 %v7691, %v7710
        %vm7716 = vc.u32 %v7691, %v7710
        %v7717 = vadd.s32 %v7713, 1
        %v7718 = vsel %vm7716, %v7717, %v7713
        %v7719 = vadd.s32 %v7714, %v7718
        %v7720 = vadd.s32 %v7719, 536870912
        %v7721 = vshrl.u32 %v7720, 30
        %v7722 = vshll.u32 %v7721, 30
        %v7723 = vsub.s32 %v7719, %v7722
        %vm7724 = vcmp.lt.s32.totalorder %v7723, 0
        %v7725 = vsub.s32 0, %v7723
        %v7726 = vsel %vm7724, %v7725, %v7723
        %v7727 = vclz %v7726
        %v7728 = vsub.s32 %v7727, 2
        %vm7729 = vcmp.gt.s32.totalorder 0, %v7728
        %v7730 = vsel %vm7729, 0, %v7728
        %v7731 = vsub.s32 32, %v7730
        %v7732 = vshll.u32 %v7723, %v7730
        %v7733 = vshrl.u32 %v7715, %v7731
        %v7734 = vor.u32 %v7732, %v7733
        %v7735 = vsub.s32 4294967266, %v7730
        %v7736 = vadd.s32 %v7735, 127
        %v7737 = vshll.u32 %v7736, 23
        %v7738 = vor.u32 4788187, %v7737
        %v7739 = vand.u32 2147483647, %v7738
        %v7741 = vcvt.s32.f32 %v7734
        %v7742 = vmul.f32 %v7741, %v7739
        %v7743 = vxor.u32 %v7742, 2147483648
        %v7744 = vsel %vm7623, %v7743, %v7742
        %v7745 = vsub.s32 4, %v7721
        %v7746 = vsel %vm7623, %v7745, %v7721
        %v7747 = vsel %vm7622, %v5672, %v7744
        %v7748 = vsel %vm7622, 0, %v7746
        %v7749 = vmul.f32 %v7747, %v7747
        %v7750 = vmul.f32 %v7749, -0.001358992
        %v7751 = vadd.f32 %v7750, 0.041655596
        %v7752 = vmul.f32 %v7749, %v7751
        %v7753 = vadd.f32 %v7752, -0.4999988
        %v7754 = vmul.f32 %v7749, %v7753
        %v7755 = vadd.f32 1.0, %v7754
        %v7756 = vmul.f32 %v7747, %v7747
        %v7757 = vmul.f32 %v7756, -0.00019511016
        %v7758 = vadd.f32 %v7757, 0.008332121
        %v7759 = vmul.f32 %v7756, %v7758
        %v7760 = vadd.f32 %v7759, -0.16666654
        %v7761 = vmul.f32 %v7756, %v7760
        %v7762 = vadd.f32 %v7761, 1.0
        %v7763 = vmul.f32 %v7762, %v7747
        %vm7764 = vweird.f32 %v5672
        %v7765 = vadd.s32 %v7748, 3
        %v7766 = vand.u32 %v7765, 3
        %vm7767 = vcmp.lt.s32.totalorder %v7766, 2
        %vm7768 = vcmp.eq.s32.totalorder %v7766, 0
        %v7769 = vxor.u32 %v7763, 2147483648
        %v7770 = vsel %vm7768, %v7755, %v7769
        %vm7771 = vcmp.eq.s32.totalorder %v7766, 2
        %v7772 = vxor.u32 %v7755, 2147483648
        %v7773 = vsel %vm7771, %v7772, %v7763
        %v7774 = vsel %vm7767, %v7770, %v7773
        %v7775 = vsel %vm7764, nan, %v7774
        %v7776 = vand.u32 2147483647, %v5701
        %vm7777 = vcmp.le.f32.partialorder %v7776, 0.7853982
        %vm7778 = vcmp.lt.s32.totalorder %v5701, 0
        %v7779 = vand.u32 %v5701, 2139095040
        %v7780 = vshrl.u32 %v7779, 23
        %v7781 = vsub.s32 %v7780, 127
        %v7782 = vand.u32 2147483647, %v5701
        %v7783 = vand.u32 %v7782, 8388607
        %v7784 = vor.u32 %v7783, 8388608
        %v7785 = vsub.s32 0, %v7784
        %v7786 = vadd.s32 %v7781, 1
        %vm7787 = vcmp.gt.s32.totalorder %v7786, 0
        %v7788 = vsel %vm7787, %v7786, 0
        %v7789 = vshrl.u32 %v7788, 5
        %v7790 = vand.u32 %v7788, 31
        %v7791 = vsub.s32 32, %v7790
        %v7792 = vshrl.u32 683565275, %v7791
        %v7793 = vshll.u32 683565275, %v7790
        %v7794 = vshrl.u32 2475754826, %v7791
        %v7795 = vor.u32 %v7793, %v7794
        %v7796 = vshll.u32 2475754826, %v7790
        %v7797 = vshrl.u32 2131351028, %v7791
        %v7798 = vor.u32 %v7796, %v7797
        %v7799 = vshll.u32 2131351028, %v7790
        %v7800 = vshrl.u32 2102212464, %v7791
        %v7801 = vor.u32 %v7799, %v7800
        %v7802 = vshll.u32 2102212464, %v7790
        %v7803 = vshrl.u32 920167782, %v7791
        %v7804 = vor.u32 %v7802, %v7803
        %v7805 = vshll.u32 920167782, %v7790
        %v7806 = vshrl.u32 1326507024, %v7791
        %v7807 = vor.u32 %v7805, %v7806
        %vm7808 = vcmp.lt.s32.totalorder %v7789, 1
        %vm7809 = vcmp.lt.s32.totalorder %v7789, 2
        %vm7810 = vcmp.lt.s32.totalorder %v7789, 3
        %vm7811 = vcmp.lt.s32.totalorder %v7789, 4
        %v7812 = vsel %vm7808, %v7792, %v7795
        %v7813 = vsel %vm7811, %v7801, 2102212464
        %v7814 = vsel %vm7810, %v7798, %v7813
        %v7815 = vsel %vm7809, %v7812, %v7814
        %v7816 = vsel %vm7808, %v7795, %v7798
        %v7817 = vsel %vm7811, %v7804, 920167782
        %v7818 = vsel %vm7810, %v7801, %v7817
        %v7819 = vsel %vm7809, %v7816, %v7818
        %v7820 = vsel %vm7808, %v7798, %v7801
        %v7821 = vsel %vm7811, %v7807, 1326507024
        %v7822 = vsel %vm7810, %v7804, %v7821
        %v7823 = vsel %vm7809, %v7820, %v7822
        %v7824 = vshll.u32 %v7784, 8
        %v7825 = vand.u32 %v7824, 65535
        %v7826 = vshrl.u32 %v7824, 16
        %v7827 = vand.u32 %v7823, 65535
        %v7828 = vshrl.u32 %v7823, 16
        %v7829 = vmul.u32 %v7825, %v7827
        %v7830 = vmul.u32 %v7825, %v7828
        %v7831 = vmul.u32 %v7826, %v7827
        %v7832 = vmul.u32 %v7826, %v7828
        %v7833 = vshll.u32 %v7830, 16
        %v7834 = vshrl.u32 %v7830, 16
        %v7835 = vshll.u32 %v7831, 16
        %v7836 = vshrl.u32 %v7831, 16
        %vm7837 = vc.u32 %v7829, %v7833
        %v7838 = vsel %vm7837, 1, 0
        %v7839 = vadd.s32 %v7829, %v7833
        %v7840 = vadd.s32 %v7832, %v7838
        %vm7841 = vc.u32 %v7839, %v7835
        %v7842 = vsel %vm7841, 1, 0
        %v7843 = vadd.s32 %v7839, %v7835
        %v7844 = vadd.s32 %v7840, %v7842
        %v7845 = vadd.s32 %v7844, %v7834
        %v7846 = vadd.s32 %v7845, %v7836
        %v7847 = vand.u32 %v7824, 65535
        %v7848 = vshrl.u32 %v7824, 16
        %v7849 = vand.u32 %v7819, 65535
        %v7850 = vshrl.u32 %v7819, 16
        %v7851 = vmul.u32 %v7847, %v7849
        %v7852 = vmul.u32 %v7847, %v7850
        %v7853 = vmul.u32 %v7848, %v7849
        %v7854 = vmul.u32 %v7848, %v7850
        %v7855 = vshll.u32 %v7852, 16
        %v7856 = vshrl.u32 %v7852, 16
        %v7857 = vshll.u32 %v7853, 16
        %v7858 = vshrl.u32 %v7853, 16
        %vm7859 = vc.u32 %v7851, %v7855
        %v7860 = vsel %vm7859, 1, 0
        %v7861 = vadd.s32 %v7851, %v7855
        %v7862 = vadd.s32 %v7854, %v7860
        %vm7863 = vc.u32 %v7861, %v7857
        %v7864 = vsel %vm7863, 1, 0
        %v7865 = vadd.s32 %v7861, %v7857
        %v7866 = vadd.s32 %v7862, %v7864
        %v7867 = vadd.s32 %v7866, %v7856
        %v7868 = vadd.s32 %v7867, %v7858
        %v7869 = vmul.u32 %v7824, %v7815
        %v7870 = vadd.s32 %v7846, %v7865
        %vm7871 = vc.u32 %v7846, %v7865
        %v7872 = vadd.s32 %v7868, 1
        %v7873 = vsel %vm7871, %v7872, %v7868
        %v7874 = vadd.s32 %v7869, %v7873
        %v7875 = vadd.s32 %v7874, 536870912
        %v7876 = vshrl.u32 %v7875, 30
        %v7877 = vshll.u32 %v7876, 30
        %v7878 = vsub.s32 %v7874, %v7877
        %vm7879 = vcmp.lt.s32.totalorder %v7878, 0
        %v7880 = vsub.s32 0, %v7878
        %v7881 = vsel %vm7879, %v7880, %v7878
        %v7882 = vclz %v7881
        %v7883 = vsub.s32 %v7882, 2
        %vm7884 = vcmp.gt.s32.totalorder 0, %v7883
        %v7885 = vsel %vm7884, 0, %v7883
        %v7886 = vsub.s32 32, %v7885
        %v7887 = vshll.u32 %v7878, %v7885
        %v7888 = vshrl.u32 %v7870, %v7886
        %v7889 = vor.u32 %v7887, %v7888
        %v7890 = vsub.s32 4294967266, %v7885
        %v7891 = vadd.s32 %v7890, 127
        %v7892 = vshll.u32 %v7891, 23
        %v7893 = vor.u32 4788187, %v7892
        %v7894 = vand.u32 2147483647, %v7893
        %v7896 = vcvt.s32.f32 %v7889
        %v7897 = vmul.f32 %v7896, %v7894
        %v7898 = vxor.u32 %v7897, 2147483648
        %v7899 = vsel %vm7778, %v7898, %v7897
        %v7900 = vsub.s32 4, %v7876
        %v7901 = vsel %vm7778, %v7900, %v7876
        %v7902 = vsel %vm7777, %v5701, %v7899
        %v7903 = vsel %vm7777, 0, %v7901
        %v7904 = vmul.f32 %v7902, %v7902
        %v7905 = vmul.f32 %v7904, -0.001358992
        %v7906 = vadd.f32 %v7905, 0.041655596
        %v7907 = vmul.f32 %v7904, %v7906
        %v7908 = vadd.f32 %v7907, -0.4999988
        %v7909 = vmul.f32 %v7904, %v7908
        %v7910 = vadd.f32 1.0, %v7909
        %v7911 = vmul.f32 %v7902, %v7902
        %v7912 = vmul.f32 %v7911, -0.00019511016
        %v7913 = vadd.f32 %v7912, 0.008332121
        %v7914 = vmul.f32 %v7911, %v7913
        %v7915 = vadd.f32 %v7914, -0.16666654
        %v7916 = vmul.f32 %v7911, %v7915
        %v7917 = vadd.f32 %v7916, 1.0
        %v7918 = vmul.f32 %v7917, %v7902
        %vm7919 = vweird.f32 %v5701
        %v7920 = vadd.s32 %v7903, 3
        %v7921 = vand.u32 %v7920, 3
        %vm7922 = vcmp.lt.s32.totalorder %v7921, 2
        %vm7923 = vcmp.eq.s32.totalorder %v7921, 0
        %v7924 = vxor.u32 %v7918, 2147483648
        %v7925 = vsel %vm7923, %v7910, %v7924
        %vm7926 = vcmp.eq.s32.totalorder %v7921, 2
        %v7927 = vxor.u32 %v7910, 2147483648
        %v7928 = vsel %vm7926, %v7927, %v7918
        %v7929 = vsel %vm7922, %v7925, %v7928
        %v7930 = vsel %vm7919, nan, %v7929
        %v7931 = vand.u32 2147483647, %v5730
        %vm7932 = vcmp.le.f32.partialorder %v7931, 0.7853982
        %vm7933 = vcmp.lt.s32.totalorder %v5730, 0
        %v7934 = vand.u32 %v5730, 2139095040
        %v7935 = vshrl.u32 %v7934, 23
        %v7936 = vsub.s32 %v7935, 127
        %v7937 = vand.u32 2147483647, %v5730
        %v7938 = vand.u32 %v7937, 8388607
        %v7939 = vor.u32 %v7938, 8388608
        %v7940 = vsub.s32 0, %v7939
        %v7941 = vadd.s32 %v7936, 1
        %vm7942 = vcmp.gt.s32.totalorder %v7941, 0
        %v7943 = vsel %vm7942, %v7941, 0
        %v7944 = vshrl.u32 %v7943, 5
        %v7945 = vand.u32 %v7943, 31
        %v7946 = vsub.s32 32, %v7945
        %v7947 = vshrl.u32 683565275, %v7946
        %v7948 = vshll.u32 683565275, %v7945
        %v7949 = vshrl.u32 2475754826, %v7946
        %v7950 = vor.u32 %v7948, %v7949
        %v7951 = vshll.u32 2475754826, %v7945
        %v7952 = vshrl.u32 2131351028, %v7946
        %v7953 = vor.u32 %v7951, %v7952
        %v7954 = vshll.u32 2131351028, %v7945
        %v7955 = vshrl.u32 2102212464, %v7946
        %v7956 = vor.u32 %v7954, %v7955
        %v7957 = vshll.u32 2102212464, %v7945
        %v7958 = vshrl.u32 920167782, %v7946
        %v7959 = vor.u32 %v7957, %v7958
        %v7960 = vshll.u32 920167782, %v7945
        %v7961 = vshrl.u32 1326507024, %v7946
        %v7962 = vor.u32 %v7960, %v7961
        %vm7963 = vcmp.lt.s32.totalorder %v7944, 1
        %vm7964 = vcmp.lt.s32.totalorder %v7944, 2
        %vm7965 = vcmp.lt.s32.totalorder %v7944, 3
        %vm7966 = vcmp.lt.s32.totalorder %v7944, 4
        %v7967 = vsel %vm7963, %v7947, %v7950
        %v7968 = vsel %vm7966, %v7956, 2102212464
        %v7969 = vsel %vm7965, %v7953, %v7968
        %v7970 = vsel %vm7964, %v7967, %v7969
        %v7971 = vsel %vm7963, %v7950, %v7953
        %v7972 = vsel %vm7966, %v7959, 920167782
        %v7973 = vsel %vm7965, %v7956, %v7972
        %v7974 = vsel %vm7964, %v7971, %v7973
        %v7975 = vsel %vm7963, %v7953, %v7956
        %v7976 = vsel %vm7966, %v7962, 1326507024
        %v7977 = vsel %vm7965, %v7959, %v7976
        %v7978 = vsel %vm7964, %v7975, %v7977
        %v7979 = vshll.u32 %v7939, 8
        %v7980 = vand.u32 %v7979, 65535
        %v7981 = vshrl.u32 %v7979, 16
        %v7982 = vand.u32 %v7978, 65535
        %v7983 = vshrl.u32 %v7978, 16
        %v7984 = vmul.u32 %v7980, %v7982
        %v7985 = vmul.u32 %v7980, %v7983
        %v7986 = vmul.u32 %v7981, %v7982
        %v7987 = vmul.u32 %v7981, %v7983
        %v7988 = vshll.u32 %v7985, 16
        %v7989 = vshrl.u32 %v7985, 16
        %v7990 = vshll.u32 %v7986, 16
        %v7991 = vshrl.u32 %v7986, 16
        %vm7992 = vc.u32 %v7984, %v7988
        %v7993 = vsel %vm7992, 1, 0
        %v7994 = vadd.s32 %v7984, %v7988
        %v7995 = vadd.s32 %v7987, %v7993
        %vm7996 = vc.u32 %v7994, %v7990
        %v7997 = vsel %vm7996, 1, 0
        %v7998 = vadd.s32 %v7994, %v7990
        %v7999 = vadd.s32 %v7995, %v7997
        %v8000 = vadd.s32 %v7999, %v7989
        %v8001 = vadd.s32 %v8000, %v7991
        %v8002 = vand.u32 %v7979, 65535
        %v8003 = vshrl.u32 %v7979, 16
        %v8004 = vand.u32 %v7974, 65535
        %v8005 = vshrl.u32 %v7974, 16
        %v8006 = vmul.u32 %v8002, %v8004
        %v8007 = vmul.u32 %v8002, %v8005
        %v8008 = vmul.u32 %v8003, %v8004
        %v8009 = vmul.u32 %v8003, %v8005
        %v8010 = vshll.u32 %v8007, 16
        %v8011 = vshrl.u32 %v8007, 16
        %v8012 = vshll.u32 %v8008, 16
        %v8013 = vshrl.u32 %v8008, 16
        %vm8014 = vc.u32 %v8006, %v8010
        %v8015 = vsel %vm8014, 1, 0
        %v8016 = vadd.s32 %v8006, %v8010
        %v8017 = vadd.s32 %v8009, %v8015
        %vm8018 = vc.u32 %v8016, %v8012
        %v8019 = vsel %vm8018, 1, 0
        %v8020 = vadd.s32 %v8016, %v8012
        %v8021 = vadd.s32 %v8017, %v8019
        %v8022 = vadd.s32 %v8021, %v8011
        %v8023 = vadd.s32 %v8022, %v8013
        %v8024 = vmul.u32 %v7979, %v7970
        %v8025 = vadd.s32 %v8001, %v8020
        %vm8026 = vc.u32 %v8001, %v8020
        %v8027 = vadd.s32 %v8023, 1
        %v8028 = vsel %vm8026, %v8027, %v8023
        %v8029 = vadd.s32 %v8024, %v8028
        %v8030 = vadd.s32 %v8029, 536870912
        %v8031 = vshrl.u32 %v8030, 30
        %v8032 = vshll.u32 %v8031, 30
        %v8033 = vsub.s32 %v8029, %v8032
        %vm8034 = vcmp.lt.s32.totalorder %v8033, 0
        %v8035 = vsub.s32 0, %v8033
        %v8036 = vsel %vm8034, %v8035, %v8033
        %v8037 = vclz %v8036
        %v8038 = vsub.s32 %v8037, 2
        %vm8039 = vcmp.gt.s32.totalorder 0, %v8038
        %v8040 = vsel %vm8039, 0, %v8038
        %v8041 = vsub.s32 32, %v8040
        %v8042 = vshll.u32 %v8033, %v8040
        %v8043 = vshrl.u32 %v8025, %v8041
        %v8044 = vor.u32 %v8042, %v8043
        %v8045 = vsub.s32 4294967266, %v8040
        %v8046 = vadd.s32 %v8045, 127
        %v8047 = vshll.u32 %v8046, 23
        %v8048 = vor.u32 4788187, %v8047
        %v8049 = vand.u32 2147483647, %v8048
        %v8051 = vcvt.s32.f32 %v8044
        %v8052 = vmul.f32 %v8051, %v8049
        %v8053 = vxor.u32 %v8052, 2147483648
        %v8054 = vsel %vm7933, %v8053, %v8052
        %v8055 = vsub.s32 4, %v8031
        %v8056 = vsel %vm7933, %v8055, %v8031
        %v8057 = vsel %vm7932, %v5730, %v8054
        %v8058 = vsel %vm7932, 0, %v8056
        %v8059 = vmul.f32 %v8057, %v8057
        %v8060 = vmul.f32 %v8059, -0.001358992
        %v8061 = vadd.f32 %v8060, 0.041655596
        %v8062 = vmul.f32 %v8059, %v8061
        %v8063 = vadd.f32 %v8062, -0.4999988
        %v8064 = vmul.f32 %v8059, %v8063
        %v8065 = vadd.f32 1.0, %v8064
        %v8066 = vmul.f32 %v8057, %v8057
        %v8067 = vmul.f32 %v8066, -0.00019511016
        %v8068 = vadd.f32 %v8067, 0.008332121
        %v8069 = vmul.f32 %v8066, %v8068
        %v8070 = vadd.f32 %v8069, -0.16666654
        %v8071 = vmul.f32 %v8066, %v8070
        %v8072 = vadd.f32 %v8071, 1.0
        %v8073 = vmul.f32 %v8072, %v8057
        %vm8074 = vweird.f32 %v5730
        %v8075 = vadd.s32 %v8058, 3
        %v8076 = vand.u32 %v8075, 3
        %vm8077 = vcmp.lt.s32.totalorder %v8076, 2
        %vm8078 = vcmp.eq.s32.totalorder %v8076, 0
        %v8079 = vxor.u32 %v8073, 2147483648
        %v8080 = vsel %vm8078, %v8065, %v8079
        %vm8081 = vcmp.eq.s32.totalorder %v8076, 2
        %v8082 = vxor.u32 %v8065, 2147483648
        %v8083 = vsel %vm8081, %v8082, %v8073
        %v8084 = vsel %vm8077, %v8080, %v8083
        %v8085 = vsel %vm8074, nan, %v8084
        %v8086 = vand.u32 2147483647, %v5759
        %vm8087 = vcmp.le.f32.partialorder %v8086, 0.7853982
        %vm8088 = vcmp.lt.s32.totalorder %v5759, 0
        %v8089 = vand.u32 %v5759, 2139095040
        %v8090 = vshrl.u32 %v8089, 23
        %v8091 = vsub.s32 %v8090, 127
        %v8092 = vand.u32 2147483647, %v5759
        %v8093 = vand.u32 %v8092, 8388607
        %v8094 = vor.u32 %v8093, 8388608
        %v8095 = vsub.s32 0, %v8094
        %v8096 = vadd.s32 %v8091, 1
        %vm8097 = vcmp.gt.s32.totalorder %v8096, 0
        %v8098 = vsel %vm8097, %v8096, 0
        %v8099 = vshrl.u32 %v8098, 5
        %v8100 = vand.u32 %v8098, 31
        %v8101 = vsub.s32 32, %v8100
        %v8102 = vshrl.u32 683565275, %v8101
        %v8103 = vshll.u32 683565275, %v8100
        %v8104 = vshrl.u32 2475754826, %v8101
        %v8105 = vor.u32 %v8103, %v8104
        %v8106 = vshll.u32 2475754826, %v8100
        %v8107 = vshrl.u32 2131351028, %v8101
        %v8108 = vor.u32 %v8106, %v8107
        %v8109 = vshll.u32 2131351028, %v8100
        %v8110 = vshrl.u32 2102212464, %v8101
        %v8111 = vor.u32 %v8109, %v8110
        %v8112 = vshll.u32 2102212464, %v8100
        %v8113 = vshrl.u32 920167782, %v8101
        %v8114 = vor.u32 %v8112, %v8113
        %v8115 = vshll.u32 920167782, %v8100
        %v8116 = vshrl.u32 1326507024, %v8101
        %v8117 = vor.u32 %v8115, %v8116
        %vm8118 = vcmp.lt.s32.totalorder %v8099, 1
        %vm8119 = vcmp.lt.s32.totalorder %v8099, 2
        %vm8120 = vcmp.lt.s32.totalorder %v8099, 3
        %vm8121 = vcmp.lt.s32.totalorder %v8099, 4
        %v8122 = vsel %vm8118, %v8102, %v8105
        %v8123 = vsel %vm8121, %v8111, 2102212464
        %v8124 = vsel %vm8120, %v8108, %v8123
        %v8125 = vsel %vm8119, %v8122, %v8124
        %v8126 = vsel %vm8118, %v8105, %v8108
        %v8127 = vsel %vm8121, %v8114, 920167782
        %v8128 = vsel %vm8120, %v8111, %v8127
        %v8129 = vsel %vm8119, %v8126, %v8128
        %v8130 = vsel %vm8118, %v8108, %v8111
        %v8131 = vsel %vm8121, %v8117, 1326507024
        %v8132 = vsel %vm8120, %v8114, %v8131
        %v8133 = vsel %vm8119, %v8130, %v8132
        %v8134 = vshll.u32 %v8094, 8
        %v8135 = vand.u32 %v8134, 65535
        %v8136 = vshrl.u32 %v8134, 16
        %v8137 = vand.u32 %v8133, 65535
        %v8138 = vshrl.u32 %v8133, 16
        %v8139 = vmul.u32 %v8135, %v8137
        %v8140 = vmul.u32 %v8135, %v8138
        %v8141 = vmul.u32 %v8136, %v8137
        %v8142 = vmul.u32 %v8136, %v8138
        %v8143 = vshll.u32 %v8140, 16
        %v8144 = vshrl.u32 %v8140, 16
        %v8145 = vshll.u32 %v8141, 16
        %v8146 = vshrl.u32 %v8141, 16
        %vm8147 = vc.u32 %v8139, %v8143
        %v8148 = vsel %vm8147, 1, 0
        %v8149 = vadd.s32 %v8139, %v8143
        %v8150 = vadd.s32 %v8142, %v8148
        %vm8151 = vc.u32 %v8149, %v8145
        %v8152 = vsel %vm8151, 1, 0
        %v8153 = vadd.s32 %v8149, %v8145
        %v8154 = vadd.s32 %v8150, %v8152
        %v8155 = vadd.s32 %v8154, %v8144
        %v8156 = vadd.s32 %v8155, %v8146
        %v8157 = vand.u32 %v8134, 65535
        %v8158 = vshrl.u32 %v8134, 16
        %v8159 = vand.u32 %v8129, 65535
        %v8160 = vshrl.u32 %v8129, 16
        %v8161 = vmul.u32 %v8157, %v8159
        %v8162 = vmul.u32 %v8157, %v8160
        %v8163 = vmul.u32 %v8158, %v8159
        %v8164 = vmul.u32 %v8158, %v8160
        %v8165 = vshll.u32 %v8162, 16
        %v8166 = vshrl.u32 %v8162, 16
        %v8167 = vshll.u32 %v8163, 16
        %v8168 = vshrl.u32 %v8163, 16
        %vm8169 = vc.u32 %v8161, %v8165
        %v8170 = vsel %vm8169, 1, 0
        %v8171 = vadd.s32 %v8161, %v8165
        %v8172 = vadd.s32 %v8164, %v8170
        %vm8173 = vc.u32 %v8171, %v8167
        %v8174 = vsel %vm8173, 1, 0
        %v8175 = vadd.s32 %v8171, %v8167
        %v8176 = vadd.s32 %v8172, %v8174
        %v8177 = vadd.s32 %v8176, %v8166
        %v8178 = vadd.s32 %v8177, %v8168
        %v8179 = vmul.u32 %v8134, %v8125
        %v8180 = vadd.s32 %v8156, %v8175
        %vm8181 = vc.u32 %v8156, %v8175
        %v8182 = vadd.s32 %v8178, 1
        %v8183 = vsel %vm8181, %v8182, %v8178
        %v8184 = vadd.s32 %v8179, %v8183
        %v8185 = vadd.s32 %v8184, 536870912
        %v8186 = vshrl.u32 %v8185, 30
        %v8187 = vshll.u32 %v8186, 30
        %v8188 = vsub.s32 %v8184, %v8187
        %vm8189 = vcmp.lt.s32.totalorder %v8188, 0
        %v8190 = vsub.s32 0, %v8188
        %v8191 = vsel %vm8189, %v8190, %v8188
        %v8192 = vclz %v8191
        %v8193 = vsub.s32 %v8192, 2
        %vm8194 = vcmp.gt.s32.totalorder 0, %v8193
        %v8195 = vsel %vm8194, 0, %v8193
        %v8196 = vsub.s32 32, %v8195
        %v8197 = vshll.u32 %v8188, %v8195
        %v8198 = vshrl.u32 %v8180, %v8196
        %v8199 = vor.u32 %v8197, %v8198
        %v8200 = vsub.s32 4294967266, %v8195
        %v8201 = vadd.s32 %v8200, 127
        %v8202 = vshll.u32 %v8201, 23
        %v8203 = vor.u32 4788187, %v8202
        %v8204 = vand.u32 2147483647, %v8203
        %v8206 = vcvt.s32.f32 %v8199
        %v8207 = vmul.f32 %v8206, %v8204
        %v8208 = vxor.u32 %v8207, 2147483648
        %v8209 = vsel %vm8088, %v8208, %v8207
        %v8210 = vsub.s32 4, %v8186
        %v8211 = vsel %vm8088, %v8210, %v8186
        %v8212 = vsel %vm8087, %v5759, %v8209
        %v8213 = vsel %vm8087, 0, %v8211
        %v8214 = vmul.f32 %v8212, %v8212
        %v8215 = vmul.f32 %v8214, -0.001358992
        %v8216 = vadd.f32 %v8215, 0.041655596
        %v8217 = vmul.f32 %v8214, %v8216
        %v8218 = vadd.f32 %v8217, -0.4999988
        %v8219 = vmul.f32 %v8214, %v8218
        %v8220 = vadd.f32 1.0, %v8219
        %v8221 = vmul.f32 %v8212, %v8212
        %v8222 = vmul.f32 %v8221, -0.00019511016
        %v8223 = vadd.f32 %v8222, 0.008332121
        %v8224 = vmul.f32 %v8221, %v8223
        %v8225 = vadd.f32 %v8224, -0.16666654
        %v8226 = vmul.f32 %v8221, %v8225
        %v8227 = vadd.f32 %v8226, 1.0
        %v8228 = vmul.f32 %v8227, %v8212
        %vm8229 = vweird.f32 %v5759
        %v8230 = vadd.s32 %v8213, 3
        %v8231 = vand.u32 %v8230, 3
        %vm8232 = vcmp.lt.s32.totalorder %v8231, 2
        %vm8233 = vcmp.eq.s32.totalorder %v8231, 0
        %v8234 = vxor.u32 %v8228, 2147483648
        %v8235 = vsel %vm8233, %v8220, %v8234
        %vm8236 = vcmp.eq.s32.totalorder %v8231, 2
        %v8237 = vxor.u32 %v8220, 2147483648
        %v8238 = vsel %vm8236, %v8237, %v8228
        %v8239 = vsel %vm8232, %v8235, %v8238
        %v8240 = vsel %vm8229, nan, %v8239
        %v8241 = vld [vmem:[%s7] sm:$0x7]
        %v8242 = vld [vmem:[%s8] sm:$0x7]
        %8244 = vset.pattern.permute.xlu0 0
        %8245 = vperm.xlu0 %8244, %v8242
        %v8246 = vpop.permute.xlu0 %8245
        %v8249 = vsel %vm2996, %v8241, 0
        %8251 = vmatpush.msra.mxu0 0.0
        %8252 = vmatpush.msra.mxu0 0.0
        %8253 = vmatpush.msra.mxu0 0.0
        %8254 = vmatpush.msra.mxu0 0.0
        %8255 = vmatpush.msra.mxu0 0.0
        %8256 = vmatpush.msra.mxu0 0.0
        %8257 = vmatpush.msra.mxu0 0.0
        %8258 = vmatpush.msra.mxu0 0.0
        %8259 = vmatpush.msra.mxu0 0.0
        %8260 = vmatpush.msra.mxu0 0.0
        %8261 = vmatpush.msra.mxu0 0.0
        %8262 = vmatpush.msra.mxu0 0.0
        %8263 = vmatpush.msra.mxu0 %v7775
        %8264 = vmatpush.msra.mxu0 %v7155
        %8265 = vmatpush.msra.mxu0 %v6535
        %8266 = vmatpush.msra.mxu0 %v5915
        %8267 = vmatmul.f32.gmra.mxu0 %v8249
        %v8268 = vpop.f32.mrf.mxu0
        %v8269 = vadd.f32 %v8246, %v8268
        %8270 = vdwg.mxu0
        %8271 = vmatpush.msra.mxu0 0.0
        %8272 = vmatpush.msra.mxu0 0.0
        %8273 = vmatpush.msra.mxu0 0.0
        %8274 = vmatpush.msra.mxu0 0.0
        %8275 = vmatpush.msra.mxu0 0.0
        %8276 = vmatpush.msra.mxu0 0.0
        %8277 = vmatpush.msra.mxu0 0.0
        %8278 = vmatpush.msra.mxu0 0.0
        %8279 = vmatpush.msra.mxu0 0.0
        %8280 = vmatpush.msra.mxu0 0.0
        %8281 = vmatpush.msra.mxu0 0.0
        %8282 = vmatpush.msra.mxu0 0.0
        %8283 = vmatpush.msra.mxu0 %v7930
        %8284 = vmatpush.msra.mxu0 %v7310
        %8285 = vmatpush.msra.mxu0 %v6690
        %8286 = vmatpush.msra.mxu0 %v6070
        %8287 = vmatmul.f32.gmra.mxu0 %v8249
        %v8288 = vpop.f32.mrf.mxu0
        %v8289 = vadd.f32 %v8246, %v8288
        %8290 = vdwg.mxu0
        %8291 = vmatpush.msra.mxu0 0.0
        %8292 = vmatpush.msra.mxu0 0.0
        %8293 = vmatpush.msra.mxu0 0.0
        %8294 = vmatpush.msra.mxu0 0.0
        %8295 = vmatpush.msra.mxu0 0.0
        %8296 = vmatpush.msra.mxu0 0.0
        %8297 = vmatpush.msra.mxu0 0.0
        %8298 = vmatpush.msra.mxu0 0.0
        %8299 = vmatpush.msra.mxu0 0.0
        %8300 = vmatpush.msra.mxu0 0.0
        %8301 = vmatpush.msra.mxu0 0.0
        %8302 = vmatpush.msra.mxu0 0.0
        %8303 = vmatpush.msra.mxu0 %v8085
        %8304 = vmatpush.msra.mxu0 %v7465
        %8305 = vmatpush.msra.mxu0 %v6845
        %8306 = vmatpush.msra.mxu0 %v6225
        %8307 = vmatmul.f32.gmra.mxu0 %v8249
        %v8308 = vpop.f32.mrf.mxu0
        %v8309 = vadd.f32 %v8246, %v8308
        %8310 = vdwg.mxu0
        %8311 = vmatpush.msra.mxu0 0.0
        %8312 = vmatpush.msra.mxu0 0.0
        %8313 = vmatpush.msra.mxu0 0.0
        %8314 = vmatpush.msra.mxu0 0.0
        %8315 = vmatpush.msra.mxu0 0.0
        %8316 = vmatpush.msra.mxu0 0.0
        %8317 = vmatpush.msra.mxu0 0.0
        %8318 = vmatpush.msra.mxu0 0.0
        %8319 = vmatpush.msra.mxu0 0.0
        %8320 = vmatpush.msra.mxu0 0.0
        %8321 = vmatpush.msra.mxu0 0.0
        %8322 = vmatpush.msra.mxu0 0.0
        %8323 = vmatpush.msra.mxu0 %v8240
        %8324 = vmatpush.msra.mxu0 %v7620
        %8325 = vmatpush.msra.mxu0 %v7000
        %8326 = vmatpush.msra.mxu0 %v6380
        %8327 = vmatmul.f32.gmra.mxu0 %v8249
        %v8328 = vpop.f32.mrf.mxu0
        %v8329 = vadd.f32 %v8246, %v8328
        %8330 = vdwg.mxu0
        %v8331 = vand.u32 2147483647, %v8269
        %vm8332 = vcmp.le.f32.partialorder %v8331, 0.7853982
        %vm8333 = vcmp.lt.s32.totalorder %v8269, 0
        %v8334 = vand.u32 %v8269, 2139095040
        %v8335 = vshrl.u32 %v8334, 23
        %v8336 = vsub.s32 %v8335, 127
        %v8337 = vand.u32 2147483647, %v8269
        %v8338 = vand.u32 %v8337, 8388607
        %v8339 = vor.u32 %v8338, 8388608
        %v8340 = vsub.s32 0, %v8339
        %v8341 = vadd.s32 %v8336, 1
        %vm8342 = vcmp.gt.s32.totalorder %v8341, 0
        %v8343 = vsel %vm8342, %v8341, 0
        %v8344 = vshrl.u32 %v8343, 5
        %v8345 = vand.u32 %v8343, 31
        %v8346 = vsub.s32 32, %v8345
        %v8347 = vshrl.u32 683565275, %v8346
        %v8348 = vshll.u32 683565275, %v8345
        %v8349 = vshrl.u32 2475754826, %v8346
        %v8350 = vor.u32 %v8348, %v8349
        %v8351 = vshll.u32 2475754826, %v8345
        %v8352 = vshrl.u32 2131351028, %v8346
        %v8353 = vor.u32 %v8351, %v8352
        %v8354 = vshll.u32 2131351028, %v8345
        %v8355 = vshrl.u32 2102212464, %v8346
        %v8356 = vor.u32 %v8354, %v8355
        %v8357 = vshll.u32 2102212464, %v8345
        %v8358 = vshrl.u32 920167782, %v8346
        %v8359 = vor.u32 %v8357, %v8358
        %v8360 = vshll.u32 920167782, %v8345
        %v8361 = vshrl.u32 1326507024, %v8346
        %v8362 = vor.u32 %v8360, %v8361
        %vm8363 = vcmp.lt.s32.totalorder %v8344, 1
        %vm8364 = vcmp.lt.s32.totalorder %v8344, 2
        %vm8365 = vcmp.lt.s32.totalorder %v8344, 3
        %vm8366 = vcmp.lt.s32.totalorder %v8344, 4
        %v8367 = vsel %vm8363, %v8347, %v8350
        %v8368 = vsel %vm8366, %v8356, 2102212464
        %v8369 = vsel %vm8365, %v8353, %v8368
        %v8370 = vsel %vm8364, %v8367, %v8369
        %v8371 = vsel %vm8363, %v8350, %v8353
        %v8372 = vsel %vm8366, %v8359, 920167782
        %v8373 = vsel %vm8365, %v8356, %v8372
        %v8374 = vsel %vm8364, %v8371, %v8373
        %v8375 = vsel %vm8363, %v8353, %v8356
        %v8376 = vsel %vm8366, %v8362, 1326507024
        %v8377 = vsel %vm8365, %v8359, %v8376
        %v8378 = vsel %vm8364, %v8375, %v8377
        %v8379 = vshll.u32 %v8339, 8
        %v8380 = vand.u32 %v8379, 65535
        %v8381 = vshrl.u32 %v8379, 16
        %v8382 = vand.u32 %v8378, 65535
        %v8383 = vshrl.u32 %v8378, 16
        %v8384 = vmul.u32 %v8380, %v8382
        %v8385 = vmul.u32 %v8380, %v8383
        %v8386 = vmul.u32 %v8381, %v8382
        %v8387 = vmul.u32 %v8381, %v8383
        %v8388 = vshll.u32 %v8385, 16
        %v8389 = vshrl.u32 %v8385, 16
        %v8390 = vshll.u32 %v8386, 16
        %v8391 = vshrl.u32 %v8386, 16
        %vm8392 = vc.u32 %v8384, %v8388
        %v8393 = vsel %vm8392, 1, 0
        %v8394 = vadd.s32 %v8384, %v8388
        %v8395 = vadd.s32 %v8387, %v8393
        %vm8396 = vc.u32 %v8394, %v8390
        %v8397 = vsel %vm8396, 1, 0
        %v8398 = vadd.s32 %v8394, %v8390
        %v8399 = vadd.s32 %v8395, %v8397
        %v8400 = vadd.s32 %v8399, %v8389
        %v8401 = vadd.s32 %v8400, %v8391
        %v8402 = vand.u32 %v8379, 65535
        %v8403 = vshrl.u32 %v8379, 16
        %v8404 = vand.u32 %v8374, 65535
        %v8405 = vshrl.u32 %v8374, 16
        %v8406 = vmul.u32 %v8402, %v8404
        %v8407 = vmul.u32 %v8402, %v8405
        %v8408 = vmul.u32 %v8403, %v8404
        %v8409 = vmul.u32 %v8403, %v8405
        %v8410 = vshll.u32 %v8407, 16
        %v8411 = vshrl.u32 %v8407, 16
        %v8412 = vshll.u32 %v8408, 16
        %v8413 = vshrl.u32 %v8408, 16
        %vm8414 = vc.u32 %v8406, %v8410
        %v8415 = vsel %vm8414, 1, 0
        %v8416 = vadd.s32 %v8406, %v8410
        %v8417 = vadd.s32 %v8409, %v8415
        %vm8418 = vc.u32 %v8416, %v8412
        %v8419 = vsel %vm8418, 1, 0
        %v8420 = vadd.s32 %v8416, %v8412
        %v8421 = vadd.s32 %v8417, %v8419
        %v8422 = vadd.s32 %v8421, %v8411
        %v8423 = vadd.s32 %v8422, %v8413
        %v8424 = vmul.u32 %v8379, %v8370
        %v8425 = vadd.s32 %v8401, %v8420
        %vm8426 = vc.u32 %v8401, %v8420
        %v8427 = vadd.s32 %v8423, 1
        %v8428 = vsel %vm8426, %v8427, %v8423
        %v8429 = vadd.s32 %v8424, %v8428
        %v8430 = vadd.s32 %v8429, 536870912
        %v8431 = vshrl.u32 %v8430, 30
        %v8432 = vshll.u32 %v8431, 30
        %v8433 = vsub.s32 %v8429, %v8432
        %vm8434 = vcmp.lt.s32.totalorder %v8433, 0
        %v8435 = vsub.s32 0, %v8433
        %v8436 = vsel %vm8434, %v8435, %v8433
        %v8437 = vclz %v8436
        %v8438 = vsub.s32 %v8437, 2
        %vm8439 = vcmp.gt.s32.totalorder 0, %v8438
        %v8440 = vsel %vm8439, 0, %v8438
        %v8441 = vsub.s32 32, %v8440
        %v8442 = vshll.u32 %v8433, %v8440
        %v8443 = vshrl.u32 %v8425, %v8441
        %v8444 = vor.u32 %v8442, %v8443
        %v8445 = vsub.s32 4294967266, %v8440
        %v8446 = vadd.s32 %v8445, 127
        %v8447 = vshll.u32 %v8446, 23
        %v8448 = vor.u32 4788187, %v8447
        %v8449 = vand.u32 2147483647, %v8448
        %v8451 = vcvt.s32.f32 %v8444
        %v8452 = vmul.f32 %v8451, %v8449
        %v8453 = vxor.u32 %v8452, 2147483648
        %v8454 = vsel %vm8333, %v8453, %v8452
        %v8455 = vsub.s32 4, %v8431
        %v8456 = vsel %vm8333, %v8455, %v8431
        %v8457 = vsel %vm8332, %v8269, %v8454
        %v8458 = vsel %vm8332, 0, %v8456
        %v8459 = vmul.f32 %v8457, %v8457
        %v8460 = vmul.f32 %v8459, -0.001358992
        %v8461 = vadd.f32 %v8460, 0.041655596
        %v8462 = vmul.f32 %v8459, %v8461
        %v8463 = vadd.f32 %v8462, -0.4999988
        %v8464 = vmul.f32 %v8459, %v8463
        %v8465 = vadd.f32 1.0, %v8464
        %v8466 = vmul.f32 %v8457, %v8457
        %v8467 = vmul.f32 %v8466, -0.00019511016
        %v8468 = vadd.f32 %v8467, 0.008332121
        %v8469 = vmul.f32 %v8466, %v8468
        %v8470 = vadd.f32 %v8469, -0.16666654
        %v8471 = vmul.f32 %v8466, %v8470
        %v8472 = vadd.f32 %v8471, 1.0
        %v8473 = vmul.f32 %v8472, %v8457
        %vm8474 = vweird.f32 %v8269
        %v8475 = vadd.s32 %v8458, 3
        %v8476 = vand.u32 %v8475, 3
        %vm8477 = vcmp.lt.s32.totalorder %v8476, 2
        %vm8478 = vcmp.eq.s32.totalorder %v8476, 0
        %v8479 = vxor.u32 %v8473, 2147483648
        %v8480 = vsel %vm8478, %v8465, %v8479
        %vm8481 = vcmp.eq.s32.totalorder %v8476, 2
        %v8482 = vxor.u32 %v8465, 2147483648
        %v8483 = vsel %vm8481, %v8482, %v8473
        %v8484 = vsel %vm8477, %v8480, %v8483
        %v8485 = vsel %vm8474, nan, %v8484
        %v8486 = vand.u32 2147483647, %v8289
        %vm8487 = vcmp.le.f32.partialorder %v8486, 0.7853982
        %vm8488 = vcmp.lt.s32.totalorder %v8289, 0
        %v8489 = vand.u32 %v8289, 2139095040
        %v8490 = vshrl.u32 %v8489, 23
        %v8491 = vsub.s32 %v8490, 127
        %v8492 = vand.u32 2147483647, %v8289
        %v8493 = vand.u32 %v8492, 8388607
        %v8494 = vor.u32 %v8493, 8388608
        %v8495 = vsub.s32 0, %v8494
        %v8496 = vadd.s32 %v8491, 1
        %vm8497 = vcmp.gt.s32.totalorder %v8496, 0
        %v8498 = vsel %vm8497, %v8496, 0
        %v8499 = vshrl.u32 %v8498, 5
        %v8500 = vand.u32 %v8498, 31
        %v8501 = vsub.s32 32, %v8500
        %v8502 = vshrl.u32 683565275, %v8501
        %v8503 = vshll.u32 683565275, %v8500
        %v8504 = vshrl.u32 2475754826, %v8501
        %v8505 = vor.u32 %v8503, %v8504
        %v8506 = vshll.u32 2475754826, %v8500
        %v8507 = vshrl.u32 2131351028, %v8501
        %v8508 = vor.u32 %v8506, %v8507
        %v8509 = vshll.u32 2131351028, %v8500
        %v8510 = vshrl.u32 2102212464, %v8501
        %v8511 = vor.u32 %v8509, %v8510
        %v8512 = vshll.u32 2102212464, %v8500
        %v8513 = vshrl.u32 920167782, %v8501
        %v8514 = vor.u32 %v8512, %v8513
        %v8515 = vshll.u32 920167782, %v8500
        %v8516 = vshrl.u32 1326507024, %v8501
        %v8517 = vor.u32 %v8515, %v8516
        %vm8518 = vcmp.lt.s32.totalorder %v8499, 1
        %vm8519 = vcmp.lt.s32.totalorder %v8499, 2
        %vm8520 = vcmp.lt.s32.totalorder %v8499, 3
        %vm8521 = vcmp.lt.s32.totalorder %v8499, 4
        %v8522 = vsel %vm8518, %v8502, %v8505
        %v8523 = vsel %vm8521, %v8511, 2102212464
        %v8524 = vsel %vm8520, %v8508, %v8523
        %v8525 = vsel %vm8519, %v8522, %v8524
        %v8526 = vsel %vm8518, %v8505, %v8508
        %v8527 = vsel %vm8521, %v8514, 920167782
        %v8528 = vsel %vm8520, %v8511, %v8527
        %v8529 = vsel %vm8519, %v8526, %v8528
        %v8530 = vsel %vm8518, %v8508, %v8511
        %v8531 = vsel %vm8521, %v8517, 1326507024
        %v8532 = vsel %vm8520, %v8514, %v8531
        %v8533 = vsel %vm8519, %v8530, %v8532
        %v8534 = vshll.u32 %v8494, 8
        %v8535 = vand.u32 %v8534, 65535
        %v8536 = vshrl.u32 %v8534, 16
        %v8537 = vand.u32 %v8533, 65535
        %v8538 = vshrl.u32 %v8533, 16
        %v8539 = vmul.u32 %v8535, %v8537
        %v8540 = vmul.u32 %v8535, %v8538
        %v8541 = vmul.u32 %v8536, %v8537
        %v8542 = vmul.u32 %v8536, %v8538
        %v8543 = vshll.u32 %v8540, 16
        %v8544 = vshrl.u32 %v8540, 16
        %v8545 = vshll.u32 %v8541, 16
        %v8546 = vshrl.u32 %v8541, 16
        %vm8547 = vc.u32 %v8539, %v8543
        %v8548 = vsel %vm8547, 1, 0
        %v8549 = vadd.s32 %v8539, %v8543
        %v8550 = vadd.s32 %v8542, %v8548
        %vm8551 = vc.u32 %v8549, %v8545
        %v8552 = vsel %vm8551, 1, 0
        %v8553 = vadd.s32 %v8549, %v8545
        %v8554 = vadd.s32 %v8550, %v8552
        %v8555 = vadd.s32 %v8554, %v8544
        %v8556 = vadd.s32 %v8555, %v8546
        %v8557 = vand.u32 %v8534, 65535
        %v8558 = vshrl.u32 %v8534, 16
        %v8559 = vand.u32 %v8529, 65535
        %v8560 = vshrl.u32 %v8529, 16
        %v8561 = vmul.u32 %v8557, %v8559
        %v8562 = vmul.u32 %v8557, %v8560
        %v8563 = vmul.u32 %v8558, %v8559
        %v8564 = vmul.u32 %v8558, %v8560
        %v8565 = vshll.u32 %v8562, 16
        %v8566 = vshrl.u32 %v8562, 16
        %v8567 = vshll.u32 %v8563, 16
        %v8568 = vshrl.u32 %v8563, 16
        %vm8569 = vc.u32 %v8561, %v8565
        %v8570 = vsel %vm8569, 1, 0
        %v8571 = vadd.s32 %v8561, %v8565
        %v8572 = vadd.s32 %v8564, %v8570
        %vm8573 = vc.u32 %v8571, %v8567
        %v8574 = vsel %vm8573, 1, 0
        %v8575 = vadd.s32 %v8571, %v8567
        %v8576 = vadd.s32 %v8572, %v8574
        %v8577 = vadd.s32 %v8576, %v8566
        %v8578 = vadd.s32 %v8577, %v8568
        %v8579 = vmul.u32 %v8534, %v8525
        %v8580 = vadd.s32 %v8556, %v8575
        %vm8581 = vc.u32 %v8556, %v8575
        %v8582 = vadd.s32 %v8578, 1
        %v8583 = vsel %vm8581, %v8582, %v8578
        %v8584 = vadd.s32 %v8579, %v8583
        %v8585 = vadd.s32 %v8584, 536870912
        %v8586 = vshrl.u32 %v8585, 30
        %v8587 = vshll.u32 %v8586, 30
        %v8588 = vsub.s32 %v8584, %v8587
        %vm8589 = vcmp.lt.s32.totalorder %v8588, 0
        %v8590 = vsub.s32 0, %v8588
        %v8591 = vsel %vm8589, %v8590, %v8588
        %v8592 = vclz %v8591
        %v8593 = vsub.s32 %v8592, 2
        %vm8594 = vcmp.gt.s32.totalorder 0, %v8593
        %v8595 = vsel %vm8594, 0, %v8593
        %v8596 = vsub.s32 32, %v8595
        %v8597 = vshll.u32 %v8588, %v8595
        %v8598 = vshrl.u32 %v8580, %v8596
        %v8599 = vor.u32 %v8597, %v8598
        %v8600 = vsub.s32 4294967266, %v8595
        %v8601 = vadd.s32 %v8600, 127
        %v8602 = vshll.u32 %v8601, 23
        %v8603 = vor.u32 4788187, %v8602
        %v8604 = vand.u32 2147483647, %v8603
        %v8606 = vcvt.s32.f32 %v8599
        %v8607 = vmul.f32 %v8606, %v8604
        %v8608 = vxor.u32 %v8607, 2147483648
        %v8609 = vsel %vm8488, %v8608, %v8607
        %v8610 = vsub.s32 4, %v8586
        %v8611 = vsel %vm8488, %v8610, %v8586
        %v8612 = vsel %vm8487, %v8289, %v8609
        %v8613 = vsel %vm8487, 0, %v8611
        %v8614 = vmul.f32 %v8612, %v8612
        %v8615 = vmul.f32 %v8614, -0.001358992
        %v8616 = vadd.f32 %v8615, 0.041655596
        %v8617 = vmul.f32 %v8614, %v8616
        %v8618 = vadd.f32 %v8617, -0.4999988
        %v8619 = vmul.f32 %v8614, %v8618
        %v8620 = vadd.f32 1.0, %v8619
        %v8621 = vmul.f32 %v8612, %v8612
        %v8622 = vmul.f32 %v8621, -0.00019511016
        %v8623 = vadd.f32 %v8622, 0.008332121
        %v8624 = vmul.f32 %v8621, %v8623
        %v8625 = vadd.f32 %v8624, -0.16666654
        %v8626 = vmul.f32 %v8621, %v8625
        %v8627 = vadd.f32 %v8626, 1.0
        %v8628 = vmul.f32 %v8627, %v8612
        %vm8629 = vweird.f32 %v8289
        %v8630 = vadd.s32 %v8613, 3
        %v8631 = vand.u32 %v8630, 3
        %vm8632 = vcmp.lt.s32.totalorder %v8631, 2
        %vm8633 = vcmp.eq.s32.totalorder %v8631, 0
        %v8634 = vxor.u32 %v8628, 2147483648
        %v8635 = vsel %vm8633, %v8620, %v8634
        %vm8636 = vcmp.eq.s32.totalorder %v8631, 2
        %v8637 = vxor.u32 %v8620, 2147483648
        %v8638 = vsel %vm8636, %v8637, %v8628
        %v8639 = vsel %vm8632, %v8635, %v8638
        %v8640 = vsel %vm8629, nan, %v8639
        %v8641 = vand.u32 2147483647, %v8309
        %vm8642 = vcmp.le.f32.partialorder %v8641, 0.7853982
        %vm8643 = vcmp.lt.s32.totalorder %v8309, 0
        %v8644 = vand.u32 %v8309, 2139095040
        %v8645 = vshrl.u32 %v8644, 23
        %v8646 = vsub.s32 %v8645, 127
        %v8647 = vand.u32 2147483647, %v8309
        %v8648 = vand.u32 %v8647, 8388607
        %v8649 = vor.u32 %v8648, 8388608
        %v8650 = vsub.s32 0, %v8649
        %v8651 = vadd.s32 %v8646, 1
        %vm8652 = vcmp.gt.s32.totalorder %v8651, 0
        %v8653 = vsel %vm8652, %v8651, 0
        %v8654 = vshrl.u32 %v8653, 5
        %v8655 = vand.u32 %v8653, 31
        %v8656 = vsub.s32 32, %v8655
        %v8657 = vshrl.u32 683565275, %v8656
        %v8658 = vshll.u32 683565275, %v8655
        %v8659 = vshrl.u32 2475754826, %v8656
        %v8660 = vor.u32 %v8658, %v8659
        %v8661 = vshll.u32 2475754826, %v8655
        %v8662 = vshrl.u32 2131351028, %v8656
        %v8663 = vor.u32 %v8661, %v8662
        %v8664 = vshll.u32 2131351028, %v8655
        %v8665 = vshrl.u32 2102212464, %v8656
        %v8666 = vor.u32 %v8664, %v8665
        %v8667 = vshll.u32 2102212464, %v8655
        %v8668 = vshrl.u32 920167782, %v8656
        %v8669 = vor.u32 %v8667, %v8668
        %v8670 = vshll.u32 920167782, %v8655
        %v8671 = vshrl.u32 1326507024, %v8656
        %v8672 = vor.u32 %v8670, %v8671
        %vm8673 = vcmp.lt.s32.totalorder %v8654, 1
        %vm8674 = vcmp.lt.s32.totalorder %v8654, 2
        %vm8675 = vcmp.lt.s32.totalorder %v8654, 3
        %vm8676 = vcmp.lt.s32.totalorder %v8654, 4
        %v8677 = vsel %vm8673, %v8657, %v8660
        %v8678 = vsel %vm8676, %v8666, 2102212464
        %v8679 = vsel %vm8675, %v8663, %v8678
        %v8680 = vsel %vm8674, %v8677, %v8679
        %v8681 = vsel %vm8673, %v8660, %v8663
        %v8682 = vsel %vm8676, %v8669, 920167782
        %v8683 = vsel %vm8675, %v8666, %v8682
        %v8684 = vsel %vm8674, %v8681, %v8683
        %v8685 = vsel %vm8673, %v8663, %v8666
        %v8686 = vsel %vm8676, %v8672, 1326507024
        %v8687 = vsel %vm8675, %v8669, %v8686
        %v8688 = vsel %vm8674, %v8685, %v8687
        %v8689 = vshll.u32 %v8649, 8
        %v8690 = vand.u32 %v8689, 65535
        %v8691 = vshrl.u32 %v8689, 16
        %v8692 = vand.u32 %v8688, 65535
        %v8693 = vshrl.u32 %v8688, 16
        %v8694 = vmul.u32 %v8690, %v8692
        %v8695 = vmul.u32 %v8690, %v8693
        %v8696 = vmul.u32 %v8691, %v8692
        %v8697 = vmul.u32 %v8691, %v8693
        %v8698 = vshll.u32 %v8695, 16
        %v8699 = vshrl.u32 %v8695, 16
        %v8700 = vshll.u32 %v8696, 16
        %v8701 = vshrl.u32 %v8696, 16
        %vm8702 = vc.u32 %v8694, %v8698
        %v8703 = vsel %vm8702, 1, 0
        %v8704 = vadd.s32 %v8694, %v8698
        %v8705 = vadd.s32 %v8697, %v8703
        %vm8706 = vc.u32 %v8704, %v8700
        %v8707 = vsel %vm8706, 1, 0
        %v8708 = vadd.s32 %v8704, %v8700
        %v8709 = vadd.s32 %v8705, %v8707
        %v8710 = vadd.s32 %v8709, %v8699
        %v8711 = vadd.s32 %v8710, %v8701
        %v8712 = vand.u32 %v8689, 65535
        %v8713 = vshrl.u32 %v8689, 16
        %v8714 = vand.u32 %v8684, 65535
        %v8715 = vshrl.u32 %v8684, 16
        %v8716 = vmul.u32 %v8712, %v8714
        %v8717 = vmul.u32 %v8712, %v8715
        %v8718 = vmul.u32 %v8713, %v8714
        %v8719 = vmul.u32 %v8713, %v8715
        %v8720 = vshll.u32 %v8717, 16
        %v8721 = vshrl.u32 %v8717, 16
        %v8722 = vshll.u32 %v8718, 16
        %v8723 = vshrl.u32 %v8718, 16
        %vm8724 = vc.u32 %v8716, %v8720
        %v8725 = vsel %vm8724, 1, 0
        %v8726 = vadd.s32 %v8716, %v8720
        %v8727 = vadd.s32 %v8719, %v8725
        %vm8728 = vc.u32 %v8726, %v8722
        %v8729 = vsel %vm8728, 1, 0
        %v8730 = vadd.s32 %v8726, %v8722
        %v8731 = vadd.s32 %v8727, %v8729
        %v8732 = vadd.s32 %v8731, %v8721
        %v8733 = vadd.s32 %v8732, %v8723
        %v8734 = vmul.u32 %v8689, %v8680
        %v8735 = vadd.s32 %v8711, %v8730
        %vm8736 = vc.u32 %v8711, %v8730
        %v8737 = vadd.s32 %v8733, 1
        %v8738 = vsel %vm8736, %v8737, %v8733
        %v8739 = vadd.s32 %v8734, %v8738
        %v8740 = vadd.s32 %v8739, 536870912
        %v8741 = vshrl.u32 %v8740, 30
        %v8742 = vshll.u32 %v8741, 30
        %v8743 = vsub.s32 %v8739, %v8742
        %vm8744 = vcmp.lt.s32.totalorder %v8743, 0
        %v8745 = vsub.s32 0, %v8743
        %v8746 = vsel %vm8744, %v8745, %v8743
        %v8747 = vclz %v8746
        %v8748 = vsub.s32 %v8747, 2
        %vm8749 = vcmp.gt.s32.totalorder 0, %v8748
        %v8750 = vsel %vm8749, 0, %v8748
        %v8751 = vsub.s32 32, %v8750
        %v8752 = vshll.u32 %v8743, %v8750
        %v8753 = vshrl.u32 %v8735, %v8751
        %v8754 = vor.u32 %v8752, %v8753
        %v8755 = vsub.s32 4294967266, %v8750
        %v8756 = vadd.s32 %v8755, 127
        %v8757 = vshll.u32 %v8756, 23
        %v8758 = vor.u32 4788187, %v8757
        %v8759 = vand.u32 2147483647, %v8758
        %v8761 = vcvt.s32.f32 %v8754
        %v8762 = vmul.f32 %v8761, %v8759
        %v8763 = vxor.u32 %v8762, 2147483648
        %v8764 = vsel %vm8643, %v8763, %v8762
        %v8765 = vsub.s32 4, %v8741
        %v8766 = vsel %vm8643, %v8765, %v8741
        %v8767 = vsel %vm8642, %v8309, %v8764
        %v8768 = vsel %vm8642, 0, %v8766
        %v8769 = vmul.f32 %v8767, %v8767
        %v8770 = vmul.f32 %v8769, -0.001358992
        %v8771 = vadd.f32 %v8770, 0.041655596
        %v8772 = vmul.f32 %v8769, %v8771
        %v8773 = vadd.f32 %v8772, -0.4999988
        %v8774 = vmul.f32 %v8769, %v8773
        %v8775 = vadd.f32 1.0, %v8774
        %v8776 = vmul.f32 %v8767, %v8767
        %v8777 = vmul.f32 %v8776, -0.00019511016
        %v8778 = vadd.f32 %v8777, 0.008332121
        %v8779 = vmul.f32 %v8776, %v8778
        %v8780 = vadd.f32 %v8779, -0.16666654
        %v8781 = vmul.f32 %v8776, %v8780
        %v8782 = vadd.f32 %v8781, 1.0
        %v8783 = vmul.f32 %v8782, %v8767
        %vm8784 = vweird.f32 %v8309
        %v8785 = vadd.s32 %v8768, 3
        %v8786 = vand.u32 %v8785, 3
        %vm8787 = vcmp.lt.s32.totalorder %v8786, 2
        %vm8788 = vcmp.eq.s32.totalorder %v8786, 0
        %v8789 = vxor.u32 %v8783, 2147483648
        %v8790 = vsel %vm8788, %v8775, %v8789
        %vm8791 = vcmp.eq.s32.totalorder %v8786, 2
        %v8792 = vxor.u32 %v8775, 2147483648
        %v8793 = vsel %vm8791, %v8792, %v8783
        %v8794 = vsel %vm8787, %v8790, %v8793
        %v8795 = vsel %vm8784, nan, %v8794
        %v8796 = vand.u32 2147483647, %v8329
        %vm8797 = vcmp.le.f32.partialorder %v8796, 0.7853982
        %vm8798 = vcmp.lt.s32.totalorder %v8329, 0
        %v8799 = vand.u32 %v8329, 2139095040
        %v8800 = vshrl.u32 %v8799, 23
        %v8801 = vsub.s32 %v8800, 127
        %v8802 = vand.u32 2147483647, %v8329
        %v8803 = vand.u32 %v8802, 8388607
        %v8804 = vor.u32 %v8803, 8388608
        %v8805 = vsub.s32 0, %v8804
        %v8806 = vadd.s32 %v8801, 1
        %vm8807 = vcmp.gt.s32.totalorder %v8806, 0
        %v8808 = vsel %vm8807, %v8806, 0
        %v8809 = vshrl.u32 %v8808, 5
        %v8810 = vand.u32 %v8808, 31
        %v8811 = vsub.s32 32, %v8810
        %v8812 = vshrl.u32 683565275, %v8811
        %v8813 = vshll.u32 683565275, %v8810
        %v8814 = vshrl.u32 2475754826, %v8811
        %v8815 = vor.u32 %v8813, %v8814
        %v8816 = vshll.u32 2475754826, %v8810
        %v8817 = vshrl.u32 2131351028, %v8811
        %v8818 = vor.u32 %v8816, %v8817
        %v8819 = vshll.u32 2131351028, %v8810
        %v8820 = vshrl.u32 2102212464, %v8811
        %v8821 = vor.u32 %v8819, %v8820
        %v8822 = vshll.u32 2102212464, %v8810
        %v8823 = vshrl.u32 920167782, %v8811
        %v8824 = vor.u32 %v8822, %v8823
        %v8825 = vshll.u32 920167782, %v8810
        %v8826 = vshrl.u32 1326507024, %v8811
        %v8827 = vor.u32 %v8825, %v8826
        %vm8828 = vcmp.lt.s32.totalorder %v8809, 1
        %vm8829 = vcmp.lt.s32.totalorder %v8809, 2
        %vm8830 = vcmp.lt.s32.totalorder %v8809, 3
        %vm8831 = vcmp.lt.s32.totalorder %v8809, 4
        %v8832 = vsel %vm8828, %v8812, %v8815
        %v8833 = vsel %vm8831, %v8821, 2102212464
        %v8834 = vsel %vm8830, %v8818, %v8833
        %v8835 = vsel %vm8829, %v8832, %v8834
        %v8836 = vsel %vm8828, %v8815, %v8818
        %v8837 = vsel %vm8831, %v8824, 920167782
        %v8838 = vsel %vm8830, %v8821, %v8837
        %v8839 = vsel %vm8829, %v8836, %v8838
        %v8840 = vsel %vm8828, %v8818, %v8821
        %v8841 = vsel %vm8831, %v8827, 1326507024
        %v8842 = vsel %vm8830, %v8824, %v8841
        %v8843 = vsel %vm8829, %v8840, %v8842
        %v8844 = vshll.u32 %v8804, 8
        %v8845 = vand.u32 %v8844, 65535
        %v8846 = vshrl.u32 %v8844, 16
        %v8847 = vand.u32 %v8843, 65535
        %v8848 = vshrl.u32 %v8843, 16
        %v8849 = vmul.u32 %v8845, %v8847
        %v8850 = vmul.u32 %v8845, %v8848
        %v8851 = vmul.u32 %v8846, %v8847
        %v8852 = vmul.u32 %v8846, %v8848
        %v8853 = vshll.u32 %v8850, 16
        %v8854 = vshrl.u32 %v8850, 16
        %v8855 = vshll.u32 %v8851, 16
        %v8856 = vshrl.u32 %v8851, 16
        %vm8857 = vc.u32 %v8849, %v8853
        %v8858 = vsel %vm8857, 1, 0
        %v8859 = vadd.s32 %v8849, %v8853
        %v8860 = vadd.s32 %v8852, %v8858
        %vm8861 = vc.u32 %v8859, %v8855
        %v8862 = vsel %vm8861, 1, 0
        %v8863 = vadd.s32 %v8859, %v8855
        %v8864 = vadd.s32 %v8860, %v8862
        %v8865 = vadd.s32 %v8864, %v8854
        %v8866 = vadd.s32 %v8865, %v8856
        %v8867 = vand.u32 %v8844, 65535
        %v8868 = vshrl.u32 %v8844, 16
        %v8869 = vand.u32 %v8839, 65535
        %v8870 = vshrl.u32 %v8839, 16
        %v8871 = vmul.u32 %v8867, %v8869
        %v8872 = vmul.u32 %v8867, %v8870
        %v8873 = vmul.u32 %v8868, %v8869
        %v8874 = vmul.u32 %v8868, %v8870
        %v8875 = vshll.u32 %v8872, 16
        %v8876 = vshrl.u32 %v8872, 16
        %v8877 = vshll.u32 %v8873, 16
        %v8878 = vshrl.u32 %v8873, 16
        %vm8879 = vc.u32 %v8871, %v8875
        %v8880 = vsel %vm8879, 1, 0
        %v8881 = vadd.s32 %v8871, %v8875
        %v8882 = vadd.s32 %v8874, %v8880
        %vm8883 = vc.u32 %v8881, %v8877
        %v8884 = vsel %vm8883, 1, 0
        %v8885 = vadd.s32 %v8881, %v8877
        %v8886 = vadd.s32 %v8882, %v8884
        %v8887 = vadd.s32 %v8886, %v8876
        %v8888 = vadd.s32 %v8887, %v8878
        %v8889 = vmul.u32 %v8844, %v8835
        %v8890 = vadd.s32 %v8866, %v8885
        %vm8891 = vc.u32 %v8866, %v8885
        %v8892 = vadd.s32 %v8888, 1
        %v8893 = vsel %vm8891, %v8892, %v8888
        %v8894 = vadd.s32 %v8889, %v8893
        %v8895 = vadd.s32 %v8894, 536870912
        %v8896 = vshrl.u32 %v8895, 30
        %v8897 = vshll.u32 %v8896, 30
        %v8898 = vsub.s32 %v8894, %v8897
        %vm8899 = vcmp.lt.s32.totalorder %v8898, 0
        %v8900 = vsub.s32 0, %v8898
        %v8901 = vsel %vm8899, %v8900, %v8898
        %v8902 = vclz %v8901
        %v8903 = vsub.s32 %v8902, 2
        %vm8904 = vcmp.gt.s32.totalorder 0, %v8903
        %v8905 = vsel %vm8904, 0, %v8903
        %v8906 = vsub.s32 32, %v8905
        %v8907 = vshll.u32 %v8898, %v8905
        %v8908 = vshrl.u32 %v8890, %v8906
        %v8909 = vor.u32 %v8907, %v8908
        %v8910 = vsub.s32 4294967266, %v8905
        %v8911 = vadd.s32 %v8910, 127
        %v8912 = vshll.u32 %v8911, 23
        %v8913 = vor.u32 4788187, %v8912
        %v8914 = vand.u32 2147483647, %v8913
        %v8916 = vcvt.s32.f32 %v8909
        %v8917 = vmul.f32 %v8916, %v8914
        %v8918 = vxor.u32 %v8917, 2147483648
        %v8919 = vsel %vm8798, %v8918, %v8917
        %v8920 = vsub.s32 4, %v8896
        %v8921 = vsel %vm8798, %v8920, %v8896
        %v8922 = vsel %vm8797, %v8329, %v8919
        %v8923 = vsel %vm8797, 0, %v8921
        %v8924 = vmul.f32 %v8922, %v8922
        %v8925 = vmul.f32 %v8924, -0.001358992
        %v8926 = vadd.f32 %v8925, 0.041655596
        %v8927 = vmul.f32 %v8924, %v8926
        %v8928 = vadd.f32 %v8927, -0.4999988
        %v8929 = vmul.f32 %v8924, %v8928
        %v8930 = vadd.f32 1.0, %v8929
        %v8931 = vmul.f32 %v8922, %v8922
        %v8932 = vmul.f32 %v8931, -0.00019511016
        %v8933 = vadd.f32 %v8932, 0.008332121
        %v8934 = vmul.f32 %v8931, %v8933
        %v8935 = vadd.f32 %v8934, -0.16666654
        %v8936 = vmul.f32 %v8931, %v8935
        %v8937 = vadd.f32 %v8936, 1.0
        %v8938 = vmul.f32 %v8937, %v8922
        %vm8939 = vweird.f32 %v8329
        %v8940 = vadd.s32 %v8923, 3
        %v8941 = vand.u32 %v8940, 3
        %vm8942 = vcmp.lt.s32.totalorder %v8941, 2
        %vm8943 = vcmp.eq.s32.totalorder %v8941, 0
        %v8944 = vxor.u32 %v8938, 2147483648
        %v8945 = vsel %vm8943, %v8930, %v8944
        %vm8946 = vcmp.eq.s32.totalorder %v8941, 2
        %v8947 = vxor.u32 %v8930, 2147483648
        %v8948 = vsel %vm8946, %v8947, %v8938
        %v8949 = vsel %vm8942, %v8945, %v8948
        %v8950 = vsel %vm8939, nan, %v8949
        %v8955 = vrot.slane %v8640, 4
        %v8956 = vrot.slane %v8950, 4
        %vm8957 = vcmask 1043456
        %v8958 = vsel %vm8957, %v8485, %v8955
        %v8959 = vsel %vm8957, %v8795, %v8956
        %8962 = vst [vmem:[%s326] sm:$0x77] %v8958
        %8963 = vst [vmem:[%s326 + $0x8] sm:$0x77] %v8959
        %s8964 = sand.u32 %s225, 1
        %s8965 = scalar_lea.sflag [#allocation3], %s8964
        %s8966 = sand.u32 %s225, 1
        %s8967 = smul.addr %s8966, 16
        %s8968 = scalar_lea.vmem [#allocation2], %s8967
        // Predicated region
        $region57: #{tpu_custom_call.1} parent=55 // pred_check
          %p8969 = pneg %p235
        $region58: #{tpu_custom_call.1} parent=55 // pred_check_branch
          %8971 = sbr.rel (%p8969) target = $region60
        $region59: #{tpu_custom_call.1} parent=55 // pred_region
          %s8972 = smul.u32 4, %s23
          %8974 = vsyncadd %s8965, 0
          %s8975 = smul.addr %s8972, 4
          %s8976 = scalar_lea.hbm %s9, %s8975
          %s8978 = sshll.u32 %s8968, 4
          %s8979 = int_to_ptr.vmem [resolvable:$true] %s8978
          %s8980 = sshll.u32 %s8976, 4
          %s8981 = int_to_ptr.hbm [resolvable:$true] %s8980
          %8983 = dma.vmem_to_hbm [thread:$0]  %s8979, 256, %s8981, %s8965
        $region60: #{tpu_custom_call.1} parent=55 // pred_fallthru
          _
      $region56: #{tpu_custom_call.1} parent=5 // pred_fallthru
        _
      %p8984 = scmp.le.s32.totalorder 2, %s18
      // Predicated region
      $region61: #{tpu_custom_call.1} parent=5 // pred_check
        %p8985 = pneg %p8984
      $region62: #{tpu_custom_call.1} parent=5 // pred_check_branch
        %8987 = sbr.rel (%p8985) target = $region64
      $region63: #{tpu_custom_call.1} parent=5 // pred_region
        %s8988 = ssub.s32 %s18, 2
        // Predicated region
        $region65: #{tpu_custom_call.1} parent=63 // pred_check
          %p8989 = pneg %p241
        $region66: #{tpu_custom_call.1} parent=63 // pred_check_branch
          %8991 = sbr.rel (%p8989) target = $region68
        $region67: #{tpu_custom_call.1} parent=63 // pred_region
          %s8992 = sand.u32 %s226, 1
          %s8993 = scalar_lea.sflag [#allocation3], %s8992
          %s8994 = sand.u32 %s226, 1
          %s8995 = smul.addr %s8994, 16
          %s8996 = scalar_lea.vmem [#allocation2], %s8995
          %8998 = dma.done %s8993, 256
        $region68: #{tpu_custom_call.1} parent=63 // pred_fallthru
          _
      $region64: #{tpu_custom_call.1} parent=5 // pred_fallthru
        _
    $region6: #{tpu_custom_call.1} parent=1 // loop_footer
      %s22 = sadd.s32 1, %s18
    $region7: #{tpu_custom_call.1} parent=1 // loop_footer_branch
      %17 = sbr.rel target = $region3
    $region8: #{tpu_custom_call.1} parent=1 // loop_exit
      _
    %8999 = vsyncpa [#allocation3], 1
    %s9000 = scalar_lea.sflag [#allocation3], 1
    %9001 = vsyncpa %s9000, 1

</llo_original>
